<compile_context>
chip_gen: v6e
topology: v6e:2x2x1
jax: 0.10.0
libtpu: 0.0.40
codegen_flags: <defaults>
</compile_context>

<pallas_src>
import jax
import jax.numpy as jnp
import numpy as np
from jax.experimental import pallas as pl
from jax.experimental.pallas import tpu as pltpu

NEG_BIAS = -1e30  # finite "minus infinity" for the additive attention-mask bias


# -----------------------------------------------------------------------------
# Kernel helpers
# -----------------------------------------------------------------------------
def _layer_norm(x, gamma, beta, eps=1e-6):
    mean = jnp.mean(x, axis=-1, keepdims=True)
    var = jnp.mean((x - mean) ** 2, axis=-1, keepdims=True)
    return (x - mean) * jax.lax.rsqrt(var + eps) * gamma + beta


def _softmax_rows(scores):
    # f32 softmax; EUP approx reciprocal (~1e-3 relative error in the attention
    # maps -- intentional accuracy/perf tradeoff, documented).
    m = jnp.max(scores, axis=-1, keepdims=True)
    e = jnp.exp(scores - m)
    denom = jnp.sum(e, axis=-1, keepdims=True)
    return e * pl.reciprocal(denom, approx=True)


# -----------------------------------------------------------------------------
# Pallas kernel: self-attn -> cross-attn -> FFN for one (batch, query-tile).
# -----------------------------------------------------------------------------
def _make_decoder_layer_kernel(return_attn, attn_dtype):
    def kernel(dec_ref, dq_ref, dkT_ref, dv_ref, ekT_ref, ev_ref,
               smask_ref, xmask_ref,
               wq_ref, bq_ref, wfc_ref, ln1g_ref, ln1b_ref,
               w1_ref, b1_ref, w2_ref, b2_ref, ln2g_ref, ln2b_ref,
               out_ref, *attn_refs):
        D = out_ref.shape[-1]
        scale = float(D) ** -0.5

        x_blk = dec_ref[0]                                  # (tq, D) f32 residual rows

        # --- self-attention (Q pre-scaled, K pre-transposed in the wrapper) ---
        s = jnp.dot(dq_ref[0], dkT_ref[0],
                    preferred_element_type=jnp.float32)     # (tq, L_dec) f32
        s = jnp.where(smask_ref[0] != 0, NEG_BIAS, s)
        attn_s = _softmax_rows(s)
        if return_attn:
            attn_refs[0][0] = attn_s.astype(attn_dtype)
        ctx = jnp.dot(attn_s.astype(jnp.bfloat16), dv_ref[0],
                      preferred_element_type=jnp.float32)
        mha = jnp.dot(ctx.astype(jnp.bfloat16), wfc_ref[...],
                      preferred_element_type=jnp.float32)   # fc (no bias)
        y = _layer_norm(mha + x_blk, ln1g_ref[...], ln1b_ref[...])

        # --- cross-attention (same MultiHeadAttention module => same weights/LN) ---
        qc = jnp.dot(y.astype(jnp.bfloat16), wq_ref[...],
                     preferred_element_type=jnp.float32) + bq_ref[...]
        qc = (qc * scale).astype(jnp.bfloat16)
        sx = jnp.dot(qc, ekT_ref[0],
                     preferred_element_type=jnp.float32)    # (tq, L_enc) f32
        sx = jnp.where(xmask_ref[0] != 0, NEG_BIAS, sx)
        attn_x = _softmax_rows(sx)
        if return_attn:
            attn_refs[1][0] = attn_x.astype(attn_dtype)
        ctx_x = jnp.dot(attn_x.astype(jnp.bfloat16), ev_ref[0],
                        preferred_element_type=jnp.float32)
        mha_x = jnp.dot(ctx_x.astype(jnp.bfloat16), wfc_ref[...],
                        preferred_element_type=jnp.float32)
        z = _layer_norm(mha_x + y, ln1g_ref[...], ln1b_ref[...])

        # --- position-wise FFN ---
        h = jnp.dot(z.astype(jnp.bfloat16), w1_ref[...],
                    preferred_element_type=jnp.float32) + b1_ref[...]
        h = jnp.maximum(h, 0.0)                             # ReLU
        ff = jnp.dot(h.astype(jnp.bfloat16), w2_ref[...],
                     preferred_element_type=jnp.float32) + b2_ref[...]
        out_ref[0] = _layer_norm(ff + z, ln2g_ref[...], ln2b_ref[...])

    return kernel


# -----------------------------------------------------------------------------
# Wrapper
# -----------------------------------------------------------------------------
def decoder_layer_pallas(dec_in, enc_out, self_mask, cross_mask, params, *,
                         tq=None, return_attn=True, attn_dtype=jnp.float32):
    """dec_in (B,L_dec,D) f32, enc_out (B,L_enc,D) f32, masks bool (True=masked)."""
    B, L_dec, D = dec_in.shape
    _, L_enc, _ = enc_out.shape
    F = params["w1"].shape[1]

    assert D % 128 == 0 and L_dec % 128 == 0 and L_enc % 128 == 0, \
        "model_dim and sequence lengths must be multiples of 128 (lane-dense tiles)"
    if tq is None:
        # 256 fills the v6e/v7x 256x256 MXU; pass tq=128 explicitly on v5e.
        tq = 256 if L_dec % 256 == 0 else 128
    assert L_dec % tq == 0
    n_q = L_dec // tq
    scale = float(D) ** -0.5

    # ---- once-per-call precompute (plain XLA matmuls, bf16 results in HBM) ----
    wqkv = jnp.concatenate([params["wq"], params["wk"], params["wv"]],
                           axis=1).astype(jnp.bfloat16)              # (D, 3D)
    bqkv = jnp.concatenate([params["bq"], params["bk"], params["bv"]], axis=1)

    qkv = jnp.einsum("bld,de->ble", dec_in.astype(jnp.bfloat16), wqkv,
                     preferred_element_type=jnp.float32) + bqkv
    dq = (qkv[..., :D] * scale).astype(jnp.bfloat16)                 # (B, L_dec, D)
    dkT = jnp.swapaxes(qkv[..., D:2 * D].astype(jnp.bfloat16), 1, 2)  # (B, D, L_dec)
    dv = qkv[..., 2 * D:].astype(jnp.bfloat16)                       # (B, L_dec, D)

    ekv = jnp.einsum("bld,de->ble", enc_out.astype(jnp.bfloat16), wqkv[:, D:],
                     preferred_element_type=jnp.float32) + bqkv[:, D:]
    ekT = jnp.swapaxes(ekv[..., :D].astype(jnp.bfloat16), 1, 2)      # (B, D, L_enc)
    ev = ekv[..., D:].astype(jnp.bfloat16)                           # (B, L_enc, D)

    smask = self_mask.astype(jnp.int8)                               # 1 byte / element
    xmask = cross_mask.astype(jnp.int8)

    wq_b = params["wq"].astype(jnp.bfloat16)
    wfc_b = params["wfc"].astype(jnp.bfloat16)
    w1_b = params["w1"].astype(jnp.bfloat16)
    w2_b = params["w2"].astype(jnp.bfloat16)

    # weights / biases / LN params: resident, single-buffered, whole-array VMEM
    resident = pl.BlockSpec(memory_space=pltpu.MemorySpace.VMEM)
    in_specs = [
        pl.BlockSpec((1, tq, D), lambda b, q: (b, q, 0)),       # residual tile (f32)
        pl.BlockSpec((1, tq, D), lambda b, q: (b, q, 0)),       # pre-scaled Q (bf16)
        # NOTE: the four per-batch K/V operands below only change every n_q steps;
        # on v7x they could additionally use pipeline_mode=pl.Buffered(1) to halve
        # their VMEM footprint (kept default-buffered here for portability).
        pl.BlockSpec((1, D, L_dec), lambda b, q: (b, 0, 0)),    # decoder K^T (bf16)
        pl.BlockSpec((1, L_dec, D), lambda b, q: (b, 0, 0)),    # decoder V   (bf16)
        pl.BlockSpec((1, D, L_enc), lambda b, q: (b, 0, 0)),    # encoder K^T (bf16)
        pl.BlockSpec((1, L_enc, D), lambda b, q: (b, 0, 0)),    # encoder V   (bf16)
        pl.BlockSpec((1, tq, L_dec), lambda b, q: (b, q, 0)),   # self mask (int8)
        pl.BlockSpec((1, tq, L_enc), lambda b, q: (b, q, 0)),   # cross mask (int8)
    ] + [resident] * 11

    out_specs = [pl.BlockSpec((1, tq, D), lambda b, q: (b, q, 0))]
    out_shape = [jax.ShapeDtypeStruct((B, L_dec, D), jnp.float32)]
    if return_attn:
        out_specs += [pl.BlockSpec((1, tq, L_dec), lambda b, q: (b, q, 0)),
                      pl.BlockSpec((1, tq, L_enc), lambda b, q: (b, q, 0))]
        out_shape += [jax.ShapeDtypeStruct((B, L_dec, L_dec), attn_dtype),
                      jax.ShapeDtypeStruct((B, L_dec, L_enc), attn_dtype)]

    # ---- tight scoped-VMEM budget (<=48 MiB cap keeps headroom on v7x's 64 MiB) ----
    def nbytes(shape, dt):
        return int(np.prod(shape)) * jnp.dtype(dt).itemsize

    attn_bytes = jnp.dtype(attn_dtype).itemsize if return_attn else 0
    per_step_io = (
        nbytes((tq, D), jnp.float32) + nbytes((tq, D), jnp.bfloat16)
        + 2 * nbytes((L_dec, D), jnp.bfloat16) + 2 * nbytes((L_enc, D), jnp.bfloat16)
        + nbytes((tq, L_dec), jnp.int8) + nbytes((tq, L_enc), jnp.int8)
        + nbytes((tq, D), jnp.float32)
        + tq * (L_dec + L_enc) * attn_bytes
    )
    resident_bytes = (
        2 * nbytes((D, D), jnp.bfloat16)
        + nbytes((D, F), jnp.bfloat16) + nbytes((F, D), jnp.bfloat16)
        + 6 * nbytes((1, D), jnp.float32) + nbytes((1, F), jnp.float32)
    )
    live_f32 = 4 * (tq * (L_dec + L_enc) + tq * F + 4 * tq * D)   # scores / ffn / temps
    est = 2 * per_step_io + resident_bytes + live_f32             # x2: double-buffering
    vmem_limit = int(min(48 * 2**20, max(int(1.5 * est), 16 * 2**20)))

    fn = pl.pallas_call(
        _make_decoder_layer_kernel(return_attn, attn_dtype),
        grid=(B, n_q),
        in_specs=in_specs,
        out_specs=out_specs,
        out_shape=out_shape,
        compiler_params=pltpu.CompilerParams(
            dimension_semantics=("parallel", "parallel"),
            vmem_limit_bytes=vmem_limit,
        ),
    )
    results = fn(
        dec_in, dq, dkT, dv, ekT, ev, smask, xmask,
        wq_b, params["bq"], wfc_b,
        params["ln1_g"], params["ln1_b"],
        w1_b, params["b1"], w2_b, params["b2"],
        params["ln2_g"], params["ln2_b"],
    )
    if return_attn:
        return results[0], results[1], results[2]
    return results[0]


# -----------------------------------------------------------------------------
# Deterministic parameter init (synthetic).
# -----------------------------------------------------------------------------
def init_params(key, model_dim, ffn_dim):
    ks = jax.random.split(key, 12)
    s = 0.05
    return dict(
        wq=s * jax.random.normal(ks[0], (model_dim, model_dim), jnp.float32),
        bq=s * jax.random.normal(ks[1], (1, model_dim), jnp.float32),
        wk=s * jax.random.normal(ks[2], (model_dim, model_dim), jnp.float32),
        bk=s * jax.random.normal(ks[3], (1, model_dim), jnp.float32),
        wv=s * jax.random.normal(ks[4], (model_dim, model_dim), jnp.float32),
        bv=jnp.zeros((1, model_dim), jnp.float32),
        wfc=s * jax.random.normal(ks[5], (model_dim, model_dim), jnp.float32),
        ln1_g=1.0 + 0.1 * jax.random.normal(ks[6], (1, model_dim), jnp.float32),
        ln1_b=0.05 * jax.random.normal(ks[7], (1, model_dim), jnp.float32),
        w1=s * jax.random.normal(ks[8], (model_dim, ffn_dim), jnp.float32),
        b1=jnp.zeros((1, ffn_dim), jnp.float32),
        w2=s * jax.random.normal(ks[9], (ffn_dim, model_dim), jnp.float32),
        b2=jnp.zeros((1, model_dim), jnp.float32),
        ln2_g=1.0 + 0.1 * jax.random.normal(ks[10], (1, model_dim), jnp.float32),
        ln2_b=0.05 * jax.random.normal(ks[11], (1, model_dim), jnp.float32),
    )


# -----------------------------------------------------------------------------
# Pure-JAX reference (mirrors the PyTorch forward; same bf16 matmul casting).
# -----------------------------------------------------------------------------
def _bdot(a, b):
    return jnp.dot(a.astype(jnp.bfloat16), b.astype(jnp.bfloat16),
                   preferred_element_type=jnp.float32)


def _ln_ref(x, g, b, eps=1e-6):
    mu = x.mean(-1, keepdims=True)
    var = ((x - mu) ** 2).mean(-1, keepdims=True)
    return (x - mu) / jnp.sqrt(var + eps) * g + b


def _mha_ref(q_in, kv_in, mask, p):
    D = q_in.shape[-1]
    scale = float(D) ** -0.5
    q = _bdot(q_in, p["wq"]) + p["bq"]
    k = _bdot(kv_in, p["wk"]) + p["bk"]
    v = _bdot(kv_in, p["wv"]) + p["bv"]
    s = jnp.einsum("bld,bmd->blm", (q * scale).astype(jnp.bfloat16),
                   k.astype(jnp.bfloat16), preferred_element_type=jnp.float32)
    s = jnp.where(mask, -jnp.inf, s)            # PyTorch masked_fill_(mask, -inf)
    a = jax.nn.softmax(s, axis=2)
    ctx = jnp.einsum("blm,bmd->bld", a.astype(jnp.bfloat16),
                     v.astype(jnp.bfloat16), preferred_element_type=jnp.float32)
    out = _ln_ref(_bdot(ctx, p["wfc"]) + q_in, p["ln1_g"], p["ln1_b"])
    return out, a


def decoder_layer_ref(dec_in, enc_out, self_mask, cross_mask, p):
    y, self_attn = _mha_ref(dec_in, dec_in, self_mask, p)
    z, cross_attn = _mha_ref(y, enc_out, cross_mask, p)
    h = jnp.maximum(_bdot(z, p["w1"]) + p["b1"], 0.0)
    out = _ln_ref(_bdot(h, p["w2"]) + p["b2"] + z, p["ln2_g"], p["ln2_b"])
    return out, self_attn, cross_attn


# -----------------------------------------------------------------------------
if __name__ == "__main__":
    B, L_DEC, L_ENC, D, FFN = 2, 512, 256, 128, 256

    key = jax.random.PRNGKey(0)
    k_dec, k_enc, k_par = jax.random.split(key, 3)

    dec_in = 0.5 * jax.random.normal(k_dec, (B, L_DEC, D), jnp.float32)
    enc_out = 0.5 * jax.random.normal(k_enc, (B, L_ENC, D), jnp.float32)

    # causal self-attention mask + encoder padding mask (True = masked)
    causal = jnp.arange(L_DEC)[None, :] > jnp.arange(L_DEC)[:, None]
    self_mask = jnp.broadcast_to(causal, (B, L_DEC, L_DEC))
    enc_pad = jnp.zeros((B, L_ENC), jnp.bool_).at[1, L_ENC - 64:].set(True)
    cross_mask = jnp.broadcast_to(enc_pad[:, None, :], (B, L_DEC, L_ENC))

    params = init_params(k_par, D, FFN)

    out, self_attn, cross_attn = decoder_layer_pallas(
        dec_in, enc_out, self_mask, cross_mask, params)     # tq auto -> 256
    out = jax.block_until_ready(out)
    self_attn = jax.block_until_ready(self_attn)
    cross_attn = jax.block_until_ready(cross_attn)

    out_ref, sa_ref, xa_ref = decoder_layer_ref(
        dec_in, enc_out, self_mask, cross_mask, params)

    np.testing.assert_allclose(np.asarray(out), np.asarray(out_ref),
                               rtol=2e-2, atol=2e-2)
    np.testing.assert_allclose(np.asarray(self_attn), np.asarray(sa_ref),
                               rtol=0, atol=5e-3)
    np.testing.assert_allclose(np.asarray(cross_attn), np.asarray(xa_ref),
                               rtol=0, atol=5e-3)

    # no-attention-map variant: drops the O(L^2) HBM writes entirely
    out_noattn = decoder_layer_pallas(
        dec_in, enc_out, self_mask, cross_mask, params, return_attn=False)
    out_noattn = jax.block_until_ready(out_noattn)
    np.testing.assert_allclose(np.asarray(out_noattn), np.asarray(out_ref),
                               rtol=2e-2, atol=2e-2)

    print("KERNEL_OK")
</pallas_src>

<mosaic_0001>
module attributes {stable_mosaic.version = 11 : i64} {
  func.func @kernel(%arg0: i32, %arg1: i32, %arg2: memref<1x256x128xf32, #tpu.memory_space<vmem>>, %arg3: memref<1x256x128xbf16, #tpu.memory_space<vmem>>, %arg4: memref<1x128x512xbf16, #tpu.memory_space<vmem>>, %arg5: memref<1x512x128xbf16, #tpu.memory_space<vmem>>, %arg6: memref<1x128x256xbf16, #tpu.memory_space<vmem>>, %arg7: memref<1x256x128xbf16, #tpu.memory_space<vmem>>, %arg8: memref<1x256x512xi8, #tpu.memory_space<vmem>>, %arg9: memref<1x256x256xi8, #tpu.memory_space<vmem>>, %arg10: memref<128x128xbf16, #tpu.memory_space<vmem>>, %arg11: memref<1x128xf32, #tpu.memory_space<vmem>>, %arg12: memref<128x128xbf16, #tpu.memory_space<vmem>>, %arg13: memref<1x128xf32, #tpu.memory_space<vmem>>, %arg14: memref<1x128xf32, #tpu.memory_space<vmem>>, %arg15: memref<128x256xbf16, #tpu.memory_space<vmem>>, %arg16: memref<1x256xf32, #tpu.memory_space<vmem>>, %arg17: memref<256x128xbf16, #tpu.memory_space<vmem>>, %arg18: memref<1x128xf32, #tpu.memory_space<vmem>>, %arg19: memref<1x128xf32, #tpu.memory_space<vmem>>, %arg20: memref<1x128xf32, #tpu.memory_space<vmem>>, %arg21: memref<1x256x128xf32, #tpu.memory_space<vmem>>, %arg22: memref<1x256x512xf32, #tpu.memory_space<vmem>>, %arg23: memref<1x256x256xf32, #tpu.memory_space<vmem>>) attributes {dimension_semantics = [#tpu.dimension_semantics<parallel>, #tpu.dimension_semantics<parallel>], iteration_bounds = array<i64: 2, 2>, scalar_prefetch = 0 : i64, scratch_operands = 0 : i64, tpu.core_type = #tpu.core_type<tc>, window_params = [{transform_indices = @transform_0, window_bounds = array<i64: 1, 256, 128>}, {transform_indices = @transform_1, window_bounds = array<i64: 1, 256, 128>}, {transform_indices = @transform_2, window_bounds = array<i64: 1, 128, 512>}, {transform_indices = @transform_3, window_bounds = array<i64: 1, 512, 128>}, {transform_indices = @transform_4, window_bounds = array<i64: 1, 128, 256>}, {transform_indices = @transform_5, window_bounds = array<i64: 1, 256, 128>}, {transform_indices = @transform_6, window_bounds = array<i64: 1, 256, 512>}, {transform_indices = @transform_7, window_bounds = array<i64: 1, 256, 256>}, {pipeline_mode = #tpu.pipeline_mode<synchronous>, transform_indices = @transform_8, window_bounds = array<i64: 128, 128>}, {pipeline_mode = #tpu.pipeline_mode<synchronous>, transform_indices = @transform_9, window_bounds = array<i64: 1, 128>}, {pipeline_mode = #tpu.pipeline_mode<synchronous>, transform_indices = @transform_10, window_bounds = array<i64: 128, 128>}, {pipeline_mode = #tpu.pipeline_mode<synchronous>, transform_indices = @transform_11, window_bounds = array<i64: 1, 128>}, {pipeline_mode = #tpu.pipeline_mode<synchronous>, transform_indices = @transform_12, window_bounds = array<i64: 1, 128>}, {pipeline_mode = #tpu.pipeline_mode<synchronous>, transform_indices = @transform_13, window_bounds = array<i64: 128, 256>}, {pipeline_mode = #tpu.pipeline_mode<synchronous>, transform_indices = @transform_14, window_bounds = array<i64: 1, 256>}, {pipeline_mode = #tpu.pipeline_mode<synchronous>, transform_indices = @transform_15, window_bounds = array<i64: 256, 128>}, {pipeline_mode = #tpu.pipeline_mode<synchronous>, transform_indices = @transform_16, window_bounds = array<i64: 1, 128>}, {pipeline_mode = #tpu.pipeline_mode<synchronous>, transform_indices = @transform_17, window_bounds = array<i64: 1, 128>}, {pipeline_mode = #tpu.pipeline_mode<synchronous>, transform_indices = @transform_18, window_bounds = array<i64: 1, 128>}, {transform_indices = @transform_19, window_bounds = array<i64: 1, 256, 128>}, {transform_indices = @transform_20, window_bounds = array<i64: 1, 256, 512>}, {transform_indices = @transform_21, window_bounds = array<i64: 1, 256, 256>}]} {
    %c0 = arith.constant 0 : index
    %c0_0 = arith.constant 0 : index
    %c0_1 = arith.constant 0 : index
    %0 = vector.load %arg2[%c0, %c0_0, %c0_1] : memref<1x256x128xf32, #tpu.memory_space<vmem>>, vector<1x256x128xf32>
    %1 = vector.shape_cast %0 : vector<1x256x128xf32> to vector<256x128xf32>
    %c0_2 = arith.constant 0 : index
    %c0_3 = arith.constant 0 : index
    %c0_4 = arith.constant 0 : index
    %2 = vector.load %arg3[%c0_2, %c0_3, %c0_4] : memref<1x256x128xbf16, #tpu.memory_space<vmem>>, vector<1x256x128xbf16>
    %3 = vector.shape_cast %2 : vector<1x256x128xbf16> to vector<256x128xbf16>
    %c0_5 = arith.constant 0 : index
    %c0_6 = arith.constant 0 : index
    %c0_7 = arith.constant 0 : index
    %4 = vector.load %arg4[%c0_5, %c0_6, %c0_7] : memref<1x128x512xbf16, #tpu.memory_space<vmem>>, vector<1x128x512xbf16>
    %5 = vector.shape_cast %4 : vector<1x128x512xbf16> to vector<128x512xbf16>
    %cst = arith.constant dense<0.000000e+00> : vector<256x512xf32>
    %6 = tpu.matmul %3, %5, %cst {dimension_numbers = #tpu.dot_dimension_numbers<[1], [0], [0], [1], [0, 0, 1, 1], [], []>} : vector<256x128xbf16>, vector<128x512xbf16>, vector<256x512xf32> -> vector<256x512xf32>
    %c0_8 = arith.constant 0 : index
    %c0_9 = arith.constant 0 : index
    %c0_10 = arith.constant 0 : index
    %7 = vector.load %arg8[%c0_8, %c0_9, %c0_10] : memref<1x256x512xi8, #tpu.memory_space<vmem>>, vector<1x256x512xi8>
    %8 = vector.shape_cast %7 : vector<1x256x512xi8> to vector<256x512xi8>
    %c0_i8 = arith.constant 0 : i8
    %9 = vector.broadcast %c0_i8 : i8 to vector<256x512xi8>
    %10 = arith.cmpi ne, %8, %9 : vector<256x512xi8>
    %cst_11 = arith.constant -1.000000e+30 : f32
    %11 = vector.broadcast %cst_11 : f32 to vector<256x512xf32>
    %12 = arith.select %10, %11, %6 : vector<256x512xi1>, vector<256x512xf32>
    %cst_12 = arith.constant dense<0xFF800000> : vector<256xf32>
    %13 = vector.multi_reduction <maximumf>, %12, %cst_12 [1] : vector<256x512xf32> to vector<256xf32>
    %14 = vector.shape_cast %13 : vector<256xf32> to vector<256x1xf32>
    %15 = vector.broadcast %14 : vector<256x1xf32> to vector<256x512xf32>
    %16 = arith.subf %12, %15 : vector<256x512xf32>
    %17 = math.exp %16 : vector<256x512xf32>
    %cst_13 = arith.constant dense<0.000000e+00> : vector<256xf32>
    %18 = vector.multi_reduction <add>, %17, %cst_13 [1] : vector<256x512xf32> to vector<256xf32>
    %19 = vector.shape_cast %18 : vector<256xf32> to vector<256x1xf32>
    %20 = tpu.reciprocal %19 {approx = true} : vector<256x1xf32> -> vector<256x1xf32>
    %21 = vector.broadcast %20 : vector<256x1xf32> to vector<256x512xf32>
    %22 = arith.mulf %17, %21 : vector<256x512xf32>
    %c0_14 = arith.constant 0 : index
    %c0_15 = arith.constant 0 : index
    %c0_16 = arith.constant 0 : index
    %23 = vector.load %arg22[%c0_14, %c0_15, %c0_16] : memref<1x256x512xf32, #tpu.memory_space<vmem>>, vector<1x256x512xf32>
    %24 = vector.shape_cast %23 : vector<1x256x512xf32> to vector<256x512xf32>
    %25 = vector.shape_cast %22 : vector<256x512xf32> to vector<1x256x512xf32>
    tpu.vector_store %arg22[%c0_14, %c0_15, %c0_16], %25 {strides = array<i32>} : memref<1x256x512xf32, #tpu.memory_space<vmem>>, vector<1x256x512xf32>,
    %26 = arith.truncf %22 : vector<256x512xf32> to vector<256x512xbf16>
    %c0_17 = arith.constant 0 : index
    %c0_18 = arith.constant 0 : index
    %c0_19 = arith.constant 0 : index
    %27 = vector.load %arg5[%c0_17, %c0_18, %c0_19] : memref<1x512x128xbf16, #tpu.memory_space<vmem>>, vector<1x512x128xbf16>
    %28 = vector.shape_cast %27 : vector<1x512x128xbf16> to vector<512x128xbf16>
    %cst_20 = arith.constant dense<0.000000e+00> : vector<256x128xf32>
    %29 = tpu.matmul %26, %28, %cst_20 {dimension_numbers = #tpu.dot_dimension_numbers<[1], [0], [0], [1], [0, 0, 1, 1], [], []>} : vector<256x512xbf16>, vector<512x128xbf16>, vector<256x128xf32> -> vector<256x128xf32>
    %30 = arith.truncf %29 : vector<256x128xf32> to vector<256x128xbf16>
    %c0_21 = arith.constant 0 : index
    %c0_22 = arith.constant 0 : index
    %31 = vector.load %arg12[%c0_21, %c0_22] : memref<128x128xbf16, #tpu.memory_space<vmem>>, vector<128x128xbf16>
    %cst_23 = arith.constant dense<0.000000e+00> : vector<256x128xf32>
    %32 = tpu.matmul %30, %31, %cst_23 {dimension_numbers = #tpu.dot_dimension_numbers<[1], [0], [0], [1], [0, 0, 1, 1], [], []>} : vector<256x128xbf16>, vector<128x128xbf16>, vector<256x128xf32> -> vector<256x128xf32>
    %33 = arith.addf %32, %1 : vector<256x128xf32>
    %c0_24 = arith.constant 0 : index
    %c0_25 = arith.constant 0 : index
    %34 = vector.load %arg13[%c0_24, %c0_25] : memref<1x128xf32, #tpu.memory_space<vmem>>, vector<1x128xf32>
    %c0_26 = arith.constant 0 : index
    %c0_27 = arith.constant 0 : index
    %35 = vector.load %arg14[%c0_26, %c0_27] : memref<1x128xf32, #tpu.memory_space<vmem>>, vector<1x128xf32>
    %cst_28 = arith.constant dense<0.000000e+00> : vector<256xf32>
    %36 = vector.multi_reduction <add>, %33, %cst_28 [1] : vector<256x128xf32> to vector<256xf32>
    %37 = vector.shape_cast %36 : vector<256xf32> to vector<256x1xf32>
    %cst_29 = arith.constant 1.280000e+02 : f32
    %38 = vector.broadcast %cst_29 : f32 to vector<256x1xf32>
    %39 = arith.divf %37, %38 : vector<256x1xf32>
    %40 = vector.broadcast %39 : vector<256x1xf32> to vector<256x128xf32>
    %41 = arith.subf %33, %40 : vector<256x128xf32>
    %42 = arith.mulf %41, %41 : vector<256x128xf32>
    %cst_30 = arith.constant dense<0.000000e+00> : vector<256xf32>
    %43 = vector.multi_reduction <add>, %42, %cst_30 [1] : vector<256x128xf32> to vector<256xf32>
    %44 = vector.shape_cast %43 : vector<256xf32> to vector<256x1xf32>
    %cst_31 = arith.constant 1.280000e+02 : f32
    %45 = vector.broadcast %cst_31 : f32 to vector<256x1xf32>
    %46 = arith.divf %44, %45 : vector<256x1xf32>
    %47 = vector.broadcast %39 : vector<256x1xf32> to vector<256x128xf32>
    %48 = arith.subf %33, %47 : vector<256x128xf32>
    %cst_32 = arith.constant 9.99999997E-7 : f32
    %49 = vector.broadcast %cst_32 : f32 to vector<256x1xf32>
    %50 = arith.addf %46, %49 : vector<256x1xf32>
    %51 = math.rsqrt %50 : vector<256x1xf32>
    %52 = vector.broadcast %51 : vector<256x1xf32> to vector<256x128xf32>
    %53 = arith.mulf %48, %52 : vector<256x128xf32>
    %54 = vector.broadcast %34 : vector<1x128xf32> to vector<256x128xf32>
    %55 = arith.mulf %53, %54 : vector<256x128xf32>
    %56 = vector.broadcast %35 : vector<1x128xf32> to vector<256x128xf32>
    %57 = arith.addf %55, %56 : vector<256x128xf32>
    %58 = arith.truncf %57 : vector<256x128xf32> to vector<256x128xbf16>
    %c0_33 = arith.constant 0 : index
    %c0_34 = arith.constant 0 : index
    %59 = vector.load %arg10[%c0_33, %c0_34] : memref<128x128xbf16, #tpu.memory_space<vmem>>, vector<128x128xbf16>
    %cst_35 = arith.constant dense<0.000000e+00> : vector<256x128xf32>
    %60 = tpu.matmul %58, %59, %cst_35 {dimension_numbers = #tpu.dot_dimension_numbers<[1], [0], [0], [1], [0, 0, 1, 1], [], []>} : vector<256x128xbf16>, vector<128x128xbf16>, vector<256x128xf32> -> vector<256x128xf32>
    %c0_36 = arith.constant 0 : index
    %c0_37 = arith.constant 0 : index
    %61 = vector.load %arg11[%c0_36, %c0_37] : memref<1x128xf32, #tpu.memory_space<vmem>>, vector<1x128xf32>
    %62 = vector.broadcast %61 : vector<1x128xf32> to vector<256x128xf32>
    %63 = arith.addf %60, %62 : vector<256x128xf32>
    %cst_38 = arith.constant 0.0883883461 : f32
    %64 = vector.broadcast %cst_38 : f32 to vector<256x128xf32>
    %65 = arith.mulf %63, %64 : vector<256x128xf32>
    %66 = arith.truncf %65 : vector<256x128xf32> to vector<256x128xbf16>
    %c0_39 = arith.constant 0 : index
    %c0_40 = arith.constant 0 : index
    %c0_41 = arith.constant 0 : index
    %67 = vector.load %arg6[%c0_39, %c0_40, %c0_41] : memref<1x128x256xbf16, #tpu.memory_space<vmem>>, vector<1x128x256xbf16>
    %68 = vector.shape_cast %67 : vector<1x128x256xbf16> to vector<128x256xbf16>
    %cst_42 = arith.constant dense<0.000000e+00> : vector<256x256xf32>
    %69 = tpu.matmul %66, %68, %cst_42 {dimension_numbers = #tpu.dot_dimension_numbers<[1], [0], [0], [1], [0, 0, 1, 1], [], []>} : vector<256x128xbf16>, vector<128x256xbf16>, vector<256x256xf32> -> vector<256x256xf32>
    %c0_43 = arith.constant 0 : index
    %c0_44 = arith.constant 0 : index
    %c0_45 = arith.constant 0 : index
    %70 = vector.load %arg9[%c0_43, %c0_44, %c0_45] : memref<1x256x256xi8, #tpu.memory_space<vmem>>, vector<1x256x256xi8>
    %71 = vector.shape_cast %70 : vector<1x256x256xi8> to vector<256x256xi8>
    %c0_i8_46 = arith.constant 0 : i8
    %72 = vector.broadcast %c0_i8_46 : i8 to vector<256x256xi8>
    %73 = arith.cmpi ne, %71, %72 : vector<256x256xi8>
    %cst_47 = arith.constant -1.000000e+30 : f32
    %74 = vector.broadcast %cst_47 : f32 to vector<256x256xf32>
    %75 = arith.select %73, %74, %69 : vector<256x256xi1>, vector<256x256xf32>
    %cst_48 = arith.constant dense<0xFF800000> : vector<256xf32>
    %76 = vector.multi_reduction <maximumf>, %75, %cst_48 [1] : vector<256x256xf32> to vector<256xf32>
    %77 = vector.shape_cast %76 : vector<256xf32> to vector<256x1xf32>
    %78 = vector.broadcast %77 : vector<256x1xf32> to vector<256x256xf32>
    %79 = arith.subf %75, %78 : vector<256x256xf32>
    %80 = math.exp %79 : vector<256x256xf32>
    %cst_49 = arith.constant dense<0.000000e+00> : vector<256xf32>
    %81 = vector.multi_reduction <add>, %80, %cst_49 [1] : vector<256x256xf32> to vector<256xf32>
    %82 = vector.shape_cast %81 : vector<256xf32> to vector<256x1xf32>
    %83 = tpu.reciprocal %82 {approx = true} : vector<256x1xf32> -> vector<256x1xf32>
    %84 = vector.broadcast %83 : vector<256x1xf32> to vector<256x256xf32>
    %85 = arith.mulf %80, %84 : vector<256x256xf32>
    %c0_50 = arith.constant 0 : index
    %c0_51 = arith.constant 0 : index
    %c0_52 = arith.constant 0 : index
    %86 = vector.load %arg23[%c0_50, %c0_51, %c0_52] : memref<1x256x256xf32, #tpu.memory_space<vmem>>, vector<1x256x256xf32>
    %87 = vector.shape_cast %86 : vector<1x256x256xf32> to vector<256x256xf32>
    %88 = vector.shape_cast %85 : vector<256x256xf32> to vector<1x256x256xf32>
    tpu.vector_store %arg23[%c0_50, %c0_51, %c0_52], %88 {strides = array<i32>} : memref<1x256x256xf32, #tpu.memory_space<vmem>>, vector<1x256x256xf32>,
    %89 = arith.truncf %85 : vector<256x256xf32> to vector<256x256xbf16>
    %c0_53 = arith.constant 0 : index
    %c0_54 = arith.constant 0 : index
    %c0_55 = arith.constant 0 : index
    %90 = vector.load %arg7[%c0_53, %c0_54, %c0_55] : memref<1x256x128xbf16, #tpu.memory_space<vmem>>, vector<1x256x128xbf16>
    %91 = vector.shape_cast %90 : vector<1x256x128xbf16> to vector<256x128xbf16>
    %cst_56 = arith.constant dense<0.000000e+00> : vector<256x128xf32>
    %92 = tpu.matmul %89, %91, %cst_56 {dimension_numbers = #tpu.dot_dimension_numbers<[1], [0], [0], [1], [0, 0, 1, 1], [], []>} : vector<256x256xbf16>, vector<256x128xbf16>, vector<256x128xf32> -> vector<256x128xf32>
    %93 = arith.truncf %92 : vector<256x128xf32> to vector<256x128xbf16>
    %c0_57 = arith.constant 0 : index
    %c0_58 = arith.constant 0 : index
    %94 = vector.load %arg12[%c0_57, %c0_58] : memref<128x128xbf16, #tpu.memory_space<vmem>>, vector<128x128xbf16>
    %cst_59 = arith.constant dense<0.000000e+00> : vector<256x128xf32>
    %95 = tpu.matmul %93, %94, %cst_59 {dimension_numbers = #tpu.dot_dimension_numbers<[1], [0], [0], [1], [0, 0, 1, 1], [], []>} : vector<256x128xbf16>, vector<128x128xbf16>, vector<256x128xf32> -> vector<256x128xf32>
    %96 = arith.addf %95, %57 : vector<256x128xf32>
    %c0_60 = arith.constant 0 : index
    %c0_61 = arith.constant 0 : index
    %97 = vector.load %arg13[%c0_60, %c0_61] : memref<1x128xf32, #tpu.memory_space<vmem>>, vector<1x128xf32>
    %c0_62 = arith.constant 0 : index
    %c0_63 = arith.constant 0 : index
    %98 = vector.load %arg14[%c0_62, %c0_63] : memref<1x128xf32, #tpu.memory_space<vmem>>, vector<1x128xf32>
    %cst_64 = arith.constant dense<0.000000e+00> : vector<256xf32>
    %99 = vector.multi_reduction <add>, %96, %cst_64 [1] : vector<256x128xf32> to vector<256xf32>
    %100 = vector.shape_cast %99 : vector<256xf32> to vector<256x1xf32>
    %cst_65 = arith.constant 1.280000e+02 : f32
    %101 = vector.broadcast %cst_65 : f32 to vector<256x1xf32>
    %102 = arith.divf %100, %101 : vector<256x1xf32>
    %103 = vector.broadcast %102 : vector<256x1xf32> to vector<256x128xf32>
    %104 = arith.subf %96, %103 : vector<256x128xf32>
    %105 = arith.mulf %104, %104 : vector<256x128xf32>
    %cst_66 = arith.constant dense<0.000000e+00> : vector<256xf32>
    %106 = vector.multi_reduction <add>, %105, %cst_66 [1] : vector<256x128xf32> to vector<256xf32>
    %107 = vector.shape_cast %106 : vector<256xf32> to vector<256x1xf32>
    %cst_67 = arith.constant 1.280000e+02 : f32
    %108 = vector.broadcast %cst_67 : f32 to vector<256x1xf32>
    %109 = arith.divf %107, %108 : vector<256x1xf32>
    %110 = vector.broadcast %102 : vector<256x1xf32> to vector<256x128xf32>
    %111 = arith.subf %96, %110 : vector<256x128xf32>
    %cst_68 = arith.constant 9.99999997E-7 : f32
    %112 = vector.broadcast %cst_68 : f32 to vector<256x1xf32>
    %113 = arith.addf %109, %112 : vector<256x1xf32>
    %114 = math.rsqrt %113 : vector<256x1xf32>
    %115 = vector.broadcast %114 : vector<256x1xf32> to vector<256x128xf32>
    %116 = arith.mulf %111, %115 : vector<256x128xf32>
    %117 = vector.broadcast %97 : vector<1x128xf32> to vector<256x128xf32>
    %118 = arith.mulf %116, %117 : vector<256x128xf32>
    %119 = vector.broadcast %98 : vector<1x128xf32> to vector<256x128xf32>
    %120 = arith.addf %118, %119 : vector<256x128xf32>
    %121 = arith.truncf %120 : vector<256x128xf32> to vector<256x128xbf16>
    %c0_69 = arith.constant 0 : index
    %c0_70 = arith.constant 0 : index
    %122 = vector.load %arg15[%c0_69, %c0_70] : memref<128x256xbf16, #tpu.memory_space<vmem>>, vector<128x256xbf16>
    %cst_71 = arith.constant dense<0.000000e+00> : vector<256x256xf32>
    %123 = tpu.matmul %121, %122, %cst_71 {dimension_numbers = #tpu.dot_dimension_numbers<[1], [0], [0], [1], [0, 0, 1, 1], [], []>} : vector<256x128xbf16>, vector<128x256xbf16>, vector<256x256xf32> -> vector<256x256xf32>
    %c0_72 = arith.constant 0 : index
    %c0_73 = arith.constant 0 : index
    %124 = vector.load %arg16[%c0_72, %c0_73] : memref<1x256xf32, #tpu.memory_space<vmem>>, vector<1x256xf32>
    %125 = vector.broadcast %124 : vector<1x256xf32> to vector<256x256xf32>
    %126 = arith.addf %123, %125 : vector<256x256xf32>
    %cst_74 = arith.constant 0.000000e+00 : f32
    %127 = vector.broadcast %cst_74 : f32 to vector<256x256xf32>
    %128 = arith.maximumf %126, %127 : vector<256x256xf32>
    %129 = arith.truncf %128 : vector<256x256xf32> to vector<256x256xbf16>
    %c0_75 = arith.constant 0 : index
    %c0_76 = arith.constant 0 : index
    %130 = vector.load %arg17[%c0_75, %c0_76] : memref<256x128xbf16, #tpu.memory_space<vmem>>, vector<256x128xbf16>
    %cst_77 = arith.constant dense<0.000000e+00> : vector<256x128xf32>
    %131 = tpu.matmul %129, %130, %cst_77 {dimension_numbers = #tpu.dot_dimension_numbers<[1], [0], [0], [1], [0, 0, 1, 1], [], []>} : vector<256x256xbf16>, vector<256x128xbf16>, vector<256x128xf32> -> vector<256x128xf32>
    %c0_78 = arith.constant 0 : index
    %c0_79 = arith.constant 0 : index
    %132 = vector.load %arg18[%c0_78, %c0_79] : memref<1x128xf32, #tpu.memory_space<vmem>>, vector<1x128xf32>
    %133 = vector.broadcast %132 : vector<1x128xf32> to vector<256x128xf32>
    %134 = arith.addf %131, %133 : vector<256x128xf32>
    %135 = arith.addf %134, %120 : vector<256x128xf32>
    %c0_80 = arith.constant 0 : index
    %c0_81 = arith.constant 0 : index
    %136 = vector.load %arg19[%c0_80, %c0_81] : memref<1x128xf32, #tpu.memory_space<vmem>>, vector<1x128xf32>
    %c0_82 = arith.constant 0 : index
    %c0_83 = arith.constant 0 : index
    %137 = vector.load %arg20[%c0_82, %c0_83] : memref<1x128xf32, #tpu.memory_space<vmem>>, vector<1x128xf32>
    %cst_84 = arith.constant dense<0.000000e+00> : vector<256xf32>
    %138 = vector.multi_reduction <add>, %135, %cst_84 [1] : vector<256x128xf32> to vector<256xf32>
    %139 = vector.shape_cast %138 : vector<256xf32> to vector<256x1xf32>
    %cst_85 = arith.constant 1.280000e+02 : f32
    %140 = vector.broadcast %cst_85 : f32 to vector<256x1xf32>
    %141 = arith.divf %139, %140 : vector<256x1xf32>
    %142 = vector.broadcast %141 : vector<256x1xf32> to vector<256x128xf32>
    %143 = arith.subf %135, %142 : vector<256x128xf32>
    %144 = arith.mulf %143, %143 : vector<256x128xf32>
    %cst_86 = arith.constant dense<0.000000e+00> : vector<256xf32>
    %145 = vector.multi_reduction <add>, %144, %cst_86 [1] : vector<256x128xf32> to vector<256xf32>
    %146 = vector.shape_cast %145 : vector<256xf32> to vector<256x1xf32>
    %cst_87 = arith.constant 1.280000e+02 : f32
    %147 = vector.broadcast %cst_87 : f32 to vector<256x1xf32>
    %148 = arith.divf %146, %147 : vector<256x1xf32>
    %149 = vector.broadcast %141 : vector<256x1xf32> to vector<256x128xf32>
    %150 = arith.subf %135, %149 : vector<256x128xf32>
    %cst_88 = arith.constant 9.99999997E-7 : f32
    %151 = vector.broadcast %cst_88 : f32 to vector<256x1xf32>
    %152 = arith.addf %148, %151 : vector<256x1xf32>
    %153 = math.rsqrt %152 : vector<256x1xf32>
    %154 = vector.broadcast %153 : vector<256x1xf32> to vector<256x128xf32>
    %155 = arith.mulf %150, %154 : vector<256x128xf32>
    %156 = vector.broadcast %136 : vector<1x128xf32> to vector<256x128xf32>
    %157 = arith.mulf %155, %156 : vector<256x128xf32>
    %158 = vector.broadcast %137 : vector<1x128xf32> to vector<256x128xf32>
    %159 = arith.addf %157, %158 : vector<256x128xf32>
    %c0_89 = arith.constant 0 : index
    %c0_90 = arith.constant 0 : index
    %c0_91 = arith.constant 0 : index
    %160 = vector.load %arg21[%c0_89, %c0_90, %c0_91] : memref<1x256x128xf32, #tpu.memory_space<vmem>>, vector<1x256x128xf32>
    %161 = vector.shape_cast %160 : vector<1x256x128xf32> to vector<256x128xf32>
    %162 = vector.shape_cast %159 : vector<256x128xf32> to vector<1x256x128xf32>
    tpu.vector_store %arg21[%c0_89, %c0_90, %c0_91], %162 {strides = array<i32>} : memref<1x256x128xf32, #tpu.memory_space<vmem>>, vector<1x256x128xf32>,
    return
  }
  func.func @transform_0(%arg0: i32, %arg1: i32) -> (i32, i32, i32) {
    %c0_i32 = arith.constant 0 : i32
    %c0_i32_0 = arith.constant 0 : i32
    return %arg0, %arg1, %c0_i32 : i32, i32, i32
  }
  func.func @transform_1(%arg0: i32, %arg1: i32) -> (i32, i32, i32) {
    %c0_i32 = arith.constant 0 : i32
    %c0_i32_0 = arith.constant 0 : i32
    return %arg0, %arg1, %c0_i32 : i32, i32, i32
  }
  func.func @transform_2(%arg0: i32, %arg1: i32) -> (i32, i32, i32) {
    %c0_i32 = arith.constant 0 : i32
    %c0_i32_0 = arith.constant 0 : i32
    %c0_i32_1 = arith.constant 0 : i32
    return %arg0, %c0_i32, %c0_i32_0 : i32, i32, i32
  }
  func.func @transform_3(%arg0: i32, %arg1: i32) -> (i32, i32, i32) {
    %c0_i32 = arith.constant 0 : i32
    %c0_i32_0 = arith.constant 0 : i32
    %c0_i32_1 = arith.constant 0 : i32
    return %arg0, %c0_i32, %c0_i32_0 : i32, i32, i32
  }
  func.func @transform_4(%arg0: i32, %arg1: i32) -> (i32, i32, i32) {
    %c0_i32 = arith.constant 0 : i32
    %c0_i32_0 = arith.constant 0 : i32
    %c0_i32_1 = arith.constant 0 : i32
    return %arg0, %c0_i32, %c0_i32_0 : i32, i32, i32
  }
  func.func @transform_5(%arg0: i32, %arg1: i32) -> (i32, i32, i32) {
    %c0_i32 = arith.constant 0 : i32
    %c0_i32_0 = arith.constant 0 : i32
    %c0_i32_1 = arith.constant 0 : i32
    return %arg0, %c0_i32, %c0_i32_0 : i32, i32, i32
  }
  func.func @transform_6(%arg0: i32, %arg1: i32) -> (i32, i32, i32) {
    %c0_i32 = arith.constant 0 : i32
    %c0_i32_0 = arith.constant 0 : i32
    return %arg0, %arg1, %c0_i32 : i32, i32, i32
  }
  func.func @transform_7(%arg0: i32, %arg1: i32) -> (i32, i32, i32) {
    %c0_i32 = arith.constant 0 : i32
    %c0_i32_0 = arith.constant 0 : i32
    return %arg0, %arg1, %c0_i32 : i32, i32, i32
  }
  func.func @transform_8(%arg0: i32, %arg1: i32) -> (i32, i32) {
    %c0_i32 = arith.constant 0 : i32
    %c0_i32_0 = arith.constant 0 : i32
    %c0_i32_1 = arith.constant 0 : i32
    return %c0_i32, %c0_i32_0 : i32, i32
  }
  func.func @transform_9(%arg0: i32, %arg1: i32) -> (i32, i32) {
    %c0_i32 = arith.constant 0 : i32
    %c0_i32_0 = arith.constant 0 : i32
    %c0_i32_1 = arith.constant 0 : i32
    return %c0_i32, %c0_i32_0 : i32, i32
  }
  func.func @transform_10(%arg0: i32, %arg1: i32) -> (i32, i32) {
    %c0_i32 = arith.constant 0 : i32
    %c0_i32_0 = arith.constant 0 : i32
    %c0_i32_1 = arith.constant 0 : i32
    return %c0_i32, %c0_i32_0 : i32, i32
  }
  func.func @transform_11(%arg0: i32, %arg1: i32) -> (i32, i32) {
    %c0_i32 = arith.constant 0 : i32
    %c0_i32_0 = arith.constant 0 : i32
    %c0_i32_1 = arith.constant 0 : i32
    return %c0_i32, %c0_i32_0 : i32, i32
  }
  func.func @transform_12(%arg0: i32, %arg1: i32) -> (i32, i32) {
    %c0_i32 = arith.constant 0 : i32
    %c0_i32_0 = arith.constant 0 : i32
    %c0_i32_1 = arith.constant 0 : i32
    return %c0_i32, %c0_i32_0 : i32, i32
  }
  func.func @transform_13(%arg0: i32, %arg1: i32) -> (i32, i32) {
    %c0_i32 = arith.constant 0 : i32
    %c0_i32_0 = arith.constant 0 : i32
    %c0_i32_1 = arith.constant 0 : i32
    return %c0_i32, %c0_i32_0 : i32, i32
  }
  func.func @transform_14(%arg0: i32, %arg1: i32) -> (i32, i32) {
    %c0_i32 = arith.constant 0 : i32
    %c0_i32_0 = arith.constant 0 : i32
    %c0_i32_1 = arith.constant 0 : i32
    return %c0_i32, %c0_i32_0 : i32, i32
  }
  func.func @transform_15(%arg0: i32, %arg1: i32) -> (i32, i32) {
    %c0_i32 = arith.constant 0 : i32
    %c0_i32_0 = arith.constant 0 : i32
    %c0_i32_1 = arith.constant 0 : i32
    return %c0_i32, %c0_i32_0 : i32, i32
  }
  func.func @transform_16(%arg0: i32, %arg1: i32) -> (i32, i32) {
    %c0_i32 = arith.constant 0 : i32
    %c0_i32_0 = arith.constant 0 : i32
    %c0_i32_1 = arith.constant 0 : i32
    return %c0_i32, %c0_i32_0 : i32, i32
  }
  func.func @transform_17(%arg0: i32, %arg1: i32) -> (i32, i32) {
    %c0_i32 = arith.constant 0 : i32
    %c0_i32_0 = arith.constant 0 : i32
    %c0_i32_1 = arith.constant 0 : i32
    return %c0_i32, %c0_i32_0 : i32, i32
  }
  func.func @transform_18(%arg0: i32, %arg1: i32) -> (i32, i32) {
    %c0_i32 = arith.constant 0 : i32
    %c0_i32_0 = arith.constant 0 : i32
    %c0_i32_1 = arith.constant 0 : i32
    return %c0_i32, %c0_i32_0 : i32, i32
  }
  func.func @transform_19(%arg0: i32, %arg1: i32) -> (i32, i32, i32) {
    %c0_i32 = arith.constant 0 : i32
    %c0_i32_0 = arith.constant 0 : i32
    return %arg0, %arg1, %c0_i32 : i32, i32, i32
  }
  func.func @transform_20(%arg0: i32, %arg1: i32) -> (i32, i32, i32) {
    %c0_i32 = arith.constant 0 : i32
    %c0_i32_0 = arith.constant 0 : i32
    return %arg0, %arg1, %c0_i32 : i32, i32, i32
  }
  func.func @transform_21(%arg0: i32, %arg1: i32) -> (i32, i32, i32) {
    %c0_i32 = arith.constant 0 : i32
    %c0_i32_0 = arith.constant 0 : i32
    return %arg0, %arg1, %c0_i32 : i32, i32, i32
  }
}

</mosaic_0001>

<llo_original>
// kernel: tpu_custom_call.1
$region0: #{tpu_custom_call.1}
  #allocation0 [shape = 'u32[]', space=smem, size = 0x4, offset = 0x4, fixed_abs, tag = 'smem constant byte address 0x4 - core index']
  #allocation1 [shape = 'u32[144,128]{1,0:T(1,128)}', space=vmem, size = 0x12000, scoped, tag = 'internal scratch']
  %s0 = inlined_call_operand.hbm [shape: f32[2,512,128], index: 0, kind: input, shape index: {}]
  %s1 = inlined_call_operand.hbm [shape: bf16[2,512,128], index: 1, kind: input, shape index: {}]
  %s2 = inlined_call_operand.hbm [shape: bf16[2,128,512], index: 2, kind: input, shape index: {}]
  %s3 = inlined_call_operand.hbm [shape: bf16[2,512,128], index: 3, kind: input, shape index: {}]
  %s4 = inlined_call_operand.hbm [shape: bf16[2,128,256], index: 4, kind: input, shape index: {}]
  %s5 = inlined_call_operand.hbm [shape: bf16[2,256,128], index: 5, kind: input, shape index: {}]
  %s6 = inlined_call_operand.hbm [shape: s8[2,512,512], index: 6, kind: input, shape index: {}]
  %s7 = inlined_call_operand.hbm [shape: s8[2,512,256], index: 7, kind: input, shape index: {}]
  %s8 = inlined_call_operand.hbm [shape: bf16[128,128], index: 8, kind: input, shape index: {}]
  %s9 = inlined_call_operand.hbm [shape: f32[1,128], index: 9, kind: input, shape index: {}]
  %s10 = inlined_call_operand.hbm [shape: bf16[128,128], index: 10, kind: input, shape index: {}]
  %s11 = inlined_call_operand.hbm [shape: f32[1,128], index: 11, kind: input, shape index: {}]
  %s12 = inlined_call_operand.hbm [shape: f32[1,128], index: 12, kind: input, shape index: {}]
  %s13 = inlined_call_operand.hbm [shape: bf16[128,256], index: 13, kind: input, shape index: {}]
  %s14 = inlined_call_operand.hbm [shape: f32[1,256], index: 14, kind: input, shape index: {}]
  %s15 = inlined_call_operand.hbm [shape: bf16[256,128], index: 15, kind: input, shape index: {}]
  %s16 = inlined_call_operand.hbm [shape: f32[1,128], index: 16, kind: input, shape index: {}]
  %s17 = inlined_call_operand.hbm [shape: f32[1,128], index: 17, kind: input, shape index: {}]
  %s18 = inlined_call_operand.hbm [shape: f32[1,128], index: 18, kind: input, shape index: {}]
  %s19 = inlined_call_operand.hbm [shape: f32[2,512,128], index: 19, kind: output, shape index: {0}]
  %s20 = inlined_call_operand.hbm [shape: f32[2,512,512], index: 20, kind: output, shape index: {1}]
  %s21 = inlined_call_operand.hbm [shape: f32[2,512,256], index: 21, kind: output, shape index: {2}]
  %22 = xla_tuple %s19, %s20, %s21
  %s23 = sld [smem:[#allocation0]]
  $region201: #{tpu_custom_call.1} parent=0
    _
  %s25 = ssub.s32 1, %s23
  %s26 = scalar_select 0, %s25, %s23
  $region1: #{tpu_custom_call.1} parent=0
    #allocation2 [shape = 'u8[262144]{0}', space=vmem, size = 0x40000, scoped, tag = 'input window, operand 0']
    #allocation3 [shape = 's32[2]{0}', space=sflag, size = 0x8, scoped, tag = 'scoped memory for tpu_custom_call.1']
    #allocation4 [shape = 's32[2]{0}', space=sflag, size = 0x8, scoped, tag = 'scoped memory for tpu_custom_call.1']
    #allocation5 [shape = 'u8[131072]{0}', space=vmem, size = 0x20000, scoped, tag = 'input window, operand 1']
    #allocation6 [shape = 's32[2]{0}', space=sflag, size = 0x8, scoped, tag = 'scoped memory for tpu_custom_call.1']
    #allocation7 [shape = 'u8[262144]{0}', space=vmem, size = 0x40000, scoped, tag = 'input window, operand 2']
    #allocation8 [shape = 'u8[262144]{0}', space=vmem, size = 0x40000, scoped, tag = 'input window, operand 3']
    #allocation9 [shape = 's32[2]{0}', space=sflag, size = 0x8, scoped, tag = 'scoped memory for tpu_custom_call.1']
    #allocation10 [shape = 'u8[131072]{0}', space=vmem, size = 0x20000, scoped, tag = 'input window, operand 4']
    #allocation11 [shape = 'u8[131072]{0}', space=vmem, size = 0x20000, scoped, tag = 'input window, operand 5']
    #allocation12 [shape = 's32[2]{0}', space=sflag, size = 0x8, scoped, tag = 'scoped memory for tpu_custom_call.1']
    #allocation13 [shape = 'u8[262144]{0}', space=vmem, size = 0x40000, scoped, tag = 'input window, operand 6']
    #allocation14 [shape = 'u8[131072]{0}', space=vmem, size = 0x20000, scoped, tag = 'input window, operand 7']
    #allocation15 [shape = 's32[2]{0}', space=sflag, size = 0x8, scoped, tag = 'scoped memory for tpu_custom_call.1']
    #allocation16 [shape = 'u8[32768]{0}', space=vmem, size = 0x8000, scoped, tag = 'input window, operand 8, single buffered']
    #allocation17 [shape = 'u8[512]{0}', space=vmem, size = 0x400, scoped, tag = 'input window, operand 9, single buffered']
    #allocation18 [shape = 's32[1]{0}', space=sflag, size = 0x4, scoped, tag = 'scoped memory for tpu_custom_call.1']
    #allocation19 [shape = 'u8[32768]{0}', space=vmem, size = 0x8000, scoped, tag = 'input window, operand 10, single buffered']
    #allocation20 [shape = 'u8[512]{0}', space=vmem, size = 0x400, scoped, tag = 'input window, operand 11, single buffered']
    #allocation21 [shape = 's32[1]{0}', space=sflag, size = 0x4, scoped, tag = 'scoped memory for tpu_custom_call.1']
    #allocation22 [shape = 'u8[512]{0}', space=vmem, size = 0x400, scoped, tag = 'input window, operand 12, single buffered']
    #allocation23 [shape = 'u8[65536]{0}', space=vmem, size = 0x10000, scoped, tag = 'input window, operand 13, single buffered']
    #allocation24 [shape = 's32[1]{0}', space=sflag, size = 0x4, scoped, tag = 'scoped memory for tpu_custom_call.1']
    #allocation25 [shape = 'u8[1024]{0}', space=vmem, size = 0x400, scoped, tag = 'input window, operand 14, single buffered']
    #allocation26 [shape = 'u8[65536]{0}', space=vmem, size = 0x10000, scoped, tag = 'input window, operand 15, single buffered']
    #allocation27 [shape = 's32[1]{0}', space=sflag, size = 0x4, scoped, tag = 'scoped memory for tpu_custom_call.1']
    #allocation28 [shape = 'u8[512]{0}', space=vmem, size = 0x400, scoped, tag = 'input window, operand 16, single buffered']
    #allocation29 [shape = 'u8[512]{0}', space=vmem, size = 0x400, scoped, tag = 'input window, operand 17, single buffered']
    #allocation30 [shape = 's32[1]{0}', space=sflag, size = 0x4, scoped, tag = 'scoped memory for tpu_custom_call.1']
    #allocation31 [shape = 'u8[512]{0}', space=vmem, size = 0x400, scoped, tag = 'input window, operand 18, single buffered']
    #allocation32 [shape = 'u8[262144]{0}', space=vmem, size = 0x40000, scoped, tag = 'output window, operand 0']
    #allocation33 [shape = 'u8[1048576]{0}', space=vmem, size = 0x100000, scoped, tag = 'output window, operand 1']
    #allocation34 [shape = 's32[2]{0}', space=sflag, size = 0x8, scoped, tag = 'scoped memory for tpu_custom_call.1']
    #allocation35 [shape = 'u8[524288]{0}', space=vmem, size = 0x80000, scoped, tag = 'output window, operand 2']
    %27 = vsyncpa [#allocation3], 0
    %s28 = scalar_lea.sflag [#allocation3], 1
    %29 = vsyncpa %s28, 0
    %30 = vsyncpa [#allocation6], 0
    %s31 = scalar_lea.sflag [#allocation6], 1
    %32 = vsyncpa %s31, 0
    %33 = vsyncpa [#allocation9], 0
    %s34 = scalar_lea.sflag [#allocation9], 1
    %35 = vsyncpa %s34, 0
    %36 = vsyncpa [#allocation12], 0
    %s37 = scalar_lea.sflag [#allocation12], 1
    %38 = vsyncpa %s37, 0
    %39 = vsyncpa [#allocation15], 0
    %s40 = scalar_lea.sflag [#allocation15], 1
    %41 = vsyncpa %s40, 0
    %42 = vsyncpa [#allocation18], 0
    %43 = vsyncpa [#allocation21], 0
    %44 = vsyncpa [#allocation24], 0
    %45 = vsyncpa [#allocation27], 0
    %46 = vsyncpa [#allocation30], 0
    %47 = vsyncpa [#allocation4], 0
    %s48 = scalar_lea.sflag [#allocation4], 1
    %49 = vsyncpa %s48, 0
    %50 = vsyncpa [#allocation34], 0
    %s51 = scalar_lea.sflag [#allocation34], 1
    %52 = vsyncpa %s51, 0
    loop: start=0, step=1, limit=6
    $region2: #{tpu_custom_call.1} parent=1 // loop_pre_header
      _
    $region3: #{tpu_custom_call.1} parent=1 // loop_header
      %s54 = sphi 0, %s58
      %p55 = scmp.ge.s32.totalorder %s54, 6
      %s61 = sphi 0, %s73
      %s62 = sphi 0, %s69
      %s63 = sphi 0, %s61
      %s64 = sphi 0, %s62
      %s65 = sphi 0, %s63
      %s66 = sphi 0, %s64
      %s78 = sphi 0, %s80
      %s81 = sphi 0, %s78
      %s82 = sphi 0, %s81
      %s98 = sphi 0, %s82
      %s106 = sphi 0, %s108
      %s109 = sphi 0, %s106
      %s110 = sphi 0, %s109
      %s126 = sphi 0, %s110
      %s132 = sphi 0, %s134
      %s135 = sphi 0, %s132
      %s136 = sphi 0, %s135
      %s152 = sphi 0, %s136
      %s158 = sphi 0, %s160
      %s161 = sphi 0, %s158
      %s162 = sphi 0, %s161
      %s178 = sphi 0, %s162
      %s184 = sphi 0, %s186
      %s187 = sphi 0, %s184
      %s188 = sphi 0, %s187
      %s204 = sphi 0, %s188
      %s210 = sphi 0, %s212
      %s213 = sphi 0, %s210
      %s214 = sphi 0, %s213
      %s230 = sphi 0, %s214
      %s238 = sphi 0, %s240
      %s241 = sphi 0, %s238
      %s242 = sphi 0, %s241
      %s258 = sphi 0, %s242
      %s266 = sphi 0, %s268
      %s269 = sphi 0, %s266
      %s270 = sphi 0, %s269
      %s286 = sphi 0, %s270
      %s290 = sphi 0, %s290
      %s292 = sphi 0, %s290
      %s293 = sphi 0, %s292
      %s307 = sphi 0, %s293
      %s311 = sphi 0, %s311
      %s313 = sphi 0, %s311
      %s314 = sphi 0, %s313
      %s328 = sphi 0, %s314
      %s332 = sphi 0, %s332
      %s334 = sphi 0, %s332
      %s335 = sphi 0, %s334
      %s349 = sphi 0, %s335
      %s353 = sphi 0, %s353
      %s355 = sphi 0, %s353
      %s356 = sphi 0, %s355
      %s370 = sphi 0, %s356
      %s374 = sphi 0, %s374
      %s376 = sphi 0, %s374
      %s377 = sphi 0, %s376
      %s391 = sphi 0, %s377
      %s395 = sphi 0, %s395
      %s397 = sphi 0, %s395
      %s398 = sphi 0, %s397
      %s412 = sphi 0, %s398
      %s416 = sphi 0, %s416
      %s418 = sphi 0, %s416
      %s419 = sphi 0, %s418
      %s433 = sphi 0, %s419
      %s437 = sphi 0, %s437
      %s439 = sphi 0, %s437
      %s440 = sphi 0, %s439
      %s454 = sphi 0, %s440
      %s458 = sphi 0, %s458
      %s460 = sphi 0, %s458
      %s461 = sphi 0, %s460
      %s475 = sphi 0, %s461
      %s479 = sphi 0, %s479
      %s481 = sphi 0, %s479
      %s482 = sphi 0, %s481
      %s496 = sphi 0, %s482
      %s500 = sphi 0, %s500
      %s502 = sphi 0, %s500
      %s503 = sphi 0, %s502
      %s517 = sphi 0, %s503
      %s525 = sphi 0, %s527
      %s528 = sphi 0, %s525
      %s529 = sphi 0, %s528
      %s545 = sphi 0, %s529
      %s553 = sphi 0, %s555
      %s556 = sphi 0, %s553
      %s557 = sphi 0, %s556
      %s573 = sphi 0, %s557
      %s581 = sphi 0, %s583
      %s584 = sphi 0, %s581
      %s585 = sphi 0, %s584
      %s601 = sphi 0, %s585
    $region4: #{tpu_custom_call.1} parent=1 // loop_header_branch
      %57 = sbr.rel (%p55) target = $region8
    $region5: #{tpu_custom_call.1} parent=1 // loop_body
      %s59 = ssub.s32 %s54, 1
      %s60 = ssub.s32 %s54, 2
      %s67 = sadd.s32 1, %s62
      %p68 = scmp.ge.s32.totalorder %s67, 2
      %s69 = scalar_select %p68, 0, %s67
      %s70 = sadd.s32 1, %s61
      %s71 = scalar_select %p68, %s70, %s61
      %p72 = scmp.ge.s32.totalorder %s71, 2
      %s73 = scalar_select %p72, 0, %s71
      %s74 = ssub.s32 %s61, %s73
      %s75 = ssub.s32 %s62, %s69
      %s76 = sor.u32 %s74, %s75
      %p77 = scmp.eq.s32.totalorder %s76, 0
      %s79 = sadd.s32 %s78, 1
      %s80 = scalar_select %p77, %s78, %s79
      %p83 = pneg %p77
      %p84 = scmp.eq.s32.totalorder %s54, 3
      %p85 = por %p83, %p84
      %p86 = scmp.ne.s32.totalorder %s78, %s81
      %p87 = scmp.eq.s32.totalorder %s54, 0
      %p88 = por %p86, %p87
      %p89 = scmp.ne.s32.totalorder %s78, %s81
      %p90 = scmp.eq.s32.totalorder %s59, 3
      %p91 = por %p89, %p90
      %p92 = scmp.ne.s32.totalorder %s81, %s82
      %p93 = scmp.eq.s32.totalorder %s59, 0
      %p94 = por %p92, %p93
      %p95 = scmp.ne.s32.totalorder %s81, %s82
      %p96 = scmp.eq.s32.totalorder %s60, 3
      %p97 = por %p95, %p96
      %p99 = scmp.ne.s32.totalorder %s82, %s98
      %p100 = scmp.eq.s32.totalorder %s60, 0
      %p101 = por %p99, %p100
      %s102 = ssub.s32 %s61, %s73
      %s103 = ssub.s32 %s62, %s69
      %s104 = sor.u32 %s102, %s103
      %p105 = scmp.eq.s32.totalorder %s104, 0
      %s107 = sadd.s32 %s106, 1
      %s108 = scalar_select %p105, %s106, %s107
      %p111 = pneg %p105
      %p112 = scmp.eq.s32.totalorder %s54, 3
      %p113 = por %p111, %p112
      %p114 = scmp.ne.s32.totalorder %s106, %s109
      %p115 = scmp.eq.s32.totalorder %s54, 0
      %p116 = por %p114, %p115
      %p117 = scmp.ne.s32.totalorder %s106, %s109
      %p118 = scmp.eq.s32.totalorder %s59, 3
      %p119 = por %p117, %p118
      %p120 = scmp.ne.s32.totalorder %s109, %s110
      %p121 = scmp.eq.s32.totalorder %s59, 0
      %p122 = por %p120, %p121
      %p123 = scmp.ne.s32.totalorder %s109, %s110
      %p124 = scmp.eq.s32.totalorder %s60, 3
      %p125 = por %p123, %p124
      %p127 = scmp.ne.s32.totalorder %s110, %s126
      %p128 = scmp.eq.s32.totalorder %s60, 0
      %p129 = por %p127, %p128
      %s130 = ssub.s32 %s61, %s73
      %p131 = scmp.eq.s32.totalorder %s130, 0
      %s133 = sadd.s32 %s132, 1
      %s134 = scalar_select %p131, %s132, %s133
      %p137 = pneg %p131
      %p138 = scmp.eq.s32.totalorder %s54, 3
      %p139 = por %p137, %p138
      %p140 = scmp.ne.s32.totalorder %s132, %s135
      %p141 = scmp.eq.s32.totalorder %s54, 0
      %p142 = por %p140, %p141
      %p143 = scmp.ne.s32.totalorder %s132, %s135
      %p144 = scmp.eq.s32.totalorder %s59, 3
      %p145 = por %p143, %p144
      %p146 = scmp.ne.s32.totalorder %s135, %s136
      %p147 = scmp.eq.s32.totalorder %s59, 0
      %p148 = por %p146, %p147
      %p149 = scmp.ne.s32.totalorder %s135, %s136
      %p150 = scmp.eq.s32.totalorder %s60, 3
      %p151 = por %p149, %p150
      %p153 = scmp.ne.s32.totalorder %s136, %s152
      %p154 = scmp.eq.s32.totalorder %s60, 0
      %p155 = por %p153, %p154
      %s156 = ssub.s32 %s61, %s73
      %p157 = scmp.eq.s32.totalorder %s156, 0
      %s159 = sadd.s32 %s158, 1
      %s160 = scalar_select %p157, %s158, %s159
      %p163 = pneg %p157
      %p164 = scmp.eq.s32.totalorder %s54, 3
      %p165 = por %p163, %p164
      %p166 = scmp.ne.s32.totalorder %s158, %s161
      %p167 = scmp.eq.s32.totalorder %s54, 0
      %p168 = por %p166, %p167
      %p169 = scmp.ne.s32.totalorder %s158, %s161
      %p170 = scmp.eq.s32.totalorder %s59, 3
      %p171 = por %p169, %p170
      %p172 = scmp.ne.s32.totalorder %s161, %s162
      %p173 = scmp.eq.s32.totalorder %s59, 0
      %p174 = por %p172, %p173
      %p175 = scmp.ne.s32.totalorder %s161, %s162
      %p176 = scmp.eq.s32.totalorder %s60, 3
      %p177 = por %p175, %p176
      %p179 = scmp.ne.s32.totalorder %s162, %s178
      %p180 = scmp.eq.s32.totalorder %s60, 0
      %p181 = por %p179, %p180
      %s182 = ssub.s32 %s61, %s73
      %p183 = scmp.eq.s32.totalorder %s182, 0
      %s185 = sadd.s32 %s184, 1
      %s186 = scalar_select %p183, %s184, %s185
      %p189 = pneg %p183
      %p190 = scmp.eq.s32.totalorder %s54, 3
      %p191 = por %p189, %p190
      %p192 = scmp.ne.s32.totalorder %s184, %s187
      %p193 = scmp.eq.s32.totalorder %s54, 0
      %p194 = por %p192, %p193
      %p195 = scmp.ne.s32.totalorder %s184, %s187
      %p196 = scmp.eq.s32.totalorder %s59, 3
      %p197 = por %p195, %p196
      %p198 = scmp.ne.s32.totalorder %s187, %s188
      %p199 = scmp.eq.s32.totalorder %s59, 0
      %p200 = por %p198, %p199
      %p201 = scmp.ne.s32.totalorder %s187, %s188
      %p202 = scmp.eq.s32.totalorder %s60, 3
      %p203 = por %p201, %p202
      %p205 = scmp.ne.s32.totalorder %s188, %s204
      %p206 = scmp.eq.s32.totalorder %s60, 0
      %p207 = por %p205, %p206
      %s208 = ssub.s32 %s61, %s73
      %p209 = scmp.eq.s32.totalorder %s208, 0
      %s211 = sadd.s32 %s210, 1
      %s212 = scalar_select %p209, %s210, %s211
      %p215 = pneg %p209
      %p216 = scmp.eq.s32.totalorder %s54, 3
      %p217 = por %p215, %p216
      %p218 = scmp.ne.s32.totalorder %s210, %s213
      %p219 = scmp.eq.s32.totalorder %s54, 0
      %p220 = por %p218, %p219
      %p221 = scmp.ne.s32.totalorder %s210, %s213
      %p222 = scmp.eq.s32.totalorder %s59, 3
      %p223 = por %p221, %p222
      %p224 = scmp.ne.s32.totalorder %s213, %s214
      %p225 = scmp.eq.s32.totalorder %s59, 0
      %p226 = por %p224, %p225
      %p227 = scmp.ne.s32.totalorder %s213, %s214
      %p228 = scmp.eq.s32.totalorder %s60, 3
      %p229 = por %p227, %p228
      %p231 = scmp.ne.s32.totalorder %s214, %s230
      %p232 = scmp.eq.s32.totalorder %s60, 0
      %p233 = por %p231, %p232
      %s234 = ssub.s32 %s61, %s73
      %s235 = ssub.s32 %s62, %s69
      %s236 = sor.u32 %s234, %s235
      %p237 = scmp.eq.s32.totalorder %s236, 0
      %s239 = sadd.s32 %s238, 1
      %s240 = scalar_select %p237, %s238, %s239
      %p243 = pneg %p237
      %p244 = scmp.eq.s32.totalorder %s54, 3
      %p245 = por %p243, %p244
      %p246 = scmp.ne.s32.totalorder %s238, %s241
      %p247 = scmp.eq.s32.totalorder %s54, 0
      %p248 = por %p246, %p247
      %p249 = scmp.ne.s32.totalorder %s238, %s241
      %p250 = scmp.eq.s32.totalorder %s59, 3
      %p251 = por %p249, %p250
      %p252 = scmp.ne.s32.totalorder %s241, %s242
      %p253 = scmp.eq.s32.totalorder %s59, 0
      %p254 = por %p252, %p253
      %p255 = scmp.ne.s32.totalorder %s241, %s242
      %p256 = scmp.eq.s32.totalorder %s60, 3
      %p257 = por %p255, %p256
      %p259 = scmp.ne.s32.totalorder %s242, %s258
      %p260 = scmp.eq.s32.totalorder %s60, 0
      %p261 = por %p259, %p260
      %s262 = ssub.s32 %s61, %s73
      %s263 = ssub.s32 %s62, %s69
      %s264 = sor.u32 %s262, %s263
      %p265 = scmp.eq.s32.totalorder %s264, 0
      %s267 = sadd.s32 %s266, 1
      %s268 = scalar_select %p265, %s266, %s267
      %p271 = pneg %p265
      %p272 = scmp.eq.s32.totalorder %s54, 3
      %p273 = por %p271, %p272
      %p274 = scmp.ne.s32.totalorder %s266, %s269
      %p275 = scmp.eq.s32.totalorder %s54, 0
      %p276 = por %p274, %p275
      %p277 = scmp.ne.s32.totalorder %s266, %s269
      %p278 = scmp.eq.s32.totalorder %s59, 3
      %p279 = por %p277, %p278
      %p280 = scmp.ne.s32.totalorder %s269, %s270
      %p281 = scmp.eq.s32.totalorder %s59, 0
      %p282 = por %p280, %p281
      %p283 = scmp.ne.s32.totalorder %s269, %s270
      %p284 = scmp.eq.s32.totalorder %s60, 3
      %p285 = por %p283, %p284
      %p287 = scmp.ne.s32.totalorder %s270, %s286
      %p288 = scmp.eq.s32.totalorder %s60, 0
      %p289 = por %p287, %p288
      %s291 = sadd.s32 %s290, 1
      %p294 = scmp.eq.s32.totalorder %s54, 3
      %p295 = scmp.ne.s32.totalorder %s290, %s292
      %p296 = scmp.eq.s32.totalorder %s54, 0
      %p297 = por %p295, %p296
      %p298 = scmp.ne.s32.totalorder %s290, %s292
      %p299 = scmp.eq.s32.totalorder %s59, 3
      %p300 = por %p298, %p299
      %p301 = scmp.ne.s32.totalorder %s292, %s293
      %p302 = scmp.eq.s32.totalorder %s59, 0
      %p303 = por %p301, %p302
      %p304 = scmp.ne.s32.totalorder %s292, %s293
      %p305 = scmp.eq.s32.totalorder %s60, 3
      %p306 = por %p304, %p305
      %p308 = scmp.ne.s32.totalorder %s293, %s307
      %p309 = scmp.eq.s32.totalorder %s60, 0
      %p310 = por %p308, %p309
      %s312 = sadd.s32 %s311, 1
      %p315 = scmp.eq.s32.totalorder %s54, 3
      %p316 = scmp.ne.s32.totalorder %s311, %s313
      %p317 = scmp.eq.s32.totalorder %s54, 0
      %p318 = por %p316, %p317
      %p319 = scmp.ne.s32.totalorder %s311, %s313
      %p320 = scmp.eq.s32.totalorder %s59, 3
      %p321 = por %p319, %p320
      %p322 = scmp.ne.s32.totalorder %s313, %s314
      %p323 = scmp.eq.s32.totalorder %s59, 0
      %p324 = por %p322, %p323
      %p325 = scmp.ne.s32.totalorder %s313, %s314
      %p326 = scmp.eq.s32.totalorder %s60, 3
      %p327 = por %p325, %p326
      %p329 = scmp.ne.s32.totalorder %s314, %s328
      %p330 = scmp.eq.s32.totalorder %s60, 0
      %p331 = por %p329, %p330
      %s333 = sadd.s32 %s332, 1
      %p336 = scmp.eq.s32.totalorder %s54, 3
      %p337 = scmp.ne.s32.totalorder %s332, %s334
      %p338 = scmp.eq.s32.totalorder %s54, 0
      %p339 = por %p337, %p338
      %p340 = scmp.ne.s32.totalorder %s332, %s334
      %p341 = scmp.eq.s32.totalorder %s59, 3
      %p342 = por %p340, %p341
      %p343 = scmp.ne.s32.totalorder %s334, %s335
      %p344 = scmp.eq.s32.totalorder %s59, 0
      %p345 = por %p343, %p344
      %p346 = scmp.ne.s32.totalorder %s334, %s335
      %p347 = scmp.eq.s32.totalorder %s60, 3
      %p348 = por %p346, %p347
      %p350 = scmp.ne.s32.totalorder %s335, %s349
      %p351 = scmp.eq.s32.totalorder %s60, 0
      %p352 = por %p350, %p351
      %s354 = sadd.s32 %s353, 1
      %p357 = scmp.eq.s32.totalorder %s54, 3
      %p358 = scmp.ne.s32.totalorder %s353, %s355
      %p359 = scmp.eq.s32.totalorder %s54, 0
      %p360 = por %p358, %p359
      %p361 = scmp.ne.s32.totalorder %s353, %s355
      %p362 = scmp.eq.s32.totalorder %s59, 3
      %p363 = por %p361, %p362
      %p364 = scmp.ne.s32.totalorder %s355, %s356
      %p365 = scmp.eq.s32.totalorder %s59, 0
      %p366 = por %p364, %p365
      %p367 = scmp.ne.s32.totalorder %s355, %s356
      %p368 = scmp.eq.s32.totalorder %s60, 3
      %p369 = por %p367, %p368
      %p371 = scmp.ne.s32.totalorder %s356, %s370
      %p372 = scmp.eq.s32.totalorder %s60, 0
      %p373 = por %p371, %p372
      %s375 = sadd.s32 %s374, 1
      %p378 = scmp.eq.s32.totalorder %s54, 3
      %p379 = scmp.ne.s32.totalorder %s374, %s376
      %p380 = scmp.eq.s32.totalorder %s54, 0
      %p381 = por %p379, %p380
      %p382 = scmp.ne.s32.totalorder %s374, %s376
      %p383 = scmp.eq.s32.totalorder %s59, 3
      %p384 = por %p382, %p383
      %p385 = scmp.ne.s32.totalorder %s376, %s377
      %p386 = scmp.eq.s32.totalorder %s59, 0
      %p387 = por %p385, %p386
      %p388 = scmp.ne.s32.totalorder %s376, %s377
      %p389 = scmp.eq.s32.totalorder %s60, 3
      %p390 = por %p388, %p389
      %p392 = scmp.ne.s32.totalorder %s377, %s391
      %p393 = scmp.eq.s32.totalorder %s60, 0
      %p394 = por %p392, %p393
      %s396 = sadd.s32 %s395, 1
      %p399 = scmp.eq.s32.totalorder %s54, 3
      %p400 = scmp.ne.s32.totalorder %s395, %s397
      %p401 = scmp.eq.s32.totalorder %s54, 0
      %p402 = por %p400, %p401
      %p403 = scmp.ne.s32.totalorder %s395, %s397
      %p404 = scmp.eq.s32.totalorder %s59, 3
      %p405 = por %p403, %p404
      %p406 = scmp.ne.s32.totalorder %s397, %s398
      %p407 = scmp.eq.s32.totalorder %s59, 0
      %p408 = por %p406, %p407
      %p409 = scmp.ne.s32.totalorder %s397, %s398
      %p410 = scmp.eq.s32.totalorder %s60, 3
      %p411 = por %p409, %p410
      %p413 = scmp.ne.s32.totalorder %s398, %s412
      %p414 = scmp.eq.s32.totalorder %s60, 0
      %p415 = por %p413, %p414
      %s417 = sadd.s32 %s416, 1
      %p420 = scmp.eq.s32.totalorder %s54, 3
      %p421 = scmp.ne.s32.totalorder %s416, %s418
      %p422 = scmp.eq.s32.totalorder %s54, 0
      %p423 = por %p421, %p422
      %p424 = scmp.ne.s32.totalorder %s416, %s418
      %p425 = scmp.eq.s32.totalorder %s59, 3
      %p426 = por %p424, %p425
      %p427 = scmp.ne.s32.totalorder %s418, %s419
      %p428 = scmp.eq.s32.totalorder %s59, 0
      %p429 = por %p427, %p428
      %p430 = scmp.ne.s32.totalorder %s418, %s419
      %p431 = scmp.eq.s32.totalorder %s60, 3
      %p432 = por %p430, %p431
      %p434 = scmp.ne.s32.totalorder %s419, %s433
      %p435 = scmp.eq.s32.totalorder %s60, 0
      %p436 = por %p434, %p435
      %s438 = sadd.s32 %s437, 1
      %p441 = scmp.eq.s32.totalorder %s54, 3
      %p442 = scmp.ne.s32.totalorder %s437, %s439
      %p443 = scmp.eq.s32.totalorder %s54, 0
      %p444 = por %p442, %p443
      %p445 = scmp.ne.s32.totalorder %s437, %s439
      %p446 = scmp.eq.s32.totalorder %s59, 3
      %p447 = por %p445, %p446
      %p448 = scmp.ne.s32.totalorder %s439, %s440
      %p449 = scmp.eq.s32.totalorder %s59, 0
      %p450 = por %p448, %p449
      %p451 = scmp.ne.s32.totalorder %s439, %s440
      %p452 = scmp.eq.s32.totalorder %s60, 3
      %p453 = por %p451, %p452
      %p455 = scmp.ne.s32.totalorder %s440, %s454
      %p456 = scmp.eq.s32.totalorder %s60, 0
      %p457 = por %p455, %p456
      %s459 = sadd.s32 %s458, 1
      %p462 = scmp.eq.s32.totalorder %s54, 3
      %p463 = scmp.ne.s32.totalorder %s458, %s460
      %p464 = scmp.eq.s32.totalorder %s54, 0
      %p465 = por %p463, %p464
      %p466 = scmp.ne.s32.totalorder %s458, %s460
      %p467 = scmp.eq.s32.totalorder %s59, 3
      %p468 = por %p466, %p467
      %p469 = scmp.ne.s32.totalorder %s460, %s461
      %p470 = scmp.eq.s32.totalorder %s59, 0
      %p471 = por %p469, %p470
      %p472 = scmp.ne.s32.totalorder %s460, %s461
      %p473 = scmp.eq.s32.totalorder %s60, 3
      %p474 = por %p472, %p473
      %p476 = scmp.ne.s32.totalorder %s461, %s475
      %p477 = scmp.eq.s32.totalorder %s60, 0
      %p478 = por %p476, %p477
      %s480 = sadd.s32 %s479, 1
      %p483 = scmp.eq.s32.totalorder %s54, 3
      %p484 = scmp.ne.s32.totalorder %s479, %s481
      %p485 = scmp.eq.s32.totalorder %s54, 0
      %p486 = por %p484, %p485
      %p487 = scmp.ne.s32.totalorder %s479, %s481
      %p488 = scmp.eq.s32.totalorder %s59, 3
      %p489 = por %p487, %p488
      %p490 = scmp.ne.s32.totalorder %s481, %s482
      %p491 = scmp.eq.s32.totalorder %s59, 0
      %p492 = por %p490, %p491
      %p493 = scmp.ne.s32.totalorder %s481, %s482
      %p494 = scmp.eq.s32.totalorder %s60, 3
      %p495 = por %p493, %p494
      %p497 = scmp.ne.s32.totalorder %s482, %s496
      %p498 = scmp.eq.s32.totalorder %s60, 0
      %p499 = por %p497, %p498
      %s501 = sadd.s32 %s500, 1
      %p504 = scmp.eq.s32.totalorder %s54, 3
      %p505 = scmp.ne.s32.totalorder %s500, %s502
      %p506 = scmp.eq.s32.totalorder %s54, 0
      %p507 = por %p505, %p506
      %p508 = scmp.ne.s32.totalorder %s500, %s502
      %p509 = scmp.eq.s32.totalorder %s59, 3
      %p510 = por %p508, %p509
      %p511 = scmp.ne.s32.totalorder %s502, %s503
      %p512 = scmp.eq.s32.totalorder %s59, 0
      %p513 = por %p511, %p512
      %p514 = scmp.ne.s32.totalorder %s502, %s503
      %p515 = scmp.eq.s32.totalorder %s60, 3
      %p516 = por %p514, %p515
      %p518 = scmp.ne.s32.totalorder %s503, %s517
      %p519 = scmp.eq.s32.totalorder %s60, 0
      %p520 = por %p518, %p519
      %s521 = ssub.s32 %s61, %s73
      %s522 = ssub.s32 %s62, %s69
      %s523 = sor.u32 %s521, %s522
      %p524 = scmp.eq.s32.totalorder %s523, 0
      %s526 = sadd.s32 %s525, 1
      %s527 = scalar_select %p524, %s525, %s526
      %p530 = pneg %p524
      %p531 = scmp.eq.s32.totalorder %s54, 3
      %p532 = por %p530, %p531
      %p533 = scmp.ne.s32.totalorder %s525, %s528
      %p534 = scmp.eq.s32.totalorder %s54, 0
      %p535 = por %p533, %p534
      %p536 = scmp.ne.s32.totalorder %s525, %s528
      %p537 = scmp.eq.s32.totalorder %s59, 3
      %p538 = por %p536, %p537
      %p539 = scmp.ne.s32.totalorder %s528, %s529
      %p540 = scmp.eq.s32.totalorder %s59, 0
      %p541 = por %p539, %p540
      %p542 = scmp.ne.s32.totalorder %s528, %s529
      %p543 = scmp.eq.s32.totalorder %s60, 3
      %p544 = por %p542, %p543
      %p546 = scmp.ne.s32.totalorder %s529, %s545
      %p547 = scmp.eq.s32.totalorder %s60, 0
      %p548 = por %p546, %p547
      %s549 = ssub.s32 %s61, %s73
      %s550 = ssub.s32 %s62, %s69
      %s551 = sor.u32 %s549, %s550
      %p552 = scmp.eq.s32.totalorder %s551, 0
      %s554 = sadd.s32 %s553, 1
      %s555 = scalar_select %p552, %s553, %s554
      %p558 = pneg %p552
      %p559 = scmp.eq.s32.totalorder %s54, 3
      %p560 = por %p558, %p559
      %p561 = scmp.ne.s32.totalorder %s553, %s556
      %p562 = scmp.eq.s32.totalorder %s54, 0
      %p563 = por %p561, %p562
      %p564 = scmp.ne.s32.totalorder %s553, %s556
      %p565 = scmp.eq.s32.totalorder %s59, 3
      %p566 = por %p564, %p565
      %p567 = scmp.ne.s32.totalorder %s556, %s557
      %p568 = scmp.eq.s32.totalorder %s59, 0
      %p569 = por %p567, %p568
      %p570 = scmp.ne.s32.totalorder %s556, %s557
      %p571 = scmp.eq.s32.totalorder %s60, 3
      %p572 = por %p570, %p571
      %p574 = scmp.ne.s32.totalorder %s557, %s573
      %p575 = scmp.eq.s32.totalorder %s60, 0
      %p576 = por %p574, %p575
      %s577 = ssub.s32 %s61, %s73
      %s578 = ssub.s32 %s62, %s69
      %s579 = sor.u32 %s577, %s578
      %p580 = scmp.eq.s32.totalorder %s579, 0
      %s582 = sadd.s32 %s581, 1
      %s583 = scalar_select %p580, %s581, %s582
      %p586 = pneg %p580
      %p587 = scmp.eq.s32.totalorder %s54, 3
      %p588 = por %p586, %p587
      %p589 = scmp.ne.s32.totalorder %s581, %s584
      %p590 = scmp.eq.s32.totalorder %s54, 0
      %p591 = por %p589, %p590
      %p592 = scmp.ne.s32.totalorder %s581, %s584
      %p593 = scmp.eq.s32.totalorder %s59, 3
      %p594 = por %p592, %p593
      %p595 = scmp.ne.s32.totalorder %s584, %s585
      %p596 = scmp.eq.s32.totalorder %s59, 0
      %p597 = por %p595, %p596
      %p598 = scmp.ne.s32.totalorder %s584, %s585
      %p599 = scmp.eq.s32.totalorder %s60, 3
      %p600 = por %p598, %p599
      %p602 = scmp.ne.s32.totalorder %s585, %s601
      %p603 = scmp.eq.s32.totalorder %s60, 0
      %p604 = por %p602, %p603
      %p605 = scmp.le.s32.totalorder 1, %s54
      %p606 = scmp.lt.s32.totalorder %s54, 5
      %p607 = pnand %p605, %p606
      %p608 = pneg %p607
      // Predicated region
      $region9: #{tpu_custom_call.1} parent=5 // pred_check
        _
      $region10: #{tpu_custom_call.1} parent=5 // pred_check_branch
        %610 = sbr.rel (%p607) target = $region12
      $region11: #{tpu_custom_call.1} parent=5 // pred_region
        %s611 = ssub.s32 %s54, 1
        // Predicated region
        $region13: #{tpu_custom_call.1} parent=11 // pred_check
          %p612 = pneg %p303
        $region14: #{tpu_custom_call.1} parent=11 // pred_check_branch
          %614 = sbr.rel (%p612) target = $region16
        $region15: #{tpu_custom_call.1} parent=11 // pred_region
          %s616 = ssub.s32 1024, 1024
          %617 = vsyncadd [#allocation15], %s616
          %s618 = sshll.u32 [#allocation16], 4
          %s619 = int_to_ptr.vmem [resolvable:$true] %s618
          %624 = dma.hbm_to_vmem [thread:$0]  %s8, 1024, %s619, [#allocation15], 64, 64, 4
        $region16: #{tpu_custom_call.1} parent=11 // pred_fallthru
          _
        // Predicated region
        $region17: #{tpu_custom_call.1} parent=11 // pred_check
          %p625 = pneg %p324
        $region18: #{tpu_custom_call.1} parent=11 // pred_check_branch
          %627 = sbr.rel (%p625) target = $region20
        $region19: #{tpu_custom_call.1} parent=11 // pred_region
          %s629 = ssub.s32 16, 16
          %630 = vsyncadd [#allocation18], %s629
          %s632 = sshll.u32 [#allocation17], 4
          %s633 = int_to_ptr.vmem [resolvable:$true] %s632
          %635 = dma.hbm_to_vmem [thread:$0]  %s9, 16, %s633, [#allocation18]
        $region20: #{tpu_custom_call.1} parent=11 // pred_fallthru
          _
        // Predicated region
        $region21: #{tpu_custom_call.1} parent=11 // pred_check
          %p636 = pneg %p345
        $region22: #{tpu_custom_call.1} parent=11 // pred_check_branch
          %638 = sbr.rel (%p636) target = $region24
        $region23: #{tpu_custom_call.1} parent=11 // pred_region
          %s640 = ssub.s32 1024, 1024
          %641 = vsyncadd [#allocation18], %s640
          %s642 = sshll.u32 [#allocation19], 4
          %s643 = int_to_ptr.vmem [resolvable:$true] %s642
          %648 = dma.hbm_to_vmem [thread:$0]  %s10, 1024, %s643, [#allocation18], 64, 64, 4
        $region24: #{tpu_custom_call.1} parent=11 // pred_fallthru
          _
        // Predicated region
        $region25: #{tpu_custom_call.1} parent=11 // pred_check
          %p649 = pneg %p366
        $region26: #{tpu_custom_call.1} parent=11 // pred_check_branch
          %651 = sbr.rel (%p649) target = $region28
        $region27: #{tpu_custom_call.1} parent=11 // pred_region
          %s653 = ssub.s32 16, 16
          %654 = vsyncadd [#allocation21], %s653
          %s656 = sshll.u32 [#allocation20], 4
          %s657 = int_to_ptr.vmem [resolvable:$true] %s656
          %659 = dma.hbm_to_vmem [thread:$0]  %s11, 16, %s657, [#allocation21]
        $region28: #{tpu_custom_call.1} parent=11 // pred_fallthru
          _
        // Predicated region
        $region29: #{tpu_custom_call.1} parent=11 // pred_check
          %p660 = pneg %p387
        $region30: #{tpu_custom_call.1} parent=11 // pred_check_branch
          %662 = sbr.rel (%p660) target = $region32
        $region31: #{tpu_custom_call.1} parent=11 // pred_region
          %s664 = ssub.s32 16, 16
          %665 = vsyncadd [#allocation21], %s664
          %s667 = sshll.u32 [#allocation22], 4
          %s668 = int_to_ptr.vmem [resolvable:$true] %s667
          %670 = dma.hbm_to_vmem [thread:$0]  %s12, 16, %s668, [#allocation21]
        $region32: #{tpu_custom_call.1} parent=11 // pred_fallthru
          _
        // Predicated region
        $region33: #{tpu_custom_call.1} parent=11 // pred_check
          %p671 = pneg %p408
        $region34: #{tpu_custom_call.1} parent=11 // pred_check_branch
          %673 = sbr.rel (%p671) target = $region36
        $region35: #{tpu_custom_call.1} parent=11 // pred_region
          %s675 = ssub.s32 2048, 2048
          %676 = vsyncadd [#allocation24], %s675
          %s677 = sshll.u32 [#allocation23], 4
          %s678 = int_to_ptr.vmem [resolvable:$true] %s677
          %683 = dma.hbm_to_vmem [thread:$0]  %s13, 2048, %s678, [#allocation24], 128, 128, 8
        $region36: #{tpu_custom_call.1} parent=11 // pred_fallthru
          _
        // Predicated region
        $region37: #{tpu_custom_call.1} parent=11 // pred_check
          %p684 = pneg %p429
        $region38: #{tpu_custom_call.1} parent=11 // pred_check_branch
          %686 = sbr.rel (%p684) target = $region40
        $region39: #{tpu_custom_call.1} parent=11 // pred_region
          %s688 = ssub.s32 32, 32
          %689 = vsyncadd [#allocation24], %s688
          %s691 = sshll.u32 [#allocation25], 4
          %s692 = int_to_ptr.vmem [resolvable:$true] %s691
          %694 = dma.hbm_to_vmem [thread:$0]  %s14, 32, %s692, [#allocation24]
        $region40: #{tpu_custom_call.1} parent=11 // pred_fallthru
          _
        // Predicated region
        $region41: #{tpu_custom_call.1} parent=11 // pred_check
          %p695 = pneg %p450
        $region42: #{tpu_custom_call.1} parent=11 // pred_check_branch
          %697 = sbr.rel (%p695) target = $region44
        $region43: #{tpu_custom_call.1} parent=11 // pred_region
          %s699 = ssub.s32 2048, 2048
          %700 = vsyncadd [#allocation27], %s699
          %s701 = sshll.u32 [#allocation26], 4
          %s702 = int_to_ptr.vmem [resolvable:$true] %s701
          %707 = dma.hbm_to_vmem [thread:$0]  %s15, 2048, %s702, [#allocation27], 64, 64, 4
        $region44: #{tpu_custom_call.1} parent=11 // pred_fallthru
          _
        // Predicated region
        $region45: #{tpu_custom_call.1} parent=11 // pred_check
          %p708 = pneg %p471
        $region46: #{tpu_custom_call.1} parent=11 // pred_check_branch
          %710 = sbr.rel (%p708) target = $region48
        $region47: #{tpu_custom_call.1} parent=11 // pred_region
          %s712 = ssub.s32 16, 16
          %713 = vsyncadd [#allocation27], %s712
          %s715 = sshll.u32 [#allocation28], 4
          %s716 = int_to_ptr.vmem [resolvable:$true] %s715
          %718 = dma.hbm_to_vmem [thread:$0]  %s16, 16, %s716, [#allocation27]
        $region48: #{tpu_custom_call.1} parent=11 // pred_fallthru
          _
        // Predicated region
        $region49: #{tpu_custom_call.1} parent=11 // pred_check
          %p719 = pneg %p492
        $region50: #{tpu_custom_call.1} parent=11 // pred_check_branch
          %721 = sbr.rel (%p719) target = $region52
        $region51: #{tpu_custom_call.1} parent=11 // pred_region
          %s723 = ssub.s32 16, 16
          %724 = vsyncadd [#allocation30], %s723
          %s726 = sshll.u32 [#allocation29], 4
          %s727 = int_to_ptr.vmem [resolvable:$true] %s726
          %729 = dma.hbm_to_vmem [thread:$0]  %s17, 16, %s727, [#allocation30]
        $region52: #{tpu_custom_call.1} parent=11 // pred_fallthru
          _
        // Predicated region
        $region53: #{tpu_custom_call.1} parent=11 // pred_check
          %p730 = pneg %p513
        $region54: #{tpu_custom_call.1} parent=11 // pred_check_branch
          %732 = sbr.rel (%p730) target = $region56
        $region55: #{tpu_custom_call.1} parent=11 // pred_region
          %s734 = ssub.s32 16, 16
          %735 = vsyncadd [#allocation30], %s734
          %s737 = sshll.u32 [#allocation31], 4
          %s738 = int_to_ptr.vmem [resolvable:$true] %s737
          %740 = dma.hbm_to_vmem [thread:$0]  %s18, 16, %s738, [#allocation30]
        $region56: #{tpu_custom_call.1} parent=11 // pred_fallthru
          _
      $region12: #{tpu_custom_call.1} parent=5 // pred_fallthru
        _
      %p741 = scmp.lt.s32.totalorder %s54, 4
      // Predicated region
      $region57: #{tpu_custom_call.1} parent=5 // pred_check
        %p742 = pneg %p741
      $region58: #{tpu_custom_call.1} parent=5 // pred_check_branch
        %744 = sbr.rel (%p742) target = $region60
      $region59: #{tpu_custom_call.1} parent=5 // pred_region
        // Predicated region
        $region61: #{tpu_custom_call.1} parent=59 // pred_check
          %p745 = pneg %p88
        $region62: #{tpu_custom_call.1} parent=59 // pred_check_branch
          %747 = sbr.rel (%p745) target = $region64
        $region63: #{tpu_custom_call.1} parent=59 // pred_region
          %s748 = sand.u32 %s78, 1
          %s749 = scalar_lea.sflag [#allocation3], %s748
          %s750 = sand.u32 %s78, 1
          %s751 = smul.addr %s750, 256
          %s752 = scalar_lea.vmem [#allocation2], %s751
          %s753 = smul.u32 32, %s62
          %s755 = ssub.s32 4096, 4096
          %756 = vsyncadd %s749, %s755
          %s757 = smul.addr %s61, 64
          %s758 = sadd.s32 %s753, %s757
          %s759 = smul.addr %s758, 128
          %s760 = scalar_lea.hbm %s0, %s759
          %s761 = sshll.u32 %s752, 4
          %s762 = int_to_ptr.vmem [resolvable:$true] %s761
          %767 = dma.hbm_to_vmem [thread:$0]  %s760, 4096, %s762, %s749, 128, 128, 8
        $region64: #{tpu_custom_call.1} parent=59 // pred_fallthru
          _
        // Predicated region
        $region65: #{tpu_custom_call.1} parent=59 // pred_check
          %p768 = pneg %p116
        $region66: #{tpu_custom_call.1} parent=59 // pred_check_branch
          %770 = sbr.rel (%p768) target = $region68
        $region67: #{tpu_custom_call.1} parent=59 // pred_region
          %s771 = sand.u32 %s54, 1
          %s772 = scalar_lea.sflag [#allocation6], %s771
          %s773 = sand.u32 %s106, 1
          %s774 = smul.addr %s773, 128
          %s775 = scalar_lea.vmem [#allocation5], %s774
          %s776 = smul.u32 32, %s62
          %s778 = ssub.s32 2048, 2048
          %779 = vsyncadd %s772, %s778
          %s780 = smul.addr %s61, 64
          %s781 = sadd.s32 %s776, %s780
          %s782 = smul.addr %s781, 64
          %s783 = scalar_lea.hbm %s1, %s782
          %s784 = sshll.u32 %s775, 4
          %s785 = int_to_ptr.vmem [resolvable:$true] %s784
          %790 = dma.hbm_to_vmem [thread:$0]  %s783, 2048, %s785, %s772, 64, 64, 4
        $region68: #{tpu_custom_call.1} parent=59 // pred_fallthru
          _
        // Predicated region
        $region69: #{tpu_custom_call.1} parent=59 // pred_check
          %p791 = pneg %p142
        $region70: #{tpu_custom_call.1} parent=59 // pred_check_branch
          %793 = sbr.rel (%p791) target = $region72
        $region71: #{tpu_custom_call.1} parent=59 // pred_region
          %s794 = sand.u32 %s54, 1
          %s795 = scalar_lea.sflag [#allocation6], %s794
          %s796 = sand.u32 %s132, 1
          %s797 = smul.addr %s796, 256
          %s798 = scalar_lea.vmem [#allocation7], %s797
          %s800 = ssub.s32 4096, 4096
          %801 = vsyncadd %s795, %s800
          %s802 = smul.addr %s61, 64
          %s803 = smul.addr %s802, 64
          %s804 = scalar_lea.hbm %s2, %s803
          %s805 = sshll.u32 %s798, 4
          %s806 = int_to_ptr.vmem [resolvable:$true] %s805
          %811 = dma.hbm_to_vmem [thread:$0]  %s804, 4096, %s806, %s795, 256, 256, 16
        $region72: #{tpu_custom_call.1} parent=59 // pred_fallthru
          _
        // Predicated region
        $region73: #{tpu_custom_call.1} parent=59 // pred_check
          %p812 = pneg %p168
        $region74: #{tpu_custom_call.1} parent=59 // pred_check_branch
          %814 = sbr.rel (%p812) target = $region76
        $region75: #{tpu_custom_call.1} parent=59 // pred_region
          %s815 = sand.u32 %s54, 1
          %s816 = scalar_lea.sflag [#allocation9], %s815
          %s817 = sand.u32 %s158, 1
          %s818 = smul.addr %s817, 256
          %s819 = scalar_lea.vmem [#allocation8], %s818
          %s821 = ssub.s32 4096, 4096
          %822 = vsyncadd %s816, %s821
          %s823 = smul.addr %s61, 64
          %s824 = smul.addr %s823, 64
          %s825 = scalar_lea.hbm %s3, %s824
          %s826 = sshll.u32 %s819, 4
          %s827 = int_to_ptr.vmem [resolvable:$true] %s826
          %832 = dma.hbm_to_vmem [thread:$0]  %s825, 4096, %s827, %s816, 64, 64, 4
        $region76: #{tpu_custom_call.1} parent=59 // pred_fallthru
          _
        // Predicated region
        $region77: #{tpu_custom_call.1} parent=59 // pred_check
          %p833 = pneg %p194
        $region78: #{tpu_custom_call.1} parent=59 // pred_check_branch
          %835 = sbr.rel (%p833) target = $region80
        $region79: #{tpu_custom_call.1} parent=59 // pred_region
          %s836 = sand.u32 %s54, 1
          %s837 = scalar_lea.sflag [#allocation9], %s836
          %s838 = sand.u32 %s184, 1
          %s839 = smul.addr %s838, 128
          %s840 = scalar_lea.vmem [#allocation10], %s839
          %s842 = ssub.s32 2048, 2048
          %843 = vsyncadd %s837, %s842
          %s844 = smul.addr %s61, 32
          %s845 = smul.addr %s844, 64
          %s846 = scalar_lea.hbm %s4, %s845
          %s847 = sshll.u32 %s840, 4
          %s848 = int_to_ptr.vmem [resolvable:$true] %s847
          %853 = dma.hbm_to_vmem [thread:$0]  %s846, 2048, %s848, %s837, 128, 128, 8
        $region80: #{tpu_custom_call.1} parent=59 // pred_fallthru
          _
        // Predicated region
        $region81: #{tpu_custom_call.1} parent=59 // pred_check
          %p854 = pneg %p220
        $region82: #{tpu_custom_call.1} parent=59 // pred_check_branch
          %856 = sbr.rel (%p854) target = $region84
        $region83: #{tpu_custom_call.1} parent=59 // pred_region
          %s857 = sand.u32 %s54, 1
          %s858 = scalar_lea.sflag [#allocation12], %s857
          %s859 = sand.u32 %s210, 1
          %s860 = smul.addr %s859, 128
          %s861 = scalar_lea.vmem [#allocation11], %s860
          %s863 = ssub.s32 2048, 2048
          %864 = vsyncadd %s858, %s863
          %s865 = smul.addr %s61, 32
          %s866 = smul.addr %s865, 64
          %s867 = scalar_lea.hbm %s5, %s866
          %s868 = sshll.u32 %s861, 4
          %s869 = int_to_ptr.vmem [resolvable:$true] %s868
          %874 = dma.hbm_to_vmem [thread:$0]  %s867, 2048, %s869, %s858, 64, 64, 4
        $region84: #{tpu_custom_call.1} parent=59 // pred_fallthru
          _
        // Predicated region
        $region85: #{tpu_custom_call.1} parent=59 // pred_check
          %p875 = pneg %p248
        $region86: #{tpu_custom_call.1} parent=59 // pred_check_branch
          %877 = sbr.rel (%p875) target = $region88
        $region87: #{tpu_custom_call.1} parent=59 // pred_region
          %s878 = sand.u32 %s54, 1
          %s879 = scalar_lea.sflag [#allocation12], %s878
          %s880 = sand.u32 %s238, 1
          %s881 = smul.addr %s880, 256
          %s882 = scalar_lea.vmem [#allocation13], %s881
          %s883 = smul.u32 8, %s62
          %s885 = ssub.s32 4096, 4096
          %886 = vsyncadd %s879, %s885
          %s887 = smul.addr %s883, 4
          %s888 = smul.addr %s61, 64
          %s889 = sadd.s32 %s887, %s888
          %s890 = smul.addr %s889, 128
          %s891 = scalar_lea.hbm %s6, %s890
          %s892 = sshll.u32 %s882, 4
          %s893 = int_to_ptr.vmem [resolvable:$true] %s892
          %898 = dma.hbm_to_vmem [thread:$0]  %s891, 4096, %s893, %s879, 512, 512, 32
        $region88: #{tpu_custom_call.1} parent=59 // pred_fallthru
          _
        // Predicated region
        $region89: #{tpu_custom_call.1} parent=59 // pred_check
          %p899 = pneg %p276
        $region90: #{tpu_custom_call.1} parent=59 // pred_check_branch
          %901 = sbr.rel (%p899) target = $region92
        $region91: #{tpu_custom_call.1} parent=59 // pred_region
          %s902 = sand.u32 %s54, 1
          %s903 = scalar_lea.sflag [#allocation15], %s902
          %s904 = sand.u32 %s266, 1
          %s905 = smul.addr %s904, 128
          %s906 = scalar_lea.vmem [#allocation14], %s905
          %s907 = smul.u32 8, %s62
          %s909 = ssub.s32 2048, 2048
          %910 = vsyncadd %s903, %s909
          %s911 = smul.addr %s907, 2
          %s912 = smul.addr %s61, 32
          %s913 = sadd.s32 %s911, %s912
          %s914 = smul.addr %s913, 128
          %s915 = scalar_lea.hbm %s7, %s914
          %s916 = sshll.u32 %s906, 4
          %s917 = int_to_ptr.vmem [resolvable:$true] %s916
          %922 = dma.hbm_to_vmem [thread:$0]  %s915, 2048, %s917, %s903, 256, 256, 16
        $region92: #{tpu_custom_call.1} parent=59 // pred_fallthru
          _
      $region60: #{tpu_custom_call.1} parent=5 // pred_fallthru
        _
      %p923 = scmp.le.s32.totalorder 1, %s54
      %p924 = scmp.lt.s32.totalorder %s54, 5
      %p925 = pnand %p923, %p924
      %p926 = pneg %p925
      // Predicated region
      $region93: #{tpu_custom_call.1} parent=5 // pred_check
        _
      $region94: #{tpu_custom_call.1} parent=5 // pred_check_branch
        %928 = sbr.rel (%p925) target = $region96
      $region95: #{tpu_custom_call.1} parent=5 // pred_region
        %s929 = ssub.s32 %s54, 1
        %s930 = sand.u32 %s81, 1
        %s931 = scalar_lea.sflag [#allocation3], %s930
        %s932 = sand.u32 %s81, 1
        %s933 = smul.addr %s932, 256
        %s934 = scalar_lea.vmem [#allocation2], %s933
        // Predicated region
        $region97: #{tpu_custom_call.1} parent=95 // pred_check
          %p935 = pneg %p94
        $region98: #{tpu_custom_call.1} parent=95 // pred_check_branch
          %937 = sbr.rel (%p935) target = $region100
        $region99: #{tpu_custom_call.1} parent=95 // pred_region
          %938 = dma.done %s931, 4096
        $region100: #{tpu_custom_call.1} parent=95 // pred_fallthru
          _
        %s939 = sand.u32 %s59, 1
        %s940 = scalar_lea.sflag [#allocation6], %s939
        %s941 = sand.u32 %s109, 1
        %s942 = smul.addr %s941, 128
        %s943 = scalar_lea.vmem [#allocation5], %s942
        // Predicated region
        $region101: #{tpu_custom_call.1} parent=95 // pred_check
          %p944 = pneg %p122
        $region102: #{tpu_custom_call.1} parent=95 // pred_check_branch
          %946 = sbr.rel (%p944) target = $region104
        $region103: #{tpu_custom_call.1} parent=95 // pred_region
          %947 = dma.done %s940, 2048
        $region104: #{tpu_custom_call.1} parent=95 // pred_fallthru
          _
        %s948 = sand.u32 %s59, 1
        %s949 = scalar_lea.sflag [#allocation6], %s948
        %s950 = sand.u32 %s135, 1
        %s951 = smul.addr %s950, 256
        %s952 = scalar_lea.vmem [#allocation7], %s951
        // Predicated region
        $region105: #{tpu_custom_call.1} parent=95 // pred_check
          %p953 = pneg %p148
        $region106: #{tpu_custom_call.1} parent=95 // pred_check_branch
          %955 = sbr.rel (%p953) target = $region108
        $region107: #{tpu_custom_call.1} parent=95 // pred_region
          %956 = dma.done %s949, 4096
        $region108: #{tpu_custom_call.1} parent=95 // pred_fallthru
          _
        %s957 = sand.u32 %s59, 1
        %s958 = scalar_lea.sflag [#allocation9], %s957
        %s959 = sand.u32 %s161, 1
        %s960 = smul.addr %s959, 256
        %s961 = scalar_lea.vmem [#allocation8], %s960
        // Predicated region
        $region109: #{tpu_custom_call.1} parent=95 // pred_check
          %p962 = pneg %p174
        $region110: #{tpu_custom_call.1} parent=95 // pred_check_branch
          %964 = sbr.rel (%p962) target = $region112
        $region111: #{tpu_custom_call.1} parent=95 // pred_region
          %965 = dma.done %s958, 4096
        $region112: #{tpu_custom_call.1} parent=95 // pred_fallthru
          _
        %s966 = sand.u32 %s59, 1
        %s967 = scalar_lea.sflag [#allocation9], %s966
        %s968 = sand.u32 %s187, 1
        %s969 = smul.addr %s968, 128
        %s970 = scalar_lea.vmem [#allocation10], %s969
        // Predicated region
        $region113: #{tpu_custom_call.1} parent=95 // pred_check
          %p971 = pneg %p200
        $region114: #{tpu_custom_call.1} parent=95 // pred_check_branch
          %973 = sbr.rel (%p971) target = $region116
        $region115: #{tpu_custom_call.1} parent=95 // pred_region
          %974 = dma.done %s967, 2048
        $region116: #{tpu_custom_call.1} parent=95 // pred_fallthru
          _
        %s975 = sand.u32 %s59, 1
        %s976 = scalar_lea.sflag [#allocation12], %s975
        %s977 = sand.u32 %s213, 1
        %s978 = smul.addr %s977, 128
        %s979 = scalar_lea.vmem [#allocation11], %s978
        // Predicated region
        $region117: #{tpu_custom_call.1} parent=95 // pred_check
          %p980 = pneg %p226
        $region118: #{tpu_custom_call.1} parent=95 // pred_check_branch
          %982 = sbr.rel (%p980) target = $region120
        $region119: #{tpu_custom_call.1} parent=95 // pred_region
          %983 = dma.done %s976, 2048
        $region120: #{tpu_custom_call.1} parent=95 // pred_fallthru
          _
        %s984 = sand.u32 %s59, 1
        %s985 = scalar_lea.sflag [#allocation12], %s984
        %s986 = sand.u32 %s241, 1
        %s987 = smul.addr %s986, 256
        %s988 = scalar_lea.vmem [#allocation13], %s987
        // Predicated region
        $region121: #{tpu_custom_call.1} parent=95 // pred_check
          %p989 = pneg %p254
        $region122: #{tpu_custom_call.1} parent=95 // pred_check_branch
          %991 = sbr.rel (%p989) target = $region124
        $region123: #{tpu_custom_call.1} parent=95 // pred_region
          %992 = dma.done %s985, 4096
        $region124: #{tpu_custom_call.1} parent=95 // pred_fallthru
          _
        %s993 = sand.u32 %s59, 1
        %s994 = scalar_lea.sflag [#allocation15], %s993
        %s995 = sand.u32 %s269, 1
        %s996 = smul.addr %s995, 128
        %s997 = scalar_lea.vmem [#allocation14], %s996
        // Predicated region
        $region125: #{tpu_custom_call.1} parent=95 // pred_check
          %p998 = pneg %p282
        $region126: #{tpu_custom_call.1} parent=95 // pred_check_branch
          %1000 = sbr.rel (%p998) target = $region128
        $region127: #{tpu_custom_call.1} parent=95 // pred_region
          %1001 = dma.done %s994, 2048
        $region128: #{tpu_custom_call.1} parent=95 // pred_fallthru
          _
        // Predicated region
        $region129: #{tpu_custom_call.1} parent=95 // pred_check
          %p1002 = pneg %p303
        $region130: #{tpu_custom_call.1} parent=95 // pred_check_branch
          %1004 = sbr.rel (%p1002) target = $region132
        $region131: #{tpu_custom_call.1} parent=95 // pred_region
          %1005 = dma.done [#allocation15], 1024
        $region132: #{tpu_custom_call.1} parent=95 // pred_fallthru
          _
        // Predicated region
        $region133: #{tpu_custom_call.1} parent=95 // pred_check
          %p1006 = pneg %p324
        $region134: #{tpu_custom_call.1} parent=95 // pred_check_branch
          %1008 = sbr.rel (%p1006) target = $region136
        $region135: #{tpu_custom_call.1} parent=95 // pred_region
          %1009 = dma.done [#allocation18], 16
        $region136: #{tpu_custom_call.1} parent=95 // pred_fallthru
          _
        // Predicated region
        $region137: #{tpu_custom_call.1} parent=95 // pred_check
          %p1010 = pneg %p345
        $region138: #{tpu_custom_call.1} parent=95 // pred_check_branch
          %1012 = sbr.rel (%p1010) target = $region140
        $region139: #{tpu_custom_call.1} parent=95 // pred_region
          %1013 = dma.done [#allocation18], 1024
        $region140: #{tpu_custom_call.1} parent=95 // pred_fallthru
          _
        // Predicated region
        $region141: #{tpu_custom_call.1} parent=95 // pred_check
          %p1014 = pneg %p366
        $region142: #{tpu_custom_call.1} parent=95 // pred_check_branch
          %1016 = sbr.rel (%p1014) target = $region144
        $region143: #{tpu_custom_call.1} parent=95 // pred_region
          %1017 = dma.done [#allocation21], 16
        $region144: #{tpu_custom_call.1} parent=95 // pred_fallthru
          _
        // Predicated region
        $region145: #{tpu_custom_call.1} parent=95 // pred_check
          %p1018 = pneg %p387
        $region146: #{tpu_custom_call.1} parent=95 // pred_check_branch
          %1020 = sbr.rel (%p1018) target = $region148
        $region147: #{tpu_custom_call.1} parent=95 // pred_region
          %1021 = dma.done [#allocation21], 16
        $region148: #{tpu_custom_call.1} parent=95 // pred_fallthru
          _
        // Predicated region
        $region149: #{tpu_custom_call.1} parent=95 // pred_check
          %p1022 = pneg %p408
        $region150: #{tpu_custom_call.1} parent=95 // pred_check_branch
          %1024 = sbr.rel (%p1022) target = $region152
        $region151: #{tpu_custom_call.1} parent=95 // pred_region
          %1025 = dma.done [#allocation24], 2048
        $region152: #{tpu_custom_call.1} parent=95 // pred_fallthru
          _
        // Predicated region
        $region153: #{tpu_custom_call.1} parent=95 // pred_check
          %p1026 = pneg %p429
        $region154: #{tpu_custom_call.1} parent=95 // pred_check_branch
          %1028 = sbr.rel (%p1026) target = $region156
        $region155: #{tpu_custom_call.1} parent=95 // pred_region
          %1029 = dma.done [#allocation24], 32
        $region156: #{tpu_custom_call.1} parent=95 // pred_fallthru
          _
        // Predicated region
        $region157: #{tpu_custom_call.1} parent=95 // pred_check
          %p1030 = pneg %p450
        $region158: #{tpu_custom_call.1} parent=95 // pred_check_branch
          %1032 = sbr.rel (%p1030) target = $region160
        $region159: #{tpu_custom_call.1} parent=95 // pred_region
          %1033 = dma.done [#allocation27], 2048
        $region160: #{tpu_custom_call.1} parent=95 // pred_fallthru
          _
        // Predicated region
        $region161: #{tpu_custom_call.1} parent=95 // pred_check
          %p1034 = pneg %p471
        $region162: #{tpu_custom_call.1} parent=95 // pred_check_branch
          %1036 = sbr.rel (%p1034) target = $region164
        $region163: #{tpu_custom_call.1} parent=95 // pred_region
          %1037 = dma.done [#allocation27], 16
        $region164: #{tpu_custom_call.1} parent=95 // pred_fallthru
          _
        // Predicated region
        $region165: #{tpu_custom_call.1} parent=95 // pred_check
          %p1038 = pneg %p492
        $region166: #{tpu_custom_call.1} parent=95 // pred_check_branch
          %1040 = sbr.rel (%p1038) target = $region168
        $region167: #{tpu_custom_call.1} parent=95 // pred_region
          %1041 = dma.done [#allocation30], 16
        $region168: #{tpu_custom_call.1} parent=95 // pred_fallthru
          _
        // Predicated region
        $region169: #{tpu_custom_call.1} parent=95 // pred_check
          %p1042 = pneg %p513
        $region170: #{tpu_custom_call.1} parent=95 // pred_check_branch
          %1044 = sbr.rel (%p1042) target = $region172
        $region171: #{tpu_custom_call.1} parent=95 // pred_region
          %1045 = dma.done [#allocation30], 16
        $region172: #{tpu_custom_call.1} parent=95 // pred_fallthru
          _
        %s1046 = sand.u32 %s81, 1
        %s1047 = scalar_lea.sflag [#allocation3], %s1046
        %s1048 = sand.u32 %s81, 1
        %s1049 = smul.addr %s1048, 256
        %s1050 = scalar_lea.vmem [#allocation2], %s1049
        %p1051 = pneg %p94
        %p1052 = pneg %p91
        %s1053 = sand.u32 %s59, 1
        %s1054 = scalar_lea.sflag [#allocation6], %s1053
        %s1055 = sand.u32 %s109, 1
        %s1056 = smul.addr %s1055, 128
        %s1057 = scalar_lea.vmem [#allocation5], %s1056
        %p1058 = pneg %p122
        %p1059 = pneg %p119
        %s1060 = sand.u32 %s59, 1
        %s1061 = scalar_lea.sflag [#allocation6], %s1060
        %s1062 = sand.u32 %s135, 1
        %s1063 = smul.addr %s1062, 256
        %s1064 = scalar_lea.vmem [#allocation7], %s1063
        %p1065 = pneg %p148
        %p1066 = pneg %p145
        %s1067 = sand.u32 %s59, 1
        %s1068 = scalar_lea.sflag [#allocation9], %s1067
        %s1069 = sand.u32 %s161, 1
        %s1070 = smul.addr %s1069, 256
        %s1071 = scalar_lea.vmem [#allocation8], %s1070
        %p1072 = pneg %p174
        %p1073 = pneg %p171
        %s1074 = sand.u32 %s59, 1
        %s1075 = scalar_lea.sflag [#allocation9], %s1074
        %s1076 = sand.u32 %s187, 1
        %s1077 = smul.addr %s1076, 128
        %s1078 = scalar_lea.vmem [#allocation10], %s1077
        %p1079 = pneg %p200
        %p1080 = pneg %p197
        %s1081 = sand.u32 %s59, 1
        %s1082 = scalar_lea.sflag [#allocation12], %s1081
        %s1083 = sand.u32 %s213, 1
        %s1084 = smul.addr %s1083, 128
        %s1085 = scalar_lea.vmem [#allocation11], %s1084
        %p1086 = pneg %p226
        %p1087 = pneg %p223
        %s1088 = sand.u32 %s59, 1
        %s1089 = scalar_lea.sflag [#allocation12], %s1088
        %s1090 = sand.u32 %s241, 1
        %s1091 = smul.addr %s1090, 256
        %s1092 = scalar_lea.vmem [#allocation13], %s1091
        %p1093 = pneg %p254
        %p1094 = pneg %p251
        %s1095 = sand.u32 %s59, 1
        %s1096 = scalar_lea.sflag [#allocation15], %s1095
        %s1097 = sand.u32 %s269, 1
        %s1098 = smul.addr %s1097, 128
        %s1099 = scalar_lea.vmem [#allocation14], %s1098
        %p1100 = pneg %p282
        %p1101 = pneg %p279
        %p1102 = pneg %p303
        %p1103 = pneg %p300
        %p1104 = pneg %p324
        %p1105 = pneg %p321
        %p1106 = pneg %p345
        %p1107 = pneg %p342
        %p1108 = pneg %p366
        %p1109 = pneg %p363
        %p1110 = pneg %p387
        %p1111 = pneg %p384
        %p1112 = pneg %p408
        %p1113 = pneg %p405
        %p1114 = pneg %p429
        %p1115 = pneg %p426
        %p1116 = pneg %p450
        %p1117 = pneg %p447
        %p1118 = pneg %p471
        %p1119 = pneg %p468
        %p1120 = pneg %p492
        %p1121 = pneg %p489
        %p1122 = pneg %p513
        %p1123 = pneg %p510
        %p1124 = pneg %p541
        %p1125 = pneg %p538
        %s1126 = sand.u32 %s528, 1
        %s1127 = scalar_lea.sflag [#allocation4], %s1126
        %s1128 = sand.u32 %s528, 1
        %s1129 = smul.addr %s1128, 256
        %s1130 = scalar_lea.vmem [#allocation32], %s1129
        %p1131 = pneg %p569
        %p1132 = pneg %p566
        %s1133 = sand.u32 %s59, 1
        %s1134 = scalar_lea.sflag [#allocation34], %s1133
        %s1135 = sand.u32 %s556, 1
        %s1136 = smul.addr %s1135, 1024
        %s1137 = scalar_lea.vmem [#allocation33], %s1136
        %p1138 = pneg %p597
        %p1139 = pneg %p594
        %s1140 = sand.u32 %s59, 1
        %s1141 = scalar_lea.sflag [#allocation34], %s1140
        %s1142 = sand.u32 %s584, 1
        %s1143 = smul.addr %s1142, 512
        %s1144 = scalar_lea.vmem [#allocation35], %s1143
        %s1145 = smul.u32 32, %s64
        %s1146 = smul.u32 32, %s64
        %s1147 = smul.u32 8, %s64
        %s1148 = smul.u32 8, %s64
        %s1149 = smul.u32 32, %s64
        %s1150 = smul.u32 32, %s64
        %s1151 = smul.u32 32, %s64
        %v1155 = vld [vmem:[%s934] sm:$0xff]
        %v1156 = vld [vmem:[%s934 + $0x8] sm:$0xff]
        %v1157 = vld [vmem:[%s934 + $0x10] sm:$0xff]
        %v1158 = vld [vmem:[%s934 + $0x18] sm:$0xff]
        %v1159 = vld [vmem:[%s934 + $0x20] sm:$0xff]
        %v1160 = vld [vmem:[%s934 + $0x28] sm:$0xff]
        %v1161 = vld [vmem:[%s934 + $0x30] sm:$0xff]
        %v1162 = vld [vmem:[%s934 + $0x38] sm:$0xff]
        %v1163 = vld [vmem:[%s934 + $0x40] sm:$0xff]
        %v1164 = vld [vmem:[%s934 + $0x48] sm:$0xff]
        %v1165 = vld [vmem:[%s934 + $0x50] sm:$0xff]
        %v1166 = vld [vmem:[%s934 + $0x58] sm:$0xff]
        %v1167 = vld [vmem:[%s934 + $0x60] sm:$0xff]
        %v1168 = vld [vmem:[%s934 + $0x68] sm:$0xff]
        %v1169 = vld [vmem:[%s934 + $0x70] sm:$0xff]
        %v1170 = vld [vmem:[%s934 + $0x78] sm:$0xff]
        %v1171 = vld [vmem:[%s934 + $0x80] sm:$0xff]
        %v1172 = vld [vmem:[%s934 + $0x88] sm:$0xff]
        %v1173 = vld [vmem:[%s934 + $0x90] sm:$0xff]
        %v1174 = vld [vmem:[%s934 + $0x98] sm:$0xff]
        %v1175 = vld [vmem:[%s934 + $0xa0] sm:$0xff]
        %v1176 = vld [vmem:[%s934 + $0xa8] sm:$0xff]
        %v1177 = vld [vmem:[%s934 + $0xb0] sm:$0xff]
        %v1178 = vld [vmem:[%s934 + $0xb8] sm:$0xff]
        %v1179 = vld [vmem:[%s934 + $0xc0] sm:$0xff]
        %v1180 = vld [vmem:[%s934 + $0xc8] sm:$0xff]
        %v1181 = vld [vmem:[%s934 + $0xd0] sm:$0xff]
        %v1182 = vld [vmem:[%s934 + $0xd8] sm:$0xff]
        %v1183 = vld [vmem:[%s934 + $0xe0] sm:$0xff]
        %v1184 = vld [vmem:[%s934 + $0xe8] sm:$0xff]
        %v1185 = vld [vmem:[%s934 + $0xf0] sm:$0xff]
        %v1186 = vld [vmem:[%s934 + $0xf8] sm:$0xff]
        %v1187 = vld [vmem:[%s943] sm:$0xf]
        %v1188 = vld [vmem:[%s943 + $0x4] sm:$0xf]
        %v1189 = vld [vmem:[%s943 + $0x8] sm:$0xf]
        %v1190 = vld [vmem:[%s943 + $0xc] sm:$0xf]
        %v1191 = vld [vmem:[%s943 + $0x10] sm:$0xf]
        %v1192 = vld [vmem:[%s943 + $0x14] sm:$0xf]
        %v1193 = vld [vmem:[%s943 + $0x18] sm:$0xf]
        %v1194 = vld [vmem:[%s943 + $0x1c] sm:$0xf]
        %v1195 = vld [vmem:[%s943 + $0x20] sm:$0xf]
        %v1196 = vld [vmem:[%s943 + $0x24] sm:$0xf]
        %v1197 = vld [vmem:[%s943 + $0x28] sm:$0xf]
        %v1198 = vld [vmem:[%s943 + $0x2c] sm:$0xf]
        %v1199 = vld [vmem:[%s943 + $0x30] sm:$0xf]
        %v1200 = vld [vmem:[%s943 + $0x34] sm:$0xf]
        %v1201 = vld [vmem:[%s943 + $0x38] sm:$0xf]
        %v1202 = vld [vmem:[%s943 + $0x3c] sm:$0xf]
        %v1203 = vld [vmem:[%s943 + $0x40] sm:$0xf]
        %v1204 = vld [vmem:[%s943 + $0x44] sm:$0xf]
        %v1205 = vld [vmem:[%s943 + $0x48] sm:$0xf]
        %v1206 = vld [vmem:[%s943 + $0x4c] sm:$0xf]
        %v1207 = vld [vmem:[%s943 + $0x50] sm:$0xf]
        %v1208 = vld [vmem:[%s943 + $0x54] sm:$0xf]
        %v1209 = vld [vmem:[%s943 + $0x58] sm:$0xf]
        %v1210 = vld [vmem:[%s943 + $0x5c] sm:$0xf]
        %v1211 = vld [vmem:[%s943 + $0x60] sm:$0xf]
        %v1212 = vld [vmem:[%s943 + $0x64] sm:$0xf]
        %v1213 = vld [vmem:[%s943 + $0x68] sm:$0xf]
        %v1214 = vld [vmem:[%s943 + $0x6c] sm:$0xf]
        %v1215 = vld [vmem:[%s943 + $0x70] sm:$0xf]
        %v1216 = vld [vmem:[%s943 + $0x74] sm:$0xf]
        %v1217 = vld [vmem:[%s943 + $0x78] sm:$0xf]
        %v1218 = vld [vmem:[%s943 + $0x7c] sm:$0xf]
        %v1219 = vld [vmem:[%s952] sm:$0xff]
        %v1220 = vld [vmem:[%s952 + $0x8] sm:$0xff]
        %v1221 = vld [vmem:[%s952 + $0x10] sm:$0xff]
        %v1222 = vld [vmem:[%s952 + $0x18] sm:$0xff]
        %v1223 = vld [vmem:[%s952 + $0x20] sm:$0xff]
        %v1224 = vld [vmem:[%s952 + $0x28] sm:$0xff]
        %v1225 = vld [vmem:[%s952 + $0x30] sm:$0xff]
        %v1226 = vld [vmem:[%s952 + $0x38] sm:$0xff]
        %v1227 = vld [vmem:[%s952 + $0x40] sm:$0xff]
        %v1228 = vld [vmem:[%s952 + $0x48] sm:$0xff]
        %v1229 = vld [vmem:[%s952 + $0x50] sm:$0xff]
        %v1230 = vld [vmem:[%s952 + $0x58] sm:$0xff]
        %v1231 = vld [vmem:[%s952 + $0x60] sm:$0xff]
        %v1232 = vld [vmem:[%s952 + $0x68] sm:$0xff]
        %v1233 = vld [vmem:[%s952 + $0x70] sm:$0xff]
        %v1234 = vld [vmem:[%s952 + $0x78] sm:$0xff]
        %v1235 = vld [vmem:[%s952 + $0x80] sm:$0xff]
        %v1236 = vld [vmem:[%s952 + $0x88] sm:$0xff]
        %v1237 = vld [vmem:[%s952 + $0x90] sm:$0xff]
        %v1238 = vld [vmem:[%s952 + $0x98] sm:$0xff]
        %v1239 = vld [vmem:[%s952 + $0xa0] sm:$0xff]
        %v1240 = vld [vmem:[%s952 + $0xa8] sm:$0xff]
        %v1241 = vld [vmem:[%s952 + $0xb0] sm:$0xff]
        %v1242 = vld [vmem:[%s952 + $0xb8] sm:$0xff]
        %v1243 = vld [vmem:[%s952 + $0xc0] sm:$0xff]
        %v1244 = vld [vmem:[%s952 + $0xc8] sm:$0xff]
        %v1245 = vld [vmem:[%s952 + $0xd0] sm:$0xff]
        %v1246 = vld [vmem:[%s952 + $0xd8] sm:$0xff]
        %v1247 = vld [vmem:[%s952 + $0xe0] sm:$0xff]
        %v1248 = vld [vmem:[%s952 + $0xe8] sm:$0xff]
        %v1249 = vld [vmem:[%s952 + $0xf0] sm:$0xff]
        %v1250 = vld [vmem:[%s952 + $0xf8] sm:$0xff]
        %v1283 = vunpack.c.l.b16 %v1187
        %v1284 = vunpack.c.l.b16 %v1188
        %v1285 = vunpack.c.l.b16 %v1189
        %v1286 = vunpack.c.l.b16 %v1190
        %v1287 = vunpack.c.l.b16 %v1191
        %v1288 = vunpack.c.l.b16 %v1192
        %v1289 = vunpack.c.l.b16 %v1193
        %v1290 = vunpack.c.l.b16 %v1194
        %v1291 = vunpack.c.l.b16 %v1195
        %v1292 = vunpack.c.l.b16 %v1196
        %v1293 = vunpack.c.l.b16 %v1197
        %v1294 = vunpack.c.l.b16 %v1198
        %v1295 = vunpack.c.l.b16 %v1199
        %v1296 = vunpack.c.l.b16 %v1200
        %v1297 = vunpack.c.l.b16 %v1201
        %v1298 = vunpack.c.l.b16 %v1202
        %v1299 = vunpack.c.l.b16 %v1203
        %v1300 = vunpack.c.l.b16 %v1204
        %v1301 = vunpack.c.l.b16 %v1205
        %v1302 = vunpack.c.l.b16 %v1206
        %v1303 = vunpack.c.l.b16 %v1207
        %v1304 = vunpack.c.l.b16 %v1208
        %v1305 = vunpack.c.l.b16 %v1209
        %v1306 = vunpack.c.l.b16 %v1210
        %v1307 = vunpack.c.l.b16 %v1211
        %v1308 = vunpack.c.l.b16 %v1212
        %v1309 = vunpack.c.l.b16 %v1213
        %v1310 = vunpack.c.l.b16 %v1214
        %v1311 = vunpack.c.l.b16 %v1215
        %v1312 = vunpack.c.l.b16 %v1216
        %v1313 = vunpack.c.l.b16 %v1217
        %v1314 = vunpack.c.l.b16 %v1218
        %v1315 = vpack.c.b16 %v1284, %v1283
        %v1316 = vpack.c.b16 %v1286, %v1285
        %v1317 = vpack.c.b16 %v1288, %v1287
        %v1318 = vpack.c.b16 %v1290, %v1289
        %v1319 = vpack.c.b16 %v1292, %v1291
        %v1320 = vpack.c.b16 %v1294, %v1293
        %v1321 = vpack.c.b16 %v1296, %v1295
        %v1322 = vpack.c.b16 %v1298, %v1297
        %v1323 = vpack.c.b16 %v1300, %v1299
        %v1324 = vpack.c.b16 %v1302, %v1301
        %v1325 = vpack.c.b16 %v1304, %v1303
        %v1326 = vpack.c.b16 %v1306, %v1305
        %v1327 = vpack.c.b16 %v1308, %v1307
        %v1328 = vpack.c.b16 %v1310, %v1309
        %v1329 = vpack.c.b16 %v1312, %v1311
        %v1330 = vpack.c.b16 %v1314, %v1313
        %v1379 = vunpack.c.l.b16 %v1219
        %v1380 = vunpack.c.h.b16 %v1219
        %v1381 = vunpack.c.l.b16 %v1220
        %v1382 = vunpack.c.h.b16 %v1220
        %v1383 = vunpack.c.l.b16 %v1221
        %v1384 = vunpack.c.h.b16 %v1221
        %v1385 = vunpack.c.l.b16 %v1222
        %v1386 = vunpack.c.h.b16 %v1222
        %v1387 = vunpack.c.l.b16 %v1223
        %v1388 = vunpack.c.h.b16 %v1223
        %v1389 = vunpack.c.l.b16 %v1224
        %v1390 = vunpack.c.h.b16 %v1224
        %v1391 = vunpack.c.l.b16 %v1225
        %v1392 = vunpack.c.h.b16 %v1225
        %v1393 = vunpack.c.l.b16 %v1226
        %v1394 = vunpack.c.h.b16 %v1226
        %v1395 = vunpack.c.l.b16 %v1227
        %v1396 = vunpack.c.h.b16 %v1227
        %v1397 = vunpack.c.l.b16 %v1228
        %v1398 = vunpack.c.h.b16 %v1228
        %v1399 = vunpack.c.l.b16 %v1229
        %v1400 = vunpack.c.h.b16 %v1229
        %v1401 = vunpack.c.l.b16 %v1230
        %v1402 = vunpack.c.h.b16 %v1230
        %v1403 = vunpack.c.l.b16 %v1231
        %v1404 = vunpack.c.h.b16 %v1231
        %v1405 = vunpack.c.l.b16 %v1232
        %v1406 = vunpack.c.h.b16 %v1232
        %v1407 = vunpack.c.l.b16 %v1233
        %v1408 = vunpack.c.h.b16 %v1233
        %v1409 = vunpack.c.l.b16 %v1234
        %v1410 = vunpack.c.h.b16 %v1234
        %v1411 = vunpack.c.l.b16 %v1235
        %v1412 = vunpack.c.h.b16 %v1235
        %v1413 = vunpack.c.l.b16 %v1236
        %v1414 = vunpack.c.h.b16 %v1236
        %v1415 = vunpack.c.l.b16 %v1237
        %v1416 = vunpack.c.h.b16 %v1237
        %v1417 = vunpack.c.l.b16 %v1238
        %v1418 = vunpack.c.h.b16 %v1238
        %v1419 = vunpack.c.l.b16 %v1239
        %v1420 = vunpack.c.h.b16 %v1239
        %v1421 = vunpack.c.l.b16 %v1240
        %v1422 = vunpack.c.h.b16 %v1240
        %v1423 = vunpack.c.l.b16 %v1241
        %v1424 = vunpack.c.h.b16 %v1241
        %v1425 = vunpack.c.l.b16 %v1242
        %v1426 = vunpack.c.h.b16 %v1242
        %v1427 = vunpack.c.l.b16 %v1243
        %v1428 = vunpack.c.h.b16 %v1243
        %v1429 = vunpack.c.l.b16 %v1244
        %v1430 = vunpack.c.h.b16 %v1244
        %v1431 = vunpack.c.l.b16 %v1245
        %v1432 = vunpack.c.h.b16 %v1245
        %v1433 = vunpack.c.l.b16 %v1246
        %v1434 = vunpack.c.h.b16 %v1246
        %v1435 = vunpack.c.l.b16 %v1247
        %v1436 = vunpack.c.h.b16 %v1247
        %v1437 = vunpack.c.l.b16 %v1248
        %v1438 = vunpack.c.h.b16 %v1248
        %v1439 = vunpack.c.l.b16 %v1249
        %v1440 = vunpack.c.h.b16 %v1249
        %v1441 = vunpack.c.l.b16 %v1250
        %v1442 = vunpack.c.h.b16 %v1250
        %v1443 = vpack.c.b16 %v1383, %v1379
        %v1444 = vpack.c.b16 %v1384, %v1380
        %v1445 = vpack.c.b16 %v1385, %v1381
        %v1446 = vpack.c.b16 %v1386, %v1382
        %v1447 = vpack.c.b16 %v1391, %v1387
        %v1448 = vpack.c.b16 %v1392, %v1388
        %v1449 = vpack.c.b16 %v1393, %v1389
        %v1450 = vpack.c.b16 %v1394, %v1390
        %v1451 = vpack.c.b16 %v1399, %v1395
        %v1452 = vpack.c.b16 %v1400, %v1396
        %v1453 = vpack.c.b16 %v1401, %v1397
        %v1454 = vpack.c.b16 %v1402, %v1398
        %v1455 = vpack.c.b16 %v1407, %v1403
        %v1456 = vpack.c.b16 %v1408, %v1404
        %v1457 = vpack.c.b16 %v1409, %v1405
        %v1458 = vpack.c.b16 %v1410, %v1406
        %v1459 = vpack.c.b16 %v1415, %v1411
        %v1460 = vpack.c.b16 %v1416, %v1412
        %v1461 = vpack.c.b16 %v1417, %v1413
        %v1462 = vpack.c.b16 %v1418, %v1414
        %v1463 = vpack.c.b16 %v1423, %v1419
        %v1464 = vpack.c.b16 %v1424, %v1420
        %v1465 = vpack.c.b16 %v1425, %v1421
        %v1466 = vpack.c.b16 %v1426, %v1422
        %v1467 = vpack.c.b16 %v1431, %v1427
        %v1468 = vpack.c.b16 %v1432, %v1428
        %v1469 = vpack.c.b16 %v1433, %v1429
        %v1470 = vpack.c.b16 %v1434, %v1430
        %v1471 = vpack.c.b16 %v1439, %v1435
        %v1472 = vpack.c.b16 %v1440, %v1436
        %v1473 = vpack.c.b16 %v1441, %v1437
        %v1474 = vpack.c.b16 %v1442, %v1438
        %1507 = vmatprep.subr.bf16.mxu0 %v1472
        %1508 = vmatpush1.bf16.msra.mxu0 %v1471
        %1509 = vmatprep.subr.bf16.mxu0 %v1468
        %1510 = vmatpush1.bf16.msra.mxu0 %v1467
        %1511 = vmatprep.subr.bf16.mxu0 %v1464
        %1512 = vmatpush1.bf16.msra.mxu0 %v1463
        %1513 = vmatprep.subr.bf16.mxu0 %v1460
        %1514 = vmatpush1.bf16.msra.mxu0 %v1459
        %1515 = vmatprep.subr.bf16.mxu0 %v1456
        %1516 = vmatpush1.bf16.msra.mxu0 %v1455
        %1517 = vmatprep.subr.bf16.mxu0 %v1452
        %1518 = vmatpush1.bf16.msra.mxu0 %v1451
        %1519 = vmatprep.subr.bf16.mxu0 %v1448
        %1520 = vmatpush1.bf16.msra.mxu0 %v1447
        %1521 = vmatprep.subr.bf16.mxu0 %v1444
        %1522 = vmatpush1.bf16.msra.mxu0 %v1443
        %1523 = vmatprep.subr.bf16.mxu0 0
        %1524 = vmatpush2.bf16.msra.mxu0 0
        %1525 = vmatprep.subr.bf16.mxu0 0
        %1526 = vmatpush2.bf16.msra.mxu0 0
        %1527 = vmatprep.subr.bf16.mxu0 0
        %1528 = vmatpush2.bf16.msra.mxu0 0
        %1529 = vmatprep.subr.bf16.mxu0 0
        %1530 = vmatpush2.bf16.msra.mxu0 0
        %1531 = vmatprep.subr.bf16.mxu0 0
        %1532 = vmatpush2.bf16.msra.mxu0 0
        %1533 = vmatprep.subr.bf16.mxu0 0
        %1534 = vmatpush2.bf16.msra.mxu0 0
        %1535 = vmatprep.subr.bf16.mxu0 0
        %1536 = vmatpush2.bf16.msra.mxu0 0
        %1537 = vmatprep.subr.bf16.mxu0 0
        %1538 = vmatpush2.bf16.msra.mxu0 0
        %1539 = vmatprep.mubr.bf16.mxu0 0
        %1540 = vmatmul.mubr.bf16.gmra.mxu0 %v1315
        %v1541 = vpop.f32.mrf.mxu0
        %v1542 = vadd.f32 0.0, %v1541
        %v1543 = vpop.f32.mrf.mxu0
        %v1544 = vadd.f32 0.0, %v1543
        %v1545 = vpop.f32.mrf.mxu0
        %v1546 = vadd.f32 0.0, %v1545
        %v1547 = vpop.f32.mrf.mxu0
        %v1548 = vadd.f32 0.0, %v1547
        %1549 = vmatprep.mubr.bf16.mxu0 0
        %1550 = vmatmul.mubr.bf16.gmra.mxu0 %v1316
        %v1551 = vpop.f32.mrf.mxu0
        %v1552 = vadd.f32 0.0, %v1551
        %v1553 = vpop.f32.mrf.mxu0
        %v1554 = vadd.f32 0.0, %v1553
        %v1555 = vpop.f32.mrf.mxu0
        %v1556 = vadd.f32 0.0, %v1555
        %v1557 = vpop.f32.mrf.mxu0
        %v1558 = vadd.f32 0.0, %v1557
        %1559 = vmatprep.mubr.bf16.mxu0 0
        %1560 = vmatmul.mubr.bf16.gmra.mxu0 %v1317
        %v1561 = vpop.f32.mrf.mxu0
        %v1562 = vadd.f32 0.0, %v1561
        %v1563 = vpop.f32.mrf.mxu0
        %v1564 = vadd.f32 0.0, %v1563
        %v1565 = vpop.f32.mrf.mxu0
        %v1566 = vadd.f32 0.0, %v1565
        %v1567 = vpop.f32.mrf.mxu0
        %v1568 = vadd.f32 0.0, %v1567
        %1569 = vmatprep.mubr.bf16.mxu0 0
        %1570 = vmatmul.mubr.bf16.gmra.mxu0 %v1318
        %v1571 = vpop.f32.mrf.mxu0
        %v1572 = vadd.f32 0.0, %v1571
        %v1573 = vpop.f32.mrf.mxu0
        %v1574 = vadd.f32 0.0, %v1573
        %v1575 = vpop.f32.mrf.mxu0
        %v1576 = vadd.f32 0.0, %v1575
        %v1577 = vpop.f32.mrf.mxu0
        %v1578 = vadd.f32 0.0, %v1577
        %1579 = vmatprep.mubr.bf16.mxu0 0
        %1580 = vmatmul.mubr.bf16.gmra.mxu0 %v1319
        %v1581 = vpop.f32.mrf.mxu0
        %v1582 = vadd.f32 0.0, %v1581
        %v1583 = vpop.f32.mrf.mxu0
        %v1584 = vadd.f32 0.0, %v1583
        %v1585 = vpop.f32.mrf.mxu0
        %v1586 = vadd.f32 0.0, %v1585
        %v1587 = vpop.f32.mrf.mxu0
        %v1588 = vadd.f32 0.0, %v1587
        %1589 = vmatprep.mubr.bf16.mxu0 0
        %1590 = vmatmul.mubr.bf16.gmra.mxu0 %v1320
        %v1591 = vpop.f32.mrf.mxu0
        %v1592 = vadd.f32 0.0, %v1591
        %v1593 = vpop.f32.mrf.mxu0
        %v1594 = vadd.f32 0.0, %v1593
        %v1595 = vpop.f32.mrf.mxu0
        %v1596 = vadd.f32 0.0, %v1595
        %v1597 = vpop.f32.mrf.mxu0
        %v1598 = vadd.f32 0.0, %v1597
        %1599 = vmatprep.mubr.bf16.mxu0 0
        %1600 = vmatmul.mubr.bf16.gmra.mxu0 %v1321
        %v1601 = vpop.f32.mrf.mxu0
        %v1602 = vadd.f32 0.0, %v1601
        %v1603 = vpop.f32.mrf.mxu0
        %v1604 = vadd.f32 0.0, %v1603
        %v1605 = vpop.f32.mrf.mxu0
        %v1606 = vadd.f32 0.0, %v1605
        %v1607 = vpop.f32.mrf.mxu0
        %v1608 = vadd.f32 0.0, %v1607
        %1609 = vmatprep.mubr.bf16.mxu0 0
        %1610 = vmatmul.mubr.bf16.gmra.mxu0 %v1322
        %v1611 = vpop.f32.mrf.mxu0
        %v1612 = vadd.f32 0.0, %v1611
        %v1613 = vpop.f32.mrf.mxu0
        %v1614 = vadd.f32 0.0, %v1613
        %v1615 = vpop.f32.mrf.mxu0
        %v1616 = vadd.f32 0.0, %v1615
        %v1617 = vpop.f32.mrf.mxu0
        %v1618 = vadd.f32 0.0, %v1617
        %1619 = vmatprep.mubr.bf16.mxu0 0
        %1620 = vmatmul.mubr.bf16.gmra.mxu0 %v1323
        %v1621 = vpop.f32.mrf.mxu0
        %v1622 = vadd.f32 0.0, %v1621
        %v1623 = vpop.f32.mrf.mxu0
        %v1624 = vadd.f32 0.0, %v1623
        %v1625 = vpop.f32.mrf.mxu0
        %v1626 = vadd.f32 0.0, %v1625
        %v1627 = vpop.f32.mrf.mxu0
        %v1628 = vadd.f32 0.0, %v1627
        %1629 = vmatprep.mubr.bf16.mxu0 0
        %1630 = vmatmul.mubr.bf16.gmra.mxu0 %v1324
        %v1631 = vpop.f32.mrf.mxu0
        %v1632 = vadd.f32 0.0, %v1631
        %v1633 = vpop.f32.mrf.mxu0
        %v1634 = vadd.f32 0.0, %v1633
        %v1635 = vpop.f32.mrf.mxu0
        %v1636 = vadd.f32 0.0, %v1635
        %v1637 = vpop.f32.mrf.mxu0
        %v1638 = vadd.f32 0.0, %v1637
        %1639 = vmatprep.mubr.bf16.mxu0 0
        %1640 = vmatmul.mubr.bf16.gmra.mxu0 %v1325
        %v1641 = vpop.f32.mrf.mxu0
        %v1642 = vadd.f32 0.0, %v1641
        %v1643 = vpop.f32.mrf.mxu0
        %v1644 = vadd.f32 0.0, %v1643
        %v1645 = vpop.f32.mrf.mxu0
        %v1646 = vadd.f32 0.0, %v1645
        %v1647 = vpop.f32.mrf.mxu0
        %v1648 = vadd.f32 0.0, %v1647
        %1649 = vmatprep.mubr.bf16.mxu0 0
        %1650 = vmatmul.mubr.bf16.gmra.mxu0 %v1326
        %v1651 = vpop.f32.mrf.mxu0
        %v1652 = vadd.f32 0.0, %v1651
        %v1653 = vpop.f32.mrf.mxu0
        %v1654 = vadd.f32 0.0, %v1653
        %v1655 = vpop.f32.mrf.mxu0
        %v1656 = vadd.f32 0.0, %v1655
        %v1657 = vpop.f32.mrf.mxu0
        %v1658 = vadd.f32 0.0, %v1657
        %1659 = vmatprep.mubr.bf16.mxu0 0
        %1660 = vmatmul.mubr.bf16.gmra.mxu0 %v1327
        %v1661 = vpop.f32.mrf.mxu0
        %v1662 = vadd.f32 0.0, %v1661
        %v1663 = vpop.f32.mrf.mxu0
        %v1664 = vadd.f32 0.0, %v1663
        %v1665 = vpop.f32.mrf.mxu0
        %v1666 = vadd.f32 0.0, %v1665
        %v1667 = vpop.f32.mrf.mxu0
        %v1668 = vadd.f32 0.0, %v1667
        %1669 = vmatprep.mubr.bf16.mxu0 0
        %1670 = vmatmul.mubr.bf16.gmra.mxu0 %v1328
        %v1671 = vpop.f32.mrf.mxu0
        %v1672 = vadd.f32 0.0, %v1671
        %v1673 = vpop.f32.mrf.mxu0
        %v1674 = vadd.f32 0.0, %v1673
        %v1675 = vpop.f32.mrf.mxu0
        %v1676 = vadd.f32 0.0, %v1675
        %v1677 = vpop.f32.mrf.mxu0
        %v1678 = vadd.f32 0.0, %v1677
        %1679 = vmatprep.mubr.bf16.mxu0 0
        %1680 = vmatmul.mubr.bf16.gmra.mxu0 %v1329
        %v1681 = vpop.f32.mrf.mxu0
        %v1682 = vadd.f32 0.0, %v1681
        %v1683 = vpop.f32.mrf.mxu0
        %v1684 = vadd.f32 0.0, %v1683
        %v1685 = vpop.f32.mrf.mxu0
        %v1686 = vadd.f32 0.0, %v1685
        %v1687 = vpop.f32.mrf.mxu0
        %v1688 = vadd.f32 0.0, %v1687
        %1689 = vmatprep.mubr.bf16.mxu0 0
        %1690 = vmatmul.mubr.bf16.gmra.mxu0 %v1330
        %v1691 = vpop.f32.mrf.mxu0
        %v1692 = vadd.f32 0.0, %v1691
        %v1693 = vpop.f32.mrf.mxu0
        %v1694 = vadd.f32 0.0, %v1693
        %v1695 = vpop.f32.mrf.mxu0
        %v1696 = vadd.f32 0.0, %v1695
        %v1697 = vpop.f32.mrf.mxu0
        %v1698 = vadd.f32 0.0, %v1697
        %1699 = vdwg.mxu0
        %1700 = vmatprep.subr.bf16.mxu0 %v1474
        %1701 = vmatpush1.bf16.msra.mxu0 %v1473
        %1702 = vmatprep.subr.bf16.mxu0 %v1470
        %1703 = vmatpush1.bf16.msra.mxu0 %v1469
        %1704 = vmatprep.subr.bf16.mxu0 %v1466
        %1705 = vmatpush1.bf16.msra.mxu0 %v1465
        %1706 = vmatprep.subr.bf16.mxu0 %v1462
        %1707 = vmatpush1.bf16.msra.mxu0 %v1461
        %1708 = vmatprep.subr.bf16.mxu0 %v1458
        %1709 = vmatpush1.bf16.msra.mxu0 %v1457
        %1710 = vmatprep.subr.bf16.mxu0 %v1454
        %1711 = vmatpush1.bf16.msra.mxu0 %v1453
        %1712 = vmatprep.subr.bf16.mxu0 %v1450
        %1713 = vmatpush1.bf16.msra.mxu0 %v1449
        %1714 = vmatprep.subr.bf16.mxu0 %v1446
        %1715 = vmatpush1.bf16.msra.mxu0 %v1445
        %1716 = vmatprep.subr.bf16.mxu0 0
        %1717 = vmatpush2.bf16.msra.mxu0 0
        %1718 = vmatprep.subr.bf16.mxu0 0
        %1719 = vmatpush2.bf16.msra.mxu0 0
        %1720 = vmatprep.subr.bf16.mxu0 0
        %1721 = vmatpush2.bf16.msra.mxu0 0
        %1722 = vmatprep.subr.bf16.mxu0 0
        %1723 = vmatpush2.bf16.msra.mxu0 0
        %1724 = vmatprep.subr.bf16.mxu0 0
        %1725 = vmatpush2.bf16.msra.mxu0 0
        %1726 = vmatprep.subr.bf16.mxu0 0
        %1727 = vmatpush2.bf16.msra.mxu0 0
        %1728 = vmatprep.subr.bf16.mxu0 0
        %1729 = vmatpush2.bf16.msra.mxu0 0
        %1730 = vmatprep.subr.bf16.mxu0 0
        %1731 = vmatpush2.bf16.msra.mxu0 0
        %1732 = vmatprep.mubr.bf16.mxu0 0
        %1733 = vmatmul.mubr.bf16.gmra.mxu0 %v1315
        %v1734 = vpop.f32.mrf.mxu0
        %v1735 = vadd.f32 0.0, %v1734
        %v1736 = vpop.f32.mrf.mxu0
        %v1737 = vadd.f32 0.0, %v1736
        %v1738 = vpop.f32.mrf.mxu0
        %v1739 = vadd.f32 0.0, %v1738
        %v1740 = vpop.f32.mrf.mxu0
        %v1741 = vadd.f32 0.0, %v1740
        %1742 = vmatprep.mubr.bf16.mxu0 0
        %1743 = vmatmul.mubr.bf16.gmra.mxu0 %v1316
        %v1744 = vpop.f32.mrf.mxu0
        %v1745 = vadd.f32 0.0, %v1744
        %v1746 = vpop.f32.mrf.mxu0
        %v1747 = vadd.f32 0.0, %v1746
        %v1748 = vpop.f32.mrf.mxu0
        %v1749 = vadd.f32 0.0, %v1748
        %v1750 = vpop.f32.mrf.mxu0
        %v1751 = vadd.f32 0.0, %v1750
        %1752 = vmatprep.mubr.bf16.mxu0 0
        %1753 = vmatmul.mubr.bf16.gmra.mxu0 %v1317
        %v1754 = vpop.f32.mrf.mxu0
        %v1755 = vadd.f32 0.0, %v1754
        %v1756 = vpop.f32.mrf.mxu0
        %v1757 = vadd.f32 0.0, %v1756
        %v1758 = vpop.f32.mrf.mxu0
        %v1759 = vadd.f32 0.0, %v1758
        %v1760 = vpop.f32.mrf.mxu0
        %v1761 = vadd.f32 0.0, %v1760
        %1762 = vmatprep.mubr.bf16.mxu0 0
        %1763 = vmatmul.mubr.bf16.gmra.mxu0 %v1318
        %v1764 = vpop.f32.mrf.mxu0
        %v1765 = vadd.f32 0.0, %v1764
        %v1766 = vpop.f32.mrf.mxu0
        %v1767 = vadd.f32 0.0, %v1766
        %v1768 = vpop.f32.mrf.mxu0
        %v1769 = vadd.f32 0.0, %v1768
        %v1770 = vpop.f32.mrf.mxu0
        %v1771 = vadd.f32 0.0, %v1770
        %1772 = vmatprep.mubr.bf16.mxu0 0
        %1773 = vmatmul.mubr.bf16.gmra.mxu0 %v1319
        %v1774 = vpop.f32.mrf.mxu0
        %v1775 = vadd.f32 0.0, %v1774
        %v1776 = vpop.f32.mrf.mxu0
        %v1777 = vadd.f32 0.0, %v1776
        %v1778 = vpop.f32.mrf.mxu0
        %v1779 = vadd.f32 0.0, %v1778
        %v1780 = vpop.f32.mrf.mxu0
        %v1781 = vadd.f32 0.0, %v1780
        %1782 = vmatprep.mubr.bf16.mxu0 0
        %1783 = vmatmul.mubr.bf16.gmra.mxu0 %v1320
        %v1784 = vpop.f32.mrf.mxu0
        %v1785 = vadd.f32 0.0, %v1784
        %v1786 = vpop.f32.mrf.mxu0
        %v1787 = vadd.f32 0.0, %v1786
        %v1788 = vpop.f32.mrf.mxu0
        %v1789 = vadd.f32 0.0, %v1788
        %v1790 = vpop.f32.mrf.mxu0
        %v1791 = vadd.f32 0.0, %v1790
        %1792 = vmatprep.mubr.bf16.mxu0 0
        %1793 = vmatmul.mubr.bf16.gmra.mxu0 %v1321
        %v1794 = vpop.f32.mrf.mxu0
        %v1795 = vadd.f32 0.0, %v1794
        %v1796 = vpop.f32.mrf.mxu0
        %v1797 = vadd.f32 0.0, %v1796
        %v1798 = vpop.f32.mrf.mxu0
        %v1799 = vadd.f32 0.0, %v1798
        %v1800 = vpop.f32.mrf.mxu0
        %v1801 = vadd.f32 0.0, %v1800
        %1802 = vmatprep.mubr.bf16.mxu0 0
        %1803 = vmatmul.mubr.bf16.gmra.mxu0 %v1322
        %v1804 = vpop.f32.mrf.mxu0
        %v1805 = vadd.f32 0.0, %v1804
        %v1806 = vpop.f32.mrf.mxu0
        %v1807 = vadd.f32 0.0, %v1806
        %v1808 = vpop.f32.mrf.mxu0
        %v1809 = vadd.f32 0.0, %v1808
        %v1810 = vpop.f32.mrf.mxu0
        %v1811 = vadd.f32 0.0, %v1810
        %1812 = vmatprep.mubr.bf16.mxu0 0
        %1813 = vmatmul.mubr.bf16.gmra.mxu0 %v1323
        %v1814 = vpop.f32.mrf.mxu0
        %v1815 = vadd.f32 0.0, %v1814
        %v1816 = vpop.f32.mrf.mxu0
        %v1817 = vadd.f32 0.0, %v1816
        %v1818 = vpop.f32.mrf.mxu0
        %v1819 = vadd.f32 0.0, %v1818
        %v1820 = vpop.f32.mrf.mxu0
        %v1821 = vadd.f32 0.0, %v1820
        %1822 = vmatprep.mubr.bf16.mxu0 0
        %1823 = vmatmul.mubr.bf16.gmra.mxu0 %v1324
        %v1824 = vpop.f32.mrf.mxu0
        %v1825 = vadd.f32 0.0, %v1824
        %v1826 = vpop.f32.mrf.mxu0
        %v1827 = vadd.f32 0.0, %v1826
        %v1828 = vpop.f32.mrf.mxu0
        %v1829 = vadd.f32 0.0, %v1828
        %v1830 = vpop.f32.mrf.mxu0
        %v1831 = vadd.f32 0.0, %v1830
        %1832 = vmatprep.mubr.bf16.mxu0 0
        %1833 = vmatmul.mubr.bf16.gmra.mxu0 %v1325
        %v1834 = vpop.f32.mrf.mxu0
        %v1835 = vadd.f32 0.0, %v1834
        %v1836 = vpop.f32.mrf.mxu0
        %v1837 = vadd.f32 0.0, %v1836
        %v1838 = vpop.f32.mrf.mxu0
        %v1839 = vadd.f32 0.0, %v1838
        %v1840 = vpop.f32.mrf.mxu0
        %v1841 = vadd.f32 0.0, %v1840
        %1842 = vmatprep.mubr.bf16.mxu0 0
        %1843 = vmatmul.mubr.bf16.gmra.mxu0 %v1326
        %v1844 = vpop.f32.mrf.mxu0
        %v1845 = vadd.f32 0.0, %v1844
        %v1846 = vpop.f32.mrf.mxu0
        %v1847 = vadd.f32 0.0, %v1846
        %v1848 = vpop.f32.mrf.mxu0
        %v1849 = vadd.f32 0.0, %v1848
        %v1850 = vpop.f32.mrf.mxu0
        %v1851 = vadd.f32 0.0, %v1850
        %1852 = vmatprep.mubr.bf16.mxu0 0
        %1853 = vmatmul.mubr.bf16.gmra.mxu0 %v1327
        %v1854 = vpop.f32.mrf.mxu0
        %v1855 = vadd.f32 0.0, %v1854
        %v1856 = vpop.f32.mrf.mxu0
        %v1857 = vadd.f32 0.0, %v1856
        %v1858 = vpop.f32.mrf.mxu0
        %v1859 = vadd.f32 0.0, %v1858
        %v1860 = vpop.f32.mrf.mxu0
        %v1861 = vadd.f32 0.0, %v1860
        %1862 = vmatprep.mubr.bf16.mxu0 0
        %1863 = vmatmul.mubr.bf16.gmra.mxu0 %v1328
        %v1864 = vpop.f32.mrf.mxu0
        %v1865 = vadd.f32 0.0, %v1864
        %v1866 = vpop.f32.mrf.mxu0
        %v1867 = vadd.f32 0.0, %v1866
        %v1868 = vpop.f32.mrf.mxu0
        %v1869 = vadd.f32 0.0, %v1868
        %v1870 = vpop.f32.mrf.mxu0
        %v1871 = vadd.f32 0.0, %v1870
        %1872 = vmatprep.mubr.bf16.mxu0 0
        %1873 = vmatmul.mubr.bf16.gmra.mxu0 %v1329
        %v1874 = vpop.f32.mrf.mxu0
        %v1875 = vadd.f32 0.0, %v1874
        %v1876 = vpop.f32.mrf.mxu0
        %v1877 = vadd.f32 0.0, %v1876
        %v1878 = vpop.f32.mrf.mxu0
        %v1879 = vadd.f32 0.0, %v1878
        %v1880 = vpop.f32.mrf.mxu0
        %v1881 = vadd.f32 0.0, %v1880
        %1882 = vmatprep.mubr.bf16.mxu0 0
        %1883 = vmatmul.mubr.bf16.gmra.mxu0 %v1330
        %v1884 = vpop.f32.mrf.mxu0
        %v1885 = vadd.f32 0.0, %v1884
        %v1886 = vpop.f32.mrf.mxu0
        %v1887 = vadd.f32 0.0, %v1886
        %v1888 = vpop.f32.mrf.mxu0
        %v1889 = vadd.f32 0.0, %v1888
        %v1890 = vpop.f32.mrf.mxu0
        %v1891 = vadd.f32 0.0, %v1890
        %1892 = vdwg.mxu0
        %v1893 = vld [vmem:[%s988] sm:$0xff]
        %v1894 = vld [vmem:[%s988 + $0x8] sm:$0xff]
        %v1895 = vld [vmem:[%s988 + $0x10] sm:$0xff]
        %v1896 = vld [vmem:[%s988 + $0x18] sm:$0xff]
        %v1897 = vld [vmem:[%s988 + $0x20] sm:$0xff]
        %v1898 = vld [vmem:[%s988 + $0x28] sm:$0xff]
        %v1899 = vld [vmem:[%s988 + $0x30] sm:$0xff]
        %v1900 = vld [vmem:[%s988 + $0x38] sm:$0xff]
        %v1901 = vld [vmem:[%s988 + $0x40] sm:$0xff]
        %v1902 = vld [vmem:[%s988 + $0x48] sm:$0xff]
        %v1903 = vld [vmem:[%s988 + $0x50] sm:$0xff]
        %v1904 = vld [vmem:[%s988 + $0x58] sm:$0xff]
        %v1905 = vld [vmem:[%s988 + $0x60] sm:$0xff]
        %v1906 = vld [vmem:[%s988 + $0x68] sm:$0xff]
        %v1907 = vld [vmem:[%s988 + $0x70] sm:$0xff]
        %v1908 = vld [vmem:[%s988 + $0x78] sm:$0xff]
        %v1909 = vld [vmem:[%s988 + $0x80] sm:$0xff]
        %v1910 = vld [vmem:[%s988 + $0x88] sm:$0xff]
        %v1911 = vld [vmem:[%s988 + $0x90] sm:$0xff]
        %v1912 = vld [vmem:[%s988 + $0x98] sm:$0xff]
        %v1913 = vld [vmem:[%s988 + $0xa0] sm:$0xff]
        %v1914 = vld [vmem:[%s988 + $0xa8] sm:$0xff]
        %v1915 = vld [vmem:[%s988 + $0xb0] sm:$0xff]
        %v1916 = vld [vmem:[%s988 + $0xb8] sm:$0xff]
        %v1917 = vld [vmem:[%s988 + $0xc0] sm:$0xff]
        %v1918 = vld [vmem:[%s988 + $0xc8] sm:$0xff]
        %v1919 = vld [vmem:[%s988 + $0xd0] sm:$0xff]
        %v1920 = vld [vmem:[%s988 + $0xd8] sm:$0xff]
        %v1921 = vld [vmem:[%s988 + $0xe0] sm:$0xff]
        %v1922 = vld [vmem:[%s988 + $0xe8] sm:$0xff]
        %v1923 = vld [vmem:[%s988 + $0xf0] sm:$0xff]
        %v1924 = vld [vmem:[%s988 + $0xf8] sm:$0xff]
        %vm1925 = vnez %v1893
        %vm1926 = vnez %v1894
        %vm1927 = vnez %v1895
        %vm1928 = vnez %v1896
        %vm1929 = vnez %v1897
        %vm1930 = vnez %v1898
        %vm1931 = vnez %v1899
        %vm1932 = vnez %v1900
        %vm1933 = vnez %v1901
        %vm1934 = vnez %v1902
        %vm1935 = vnez %v1903
        %vm1936 = vnez %v1904
        %vm1937 = vnez %v1905
        %vm1938 = vnez %v1906
        %vm1939 = vnez %v1907
        %vm1940 = vnez %v1908
        %vm1941 = vnez %v1909
        %vm1942 = vnez %v1910
        %vm1943 = vnez %v1911
        %vm1944 = vnez %v1912
        %vm1945 = vnez %v1913
        %vm1946 = vnez %v1914
        %vm1947 = vnez %v1915
        %vm1948 = vnez %v1916
        %vm1949 = vnez %v1917
        %vm1950 = vnez %v1918
        %vm1951 = vnez %v1919
        %vm1952 = vnez %v1920
        %vm1953 = vnez %v1921
        %vm1954 = vnez %v1922
        %vm1955 = vnez %v1923
        %vm1956 = vnez %v1924
        %v1957 = vsel %vm1925, 16843009, 0
        %v1958 = vsel %vm1926, 16843009, 0
        %v1959 = vsel %vm1927, 16843009, 0
        %v1960 = vsel %vm1928, 16843009, 0
        %v1961 = vsel %vm1929, 16843009, 0
        %v1962 = vsel %vm1930, 16843009, 0
        %v1963 = vsel %vm1931, 16843009, 0
        %v1964 = vsel %vm1932, 16843009, 0
        %v1965 = vsel %vm1933, 16843009, 0
        %v1966 = vsel %vm1934, 16843009, 0
        %v1967 = vsel %vm1935, 16843009, 0
        %v1968 = vsel %vm1936, 16843009, 0
        %v1969 = vsel %vm1937, 16843009, 0
        %v1970 = vsel %vm1938, 16843009, 0
        %v1971 = vsel %vm1939, 16843009, 0
        %v1972 = vsel %vm1940, 16843009, 0
        %v1973 = vsel %vm1941, 16843009, 0
        %v1974 = vsel %vm1942, 16843009, 0
        %v1975 = vsel %vm1943, 16843009, 0
        %v1976 = vsel %vm1944, 16843009, 0
        %v1977 = vsel %vm1945, 16843009, 0
        %v1978 = vsel %vm1946, 16843009, 0
        %v1979 = vsel %vm1947, 16843009, 0
        %v1980 = vsel %vm1948, 16843009, 0
        %v1981 = vsel %vm1949, 16843009, 0
        %v1982 = vsel %vm1950, 16843009, 0
        %v1983 = vsel %vm1951, 16843009, 0
        %v1984 = vsel %vm1952, 16843009, 0
        %v1985 = vsel %vm1953, 16843009, 0
        %v1986 = vsel %vm1954, 16843009, 0
        %v1987 = vsel %vm1955, 16843009, 0
        %v1988 = vsel %vm1956, 16843009, 0
        %v1989 = vunpack.c.0.s8 %v1957
        %v1990 = vunpack.c.0.s8 %v1958
        %v1991 = vunpack.c.0.s8 %v1959
        %v1992 = vunpack.c.0.s8 %v1960
        %v1993 = vunpack.c.1.s8 %v1957
        %v1994 = vunpack.c.1.s8 %v1958
        %v1995 = vunpack.c.1.s8 %v1959
        %v1996 = vunpack.c.1.s8 %v1960
        %v1997 = vunpack.c.2.s8 %v1957
        %v1998 = vunpack.c.2.s8 %v1958
        %v1999 = vunpack.c.2.s8 %v1959
        %v2000 = vunpack.c.2.s8 %v1960
        %v2001 = vunpack.c.3.s8 %v1957
        %v2002 = vunpack.c.3.s8 %v1958
        %v2003 = vunpack.c.3.s8 %v1959
        %v2004 = vunpack.c.3.s8 %v1960
        %v2005 = vunpack.c.0.s8 %v1961
        %v2006 = vunpack.c.0.s8 %v1962
        %v2007 = vunpack.c.0.s8 %v1963
        %v2008 = vunpack.c.0.s8 %v1964
        %v2009 = vunpack.c.1.s8 %v1961
        %v2010 = vunpack.c.1.s8 %v1962
        %v2011 = vunpack.c.1.s8 %v1963
        %v2012 = vunpack.c.1.s8 %v1964
        %v2013 = vunpack.c.2.s8 %v1961
        %v2014 = vunpack.c.2.s8 %v1962
        %v2015 = vunpack.c.2.s8 %v1963
        %v2016 = vunpack.c.2.s8 %v1964
        %v2017 = vunpack.c.3.s8 %v1961
        %v2018 = vunpack.c.3.s8 %v1962
        %v2019 = vunpack.c.3.s8 %v1963
        %v2020 = vunpack.c.3.s8 %v1964
        %v2021 = vunpack.c.0.s8 %v1965
        %v2022 = vunpack.c.0.s8 %v1966
        %v2023 = vunpack.c.0.s8 %v1967
        %v2024 = vunpack.c.0.s8 %v1968
        %v2025 = vunpack.c.1.s8 %v1965
        %v2026 = vunpack.c.1.s8 %v1966
        %v2027 = vunpack.c.1.s8 %v1967
        %v2028 = vunpack.c.1.s8 %v1968
        %v2029 = vunpack.c.2.s8 %v1965
        %v2030 = vunpack.c.2.s8 %v1966
        %v2031 = vunpack.c.2.s8 %v1967
        %v2032 = vunpack.c.2.s8 %v1968
        %v2033 = vunpack.c.3.s8 %v1965
        %v2034 = vunpack.c.3.s8 %v1966
        %v2035 = vunpack.c.3.s8 %v1967
        %v2036 = vunpack.c.3.s8 %v1968
        %v2037 = vunpack.c.0.s8 %v1969
        %v2038 = vunpack.c.0.s8 %v1970
        %v2039 = vunpack.c.0.s8 %v1971
        %v2040 = vunpack.c.0.s8 %v1972
        %v2041 = vunpack.c.1.s8 %v1969
        %v2042 = vunpack.c.1.s8 %v1970
        %v2043 = vunpack.c.1.s8 %v1971
        %v2044 = vunpack.c.1.s8 %v1972
        %v2045 = vunpack.c.2.s8 %v1969
        %v2046 = vunpack.c.2.s8 %v1970
        %v2047 = vunpack.c.2.s8 %v1971
        %v2048 = vunpack.c.2.s8 %v1972
        %v2049 = vunpack.c.3.s8 %v1969
        %v2050 = vunpack.c.3.s8 %v1970
        %v2051 = vunpack.c.3.s8 %v1971
        %v2052 = vunpack.c.3.s8 %v1972
        %v2053 = vunpack.c.0.s8 %v1973
        %v2054 = vunpack.c.0.s8 %v1974
        %v2055 = vunpack.c.0.s8 %v1975
        %v2056 = vunpack.c.0.s8 %v1976
        %v2057 = vunpack.c.1.s8 %v1973
        %v2058 = vunpack.c.1.s8 %v1974
        %v2059 = vunpack.c.1.s8 %v1975
        %v2060 = vunpack.c.1.s8 %v1976
        %v2061 = vunpack.c.2.s8 %v1973
        %v2062 = vunpack.c.2.s8 %v1974
        %v2063 = vunpack.c.2.s8 %v1975
        %v2064 = vunpack.c.2.s8 %v1976
        %v2065 = vunpack.c.3.s8 %v1973
        %v2066 = vunpack.c.3.s8 %v1974
        %v2067 = vunpack.c.3.s8 %v1975
        %v2068 = vunpack.c.3.s8 %v1976
        %v2069 = vunpack.c.0.s8 %v1977
        %v2070 = vunpack.c.0.s8 %v1978
        %v2071 = vunpack.c.0.s8 %v1979
        %v2072 = vunpack.c.0.s8 %v1980
        %v2073 = vunpack.c.1.s8 %v1977
        %v2074 = vunpack.c.1.s8 %v1978
        %v2075 = vunpack.c.1.s8 %v1979
        %v2076 = vunpack.c.1.s8 %v1980
        %v2077 = vunpack.c.2.s8 %v1977
        %v2078 = vunpack.c.2.s8 %v1978
        %v2079 = vunpack.c.2.s8 %v1979
        %v2080 = vunpack.c.2.s8 %v1980
        %v2081 = vunpack.c.3.s8 %v1977
        %v2082 = vunpack.c.3.s8 %v1978
        %v2083 = vunpack.c.3.s8 %v1979
        %v2084 = vunpack.c.3.s8 %v1980
        %v2085 = vunpack.c.0.s8 %v1981
        %v2086 = vunpack.c.0.s8 %v1982
        %v2087 = vunpack.c.0.s8 %v1983
        %v2088 = vunpack.c.0.s8 %v1984
        %v2089 = vunpack.c.1.s8 %v1981
        %v2090 = vunpack.c.1.s8 %v1982
        %v2091 = vunpack.c.1.s8 %v1983
        %v2092 = vunpack.c.1.s8 %v1984
        %v2093 = vunpack.c.2.s8 %v1981
        %v2094 = vunpack.c.2.s8 %v1982
        %v2095 = vunpack.c.2.s8 %v1983
        %v2096 = vunpack.c.2.s8 %v1984
        %v2097 = vunpack.c.3.s8 %v1981
        %v2098 = vunpack.c.3.s8 %v1982
        %v2099 = vunpack.c.3.s8 %v1983
        %v2100 = vunpack.c.3.s8 %v1984
        %v2101 = vunpack.c.0.s8 %v1985
        %v2102 = vunpack.c.0.s8 %v1986
        %v2103 = vunpack.c.0.s8 %v1987
        %v2104 = vunpack.c.0.s8 %v1988
        %v2105 = vunpack.c.1.s8 %v1985
        %v2106 = vunpack.c.1.s8 %v1986
        %v2107 = vunpack.c.1.s8 %v1987
        %v2108 = vunpack.c.1.s8 %v1988
        %v2109 = vunpack.c.2.s8 %v1985
        %v2110 = vunpack.c.2.s8 %v1986
        %v2111 = vunpack.c.2.s8 %v1987
        %v2112 = vunpack.c.2.s8 %v1988
        %v2113 = vunpack.c.3.s8 %v1985
        %v2114 = vunpack.c.3.s8 %v1986
        %v2115 = vunpack.c.3.s8 %v1987
        %v2116 = vunpack.c.3.s8 %v1988
        %v2117 = vpack.c.b16 %v1990, %v1989
        %v2118 = vpack.c.b16 %v1992, %v1991
        %v2119 = vpack.c.b8 %v2118, %v2117
        %v2120 = vpack.c.b16 %v1994, %v1993
        %v2121 = vpack.c.b16 %v1996, %v1995
        %v2122 = vpack.c.b8 %v2121, %v2120
        %v2123 = vpack.c.b16 %v1998, %v1997
        %v2124 = vpack.c.b16 %v2000, %v1999
        %v2125 = vpack.c.b8 %v2124, %v2123
        %v2126 = vpack.c.b16 %v2002, %v2001
        %v2127 = vpack.c.b16 %v2004, %v2003
        %v2128 = vpack.c.b8 %v2127, %v2126
        %v2129 = vpack.c.b16 %v2006, %v2005
        %v2130 = vpack.c.b16 %v2008, %v2007
        %v2131 = vpack.c.b8 %v2130, %v2129
        %v2132 = vpack.c.b16 %v2010, %v2009
        %v2133 = vpack.c.b16 %v2012, %v2011
        %v2134 = vpack.c.b8 %v2133, %v2132
        %v2135 = vpack.c.b16 %v2014, %v2013
        %v2136 = vpack.c.b16 %v2016, %v2015
        %v2137 = vpack.c.b8 %v2136, %v2135
        %v2138 = vpack.c.b16 %v2018, %v2017
        %v2139 = vpack.c.b16 %v2020, %v2019
        %v2140 = vpack.c.b8 %v2139, %v2138
        %v2141 = vpack.c.b16 %v2022, %v2021
        %v2142 = vpack.c.b16 %v2024, %v2023
        %v2143 = vpack.c.b8 %v2142, %v2141
        %v2144 = vpack.c.b16 %v2026, %v2025
        %v2145 = vpack.c.b16 %v2028, %v2027
        %v2146 = vpack.c.b8 %v2145, %v2144
        %v2147 = vpack.c.b16 %v2030, %v2029
        %v2148 = vpack.c.b16 %v2032, %v2031
        %v2149 = vpack.c.b8 %v2148, %v2147
        %v2150 = vpack.c.b16 %v2034, %v2033
        %v2151 = vpack.c.b16 %v2036, %v2035
        %v2152 = vpack.c.b8 %v2151, %v2150
        %v2153 = vpack.c.b16 %v2038, %v2037
        %v2154 = vpack.c.b16 %v2040, %v2039
        %v2155 = vpack.c.b8 %v2154, %v2153
        %v2156 = vpack.c.b16 %v2042, %v2041
        %v2157 = vpack.c.b16 %v2044, %v2043
        %v2158 = vpack.c.b8 %v2157, %v2156
        %v2159 = vpack.c.b16 %v2046, %v2045
        %v2160 = vpack.c.b16 %v2048, %v2047
        %v2161 = vpack.c.b8 %v2160, %v2159
        %v2162 = vpack.c.b16 %v2050, %v2049
        %v2163 = vpack.c.b16 %v2052, %v2051
        %v2164 = vpack.c.b8 %v2163, %v2162
        %v2165 = vpack.c.b16 %v2054, %v2053
        %v2166 = vpack.c.b16 %v2056, %v2055
        %v2167 = vpack.c.b8 %v2166, %v2165
        %v2168 = vpack.c.b16 %v2058, %v2057
        %v2169 = vpack.c.b16 %v2060, %v2059
        %v2170 = vpack.c.b8 %v2169, %v2168
        %v2171 = vpack.c.b16 %v2062, %v2061
        %v2172 = vpack.c.b16 %v2064, %v2063
        %v2173 = vpack.c.b8 %v2172, %v2171
        %v2174 = vpack.c.b16 %v2066, %v2065
        %v2175 = vpack.c.b16 %v2068, %v2067
        %v2176 = vpack.c.b8 %v2175, %v2174
        %v2177 = vpack.c.b16 %v2070, %v2069
        %v2178 = vpack.c.b16 %v2072, %v2071
        %v2179 = vpack.c.b8 %v2178, %v2177
        %v2180 = vpack.c.b16 %v2074, %v2073
        %v2181 = vpack.c.b16 %v2076, %v2075
        %v2182 = vpack.c.b8 %v2181, %v2180
        %v2183 = vpack.c.b16 %v2078, %v2077
        %v2184 = vpack.c.b16 %v2080, %v2079
        %v2185 = vpack.c.b8 %v2184, %v2183
        %v2186 = vpack.c.b16 %v2082, %v2081
        %v2187 = vpack.c.b16 %v2084, %v2083
        %v2188 = vpack.c.b8 %v2187, %v2186
        %v2189 = vpack.c.b16 %v2086, %v2085
        %v2190 = vpack.c.b16 %v2088, %v2087
        %v2191 = vpack.c.b8 %v2190, %v2189
        %v2192 = vpack.c.b16 %v2090, %v2089
        %v2193 = vpack.c.b16 %v2092, %v2091
        %v2194 = vpack.c.b8 %v2193, %v2192
        %v2195 = vpack.c.b16 %v2094, %v2093
        %v2196 = vpack.c.b16 %v2096, %v2095
        %v2197 = vpack.c.b8 %v2196, %v2195
        %v2198 = vpack.c.b16 %v2098, %v2097
        %v2199 = vpack.c.b16 %v2100, %v2099
        %v2200 = vpack.c.b8 %v2199, %v2198
        %v2201 = vpack.c.b16 %v2102, %v2101
        %v2202 = vpack.c.b16 %v2104, %v2103
        %v2203 = vpack.c.b8 %v2202, %v2201
        %v2204 = vpack.c.b16 %v2106, %v2105
        %v2205 = vpack.c.b16 %v2108, %v2107
        %v2206 = vpack.c.b8 %v2205, %v2204
        %v2207 = vpack.c.b16 %v2110, %v2109
        %v2208 = vpack.c.b16 %v2112, %v2111
        %v2209 = vpack.c.b8 %v2208, %v2207
        %v2210 = vpack.c.b16 %v2114, %v2113
        %v2211 = vpack.c.b16 %v2116, %v2115
        %v2212 = vpack.c.b8 %v2211, %v2210
        %vm2213 = vnez %v2119
        %vm2214 = vnez %v2122
        %vm2215 = vnez %v2125
        %vm2216 = vnez %v2128
        %vm2217 = vnez %v2131
        %vm2218 = vnez %v2134
        %vm2219 = vnez %v2137
        %vm2220 = vnez %v2140
        %vm2221 = vnez %v2143
        %vm2222 = vnez %v2146
        %vm2223 = vnez %v2149
        %vm2224 = vnez %v2152
        %vm2225 = vnez %v2155
        %vm2226 = vnez %v2158
        %vm2227 = vnez %v2161
        %vm2228 = vnez %v2164
        %vm2229 = vnez %v2167
        %vm2230 = vnez %v2170
        %vm2231 = vnez %v2173
        %vm2232 = vnez %v2176
        %vm2233 = vnez %v2179
        %vm2234 = vnez %v2182
        %vm2235 = vnez %v2185
        %vm2236 = vnez %v2188
        %vm2237 = vnez %v2191
        %vm2238 = vnez %v2194
        %vm2239 = vnez %v2197
        %vm2240 = vnez %v2200
        %vm2241 = vnez %v2203
        %vm2242 = vnez %v2206
        %vm2243 = vnez %v2209
        %vm2244 = vnez %v2212
        %v2245 = vsel %vm2213, 16843009, 0
        %v2246 = vsel %vm2214, 16843009, 0
        %v2247 = vsel %vm2215, 16843009, 0
        %v2248 = vsel %vm2216, 16843009, 0
        %v2249 = vsel %vm2217, 16843009, 0
        %v2250 = vsel %vm2218, 16843009, 0
        %v2251 = vsel %vm2219, 16843009, 0
        %v2252 = vsel %vm2220, 16843009, 0
        %v2253 = vsel %vm2221, 16843009, 0
        %v2254 = vsel %vm2222, 16843009, 0
        %v2255 = vsel %vm2223, 16843009, 0
        %v2256 = vsel %vm2224, 16843009, 0
        %v2257 = vsel %vm2225, 16843009, 0
        %v2258 = vsel %vm2226, 16843009, 0
        %v2259 = vsel %vm2227, 16843009, 0
        %v2260 = vsel %vm2228, 16843009, 0
        %v2261 = vsel %vm2229, 16843009, 0
        %v2262 = vsel %vm2230, 16843009, 0
        %v2263 = vsel %vm2231, 16843009, 0
        %v2264 = vsel %vm2232, 16843009, 0
        %v2265 = vsel %vm2233, 16843009, 0
        %v2266 = vsel %vm2234, 16843009, 0
        %v2267 = vsel %vm2235, 16843009, 0
        %v2268 = vsel %vm2236, 16843009, 0
        %v2269 = vsel %vm2237, 16843009, 0
        %v2270 = vsel %vm2238, 16843009, 0
        %v2271 = vsel %vm2239, 16843009, 0
        %v2272 = vsel %vm2240, 16843009, 0
        %v2273 = vsel %vm2241, 16843009, 0
        %v2274 = vsel %vm2242, 16843009, 0
        %v2275 = vsel %vm2243, 16843009, 0
        %v2276 = vsel %vm2244, 16843009, 0
        %v2277 = vunpack.c.0.s8 %v2245
        %v2278 = vunpack.c.1.s8 %v2245
        %v2279 = vunpack.c.2.s8 %v2245
        %v2280 = vunpack.c.3.s8 %v2245
        %v2281 = vunpack.c.0.s8 %v2246
        %v2282 = vunpack.c.1.s8 %v2246
        %v2283 = vunpack.c.2.s8 %v2246
        %v2284 = vunpack.c.3.s8 %v2246
        %v2285 = vunpack.c.0.s8 %v2247
        %v2286 = vunpack.c.1.s8 %v2247
        %v2287 = vunpack.c.2.s8 %v2247
        %v2288 = vunpack.c.3.s8 %v2247
        %v2289 = vunpack.c.0.s8 %v2248
        %v2290 = vunpack.c.1.s8 %v2248
        %v2291 = vunpack.c.2.s8 %v2248
        %v2292 = vunpack.c.3.s8 %v2248
        %v2293 = vunpack.c.0.s8 %v2249
        %v2294 = vunpack.c.1.s8 %v2249
        %v2295 = vunpack.c.2.s8 %v2249
        %v2296 = vunpack.c.3.s8 %v2249
        %v2297 = vunpack.c.0.s8 %v2250
        %v2298 = vunpack.c.1.s8 %v2250
        %v2299 = vunpack.c.2.s8 %v2250
        %v2300 = vunpack.c.3.s8 %v2250
        %v2301 = vunpack.c.0.s8 %v2251
        %v2302 = vunpack.c.1.s8 %v2251
        %v2303 = vunpack.c.2.s8 %v2251
        %v2304 = vunpack.c.3.s8 %v2251
        %v2305 = vunpack.c.0.s8 %v2252
        %v2306 = vunpack.c.1.s8 %v2252
        %v2307 = vunpack.c.2.s8 %v2252
        %v2308 = vunpack.c.3.s8 %v2252
        %v2309 = vunpack.c.0.s8 %v2253
        %v2310 = vunpack.c.1.s8 %v2253
        %v2311 = vunpack.c.2.s8 %v2253
        %v2312 = vunpack.c.3.s8 %v2253
        %v2313 = vunpack.c.0.s8 %v2254
        %v2314 = vunpack.c.1.s8 %v2254
        %v2315 = vunpack.c.2.s8 %v2254
        %v2316 = vunpack.c.3.s8 %v2254
        %v2317 = vunpack.c.0.s8 %v2255
        %v2318 = vunpack.c.1.s8 %v2255
        %v2319 = vunpack.c.2.s8 %v2255
        %v2320 = vunpack.c.3.s8 %v2255
        %v2321 = vunpack.c.0.s8 %v2256
        %v2322 = vunpack.c.1.s8 %v2256
        %v2323 = vunpack.c.2.s8 %v2256
        %v2324 = vunpack.c.3.s8 %v2256
        %v2325 = vunpack.c.0.s8 %v2257
        %v2326 = vunpack.c.1.s8 %v2257
        %v2327 = vunpack.c.2.s8 %v2257
        %v2328 = vunpack.c.3.s8 %v2257
        %v2329 = vunpack.c.0.s8 %v2258
        %v2330 = vunpack.c.1.s8 %v2258
        %v2331 = vunpack.c.2.s8 %v2258
        %v2332 = vunpack.c.3.s8 %v2258
        %v2333 = vunpack.c.0.s8 %v2259
        %v2334 = vunpack.c.1.s8 %v2259
        %v2335 = vunpack.c.2.s8 %v2259
        %v2336 = vunpack.c.3.s8 %v2259
        %v2337 = vunpack.c.0.s8 %v2260
        %v2338 = vunpack.c.1.s8 %v2260
        %v2339 = vunpack.c.2.s8 %v2260
        %v2340 = vunpack.c.3.s8 %v2260
        %v2341 = vunpack.c.0.s8 %v2261
        %v2342 = vunpack.c.1.s8 %v2261
        %v2343 = vunpack.c.2.s8 %v2261
        %v2344 = vunpack.c.3.s8 %v2261
        %v2345 = vunpack.c.0.s8 %v2262
        %v2346 = vunpack.c.1.s8 %v2262
        %v2347 = vunpack.c.2.s8 %v2262
        %v2348 = vunpack.c.3.s8 %v2262
        %v2349 = vunpack.c.0.s8 %v2263
        %v2350 = vunpack.c.1.s8 %v2263
        %v2351 = vunpack.c.2.s8 %v2263
        %v2352 = vunpack.c.3.s8 %v2263
        %v2353 = vunpack.c.0.s8 %v2264
        %v2354 = vunpack.c.1.s8 %v2264
        %v2355 = vunpack.c.2.s8 %v2264
        %v2356 = vunpack.c.3.s8 %v2264
        %v2357 = vunpack.c.0.s8 %v2265
        %v2358 = vunpack.c.1.s8 %v2265
        %v2359 = vunpack.c.2.s8 %v2265
        %v2360 = vunpack.c.3.s8 %v2265
        %v2361 = vunpack.c.0.s8 %v2266
        %v2362 = vunpack.c.1.s8 %v2266
        %v2363 = vunpack.c.2.s8 %v2266
        %v2364 = vunpack.c.3.s8 %v2266
        %v2365 = vunpack.c.0.s8 %v2267
        %v2366 = vunpack.c.1.s8 %v2267
        %v2367 = vunpack.c.2.s8 %v2267
        %v2368 = vunpack.c.3.s8 %v2267
        %v2369 = vunpack.c.0.s8 %v2268
        %v2370 = vunpack.c.1.s8 %v2268
        %v2371 = vunpack.c.2.s8 %v2268
        %v2372 = vunpack.c.3.s8 %v2268
        %v2373 = vunpack.c.0.s8 %v2269
        %v2374 = vunpack.c.1.s8 %v2269
        %v2375 = vunpack.c.2.s8 %v2269
        %v2376 = vunpack.c.3.s8 %v2269
        %v2377 = vunpack.c.0.s8 %v2270
        %v2378 = vunpack.c.1.s8 %v2270
        %v2379 = vunpack.c.2.s8 %v2270
        %v2380 = vunpack.c.3.s8 %v2270
        %v2381 = vunpack.c.0.s8 %v2271
        %v2382 = vunpack.c.1.s8 %v2271
        %v2383 = vunpack.c.2.s8 %v2271
        %v2384 = vunpack.c.3.s8 %v2271
        %v2385 = vunpack.c.0.s8 %v2272
        %v2386 = vunpack.c.1.s8 %v2272
        %v2387 = vunpack.c.2.s8 %v2272
        %v2388 = vunpack.c.3.s8 %v2272
        %v2389 = vunpack.c.0.s8 %v2273
        %v2390 = vunpack.c.1.s8 %v2273
        %v2391 = vunpack.c.2.s8 %v2273
        %v2392 = vunpack.c.3.s8 %v2273
        %v2393 = vunpack.c.0.s8 %v2274
        %v2394 = vunpack.c.1.s8 %v2274
        %v2395 = vunpack.c.2.s8 %v2274
        %v2396 = vunpack.c.3.s8 %v2274
        %v2397 = vunpack.c.0.s8 %v2275
        %v2398 = vunpack.c.1.s8 %v2275
        %v2399 = vunpack.c.2.s8 %v2275
        %v2400 = vunpack.c.3.s8 %v2275
        %v2401 = vunpack.c.0.s8 %v2276
        %v2402 = vunpack.c.1.s8 %v2276
        %v2403 = vunpack.c.2.s8 %v2276
        %v2404 = vunpack.c.3.s8 %v2276
        %vm2405 = vcmp.ne.s32.totalorder %v2277, 0
        %vm2406 = vcmp.ne.s32.totalorder %v2278, 0
        %vm2407 = vcmp.ne.s32.totalorder %v2279, 0
        %vm2408 = vcmp.ne.s32.totalorder %v2280, 0
        %vm2409 = vcmp.ne.s32.totalorder %v2281, 0
        %vm2410 = vcmp.ne.s32.totalorder %v2282, 0
        %vm2411 = vcmp.ne.s32.totalorder %v2283, 0
        %vm2412 = vcmp.ne.s32.totalorder %v2284, 0
        %vm2413 = vcmp.ne.s32.totalorder %v2285, 0
        %vm2414 = vcmp.ne.s32.totalorder %v2286, 0
        %vm2415 = vcmp.ne.s32.totalorder %v2287, 0
        %vm2416 = vcmp.ne.s32.totalorder %v2288, 0
        %vm2417 = vcmp.ne.s32.totalorder %v2289, 0
        %vm2418 = vcmp.ne.s32.totalorder %v2290, 0
        %vm2419 = vcmp.ne.s32.totalorder %v2291, 0
        %vm2420 = vcmp.ne.s32.totalorder %v2292, 0
        %vm2421 = vcmp.ne.s32.totalorder %v2293, 0
        %vm2422 = vcmp.ne.s32.totalorder %v2294, 0
        %vm2423 = vcmp.ne.s32.totalorder %v2295, 0
        %vm2424 = vcmp.ne.s32.totalorder %v2296, 0
        %vm2425 = vcmp.ne.s32.totalorder %v2297, 0
        %vm2426 = vcmp.ne.s32.totalorder %v2298, 0
        %vm2427 = vcmp.ne.s32.totalorder %v2299, 0
        %vm2428 = vcmp.ne.s32.totalorder %v2300, 0
        %vm2429 = vcmp.ne.s32.totalorder %v2301, 0
        %vm2430 = vcmp.ne.s32.totalorder %v2302, 0
        %vm2431 = vcmp.ne.s32.totalorder %v2303, 0
        %vm2432 = vcmp.ne.s32.totalorder %v2304, 0
        %vm2433 = vcmp.ne.s32.totalorder %v2305, 0
        %vm2434 = vcmp.ne.s32.totalorder %v2306, 0
        %vm2435 = vcmp.ne.s32.totalorder %v2307, 0
        %vm2436 = vcmp.ne.s32.totalorder %v2308, 0
        %vm2437 = vcmp.ne.s32.totalorder %v2309, 0
        %vm2438 = vcmp.ne.s32.totalorder %v2310, 0
        %vm2439 = vcmp.ne.s32.totalorder %v2311, 0
        %vm2440 = vcmp.ne.s32.totalorder %v2312, 0
        %vm2441 = vcmp.ne.s32.totalorder %v2313, 0
        %vm2442 = vcmp.ne.s32.totalorder %v2314, 0
        %vm2443 = vcmp.ne.s32.totalorder %v2315, 0
        %vm2444 = vcmp.ne.s32.totalorder %v2316, 0
        %vm2445 = vcmp.ne.s32.totalorder %v2317, 0
        %vm2446 = vcmp.ne.s32.totalorder %v2318, 0
        %vm2447 = vcmp.ne.s32.totalorder %v2319, 0
        %vm2448 = vcmp.ne.s32.totalorder %v2320, 0
        %vm2449 = vcmp.ne.s32.totalorder %v2321, 0
        %vm2450 = vcmp.ne.s32.totalorder %v2322, 0
        %vm2451 = vcmp.ne.s32.totalorder %v2323, 0
        %vm2452 = vcmp.ne.s32.totalorder %v2324, 0
        %vm2453 = vcmp.ne.s32.totalorder %v2325, 0
        %vm2454 = vcmp.ne.s32.totalorder %v2326, 0
        %vm2455 = vcmp.ne.s32.totalorder %v2327, 0
        %vm2456 = vcmp.ne.s32.totalorder %v2328, 0
        %vm2457 = vcmp.ne.s32.totalorder %v2329, 0
        %vm2458 = vcmp.ne.s32.totalorder %v2330, 0
        %vm2459 = vcmp.ne.s32.totalorder %v2331, 0
        %vm2460 = vcmp.ne.s32.totalorder %v2332, 0
        %vm2461 = vcmp.ne.s32.totalorder %v2333, 0
        %vm2462 = vcmp.ne.s32.totalorder %v2334, 0
        %vm2463 = vcmp.ne.s32.totalorder %v2335, 0
        %vm2464 = vcmp.ne.s32.totalorder %v2336, 0
        %vm2465 = vcmp.ne.s32.totalorder %v2337, 0
        %vm2466 = vcmp.ne.s32.totalorder %v2338, 0
        %vm2467 = vcmp.ne.s32.totalorder %v2339, 0
        %vm2468 = vcmp.ne.s32.totalorder %v2340, 0
        %vm2469 = vcmp.ne.s32.totalorder %v2341, 0
        %vm2470 = vcmp.ne.s32.totalorder %v2342, 0
        %vm2471 = vcmp.ne.s32.totalorder %v2343, 0
        %vm2472 = vcmp.ne.s32.totalorder %v2344, 0
        %vm2473 = vcmp.ne.s32.totalorder %v2345, 0
        %vm2474 = vcmp.ne.s32.totalorder %v2346, 0
        %vm2475 = vcmp.ne.s32.totalorder %v2347, 0
        %vm2476 = vcmp.ne.s32.totalorder %v2348, 0
        %vm2477 = vcmp.ne.s32.totalorder %v2349, 0
        %vm2478 = vcmp.ne.s32.totalorder %v2350, 0
        %vm2479 = vcmp.ne.s32.totalorder %v2351, 0
        %vm2480 = vcmp.ne.s32.totalorder %v2352, 0
        %vm2481 = vcmp.ne.s32.totalorder %v2353, 0
        %vm2482 = vcmp.ne.s32.totalorder %v2354, 0
        %vm2483 = vcmp.ne.s32.totalorder %v2355, 0
        %vm2484 = vcmp.ne.s32.totalorder %v2356, 0
        %vm2485 = vcmp.ne.s32.totalorder %v2357, 0
        %vm2486 = vcmp.ne.s32.totalorder %v2358, 0
        %vm2487 = vcmp.ne.s32.totalorder %v2359, 0
        %vm2488 = vcmp.ne.s32.totalorder %v2360, 0
        %vm2489 = vcmp.ne.s32.totalorder %v2361, 0
        %vm2490 = vcmp.ne.s32.totalorder %v2362, 0
        %vm2491 = vcmp.ne.s32.totalorder %v2363, 0
        %vm2492 = vcmp.ne.s32.totalorder %v2364, 0
        %vm2493 = vcmp.ne.s32.totalorder %v2365, 0
        %vm2494 = vcmp.ne.s32.totalorder %v2366, 0
        %vm2495 = vcmp.ne.s32.totalorder %v2367, 0
        %vm2496 = vcmp.ne.s32.totalorder %v2368, 0
        %vm2497 = vcmp.ne.s32.totalorder %v2369, 0
        %vm2498 = vcmp.ne.s32.totalorder %v2370, 0
        %vm2499 = vcmp.ne.s32.totalorder %v2371, 0
        %vm2500 = vcmp.ne.s32.totalorder %v2372, 0
        %vm2501 = vcmp.ne.s32.totalorder %v2373, 0
        %vm2502 = vcmp.ne.s32.totalorder %v2374, 0
        %vm2503 = vcmp.ne.s32.totalorder %v2375, 0
        %vm2504 = vcmp.ne.s32.totalorder %v2376, 0
        %vm2505 = vcmp.ne.s32.totalorder %v2377, 0
        %vm2506 = vcmp.ne.s32.totalorder %v2378, 0
        %vm2507 = vcmp.ne.s32.totalorder %v2379, 0
        %vm2508 = vcmp.ne.s32.totalorder %v2380, 0
        %vm2509 = vcmp.ne.s32.totalorder %v2381, 0
        %vm2510 = vcmp.ne.s32.totalorder %v2382, 0
        %vm2511 = vcmp.ne.s32.totalorder %v2383, 0
        %vm2512 = vcmp.ne.s32.totalorder %v2384, 0
        %vm2513 = vcmp.ne.s32.totalorder %v2385, 0
        %vm2514 = vcmp.ne.s32.totalorder %v2386, 0
        %vm2515 = vcmp.ne.s32.totalorder %v2387, 0
        %vm2516 = vcmp.ne.s32.totalorder %v2388, 0
        %vm2517 = vcmp.ne.s32.totalorder %v2389, 0
        %vm2518 = vcmp.ne.s32.totalorder %v2390, 0
        %vm2519 = vcmp.ne.s32.totalorder %v2391, 0
        %vm2520 = vcmp.ne.s32.totalorder %v2392, 0
        %vm2521 = vcmp.ne.s32.totalorder %v2393, 0
        %vm2522 = vcmp.ne.s32.totalorder %v2394, 0
        %vm2523 = vcmp.ne.s32.totalorder %v2395, 0
        %vm2524 = vcmp.ne.s32.totalorder %v2396, 0
        %vm2525 = vcmp.ne.s32.totalorder %v2397, 0
        %vm2526 = vcmp.ne.s32.totalorder %v2398, 0
        %vm2527 = vcmp.ne.s32.totalorder %v2399, 0
        %vm2528 = vcmp.ne.s32.totalorder %v2400, 0
        %vm2529 = vcmp.ne.s32.totalorder %v2401, 0
        %vm2530 = vcmp.ne.s32.totalorder %v2402, 0
        %vm2531 = vcmp.ne.s32.totalorder %v2403, 0
        %vm2532 = vcmp.ne.s32.totalorder %v2404, 0
        %v2533 = vsel %vm2405, -1e+30, %v1542
        %v2534 = vsel %vm2406, -1e+30, %v1544
        %v2535 = vsel %vm2407, -1e+30, %v1735
        %v2536 = vsel %vm2408, -1e+30, %v1737
        %v2537 = vsel %vm2409, -1e+30, %v1546
        %v2538 = vsel %vm2410, -1e+30, %v1548
        %v2539 = vsel %vm2411, -1e+30, %v1739
        %v2540 = vsel %vm2412, -1e+30, %v1741
        %v2541 = vsel %vm2413, -1e+30, %v1552
        %v2542 = vsel %vm2414, -1e+30, %v1554
        %v2543 = vsel %vm2415, -1e+30, %v1745
        %v2544 = vsel %vm2416, -1e+30, %v1747
        %v2545 = vsel %vm2417, -1e+30, %v1556
        %v2546 = vsel %vm2418, -1e+30, %v1558
        %v2547 = vsel %vm2419, -1e+30, %v1749
        %v2548 = vsel %vm2420, -1e+30, %v1751
        %v2549 = vsel %vm2421, -1e+30, %v1562
        %v2550 = vsel %vm2422, -1e+30, %v1564
        %v2551 = vsel %vm2423, -1e+30, %v1755
        %v2552 = vsel %vm2424, -1e+30, %v1757
        %v2553 = vsel %vm2425, -1e+30, %v1566
        %v2554 = vsel %vm2426, -1e+30, %v1568
        %v2555 = vsel %vm2427, -1e+30, %v1759
        %v2556 = vsel %vm2428, -1e+30, %v1761
        %v2557 = vsel %vm2429, -1e+30, %v1572
        %v2558 = vsel %vm2430, -1e+30, %v1574
        %v2559 = vsel %vm2431, -1e+30, %v1765
        %v2560 = vsel %vm2432, -1e+30, %v1767
        %v2561 = vsel %vm2433, -1e+30, %v1576
        %v2562 = vsel %vm2434, -1e+30, %v1578
        %v2563 = vsel %vm2435, -1e+30, %v1769
        %v2564 = vsel %vm2436, -1e+30, %v1771
        %v2565 = vsel %vm2437, -1e+30, %v1582
        %v2566 = vsel %vm2438, -1e+30, %v1584
        %v2567 = vsel %vm2439, -1e+30, %v1775
        %v2568 = vsel %vm2440, -1e+30, %v1777
        %v2569 = vsel %vm2441, -1e+30, %v1586
        %v2570 = vsel %vm2442, -1e+30, %v1588
        %v2571 = vsel %vm2443, -1e+30, %v1779
        %v2572 = vsel %vm2444, -1e+30, %v1781
        %v2573 = vsel %vm2445, -1e+30, %v1592
        %v2574 = vsel %vm2446, -1e+30, %v1594
        %v2575 = vsel %vm2447, -1e+30, %v1785
        %v2576 = vsel %vm2448, -1e+30, %v1787
        %v2577 = vsel %vm2449, -1e+30, %v1596
        %v2578 = vsel %vm2450, -1e+30, %v1598
        %v2579 = vsel %vm2451, -1e+30, %v1789
        %v2580 = vsel %vm2452, -1e+30, %v1791
        %v2581 = vsel %vm2453, -1e+30, %v1602
        %v2582 = vsel %vm2454, -1e+30, %v1604
        %v2583 = vsel %vm2455, -1e+30, %v1795
        %v2584 = vsel %vm2456, -1e+30, %v1797
        %v2585 = vsel %vm2457, -1e+30, %v1606
        %v2586 = vsel %vm2458, -1e+30, %v1608
        %v2587 = vsel %vm2459, -1e+30, %v1799
        %v2588 = vsel %vm2460, -1e+30, %v1801
        %v2589 = vsel %vm2461, -1e+30, %v1612
        %v2590 = vsel %vm2462, -1e+30, %v1614
        %v2591 = vsel %vm2463, -1e+30, %v1805
        %v2592 = vsel %vm2464, -1e+30, %v1807
        %v2593 = vsel %vm2465, -1e+30, %v1616
        %v2594 = vsel %vm2466, -1e+30, %v1618
        %v2595 = vsel %vm2467, -1e+30, %v1809
        %v2596 = vsel %vm2468, -1e+30, %v1811
        %v2597 = vsel %vm2469, -1e+30, %v1622
        %v2598 = vsel %vm2470, -1e+30, %v1624
        %v2599 = vsel %vm2471, -1e+30, %v1815
        %v2600 = vsel %vm2472, -1e+30, %v1817
        %v2601 = vsel %vm2473, -1e+30, %v1626
        %v2602 = vsel %vm2474, -1e+30, %v1628
        %v2603 = vsel %vm2475, -1e+30, %v1819
        %v2604 = vsel %vm2476, -1e+30, %v1821
        %v2605 = vsel %vm2477, -1e+30, %v1632
        %v2606 = vsel %vm2478, -1e+30, %v1634
        %v2607 = vsel %vm2479, -1e+30, %v1825
        %v2608 = vsel %vm2480, -1e+30, %v1827
        %v2609 = vsel %vm2481, -1e+30, %v1636
        %v2610 = vsel %vm2482, -1e+30, %v1638
        %v2611 = vsel %vm2483, -1e+30, %v1829
        %v2612 = vsel %vm2484, -1e+30, %v1831
        %v2613 = vsel %vm2485, -1e+30, %v1642
        %v2614 = vsel %vm2486, -1e+30, %v1644
        %v2615 = vsel %vm2487, -1e+30, %v1835
        %v2616 = vsel %vm2488, -1e+30, %v1837
        %v2617 = vsel %vm2489, -1e+30, %v1646
        %v2618 = vsel %vm2490, -1e+30, %v1648
        %v2619 = vsel %vm2491, -1e+30, %v1839
        %v2620 = vsel %vm2492, -1e+30, %v1841
        %v2621 = vsel %vm2493, -1e+30, %v1652
        %v2622 = vsel %vm2494, -1e+30, %v1654
        %v2623 = vsel %vm2495, -1e+30, %v1845
        %v2624 = vsel %vm2496, -1e+30, %v1847
        %v2625 = vsel %vm2497, -1e+30, %v1656
        %v2626 = vsel %vm2498, -1e+30, %v1658
        %v2627 = vsel %vm2499, -1e+30, %v1849
        %v2628 = vsel %vm2500, -1e+30, %v1851
        %v2629 = vsel %vm2501, -1e+30, %v1662
        %v2630 = vsel %vm2502, -1e+30, %v1664
        %v2631 = vsel %vm2503, -1e+30, %v1855
        %v2632 = vsel %vm2504, -1e+30, %v1857
        %v2633 = vsel %vm2505, -1e+30, %v1666
        %v2634 = vsel %vm2506, -1e+30, %v1668
        %v2635 = vsel %vm2507, -1e+30, %v1859
        %v2636 = vsel %vm2508, -1e+30, %v1861
        %v2637 = vsel %vm2509, -1e+30, %v1672
        %v2638 = vsel %vm2510, -1e+30, %v1674
        %v2639 = vsel %vm2511, -1e+30, %v1865
        %v2640 = vsel %vm2512, -1e+30, %v1867
        %v2641 = vsel %vm2513, -1e+30, %v1676
        %v2642 = vsel %vm2514, -1e+30, %v1678
        %v2643 = vsel %vm2515, -1e+30, %v1869
        %v2644 = vsel %vm2516, -1e+30, %v1871
        %v2645 = vsel %vm2517, -1e+30, %v1682
        %v2646 = vsel %vm2518, -1e+30, %v1684
        %v2647 = vsel %vm2519, -1e+30, %v1875
        %v2648 = vsel %vm2520, -1e+30, %v1877
        %v2649 = vsel %vm2521, -1e+30, %v1686
        %v2650 = vsel %vm2522, -1e+30, %v1688
        %v2651 = vsel %vm2523, -1e+30, %v1879
        %v2652 = vsel %vm2524, -1e+30, %v1881
        %v2653 = vsel %vm2525, -1e+30, %v1692
        %v2654 = vsel %vm2526, -1e+30, %v1694
        %v2655 = vsel %vm2527, -1e+30, %v1885
        %v2656 = vsel %vm2528, -1e+30, %v1887
        %v2657 = vsel %vm2529, -1e+30, %v1696
        %v2658 = vsel %vm2530, -1e+30, %v1698
        %v2659 = vsel %vm2531, -1e+30, %v1889
        %v2660 = vsel %vm2532, -1e+30, %v1891
        %v2661 = vmax.f32 %v2533, %v2534
        %v2662 = vmax.f32 %v2661, %v2535
        %v2663 = vmax.f32 %v2662, %v2536
        %2664 = vmax.xlane.f32.xlu0 %v2663
        %v2665 = vpop.xlane.xlu0 %2664
        %v2666 = vmax.f32 %v2537, %v2538
        %v2667 = vmax.f32 %v2666, %v2539
        %v2668 = vmax.f32 %v2667, %v2540
        %2669 = vmax.xlane.f32.xlu0 %v2668
        %v2670 = vpop.xlane.xlu0 %2669
        %v2671 = vmax.f32 %v2541, %v2542
        %v2672 = vmax.f32 %v2671, %v2543
        %v2673 = vmax.f32 %v2672, %v2544
        %2674 = vmax.xlane.f32.xlu0 %v2673
        %v2675 = vpop.xlane.xlu0 %2674
        %v2676 = vmax.f32 %v2545, %v2546
        %v2677 = vmax.f32 %v2676, %v2547
        %v2678 = vmax.f32 %v2677, %v2548
        %2679 = vmax.xlane.f32.xlu0 %v2678
        %v2680 = vpop.xlane.xlu0 %2679
        %v2681 = vmax.f32 %v2549, %v2550
        %v2682 = vmax.f32 %v2681, %v2551
        %v2683 = vmax.f32 %v2682, %v2552
        %2684 = vmax.xlane.f32.xlu0 %v2683
        %v2685 = vpop.xlane.xlu0 %2684
        %v2686 = vmax.f32 %v2553, %v2554
        %v2687 = vmax.f32 %v2686, %v2555
        %v2688 = vmax.f32 %v2687, %v2556
        %2689 = vmax.xlane.f32.xlu0 %v2688
        %v2690 = vpop.xlane.xlu0 %2689
        %v2691 = vmax.f32 %v2557, %v2558
        %v2692 = vmax.f32 %v2691, %v2559
        %v2693 = vmax.f32 %v2692, %v2560
        %2694 = vmax.xlane.f32.xlu0 %v2693
        %v2695 = vpop.xlane.xlu0 %2694
        %v2696 = vmax.f32 %v2561, %v2562
        %v2697 = vmax.f32 %v2696, %v2563
        %v2698 = vmax.f32 %v2697, %v2564
        %2699 = vmax.xlane.f32.xlu0 %v2698
        %v2700 = vpop.xlane.xlu0 %2699
        %v2701 = vmax.f32 %v2565, %v2566
        %v2702 = vmax.f32 %v2701, %v2567
        %v2703 = vmax.f32 %v2702, %v2568
        %2704 = vmax.xlane.f32.xlu0 %v2703
        %v2705 = vpop.xlane.xlu0 %2704
        %v2706 = vmax.f32 %v2569, %v2570
        %v2707 = vmax.f32 %v2706, %v2571
        %v2708 = vmax.f32 %v2707, %v2572
        %2709 = vmax.xlane.f32.xlu0 %v2708
        %v2710 = vpop.xlane.xlu0 %2709
        %v2711 = vmax.f32 %v2573, %v2574
        %v2712 = vmax.f32 %v2711, %v2575
        %v2713 = vmax.f32 %v2712, %v2576
        %2714 = vmax.xlane.f32.xlu0 %v2713
        %v2715 = vpop.xlane.xlu0 %2714
        %v2716 = vmax.f32 %v2577, %v2578
        %v2717 = vmax.f32 %v2716, %v2579
        %v2718 = vmax.f32 %v2717, %v2580
        %2719 = vmax.xlane.f32.xlu0 %v2718
        %v2720 = vpop.xlane.xlu0 %2719
        %v2721 = vmax.f32 %v2581, %v2582
        %v2722 = vmax.f32 %v2721, %v2583
        %v2723 = vmax.f32 %v2722, %v2584
        %2724 = vmax.xlane.f32.xlu0 %v2723
        %v2725 = vpop.xlane.xlu0 %2724
        %v2726 = vmax.f32 %v2585, %v2586
        %v2727 = vmax.f32 %v2726, %v2587
        %v2728 = vmax.f32 %v2727, %v2588
        %2729 = vmax.xlane.f32.xlu0 %v2728
        %v2730 = vpop.xlane.xlu0 %2729
        %v2731 = vmax.f32 %v2589, %v2590
        %v2732 = vmax.f32 %v2731, %v2591
        %v2733 = vmax.f32 %v2732, %v2592
        %2734 = vmax.xlane.f32.xlu0 %v2733
        %v2735 = vpop.xlane.xlu0 %2734
        %v2736 = vmax.f32 %v2593, %v2594
        %v2737 = vmax.f32 %v2736, %v2595
        %v2738 = vmax.f32 %v2737, %v2596
        %2739 = vmax.xlane.f32.xlu0 %v2738
        %v2740 = vpop.xlane.xlu0 %2739
        %v2741 = vmax.f32 %v2597, %v2598
        %v2742 = vmax.f32 %v2741, %v2599
        %v2743 = vmax.f32 %v2742, %v2600
        %2744 = vmax.xlane.f32.xlu0 %v2743
        %v2745 = vpop.xlane.xlu0 %2744
        %v2746 = vmax.f32 %v2601, %v2602
        %v2747 = vmax.f32 %v2746, %v2603
        %v2748 = vmax.f32 %v2747, %v2604
        %2749 = vmax.xlane.f32.xlu0 %v2748
        %v2750 = vpop.xlane.xlu0 %2749
        %v2751 = vmax.f32 %v2605, %v2606
        %v2752 = vmax.f32 %v2751, %v2607
        %v2753 = vmax.f32 %v2752, %v2608
        %2754 = vmax.xlane.f32.xlu0 %v2753
        %v2755 = vpop.xlane.xlu0 %2754
        %v2756 = vmax.f32 %v2609, %v2610
        %v2757 = vmax.f32 %v2756, %v2611
        %v2758 = vmax.f32 %v2757, %v2612
        %2759 = vmax.xlane.f32.xlu0 %v2758
        %v2760 = vpop.xlane.xlu0 %2759
        %v2761 = vmax.f32 %v2613, %v2614
        %v2762 = vmax.f32 %v2761, %v2615
        %v2763 = vmax.f32 %v2762, %v2616
        %2764 = vmax.xlane.f32.xlu0 %v2763
        %v2765 = vpop.xlane.xlu0 %2764
        %v2766 = vmax.f32 %v2617, %v2618
        %v2767 = vmax.f32 %v2766, %v2619
        %v2768 = vmax.f32 %v2767, %v2620
        %2769 = vmax.xlane.f32.xlu0 %v2768
        %v2770 = vpop.xlane.xlu0 %2769
        %v2771 = vmax.f32 %v2621, %v2622
        %v2772 = vmax.f32 %v2771, %v2623
        %v2773 = vmax.f32 %v2772, %v2624
        %2774 = vmax.xlane.f32.xlu0 %v2773
        %v2775 = vpop.xlane.xlu0 %2774
        %v2776 = vmax.f32 %v2625, %v2626
        %v2777 = vmax.f32 %v2776, %v2627
        %v2778 = vmax.f32 %v2777, %v2628
        %2779 = vmax.xlane.f32.xlu0 %v2778
        %v2780 = vpop.xlane.xlu0 %2779
        %v2781 = vmax.f32 %v2629, %v2630
        %v2782 = vmax.f32 %v2781, %v2631
        %v2783 = vmax.f32 %v2782, %v2632
        %2784 = vmax.xlane.f32.xlu0 %v2783
        %v2785 = vpop.xlane.xlu0 %2784
        %v2786 = vmax.f32 %v2633, %v2634
        %v2787 = vmax.f32 %v2786, %v2635
        %v2788 = vmax.f32 %v2787, %v2636
        %2789 = vmax.xlane.f32.xlu0 %v2788
        %v2790 = vpop.xlane.xlu0 %2789
        %v2791 = vmax.f32 %v2637, %v2638
        %v2792 = vmax.f32 %v2791, %v2639
        %v2793 = vmax.f32 %v2792, %v2640
        %2794 = vmax.xlane.f32.xlu0 %v2793
        %v2795 = vpop.xlane.xlu0 %2794
        %v2796 = vmax.f32 %v2641, %v2642
        %v2797 = vmax.f32 %v2796, %v2643
        %v2798 = vmax.f32 %v2797, %v2644
        %2799 = vmax.xlane.f32.xlu0 %v2798
        %v2800 = vpop.xlane.xlu0 %2799
        %v2801 = vmax.f32 %v2645, %v2646
        %v2802 = vmax.f32 %v2801, %v2647
        %v2803 = vmax.f32 %v2802, %v2648
        %2804 = vmax.xlane.f32.xlu0 %v2803
        %v2805 = vpop.xlane.xlu0 %2804
        %v2806 = vmax.f32 %v2649, %v2650
        %v2807 = vmax.f32 %v2806, %v2651
        %v2808 = vmax.f32 %v2807, %v2652
        %2809 = vmax.xlane.f32.xlu0 %v2808
        %v2810 = vpop.xlane.xlu0 %2809
        %v2811 = vmax.f32 %v2653, %v2654
        %v2812 = vmax.f32 %v2811, %v2655
        %v2813 = vmax.f32 %v2812, %v2656
        %2814 = vmax.xlane.f32.xlu0 %v2813
        %v2815 = vpop.xlane.xlu0 %2814
        %v2816 = vmax.f32 %v2657, %v2658
        %v2817 = vmax.f32 %v2816, %v2659
        %v2818 = vmax.f32 %v2817, %v2660
        %2819 = vmax.xlane.f32.xlu0 %v2818
        %v2820 = vpop.xlane.xlu0 %2819
        %v2821 = vsub.f32 %v2533, %v2665
        %v2822 = vsub.f32 %v2534, %v2665
        %v2823 = vsub.f32 %v2535, %v2665
        %v2824 = vsub.f32 %v2536, %v2665
        %v2825 = vsub.f32 %v2537, %v2670
        %v2826 = vsub.f32 %v2538, %v2670
        %v2827 = vsub.f32 %v2539, %v2670
        %v2828 = vsub.f32 %v2540, %v2670
        %v2829 = vsub.f32 %v2541, %v2675
        %v2830 = vsub.f32 %v2542, %v2675
        %v2831 = vsub.f32 %v2543, %v2675
        %v2832 = vsub.f32 %v2544, %v2675
        %v2833 = vsub.f32 %v2545, %v2680
        %v2834 = vsub.f32 %v2546, %v2680
        %v2835 = vsub.f32 %v2547, %v2680
        %v2836 = vsub.f32 %v2548, %v2680
        %v2837 = vsub.f32 %v2549, %v2685
        %v2838 = vsub.f32 %v2550, %v2685
        %v2839 = vsub.f32 %v2551, %v2685
        %v2840 = vsub.f32 %v2552, %v2685
        %v2841 = vsub.f32 %v2553, %v2690
        %v2842 = vsub.f32 %v2554, %v2690
        %v2843 = vsub.f32 %v2555, %v2690
        %v2844 = vsub.f32 %v2556, %v2690
        %v2845 = vsub.f32 %v2557, %v2695
        %v2846 = vsub.f32 %v2558, %v2695
        %v2847 = vsub.f32 %v2559, %v2695
        %v2848 = vsub.f32 %v2560, %v2695
        %v2849 = vsub.f32 %v2561, %v2700
        %v2850 = vsub.f32 %v2562, %v2700
        %v2851 = vsub.f32 %v2563, %v2700
        %v2852 = vsub.f32 %v2564, %v2700
        %v2853 = vsub.f32 %v2565, %v2705
        %v2854 = vsub.f32 %v2566, %v2705
        %v2855 = vsub.f32 %v2567, %v2705
        %v2856 = vsub.f32 %v2568, %v2705
        %v2857 = vsub.f32 %v2569, %v2710
        %v2858 = vsub.f32 %v2570, %v2710
        %v2859 = vsub.f32 %v2571, %v2710
        %v2860 = vsub.f32 %v2572, %v2710
        %v2861 = vsub.f32 %v2573, %v2715
        %v2862 = vsub.f32 %v2574, %v2715
        %v2863 = vsub.f32 %v2575, %v2715
        %v2864 = vsub.f32 %v2576, %v2715
        %v2865 = vsub.f32 %v2577, %v2720
        %v2866 = vsub.f32 %v2578, %v2720
        %v2867 = vsub.f32 %v2579, %v2720
        %v2868 = vsub.f32 %v2580, %v2720
        %v2869 = vsub.f32 %v2581, %v2725
        %v2870 = vsub.f32 %v2582, %v2725
        %v2871 = vsub.f32 %v2583, %v2725
        %v2872 = vsub.f32 %v2584, %v2725
        %v2873 = vsub.f32 %v2585, %v2730
        %v2874 = vsub.f32 %v2586, %v2730
        %v2875 = vsub.f32 %v2587, %v2730
        %v2876 = vsub.f32 %v2588, %v2730
        %v2877 = vsub.f32 %v2589, %v2735
        %v2878 = vsub.f32 %v2590, %v2735
        %v2879 = vsub.f32 %v2591, %v2735
        %v2880 = vsub.f32 %v2592, %v2735
        %v2881 = vsub.f32 %v2593, %v2740
        %v2882 = vsub.f32 %v2594, %v2740
        %v2883 = vsub.f32 %v2595, %v2740
        %v2884 = vsub.f32 %v2596, %v2740
        %v2885 = vsub.f32 %v2597, %v2745
        %v2886 = vsub.f32 %v2598, %v2745
        %v2887 = vsub.f32 %v2599, %v2745
        %v2888 = vsub.f32 %v2600, %v2745
        %v2889 = vsub.f32 %v2601, %v2750
        %v2890 = vsub.f32 %v2602, %v2750
        %v2891 = vsub.f32 %v2603, %v2750
        %v2892 = vsub.f32 %v2604, %v2750
        %v2893 = vsub.f32 %v2605, %v2755
        %v2894 = vsub.f32 %v2606, %v2755
        %v2895 = vsub.f32 %v2607, %v2755
        %v2896 = vsub.f32 %v2608, %v2755
        %v2897 = vsub.f32 %v2609, %v2760
        %v2898 = vsub.f32 %v2610, %v2760
        %v2899 = vsub.f32 %v2611, %v2760
        %v2900 = vsub.f32 %v2612, %v2760
        %v2901 = vsub.f32 %v2613, %v2765
        %v2902 = vsub.f32 %v2614, %v2765
        %v2903 = vsub.f32 %v2615, %v2765
        %v2904 = vsub.f32 %v2616, %v2765
        %v2905 = vsub.f32 %v2617, %v2770
        %v2906 = vsub.f32 %v2618, %v2770
        %v2907 = vsub.f32 %v2619, %v2770
        %v2908 = vsub.f32 %v2620, %v2770
        %v2909 = vsub.f32 %v2621, %v2775
        %v2910 = vsub.f32 %v2622, %v2775
        %v2911 = vsub.f32 %v2623, %v2775
        %v2912 = vsub.f32 %v2624, %v2775
        %v2913 = vsub.f32 %v2625, %v2780
        %v2914 = vsub.f32 %v2626, %v2780
        %v2915 = vsub.f32 %v2627, %v2780
        %v2916 = vsub.f32 %v2628, %v2780
        %v2917 = vsub.f32 %v2629, %v2785
        %v2918 = vsub.f32 %v2630, %v2785
        %v2919 = vsub.f32 %v2631, %v2785
        %v2920 = vsub.f32 %v2632, %v2785
        %v2921 = vsub.f32 %v2633, %v2790
        %v2922 = vsub.f32 %v2634, %v2790
        %v2923 = vsub.f32 %v2635, %v2790
        %v2924 = vsub.f32 %v2636, %v2790
        %v2925 = vsub.f32 %v2637, %v2795
        %v2926 = vsub.f32 %v2638, %v2795
        %v2927 = vsub.f32 %v2639, %v2795
        %v2928 = vsub.f32 %v2640, %v2795
        %v2929 = vsub.f32 %v2641, %v2800
        %v2930 = vsub.f32 %v2642, %v2800
        %v2931 = vsub.f32 %v2643, %v2800
        %v2932 = vsub.f32 %v2644, %v2800
        %v2933 = vsub.f32 %v2645, %v2805
        %v2934 = vsub.f32 %v2646, %v2805
        %v2935 = vsub.f32 %v2647, %v2805
        %v2936 = vsub.f32 %v2648, %v2805
        %v2937 = vsub.f32 %v2649, %v2810
        %v2938 = vsub.f32 %v2650, %v2810
        %v2939 = vsub.f32 %v2651, %v2810
        %v2940 = vsub.f32 %v2652, %v2810
        %v2941 = vsub.f32 %v2653, %v2815
        %v2942 = vsub.f32 %v2654, %v2815
        %v2943 = vsub.f32 %v2655, %v2815
        %v2944 = vsub.f32 %v2656, %v2815
        %v2945 = vsub.f32 %v2657, %v2820
        %v2946 = vsub.f32 %v2658, %v2820
        %v2947 = vsub.f32 %v2659, %v2820
        %v2948 = vsub.f32 %v2660, %v2820
        %v2949 = vmul.f32 %v2821, 1.442695
        %v2950 = vpow.pop %v2949
        %v2951 = vmul.f32 %v2822, 1.442695
        %v2952 = vpow.pop %v2951
        %v2953 = vmul.f32 %v2823, 1.442695
        %v2954 = vpow.pop %v2953
        %v2955 = vmul.f32 %v2824, 1.442695
        %v2956 = vpow.pop %v2955
        %v2957 = vmul.f32 %v2825, 1.442695
        %v2958 = vpow.pop %v2957
        %v2959 = vmul.f32 %v2826, 1.442695
        %v2960 = vpow.pop %v2959
        %v2961 = vmul.f32 %v2827, 1.442695
        %v2962 = vpow.pop %v2961
        %v2963 = vmul.f32 %v2828, 1.442695
        %v2964 = vpow.pop %v2963
        %v2965 = vmul.f32 %v2829, 1.442695
        %v2966 = vpow.pop %v2965
        %v2967 = vmul.f32 %v2830, 1.442695
        %v2968 = vpow.pop %v2967
        %v2969 = vmul.f32 %v2831, 1.442695
        %v2970 = vpow.pop %v2969
        %v2971 = vmul.f32 %v2832, 1.442695
        %v2972 = vpow.pop %v2971
        %v2973 = vmul.f32 %v2833, 1.442695
        %v2974 = vpow.pop %v2973
        %v2975 = vmul.f32 %v2834, 1.442695
        %v2976 = vpow.pop %v2975
        %v2977 = vmul.f32 %v2835, 1.442695
        %v2978 = vpow.pop %v2977
        %v2979 = vmul.f32 %v2836, 1.442695
        %v2980 = vpow.pop %v2979
        %v2981 = vmul.f32 %v2837, 1.442695
        %v2982 = vpow.pop %v2981
        %v2983 = vmul.f32 %v2838, 1.442695
        %v2984 = vpow.pop %v2983
        %v2985 = vmul.f32 %v2839, 1.442695
        %v2986 = vpow.pop %v2985
        %v2987 = vmul.f32 %v2840, 1.442695
        %v2988 = vpow.pop %v2987
        %v2989 = vmul.f32 %v2841, 1.442695
        %v2990 = vpow.pop %v2989
        %v2991 = vmul.f32 %v2842, 1.442695
        %v2992 = vpow.pop %v2991
        %v2993 = vmul.f32 %v2843, 1.442695
        %v2994 = vpow.pop %v2993
        %v2995 = vmul.f32 %v2844, 1.442695
        %v2996 = vpow.pop %v2995
        %v2997 = vmul.f32 %v2845, 1.442695
        %v2998 = vpow.pop %v2997
        %v2999 = vmul.f32 %v2846, 1.442695
        %v3000 = vpow.pop %v2999
        %v3001 = vmul.f32 %v2847, 1.442695
        %v3002 = vpow.pop %v3001
        %v3003 = vmul.f32 %v2848, 1.442695
        %v3004 = vpow.pop %v3003
        %v3005 = vmul.f32 %v2849, 1.442695
        %v3006 = vpow.pop %v3005
        %v3007 = vmul.f32 %v2850, 1.442695
        %v3008 = vpow.pop %v3007
        %v3009 = vmul.f32 %v2851, 1.442695
        %v3010 = vpow.pop %v3009
        %v3011 = vmul.f32 %v2852, 1.442695
        %v3012 = vpow.pop %v3011
        %v3013 = vmul.f32 %v2853, 1.442695
        %v3014 = vpow.pop %v3013
        %v3015 = vmul.f32 %v2854, 1.442695
        %v3016 = vpow.pop %v3015
        %v3017 = vmul.f32 %v2855, 1.442695
        %v3018 = vpow.pop %v3017
        %v3019 = vmul.f32 %v2856, 1.442695
        %v3020 = vpow.pop %v3019
        %v3021 = vmul.f32 %v2857, 1.442695
        %v3022 = vpow.pop %v3021
        %v3023 = vmul.f32 %v2858, 1.442695
        %v3024 = vpow.pop %v3023
        %v3025 = vmul.f32 %v2859, 1.442695
        %v3026 = vpow.pop %v3025
        %v3027 = vmul.f32 %v2860, 1.442695
        %v3028 = vpow.pop %v3027
        %v3029 = vmul.f32 %v2861, 1.442695
        %v3030 = vpow.pop %v3029
        %v3031 = vmul.f32 %v2862, 1.442695
        %v3032 = vpow.pop %v3031
        %v3033 = vmul.f32 %v2863, 1.442695
        %v3034 = vpow.pop %v3033
        %v3035 = vmul.f32 %v2864, 1.442695
        %v3036 = vpow.pop %v3035
        %v3037 = vmul.f32 %v2865, 1.442695
        %v3038 = vpow.pop %v3037
        %v3039 = vmul.f32 %v2866, 1.442695
        %v3040 = vpow.pop %v3039
        %v3041 = vmul.f32 %v2867, 1.442695
        %v3042 = vpow.pop %v3041
        %v3043 = vmul.f32 %v2868, 1.442695
        %v3044 = vpow.pop %v3043
        %v3045 = vmul.f32 %v2869, 1.442695
        %v3046 = vpow.pop %v3045
        %v3047 = vmul.f32 %v2870, 1.442695
        %v3048 = vpow.pop %v3047
        %v3049 = vmul.f32 %v2871, 1.442695
        %v3050 = vpow.pop %v3049
        %v3051 = vmul.f32 %v2872, 1.442695
        %v3052 = vpow.pop %v3051
        %v3053 = vmul.f32 %v2873, 1.442695
        %v3054 = vpow.pop %v3053
        %v3055 = vmul.f32 %v2874, 1.442695
        %v3056 = vpow.pop %v3055
        %v3057 = vmul.f32 %v2875, 1.442695
        %v3058 = vpow.pop %v3057
        %v3059 = vmul.f32 %v2876, 1.442695
        %v3060 = vpow.pop %v3059
        %v3061 = vmul.f32 %v2877, 1.442695
        %v3062 = vpow.pop %v3061
        %v3063 = vmul.f32 %v2878, 1.442695
        %v3064 = vpow.pop %v3063
        %v3065 = vmul.f32 %v2879, 1.442695
        %v3066 = vpow.pop %v3065
        %v3067 = vmul.f32 %v2880, 1.442695
        %v3068 = vpow.pop %v3067
        %v3069 = vmul.f32 %v2881, 1.442695
        %v3070 = vpow.pop %v3069
        %v3071 = vmul.f32 %v2882, 1.442695
        %v3072 = vpow.pop %v3071
        %v3073 = vmul.f32 %v2883, 1.442695
        %v3074 = vpow.pop %v3073
        %v3075 = vmul.f32 %v2884, 1.442695
        %v3076 = vpow.pop %v3075
        %v3077 = vmul.f32 %v2885, 1.442695
        %v3078 = vpow.pop %v3077
        %v3079 = vmul.f32 %v2886, 1.442695
        %v3080 = vpow.pop %v3079
        %v3081 = vmul.f32 %v2887, 1.442695
        %v3082 = vpow.pop %v3081
        %v3083 = vmul.f32 %v2888, 1.442695
        %v3084 = vpow.pop %v3083
        %v3085 = vmul.f32 %v2889, 1.442695
        %v3086 = vpow.pop %v3085
        %v3087 = vmul.f32 %v2890, 1.442695
        %v3088 = vpow.pop %v3087
        %v3089 = vmul.f32 %v2891, 1.442695
        %v3090 = vpow.pop %v3089
        %v3091 = vmul.f32 %v2892, 1.442695
        %v3092 = vpow.pop %v3091
        %v3093 = vmul.f32 %v2893, 1.442695
        %v3094 = vpow.pop %v3093
        %v3095 = vmul.f32 %v2894, 1.442695
        %v3096 = vpow.pop %v3095
        %v3097 = vmul.f32 %v2895, 1.442695
        %v3098 = vpow.pop %v3097
        %v3099 = vmul.f32 %v2896, 1.442695
        %v3100 = vpow.pop %v3099
        %v3101 = vmul.f32 %v2897, 1.442695
        %v3102 = vpow.pop %v3101
        %v3103 = vmul.f32 %v2898, 1.442695
        %v3104 = vpow.pop %v3103
        %v3105 = vmul.f32 %v2899, 1.442695
        %v3106 = vpow.pop %v3105
        %v3107 = vmul.f32 %v2900, 1.442695
        %v3108 = vpow.pop %v3107
        %v3109 = vmul.f32 %v2901, 1.442695
        %v3110 = vpow.pop %v3109
        %v3111 = vmul.f32 %v2902, 1.442695
        %v3112 = vpow.pop %v3111
        %v3113 = vmul.f32 %v2903, 1.442695
        %v3114 = vpow.pop %v3113
        %v3115 = vmul.f32 %v2904, 1.442695
        %v3116 = vpow.pop %v3115
        %v3117 = vmul.f32 %v2905, 1.442695
        %v3118 = vpow.pop %v3117
        %v3119 = vmul.f32 %v2906, 1.442695
        %v3120 = vpow.pop %v3119
        %v3121 = vmul.f32 %v2907, 1.442695
        %v3122 = vpow.pop %v3121
        %v3123 = vmul.f32 %v2908, 1.442695
        %v3124 = vpow.pop %v3123
        %v3125 = vmul.f32 %v2909, 1.442695
        %v3126 = vpow.pop %v3125
        %v3127 = vmul.f32 %v2910, 1.442695
        %v3128 = vpow.pop %v3127
        %v3129 = vmul.f32 %v2911, 1.442695
        %v3130 = vpow.pop %v3129
        %v3131 = vmul.f32 %v2912, 1.442695
        %v3132 = vpow.pop %v3131
        %v3133 = vmul.f32 %v2913, 1.442695
        %v3134 = vpow.pop %v3133
        %v3135 = vmul.f32 %v2914, 1.442695
        %v3136 = vpow.pop %v3135
        %v3137 = vmul.f32 %v2915, 1.442695
        %v3138 = vpow.pop %v3137
        %v3139 = vmul.f32 %v2916, 1.442695
        %v3140 = vpow.pop %v3139
        %v3141 = vmul.f32 %v2917, 1.442695
        %v3142 = vpow.pop %v3141
        %v3143 = vmul.f32 %v2918, 1.442695
        %v3144 = vpow.pop %v3143
        %v3145 = vmul.f32 %v2919, 1.442695
        %v3146 = vpow.pop %v3145
        %v3147 = vmul.f32 %v2920, 1.442695
        %v3148 = vpow.pop %v3147
        %v3149 = vmul.f32 %v2921, 1.442695
        %v3150 = vpow.pop %v3149
        %v3151 = vmul.f32 %v2922, 1.442695
        %v3152 = vpow.pop %v3151
        %v3153 = vmul.f32 %v2923, 1.442695
        %v3154 = vpow.pop %v3153
        %v3155 = vmul.f32 %v2924, 1.442695
        %v3156 = vpow.pop %v3155
        %v3157 = vmul.f32 %v2925, 1.442695
        %v3158 = vpow.pop %v3157
        %v3159 = vmul.f32 %v2926, 1.442695
        %v3160 = vpow.pop %v3159
        %v3161 = vmul.f32 %v2927, 1.442695
        %v3162 = vpow.pop %v3161
        %v3163 = vmul.f32 %v2928, 1.442695
        %v3164 = vpow.pop %v3163
        %v3165 = vmul.f32 %v2929, 1.442695
        %v3166 = vpow.pop %v3165
        %v3167 = vmul.f32 %v2930, 1.442695
        %v3168 = vpow.pop %v3167
        %v3169 = vmul.f32 %v2931, 1.442695
        %v3170 = vpow.pop %v3169
        %v3171 = vmul.f32 %v2932, 1.442695
        %v3172 = vpow.pop %v3171
        %v3173 = vmul.f32 %v2933, 1.442695
        %v3174 = vpow.pop %v3173
        %v3175 = vmul.f32 %v2934, 1.442695
        %v3176 = vpow.pop %v3175
        %v3177 = vmul.f32 %v2935, 1.442695
        %v3178 = vpow.pop %v3177
        %v3179 = vmul.f32 %v2936, 1.442695
        %v3180 = vpow.pop %v3179
        %v3181 = vmul.f32 %v2937, 1.442695
        %v3182 = vpow.pop %v3181
        %v3183 = vmul.f32 %v2938, 1.442695
        %v3184 = vpow.pop %v3183
        %v3185 = vmul.f32 %v2939, 1.442695
        %v3186 = vpow.pop %v3185
        %v3187 = vmul.f32 %v2940, 1.442695
        %v3188 = vpow.pop %v3187
        %v3189 = vmul.f32 %v2941, 1.442695
        %v3190 = vpow.pop %v3189
        %v3191 = vmul.f32 %v2942, 1.442695
        %v3192 = vpow.pop %v3191
        %v3193 = vmul.f32 %v2943, 1.442695
        %v3194 = vpow.pop %v3193
        %v3195 = vmul.f32 %v2944, 1.442695
        %v3196 = vpow.pop %v3195
        %v3197 = vmul.f32 %v2945, 1.442695
        %v3198 = vpow.pop %v3197
        %v3199 = vmul.f32 %v2946, 1.442695
        %v3200 = vpow.pop %v3199
        %v3201 = vmul.f32 %v2947, 1.442695
        %v3202 = vpow.pop %v3201
        %v3203 = vmul.f32 %v2948, 1.442695
        %v3204 = vpow.pop %v3203
        %v3205 = vadd.f32 %v2950, %v2952
        %v3206 = vadd.f32 %v3205, %v2954
        %v3207 = vadd.f32 %v3206, %v2956
        %3208 = vadd.xlane.f32.xlu0 %v3207
        %v3209 = vpop.xlane.xlu0 %3208
        %v3210 = vadd.f32 %v2958, %v2960
        %v3211 = vadd.f32 %v3210, %v2962
        %v3212 = vadd.f32 %v3211, %v2964
        %3213 = vadd.xlane.f32.xlu0 %v3212
        %v3214 = vpop.xlane.xlu0 %3213
        %v3215 = vadd.f32 %v2966, %v2968
        %v3216 = vadd.f32 %v3215, %v2970
        %v3217 = vadd.f32 %v3216, %v2972
        %3218 = vadd.xlane.f32.xlu0 %v3217
        %v3219 = vpop.xlane.xlu0 %3218
        %v3220 = vadd.f32 %v2974, %v2976
        %v3221 = vadd.f32 %v3220, %v2978
        %v3222 = vadd.f32 %v3221, %v2980
        %3223 = vadd.xlane.f32.xlu0 %v3222
        %v3224 = vpop.xlane.xlu0 %3223
        %v3225 = vadd.f32 %v2982, %v2984
        %v3226 = vadd.f32 %v3225, %v2986
        %v3227 = vadd.f32 %v3226, %v2988
        %3228 = vadd.xlane.f32.xlu0 %v3227
        %v3229 = vpop.xlane.xlu0 %3228
        %v3230 = vadd.f32 %v2990, %v2992
        %v3231 = vadd.f32 %v3230, %v2994
        %v3232 = vadd.f32 %v3231, %v2996
        %3233 = vadd.xlane.f32.xlu0 %v3232
        %v3234 = vpop.xlane.xlu0 %3233
        %v3235 = vadd.f32 %v2998, %v3000
        %v3236 = vadd.f32 %v3235, %v3002
        %v3237 = vadd.f32 %v3236, %v3004
        %3238 = vadd.xlane.f32.xlu0 %v3237
        %v3239 = vpop.xlane.xlu0 %3238
        %v3240 = vadd.f32 %v3006, %v3008
        %v3241 = vadd.f32 %v3240, %v3010
        %v3242 = vadd.f32 %v3241, %v3012
        %3243 = vadd.xlane.f32.xlu0 %v3242
        %v3244 = vpop.xlane.xlu0 %3243
        %v3245 = vadd.f32 %v3014, %v3016
        %v3246 = vadd.f32 %v3245, %v3018
        %v3247 = vadd.f32 %v3246, %v3020
        %3248 = vadd.xlane.f32.xlu0 %v3247
        %v3249 = vpop.xlane.xlu0 %3248
        %v3250 = vadd.f32 %v3022, %v3024
        %v3251 = vadd.f32 %v3250, %v3026
        %v3252 = vadd.f32 %v3251, %v3028
        %3253 = vadd.xlane.f32.xlu0 %v3252
        %v3254 = vpop.xlane.xlu0 %3253
        %v3255 = vadd.f32 %v3030, %v3032
        %v3256 = vadd.f32 %v3255, %v3034
        %v3257 = vadd.f32 %v3256, %v3036
        %3258 = vadd.xlane.f32.xlu0 %v3257
        %v3259 = vpop.xlane.xlu0 %3258
        %v3260 = vadd.f32 %v3038, %v3040
        %v3261 = vadd.f32 %v3260, %v3042
        %v3262 = vadd.f32 %v3261, %v3044
        %3263 = vadd.xlane.f32.xlu0 %v3262
        %v3264 = vpop.xlane.xlu0 %3263
        %v3265 = vadd.f32 %v3046, %v3048
        %v3266 = vadd.f32 %v3265, %v3050
        %v3267 = vadd.f32 %v3266, %v3052
        %3268 = vadd.xlane.f32.xlu0 %v3267
        %v3269 = vpop.xlane.xlu0 %3268
        %v3270 = vadd.f32 %v3054, %v3056
        %v3271 = vadd.f32 %v3270, %v3058
        %v3272 = vadd.f32 %v3271, %v3060
        %3273 = vadd.xlane.f32.xlu0 %v3272
        %v3274 = vpop.xlane.xlu0 %3273
        %v3275 = vadd.f32 %v3062, %v3064
        %v3276 = vadd.f32 %v3275, %v3066
        %v3277 = vadd.f32 %v3276, %v3068
        %3278 = vadd.xlane.f32.xlu0 %v3277
        %v3279 = vpop.xlane.xlu0 %3278
        %v3280 = vadd.f32 %v3070, %v3072
        %v3281 = vadd.f32 %v3280, %v3074
        %v3282 = vadd.f32 %v3281, %v3076
        %3283 = vadd.xlane.f32.xlu0 %v3282
        %v3284 = vpop.xlane.xlu0 %3283
        %v3285 = vadd.f32 %v3078, %v3080
        %v3286 = vadd.f32 %v3285, %v3082
        %v3287 = vadd.f32 %v3286, %v3084
        %3288 = vadd.xlane.f32.xlu0 %v3287
        %v3289 = vpop.xlane.xlu0 %3288
        %v3290 = vadd.f32 %v3086, %v3088
        %v3291 = vadd.f32 %v3290, %v3090
        %v3292 = vadd.f32 %v3291, %v3092
        %3293 = vadd.xlane.f32.xlu0 %v3292
        %v3294 = vpop.xlane.xlu0 %3293
        %v3295 = vadd.f32 %v3094, %v3096
        %v3296 = vadd.f32 %v3295, %v3098
        %v3297 = vadd.f32 %v3296, %v3100
        %3298 = vadd.xlane.f32.xlu0 %v3297
        %v3299 = vpop.xlane.xlu0 %3298
        %v3300 = vadd.f32 %v3102, %v3104
        %v3301 = vadd.f32 %v3300, %v3106
        %v3302 = vadd.f32 %v3301, %v3108
        %3303 = vadd.xlane.f32.xlu0 %v3302
        %v3304 = vpop.xlane.xlu0 %3303
        %v3305 = vadd.f32 %v3110, %v3112
        %v3306 = vadd.f32 %v3305, %v3114
        %v3307 = vadd.f32 %v3306, %v3116
        %3308 = vadd.xlane.f32.xlu0 %v3307
        %v3309 = vpop.xlane.xlu0 %3308
        %v3310 = vadd.f32 %v3118, %v3120
        %v3311 = vadd.f32 %v3310, %v3122
        %v3312 = vadd.f32 %v3311, %v3124
        %3313 = vadd.xlane.f32.xlu0 %v3312
        %v3314 = vpop.xlane.xlu0 %3313
        %v3315 = vadd.f32 %v3126, %v3128
        %v3316 = vadd.f32 %v3315, %v3130
        %v3317 = vadd.f32 %v3316, %v3132
        %3318 = vadd.xlane.f32.xlu0 %v3317
        %v3319 = vpop.xlane.xlu0 %3318
        %v3320 = vadd.f32 %v3134, %v3136
        %v3321 = vadd.f32 %v3320, %v3138
        %v3322 = vadd.f32 %v3321, %v3140
        %3323 = vadd.xlane.f32.xlu0 %v3322
        %v3324 = vpop.xlane.xlu0 %3323
        %v3325 = vadd.f32 %v3142, %v3144
        %v3326 = vadd.f32 %v3325, %v3146
        %v3327 = vadd.f32 %v3326, %v3148
        %3328 = vadd.xlane.f32.xlu0 %v3327
        %v3329 = vpop.xlane.xlu0 %3328
        %v3330 = vadd.f32 %v3150, %v3152
        %v3331 = vadd.f32 %v3330, %v3154
        %v3332 = vadd.f32 %v3331, %v3156
        %3333 = vadd.xlane.f32.xlu0 %v3332
        %v3334 = vpop.xlane.xlu0 %3333
        %v3335 = vadd.f32 %v3158, %v3160
        %v3336 = vadd.f32 %v3335, %v3162
        %v3337 = vadd.f32 %v3336, %v3164
        %3338 = vadd.xlane.f32.xlu0 %v3337
        %v3339 = vpop.xlane.xlu0 %3338
        %v3340 = vadd.f32 %v3166, %v3168
        %v3341 = vadd.f32 %v3340, %v3170
        %v3342 = vadd.f32 %v3341, %v3172
        %3343 = vadd.xlane.f32.xlu0 %v3342
        %v3344 = vpop.xlane.xlu0 %3343
        %v3345 = vadd.f32 %v3174, %v3176
        %v3346 = vadd.f32 %v3345, %v3178
        %v3347 = vadd.f32 %v3346, %v3180
        %3348 = vadd.xlane.f32.xlu0 %v3347
        %v3349 = vpop.xlane.xlu0 %3348
        %v3350 = vadd.f32 %v3182, %v3184
        %v3351 = vadd.f32 %v3350, %v3186
        %v3352 = vadd.f32 %v3351, %v3188
        %3353 = vadd.xlane.f32.xlu0 %v3352
        %v3354 = vpop.xlane.xlu0 %3353
        %v3355 = vadd.f32 %v3190, %v3192
        %v3356 = vadd.f32 %v3355, %v3194
        %v3357 = vadd.f32 %v3356, %v3196
        %3358 = vadd.xlane.f32.xlu0 %v3357
        %v3359 = vpop.xlane.xlu0 %3358
        %v3360 = vadd.f32 %v3198, %v3200
        %v3361 = vadd.f32 %v3360, %v3202
        %v3362 = vadd.f32 %v3361, %v3204
        %3363 = vadd.xlane.f32.xlu0 %v3362
        %v3364 = vpop.xlane.xlu0 %3363
        %v3365 = vrcp.pop %v3209
        %v3366 = vrcp.pop %v3214
        %v3367 = vrcp.pop %v3219
        %v3368 = vrcp.pop %v3224
        %v3369 = vrcp.pop %v3229
        %v3370 = vrcp.pop %v3234
        %v3371 = vrcp.pop %v3239
        %v3372 = vrcp.pop %v3244
        %v3373 = vrcp.pop %v3249
        %v3374 = vrcp.pop %v3254
        %v3375 = vrcp.pop %v3259
        %v3376 = vrcp.pop %v3264
        %v3377 = vrcp.pop %v3269
        %v3378 = vrcp.pop %v3274
        %v3379 = vrcp.pop %v3279
        %v3380 = vrcp.pop %v3284
        %v3381 = vrcp.pop %v3289
        %v3382 = vrcp.pop %v3294
        %v3383 = vrcp.pop %v3299
        %v3384 = vrcp.pop %v3304
        %v3385 = vrcp.pop %v3309
        %v3386 = vrcp.pop %v3314
        %v3387 = vrcp.pop %v3319
        %v3388 = vrcp.pop %v3324
        %v3389 = vrcp.pop %v3329
        %v3390 = vrcp.pop %v3334
        %v3391 = vrcp.pop %v3339
        %v3392 = vrcp.pop %v3344
        %v3393 = vrcp.pop %v3349
        %v3394 = vrcp.pop %v3354
        %v3395 = vrcp.pop %v3359
        %v3396 = vrcp.pop %v3364
        %v3397 = vmul.f32 %v2950, %v3365
        %v3398 = vmul.f32 %v2952, %v3365
        %v3399 = vmul.f32 %v2954, %v3365
        %v3400 = vmul.f32 %v2956, %v3365
        %v3401 = vmul.f32 %v2958, %v3366
        %v3402 = vmul.f32 %v2960, %v3366
        %v3403 = vmul.f32 %v2962, %v3366
        %v3404 = vmul.f32 %v2964, %v3366
        %v3405 = vmul.f32 %v2966, %v3367
        %v3406 = vmul.f32 %v2968, %v3367
        %v3407 = vmul.f32 %v2970, %v3367
        %v3408 = vmul.f32 %v2972, %v3367
        %v3409 = vmul.f32 %v2974, %v3368
        %v3410 = vmul.f32 %v2976, %v3368
        %v3411 = vmul.f32 %v2978, %v3368
        %v3412 = vmul.f32 %v2980, %v3368
        %v3413 = vmul.f32 %v2982, %v3369
        %v3414 = vmul.f32 %v2984, %v3369
        %v3415 = vmul.f32 %v2986, %v3369
        %v3416 = vmul.f32 %v2988, %v3369
        %v3417 = vmul.f32 %v2990, %v3370
        %v3418 = vmul.f32 %v2992, %v3370
        %v3419 = vmul.f32 %v2994, %v3370
        %v3420 = vmul.f32 %v2996, %v3370
        %v3421 = vmul.f32 %v2998, %v3371
        %v3422 = vmul.f32 %v3000, %v3371
        %v3423 = vmul.f32 %v3002, %v3371
        %v3424 = vmul.f32 %v3004, %v3371
        %v3425 = vmul.f32 %v3006, %v3372
        %v3426 = vmul.f32 %v3008, %v3372
        %v3427 = vmul.f32 %v3010, %v3372
        %v3428 = vmul.f32 %v3012, %v3372
        %v3429 = vmul.f32 %v3014, %v3373
        %v3430 = vmul.f32 %v3016, %v3373
        %v3431 = vmul.f32 %v3018, %v3373
        %v3432 = vmul.f32 %v3020, %v3373
        %v3433 = vmul.f32 %v3022, %v3374
        %v3434 = vmul.f32 %v3024, %v3374
        %v3435 = vmul.f32 %v3026, %v3374
        %v3436 = vmul.f32 %v3028, %v3374
        %v3437 = vmul.f32 %v3030, %v3375
        %v3438 = vmul.f32 %v3032, %v3375
        %v3439 = vmul.f32 %v3034, %v3375
        %v3440 = vmul.f32 %v3036, %v3375
        %v3441 = vmul.f32 %v3038, %v3376
        %v3442 = vmul.f32 %v3040, %v3376
        %v3443 = vmul.f32 %v3042, %v3376
        %v3444 = vmul.f32 %v3044, %v3376
        %v3445 = vmul.f32 %v3046, %v3377
        %v3446 = vmul.f32 %v3048, %v3377
        %v3447 = vmul.f32 %v3050, %v3377
        %v3448 = vmul.f32 %v3052, %v3377
        %v3449 = vmul.f32 %v3054, %v3378
        %v3450 = vmul.f32 %v3056, %v3378
        %v3451 = vmul.f32 %v3058, %v3378
        %v3452 = vmul.f32 %v3060, %v3378
        %v3453 = vmul.f32 %v3062, %v3379
        %v3454 = vmul.f32 %v3064, %v3379
        %v3455 = vmul.f32 %v3066, %v3379
        %v3456 = vmul.f32 %v3068, %v3379
        %v3457 = vmul.f32 %v3070, %v3380
        %v3458 = vmul.f32 %v3072, %v3380
        %v3459 = vmul.f32 %v3074, %v3380
        %v3460 = vmul.f32 %v3076, %v3380
        %v3461 = vmul.f32 %v3078, %v3381
        %v3462 = vmul.f32 %v3080, %v3381
        %v3463 = vmul.f32 %v3082, %v3381
        %v3464 = vmul.f32 %v3084, %v3381
        %v3465 = vmul.f32 %v3086, %v3382
        %v3466 = vmul.f32 %v3088, %v3382
        %v3467 = vmul.f32 %v3090, %v3382
        %v3468 = vmul.f32 %v3092, %v3382
        %v3469 = vmul.f32 %v3094, %v3383
        %v3470 = vmul.f32 %v3096, %v3383
        %v3471 = vmul.f32 %v3098, %v3383
        %v3472 = vmul.f32 %v3100, %v3383
        %v3473 = vmul.f32 %v3102, %v3384
        %v3474 = vmul.f32 %v3104, %v3384
        %v3475 = vmul.f32 %v3106, %v3384
        %v3476 = vmul.f32 %v3108, %v3384
        %v3477 = vmul.f32 %v3110, %v3385
        %v3478 = vmul.f32 %v3112, %v3385
        %v3479 = vmul.f32 %v3114, %v3385
        %v3480 = vmul.f32 %v3116, %v3385
        %v3481 = vmul.f32 %v3118, %v3386
        %v3482 = vmul.f32 %v3120, %v3386
        %v3483 = vmul.f32 %v3122, %v3386
        %v3484 = vmul.f32 %v3124, %v3386
        %v3485 = vmul.f32 %v3126, %v3387
        %v3486 = vmul.f32 %v3128, %v3387
        %v3487 = vmul.f32 %v3130, %v3387
        %v3488 = vmul.f32 %v3132, %v3387
        %v3489 = vmul.f32 %v3134, %v3388
        %v3490 = vmul.f32 %v3136, %v3388
        %v3491 = vmul.f32 %v3138, %v3388
        %v3492 = vmul.f32 %v3140, %v3388
        %v3493 = vmul.f32 %v3142, %v3389
        %v3494 = vmul.f32 %v3144, %v3389
        %v3495 = vmul.f32 %v3146, %v3389
        %v3496 = vmul.f32 %v3148, %v3389
        %v3497 = vmul.f32 %v3150, %v3390
        %v3498 = vmul.f32 %v3152, %v3390
        %v3499 = vmul.f32 %v3154, %v3390
        %v3500 = vmul.f32 %v3156, %v3390
        %v3501 = vmul.f32 %v3158, %v3391
        %v3502 = vmul.f32 %v3160, %v3391
        %v3503 = vmul.f32 %v3162, %v3391
        %v3504 = vmul.f32 %v3164, %v3391
        %v3505 = vmul.f32 %v3166, %v3392
        %v3506 = vmul.f32 %v3168, %v3392
        %v3507 = vmul.f32 %v3170, %v3392
        %v3508 = vmul.f32 %v3172, %v3392
        %v3509 = vmul.f32 %v3174, %v3393
        %v3510 = vmul.f32 %v3176, %v3393
        %v3511 = vmul.f32 %v3178, %v3393
        %v3512 = vmul.f32 %v3180, %v3393
        %v3513 = vmul.f32 %v3182, %v3394
        %v3514 = vmul.f32 %v3184, %v3394
        %v3515 = vmul.f32 %v3186, %v3394
        %v3516 = vmul.f32 %v3188, %v3394
        %v3517 = vmul.f32 %v3190, %v3395
        %v3518 = vmul.f32 %v3192, %v3395
        %v3519 = vmul.f32 %v3194, %v3395
        %v3520 = vmul.f32 %v3196, %v3395
        %v3521 = vmul.f32 %v3198, %v3396
        %v3522 = vmul.f32 %v3200, %v3396
        %v3523 = vmul.f32 %v3202, %v3396
        %v3524 = vmul.f32 %v3204, %v3396
        %3525 = vst [vmem:[%s1137] sm:$0xff] %v3397
        %3526 = vst [vmem:[%s1137 + $0x8] sm:$0xff] %v3398
        %3527 = vst [vmem:[%s1137 + $0x10] sm:$0xff] %v3399
        %3528 = vst [vmem:[%s1137 + $0x18] sm:$0xff] %v3400
        %3529 = vst [vmem:[%s1137 + $0x20] sm:$0xff] %v3401
        %3530 = vst [vmem:[%s1137 + $0x28] sm:$0xff] %v3402
        %3531 = vst [vmem:[%s1137 + $0x30] sm:$0xff] %v3403
        %3532 = vst [vmem:[%s1137 + $0x38] sm:$0xff] %v3404
        %3533 = vst [vmem:[%s1137 + $0x40] sm:$0xff] %v3405
        %3534 = vst [vmem:[%s1137 + $0x48] sm:$0xff] %v3406
        %3535 = vst [vmem:[%s1137 + $0x50] sm:$0xff] %v3407
        %3536 = vst [vmem:[%s1137 + $0x58] sm:$0xff] %v3408
        %3537 = vst [vmem:[%s1137 + $0x60] sm:$0xff] %v3409
        %3538 = vst [vmem:[%s1137 + $0x68] sm:$0xff] %v3410
        %3539 = vst [vmem:[%s1137 + $0x70] sm:$0xff] %v3411
        %3540 = vst [vmem:[%s1137 + $0x78] sm:$0xff] %v3412
        %3541 = vst [vmem:[%s1137 + $0x80] sm:$0xff] %v3413
        %3542 = vst [vmem:[%s1137 + $0x88] sm:$0xff] %v3414
        %3543 = vst [vmem:[%s1137 + $0x90] sm:$0xff] %v3415
        %3544 = vst [vmem:[%s1137 + $0x98] sm:$0xff] %v3416
        %3545 = vst [vmem:[%s1137 + $0xa0] sm:$0xff] %v3417
        %3546 = vst [vmem:[%s1137 + $0xa8] sm:$0xff] %v3418
        %3547 = vst [vmem:[%s1137 + $0xb0] sm:$0xff] %v3419
        %3548 = vst [vmem:[%s1137 + $0xb8] sm:$0xff] %v3420
        %3549 = vst [vmem:[%s1137 + $0xc0] sm:$0xff] %v3421
        %3550 = vst [vmem:[%s1137 + $0xc8] sm:$0xff] %v3422
        %3551 = vst [vmem:[%s1137 + $0xd0] sm:$0xff] %v3423
        %3552 = vst [vmem:[%s1137 + $0xd8] sm:$0xff] %v3424
        %3553 = vst [vmem:[%s1137 + $0xe0] sm:$0xff] %v3425
        %3554 = vst [vmem:[%s1137 + $0xe8] sm:$0xff] %v3426
        %3555 = vst [vmem:[%s1137 + $0xf0] sm:$0xff] %v3427
        %3556 = vst [vmem:[%s1137 + $0xf8] sm:$0xff] %v3428
        %3557 = vst [vmem:[%s1137 + $0x100] sm:$0xff] %v3429
        %3558 = vst [vmem:[%s1137 + $0x108] sm:$0xff] %v3430
        %3559 = vst [vmem:[%s1137 + $0x110] sm:$0xff] %v3431
        %3560 = vst [vmem:[%s1137 + $0x118] sm:$0xff] %v3432
        %3561 = vst [vmem:[%s1137 + $0x120] sm:$0xff] %v3433
        %3562 = vst [vmem:[%s1137 + $0x128] sm:$0xff] %v3434
        %3563 = vst [vmem:[%s1137 + $0x130] sm:$0xff] %v3435
        %3564 = vst [vmem:[%s1137 + $0x138] sm:$0xff] %v3436
        %3565 = vst [vmem:[%s1137 + $0x140] sm:$0xff] %v3437
        %3566 = vst [vmem:[%s1137 + $0x148] sm:$0xff] %v3438
        %3567 = vst [vmem:[%s1137 + $0x150] sm:$0xff] %v3439
        %3568 = vst [vmem:[%s1137 + $0x158] sm:$0xff] %v3440
        %3569 = vst [vmem:[%s1137 + $0x160] sm:$0xff] %v3441
        %3570 = vst [vmem:[%s1137 + $0x168] sm:$0xff] %v3442
        %3571 = vst [vmem:[%s1137 + $0x170] sm:$0xff] %v3443
        %3572 = vst [vmem:[%s1137 + $0x178] sm:$0xff] %v3444
        %3573 = vst [vmem:[%s1137 + $0x180] sm:$0xff] %v3445
        %3574 = vst [vmem:[%s1137 + $0x188] sm:$0xff] %v3446
        %3575 = vst [vmem:[%s1137 + $0x190] sm:$0xff] %v3447
        %3576 = vst [vmem:[%s1137 + $0x198] sm:$0xff] %v3448
        %3577 = vst [vmem:[%s1137 + $0x1a0] sm:$0xff] %v3449
        %3578 = vst [vmem:[%s1137 + $0x1a8] sm:$0xff] %v3450
        %3579 = vst [vmem:[%s1137 + $0x1b0] sm:$0xff] %v3451
        %3580 = vst [vmem:[%s1137 + $0x1b8] sm:$0xff] %v3452
        %3581 = vst [vmem:[%s1137 + $0x1c0] sm:$0xff] %v3453
        %3582 = vst [vmem:[%s1137 + $0x1c8] sm:$0xff] %v3454
        %3583 = vst [vmem:[%s1137 + $0x1d0] sm:$0xff] %v3455
        %3584 = vst [vmem:[%s1137 + $0x1d8] sm:$0xff] %v3456
        %3585 = vst [vmem:[%s1137 + $0x1e0] sm:$0xff] %v3457
        %3586 = vst [vmem:[%s1137 + $0x1e8] sm:$0xff] %v3458
        %3587 = vst [vmem:[%s1137 + $0x1f0] sm:$0xff] %v3459
        %3588 = vst [vmem:[%s1137 + $0x1f8] sm:$0xff] %v3460
        %3589 = vst [vmem:[%s1137 + $0x200] sm:$0xff] %v3461
        %3590 = vst [vmem:[%s1137 + $0x208] sm:$0xff] %v3462
        %3591 = vst [vmem:[%s1137 + $0x210] sm:$0xff] %v3463
        %3592 = vst [vmem:[%s1137 + $0x218] sm:$0xff] %v3464
        %3593 = vst [vmem:[%s1137 + $0x220] sm:$0xff] %v3465
        %3594 = vst [vmem:[%s1137 + $0x228] sm:$0xff] %v3466
        %3595 = vst [vmem:[%s1137 + $0x230] sm:$0xff] %v3467
        %3596 = vst [vmem:[%s1137 + $0x238] sm:$0xff] %v3468
        %3597 = vst [vmem:[%s1137 + $0x240] sm:$0xff] %v3469
        %3598 = vst [vmem:[%s1137 + $0x248] sm:$0xff] %v3470
        %3599 = vst [vmem:[%s1137 + $0x250] sm:$0xff] %v3471
        %3600 = vst [vmem:[%s1137 + $0x258] sm:$0xff] %v3472
        %3601 = vst [vmem:[%s1137 + $0x260] sm:$0xff] %v3473
        %3602 = vst [vmem:[%s1137 + $0x268] sm:$0xff] %v3474
        %3603 = vst [vmem:[%s1137 + $0x270] sm:$0xff] %v3475
        %3604 = vst [vmem:[%s1137 + $0x278] sm:$0xff] %v3476
        %3605 = vst [vmem:[%s1137 + $0x280] sm:$0xff] %v3477
        %3606 = vst [vmem:[%s1137 + $0x288] sm:$0xff] %v3478
        %3607 = vst [vmem:[%s1137 + $0x290] sm:$0xff] %v3479
        %3608 = vst [vmem:[%s1137 + $0x298] sm:$0xff] %v3480
        %3609 = vst [vmem:[%s1137 + $0x2a0] sm:$0xff] %v3481
        %3610 = vst [vmem:[%s1137 + $0x2a8] sm:$0xff] %v3482
        %3611 = vst [vmem:[%s1137 + $0x2b0] sm:$0xff] %v3483
        %3612 = vst [vmem:[%s1137 + $0x2b8] sm:$0xff] %v3484
        %3613 = vst [vmem:[%s1137 + $0x2c0] sm:$0xff] %v3485
        %3614 = vst [vmem:[%s1137 + $0x2c8] sm:$0xff] %v3486
        %3615 = vst [vmem:[%s1137 + $0x2d0] sm:$0xff] %v3487
        %3616 = vst [vmem:[%s1137 + $0x2d8] sm:$0xff] %v3488
        %3617 = vst [vmem:[%s1137 + $0x2e0] sm:$0xff] %v3489
        %3618 = vst [vmem:[%s1137 + $0x2e8] sm:$0xff] %v3490
        %3619 = vst [vmem:[%s1137 + $0x2f0] sm:$0xff] %v3491
        %3620 = vst [vmem:[%s1137 + $0x2f8] sm:$0xff] %v3492
        %3621 = vst [vmem:[%s1137 + $0x300] sm:$0xff] %v3493
        %3622 = vst [vmem:[%s1137 + $0x308] sm:$0xff] %v3494
        %3623 = vst [vmem:[%s1137 + $0x310] sm:$0xff] %v3495
        %3624 = vst [vmem:[%s1137 + $0x318] sm:$0xff] %v3496
        %3625 = vst [vmem:[%s1137 + $0x320] sm:$0xff] %v3497
        %3626 = vst [vmem:[%s1137 + $0x328] sm:$0xff] %v3498
        %3627 = vst [vmem:[%s1137 + $0x330] sm:$0xff] %v3499
        %3628 = vst [vmem:[%s1137 + $0x338] sm:$0xff] %v3500
        %3629 = vst [vmem:[%s1137 + $0x340] sm:$0xff] %v3501
        %3630 = vst [vmem:[%s1137 + $0x348] sm:$0xff] %v3502
        %3631 = vst [vmem:[%s1137 + $0x350] sm:$0xff] %v3503
        %3632 = vst [vmem:[%s1137 + $0x358] sm:$0xff] %v3504
        %3633 = vst [vmem:[%s1137 + $0x360] sm:$0xff] %v3505
        %3634 = vst [vmem:[%s1137 + $0x368] sm:$0xff] %v3506
        %3635 = vst [vmem:[%s1137 + $0x370] sm:$0xff] %v3507
        %3636 = vst [vmem:[%s1137 + $0x378] sm:$0xff] %v3508
        %3637 = vst [vmem:[%s1137 + $0x380] sm:$0xff] %v3509
        %3638 = vst [vmem:[%s1137 + $0x388] sm:$0xff] %v3510
        %3639 = vst [vmem:[%s1137 + $0x390] sm:$0xff] %v3511
        %3640 = vst [vmem:[%s1137 + $0x398] sm:$0xff] %v3512
        %3641 = vst [vmem:[%s1137 + $0x3a0] sm:$0xff] %v3513
        %3642 = vst [vmem:[%s1137 + $0x3a8] sm:$0xff] %v3514
        %3643 = vst [vmem:[%s1137 + $0x3b0] sm:$0xff] %v3515
        %3644 = vst [vmem:[%s1137 + $0x3b8] sm:$0xff] %v3516
        %3645 = vst [vmem:[%s1137 + $0x3c0] sm:$0xff] %v3517
        %3646 = vst [vmem:[%s1137 + $0x3c8] sm:$0xff] %v3518
        %3647 = vst [vmem:[%s1137 + $0x3d0] sm:$0xff] %v3519
        %3648 = vst [vmem:[%s1137 + $0x3d8] sm:$0xff] %v3520
        %3649 = vst [vmem:[%s1137 + $0x3e0] sm:$0xff] %v3521
        %3650 = vst [vmem:[%s1137 + $0x3e8] sm:$0xff] %v3522
        %3651 = vst [vmem:[%s1137 + $0x3f0] sm:$0xff] %v3523
        %3652 = vst [vmem:[%s1137 + $0x3f8] sm:$0xff] %v3524
        %v3653 = vpack.c.bf16 %v3401, %v3397
        %v3654 = vpack.c.bf16 %v3402, %v3398
        %v3655 = vpack.c.bf16 %v3403, %v3399
        %v3656 = vpack.c.bf16 %v3404, %v3400
        %v3657 = vpack.c.bf16 %v3409, %v3405
        %v3658 = vpack.c.bf16 %v3410, %v3406
        %v3659 = vpack.c.bf16 %v3411, %v3407
        %v3660 = vpack.c.bf16 %v3412, %v3408
        %v3661 = vpack.c.bf16 %v3417, %v3413
        %v3662 = vpack.c.bf16 %v3418, %v3414
        %v3663 = vpack.c.bf16 %v3419, %v3415
        %v3664 = vpack.c.bf16 %v3420, %v3416
        %v3665 = vpack.c.bf16 %v3425, %v3421
        %v3666 = vpack.c.bf16 %v3426, %v3422
        %v3667 = vpack.c.bf16 %v3427, %v3423
        %v3668 = vpack.c.bf16 %v3428, %v3424
        %v3669 = vpack.c.bf16 %v3433, %v3429
        %v3670 = vpack.c.bf16 %v3434, %v3430
        %v3671 = vpack.c.bf16 %v3435, %v3431
        %v3672 = vpack.c.bf16 %v3436, %v3432
        %v3673 = vpack.c.bf16 %v3441, %v3437
        %v3674 = vpack.c.bf16 %v3442, %v3438
        %v3675 = vpack.c.bf16 %v3443, %v3439
        %v3676 = vpack.c.bf16 %v3444, %v3440
        %v3677 = vpack.c.bf16 %v3449, %v3445
        %v3678 = vpack.c.bf16 %v3450, %v3446
        %v3679 = vpack.c.bf16 %v3451, %v3447
        %v3680 = vpack.c.bf16 %v3452, %v3448
        %v3681 = vpack.c.bf16 %v3457, %v3453
        %v3682 = vpack.c.bf16 %v3458, %v3454
        %v3683 = vpack.c.bf16 %v3459, %v3455
        %v3684 = vpack.c.bf16 %v3460, %v3456
        %v3685 = vpack.c.bf16 %v3465, %v3461
        %v3686 = vpack.c.bf16 %v3466, %v3462
        %v3687 = vpack.c.bf16 %v3467, %v3463
        %v3688 = vpack.c.bf16 %v3468, %v3464
        %v3689 = vpack.c.bf16 %v3473, %v3469
        %v3690 = vpack.c.bf16 %v3474, %v3470
        %v3691 = vpack.c.bf16 %v3475, %v3471
        %v3692 = vpack.c.bf16 %v3476, %v3472
        %v3693 = vpack.c.bf16 %v3481, %v3477
        %v3694 = vpack.c.bf16 %v3482, %v3478
        %v3695 = vpack.c.bf16 %v3483, %v3479
        %v3696 = vpack.c.bf16 %v3484, %v3480
        %v3697 = vpack.c.bf16 %v3489, %v3485
        %v3698 = vpack.c.bf16 %v3490, %v3486
        %v3699 = vpack.c.bf16 %v3491, %v3487
        %v3700 = vpack.c.bf16 %v3492, %v3488
        %v3701 = vpack.c.bf16 %v3497, %v3493
        %v3702 = vpack.c.bf16 %v3498, %v3494
        %v3703 = vpack.c.bf16 %v3499, %v3495
        %v3704 = vpack.c.bf16 %v3500, %v3496
        %v3705 = vpack.c.bf16 %v3505, %v3501
        %v3706 = vpack.c.bf16 %v3506, %v3502
        %v3707 = vpack.c.bf16 %v3507, %v3503
        %v3708 = vpack.c.bf16 %v3508, %v3504
        %v3709 = vpack.c.bf16 %v3513, %v3509
        %v3710 = vpack.c.bf16 %v3514, %v3510
        %v3711 = vpack.c.bf16 %v3515, %v3511
        %v3712 = vpack.c.bf16 %v3516, %v3512
        %v3713 = vpack.c.bf16 %v3521, %v3517
        %v3714 = vpack.c.bf16 %v3522, %v3518
        %v3715 = vpack.c.bf16 %v3523, %v3519
        %v3716 = vpack.c.bf16 %v3524, %v3520
        %v3717 = vld [vmem:[%s961] sm:$0xf]
        %v3718 = vld [vmem:[%s961 + $0x4] sm:$0xf]
        %v3719 = vld [vmem:[%s961 + $0x8] sm:$0xf]
        %v3720 = vld [vmem:[%s961 + $0xc] sm:$0xf]
        %v3721 = vld [vmem:[%s961 + $0x10] sm:$0xf]
        %v3722 = vld [vmem:[%s961 + $0x14] sm:$0xf]
        %v3723 = vld [vmem:[%s961 + $0x18] sm:$0xf]
        %v3724 = vld [vmem:[%s961 + $0x1c] sm:$0xf]
        %v3725 = vld [vmem:[%s961 + $0x20] sm:$0xf]
        %v3726 = vld [vmem:[%s961 + $0x24] sm:$0xf]
        %v3727 = vld [vmem:[%s961 + $0x28] sm:$0xf]
        %v3728 = vld [vmem:[%s961 + $0x2c] sm:$0xf]
        %v3729 = vld [vmem:[%s961 + $0x30] sm:$0xf]
        %v3730 = vld [vmem:[%s961 + $0x34] sm:$0xf]
        %v3731 = vld [vmem:[%s961 + $0x38] sm:$0xf]
        %v3732 = vld [vmem:[%s961 + $0x3c] sm:$0xf]
        %v3733 = vld [vmem:[%s961 + $0x40] sm:$0xf]
        %v3734 = vld [vmem:[%s961 + $0x44] sm:$0xf]
        %v3735 = vld [vmem:[%s961 + $0x48] sm:$0xf]
        %v3736 = vld [vmem:[%s961 + $0x4c] sm:$0xf]
        %v3737 = vld [vmem:[%s961 + $0x50] sm:$0xf]
        %v3738 = vld [vmem:[%s961 + $0x54] sm:$0xf]
        %v3739 = vld [vmem:[%s961 + $0x58] sm:$0xf]
        %v3740 = vld [vmem:[%s961 + $0x5c] sm:$0xf]
        %v3741 = vld [vmem:[%s961 + $0x60] sm:$0xf]
        %v3742 = vld [vmem:[%s961 + $0x64] sm:$0xf]
        %v3743 = vld [vmem:[%s961 + $0x68] sm:$0xf]
        %v3744 = vld [vmem:[%s961 + $0x6c] sm:$0xf]
        %v3745 = vld [vmem:[%s961 + $0x70] sm:$0xf]
        %v3746 = vld [vmem:[%s961 + $0x74] sm:$0xf]
        %v3747 = vld [vmem:[%s961 + $0x78] sm:$0xf]
        %v3748 = vld [vmem:[%s961 + $0x7c] sm:$0xf]
        %v3749 = vld [vmem:[%s961 + $0x80] sm:$0xf]
        %v3750 = vld [vmem:[%s961 + $0x84] sm:$0xf]
        %v3751 = vld [vmem:[%s961 + $0x88] sm:$0xf]
        %v3752 = vld [vmem:[%s961 + $0x8c] sm:$0xf]
        %v3753 = vld [vmem:[%s961 + $0x90] sm:$0xf]
        %v3754 = vld [vmem:[%s961 + $0x94] sm:$0xf]
        %v3755 = vld [vmem:[%s961 + $0x98] sm:$0xf]
        %v3756 = vld [vmem:[%s961 + $0x9c] sm:$0xf]
        %v3757 = vld [vmem:[%s961 + $0xa0] sm:$0xf]
        %v3758 = vld [vmem:[%s961 + $0xa4] sm:$0xf]
        %v3759 = vld [vmem:[%s961 + $0xa8] sm:$0xf]
        %v3760 = vld [vmem:[%s961 + $0xac] sm:$0xf]
        %v3761 = vld [vmem:[%s961 + $0xb0] sm:$0xf]
        %v3762 = vld [vmem:[%s961 + $0xb4] sm:$0xf]
        %v3763 = vld [vmem:[%s961 + $0xb8] sm:$0xf]
        %v3764 = vld [vmem:[%s961 + $0xbc] sm:$0xf]
        %v3765 = vld [vmem:[%s961 + $0xc0] sm:$0xf]
        %v3766 = vld [vmem:[%s961 + $0xc4] sm:$0xf]
        %v3767 = vld [vmem:[%s961 + $0xc8] sm:$0xf]
        %v3768 = vld [vmem:[%s961 + $0xcc] sm:$0xf]
        %v3769 = vld [vmem:[%s961 + $0xd0] sm:$0xf]
        %v3770 = vld [vmem:[%s961 + $0xd4] sm:$0xf]
        %v3771 = vld [vmem:[%s961 + $0xd8] sm:$0xf]
        %v3772 = vld [vmem:[%s961 + $0xdc] sm:$0xf]
        %v3773 = vld [vmem:[%s961 + $0xe0] sm:$0xf]
        %v3774 = vld [vmem:[%s961 + $0xe4] sm:$0xf]
        %v3775 = vld [vmem:[%s961 + $0xe8] sm:$0xf]
        %v3776 = vld [vmem:[%s961 + $0xec] sm:$0xf]
        %v3777 = vld [vmem:[%s961 + $0xf0] sm:$0xf]
        %v3778 = vld [vmem:[%s961 + $0xf4] sm:$0xf]
        %v3779 = vld [vmem:[%s961 + $0xf8] sm:$0xf]
        %v3780 = vld [vmem:[%s961 + $0xfc] sm:$0xf]
        %v3845 = vunpack.c.l.b16 %v3717
        %v3846 = vunpack.c.l.b16 %v3718
        %v3847 = vunpack.c.l.b16 %v3719
        %v3848 = vunpack.c.l.b16 %v3720
        %v3849 = vunpack.c.l.b16 %v3721
        %v3850 = vunpack.c.l.b16 %v3722
        %v3851 = vunpack.c.l.b16 %v3723
        %v3852 = vunpack.c.l.b16 %v3724
        %v3853 = vunpack.c.l.b16 %v3725
        %v3854 = vunpack.c.l.b16 %v3726
        %v3855 = vunpack.c.l.b16 %v3727
        %v3856 = vunpack.c.l.b16 %v3728
        %v3857 = vunpack.c.l.b16 %v3729
        %v3858 = vunpack.c.l.b16 %v3730
        %v3859 = vunpack.c.l.b16 %v3731
        %v3860 = vunpack.c.l.b16 %v3732
        %v3861 = vunpack.c.l.b16 %v3733
        %v3862 = vunpack.c.l.b16 %v3734
        %v3863 = vunpack.c.l.b16 %v3735
        %v3864 = vunpack.c.l.b16 %v3736
        %v3865 = vunpack.c.l.b16 %v3737
        %v3866 = vunpack.c.l.b16 %v3738
        %v3867 = vunpack.c.l.b16 %v3739
        %v3868 = vunpack.c.l.b16 %v3740
        %v3869 = vunpack.c.l.b16 %v3741
        %v3870 = vunpack.c.l.b16 %v3742
        %v3871 = vunpack.c.l.b16 %v3743
        %v3872 = vunpack.c.l.b16 %v3744
        %v3873 = vunpack.c.l.b16 %v3745
        %v3874 = vunpack.c.l.b16 %v3746
        %v3875 = vunpack.c.l.b16 %v3747
        %v3876 = vunpack.c.l.b16 %v3748
        %v3877 = vunpack.c.l.b16 %v3749
        %v3878 = vunpack.c.l.b16 %v3750
        %v3879 = vunpack.c.l.b16 %v3751
        %v3880 = vunpack.c.l.b16 %v3752
        %v3881 = vunpack.c.l.b16 %v3753
        %v3882 = vunpack.c.l.b16 %v3754
        %v3883 = vunpack.c.l.b16 %v3755
        %v3884 = vunpack.c.l.b16 %v3756
        %v3885 = vunpack.c.l.b16 %v3757
        %v3886 = vunpack.c.l.b16 %v3758
        %v3887 = vunpack.c.l.b16 %v3759
        %v3888 = vunpack.c.l.b16 %v3760
        %v3889 = vunpack.c.l.b16 %v3761
        %v3890 = vunpack.c.l.b16 %v3762
        %v3891 = vunpack.c.l.b16 %v3763
        %v3892 = vunpack.c.l.b16 %v3764
        %v3893 = vunpack.c.l.b16 %v3765
        %v3894 = vunpack.c.l.b16 %v3766
        %v3895 = vunpack.c.l.b16 %v3767
        %v3896 = vunpack.c.l.b16 %v3768
        %v3897 = vunpack.c.l.b16 %v3769
        %v3898 = vunpack.c.l.b16 %v3770
        %v3899 = vunpack.c.l.b16 %v3771
        %v3900 = vunpack.c.l.b16 %v3772
        %v3901 = vunpack.c.l.b16 %v3773
        %v3902 = vunpack.c.l.b16 %v3774
        %v3903 = vunpack.c.l.b16 %v3775
        %v3904 = vunpack.c.l.b16 %v3776
        %v3905 = vunpack.c.l.b16 %v3777
        %v3906 = vunpack.c.l.b16 %v3778
        %v3907 = vunpack.c.l.b16 %v3779
        %v3908 = vunpack.c.l.b16 %v3780
        %v3909 = vpack.c.b16 %v3846, %v3845
        %v3910 = vpack.c.b16 %v3848, %v3847
        %v3911 = vpack.c.b16 %v3850, %v3849
        %v3912 = vpack.c.b16 %v3852, %v3851
        %v3913 = vpack.c.b16 %v3854, %v3853
        %v3914 = vpack.c.b16 %v3856, %v3855
        %v3915 = vpack.c.b16 %v3858, %v3857
        %v3916 = vpack.c.b16 %v3860, %v3859
        %v3917 = vpack.c.b16 %v3862, %v3861
        %v3918 = vpack.c.b16 %v3864, %v3863
        %v3919 = vpack.c.b16 %v3866, %v3865
        %v3920 = vpack.c.b16 %v3868, %v3867
        %v3921 = vpack.c.b16 %v3870, %v3869
        %v3922 = vpack.c.b16 %v3872, %v3871
        %v3923 = vpack.c.b16 %v3874, %v3873
        %v3924 = vpack.c.b16 %v3876, %v3875
        %v3925 = vpack.c.b16 %v3878, %v3877
        %v3926 = vpack.c.b16 %v3880, %v3879
        %v3927 = vpack.c.b16 %v3882, %v3881
        %v3928 = vpack.c.b16 %v3884, %v3883
        %v3929 = vpack.c.b16 %v3886, %v3885
        %v3930 = vpack.c.b16 %v3888, %v3887
        %v3931 = vpack.c.b16 %v3890, %v3889
        %v3932 = vpack.c.b16 %v3892, %v3891
        %v3933 = vpack.c.b16 %v3894, %v3893
        %v3934 = vpack.c.b16 %v3896, %v3895
        %v3935 = vpack.c.b16 %v3898, %v3897
        %v3936 = vpack.c.b16 %v3900, %v3899
        %v3937 = vpack.c.b16 %v3902, %v3901
        %v3938 = vpack.c.b16 %v3904, %v3903
        %v3939 = vpack.c.b16 %v3906, %v3905
        %v3940 = vpack.c.b16 %v3908, %v3907
        %3973 = vmatprep.subr.bf16.mxu0 0
        %3974 = vmatpush1.bf16.msra.mxu0 %v3916
        %3975 = vmatprep.subr.bf16.mxu0 0
        %3976 = vmatpush1.bf16.msra.mxu0 %v3915
        %3977 = vmatprep.subr.bf16.mxu0 0
        %3978 = vmatpush1.bf16.msra.mxu0 %v3914
        %3979 = vmatprep.subr.bf16.mxu0 0
        %3980 = vmatpush1.bf16.msra.mxu0 %v3913
        %3981 = vmatprep.subr.bf16.mxu0 0
        %3982 = vmatpush1.bf16.msra.mxu0 %v3912
        %3983 = vmatprep.subr.bf16.mxu0 0
        %3984 = vmatpush1.bf16.msra.mxu0 %v3911
        %3985 = vmatprep.subr.bf16.mxu0 0
        %3986 = vmatpush1.bf16.msra.mxu0 %v3910
        %3987 = vmatprep.subr.bf16.mxu0 0
        %3988 = vmatpush1.bf16.msra.mxu0 %v3909
        %3989 = vmatprep.subr.bf16.mxu0 0
        %3990 = vmatpush2.bf16.msra.mxu0 %v3924
        %3991 = vmatprep.subr.bf16.mxu0 0
        %3992 = vmatpush2.bf16.msra.mxu0 %v3923
        %3993 = vmatprep.subr.bf16.mxu0 0
        %3994 = vmatpush2.bf16.msra.mxu0 %v3922
        %3995 = vmatprep.subr.bf16.mxu0 0
        %3996 = vmatpush2.bf16.msra.mxu0 %v3921
        %3997 = vmatprep.subr.bf16.mxu0 0
        %3998 = vmatpush2.bf16.msra.mxu0 %v3920
        %3999 = vmatprep.subr.bf16.mxu0 0
        %4000 = vmatpush2.bf16.msra.mxu0 %v3919
        %4001 = vmatprep.subr.bf16.mxu0 0
        %4002 = vmatpush2.bf16.msra.mxu0 %v3918
        %4003 = vmatprep.subr.bf16.mxu0 0
        %4004 = vmatpush2.bf16.msra.mxu0 %v3917
        %4005 = vmatprep.mubr.bf16.mxu0 %v3654
        %4006 = vmatmul.mubr.bf16.gmra.mxu0 %v3653
        %v4007 = vpop.f32.mrf.mxu0
        %v4008 = vadd.f32 0.0, %v4007
        %v4009 = vpop.f32.mrf.mxu0
        %v4010 = vpop.f32.mrf.mxu0
        %v4011 = vadd.f32 0.0, %v4010
        %v4012 = vpop.f32.mrf.mxu0
        %4013 = vmatprep.mubr.bf16.mxu0 %v3658
        %4014 = vmatmul.mubr.bf16.gmra.mxu0 %v3657
        %v4015 = vpop.f32.mrf.mxu0
        %v4016 = vadd.f32 0.0, %v4015
        %v4017 = vpop.f32.mrf.mxu0
        %v4018 = vpop.f32.mrf.mxu0
        %v4019 = vadd.f32 0.0, %v4018
        %v4020 = vpop.f32.mrf.mxu0
        %4021 = vmatprep.mubr.bf16.mxu0 %v3662
        %4022 = vmatmul.mubr.bf16.gmra.mxu0 %v3661
        %v4023 = vpop.f32.mrf.mxu0
        %v4024 = vadd.f32 0.0, %v4023
        %v4025 = vpop.f32.mrf.mxu0
        %v4026 = vpop.f32.mrf.mxu0
        %v4027 = vadd.f32 0.0, %v4026
        %v4028 = vpop.f32.mrf.mxu0
        %4029 = vmatprep.mubr.bf16.mxu0 %v3666
        %4030 = vmatmul.mubr.bf16.gmra.mxu0 %v3665
        %v4031 = vpop.f32.mrf.mxu0
        %v4032 = vadd.f32 0.0, %v4031
        %v4033 = vpop.f32.mrf.mxu0
        %v4034 = vpop.f32.mrf.mxu0
        %v4035 = vadd.f32 0.0, %v4034
        %v4036 = vpop.f32.mrf.mxu0
        %4037 = vmatprep.mubr.bf16.mxu0 %v3670
        %4038 = vmatmul.mubr.bf16.gmra.mxu0 %v3669
        %v4039 = vpop.f32.mrf.mxu0
        %v4040 = vadd.f32 0.0, %v4039
        %v4041 = vpop.f32.mrf.mxu0
        %v4042 = vpop.f32.mrf.mxu0
        %v4043 = vadd.f32 0.0, %v4042
        %v4044 = vpop.f32.mrf.mxu0
        %4045 = vmatprep.mubr.bf16.mxu0 %v3674
        %4046 = vmatmul.mubr.bf16.gmra.mxu0 %v3673
        %v4047 = vpop.f32.mrf.mxu0
        %v4048 = vadd.f32 0.0, %v4047
        %v4049 = vpop.f32.mrf.mxu0
        %v4050 = vpop.f32.mrf.mxu0
        %v4051 = vadd.f32 0.0, %v4050
        %v4052 = vpop.f32.mrf.mxu0
        %4053 = vmatprep.mubr.bf16.mxu0 %v3678
        %4054 = vmatmul.mubr.bf16.gmra.mxu0 %v3677
        %v4055 = vpop.f32.mrf.mxu0
        %v4056 = vadd.f32 0.0, %v4055
        %v4057 = vpop.f32.mrf.mxu0
        %v4058 = vpop.f32.mrf.mxu0
        %v4059 = vadd.f32 0.0, %v4058
        %v4060 = vpop.f32.mrf.mxu0
        %4061 = vmatprep.mubr.bf16.mxu0 %v3682
        %4062 = vmatmul.mubr.bf16.gmra.mxu0 %v3681
        %v4063 = vpop.f32.mrf.mxu0
        %v4064 = vadd.f32 0.0, %v4063
        %v4065 = vpop.f32.mrf.mxu0
        %v4066 = vpop.f32.mrf.mxu0
        %v4067 = vadd.f32 0.0, %v4066
        %v4068 = vpop.f32.mrf.mxu0
        %4069 = vmatprep.mubr.bf16.mxu0 %v3686
        %4070 = vmatmul.mubr.bf16.gmra.mxu0 %v3685
        %v4071 = vpop.f32.mrf.mxu0
        %v4072 = vadd.f32 0.0, %v4071
        %v4073 = vpop.f32.mrf.mxu0
        %v4074 = vpop.f32.mrf.mxu0
        %v4075 = vadd.f32 0.0, %v4074
        %v4076 = vpop.f32.mrf.mxu0
        %4077 = vmatprep.mubr.bf16.mxu0 %v3690
        %4078 = vmatmul.mubr.bf16.gmra.mxu0 %v3689
        %v4079 = vpop.f32.mrf.mxu0
        %v4080 = vadd.f32 0.0, %v4079
        %v4081 = vpop.f32.mrf.mxu0
        %v4082 = vpop.f32.mrf.mxu0
        %v4083 = vadd.f32 0.0, %v4082
        %v4084 = vpop.f32.mrf.mxu0
        %4085 = vmatprep.mubr.bf16.mxu0 %v3694
        %4086 = vmatmul.mubr.bf16.gmra.mxu0 %v3693
        %v4087 = vpop.f32.mrf.mxu0
        %v4088 = vadd.f32 0.0, %v4087
        %v4089 = vpop.f32.mrf.mxu0
        %v4090 = vpop.f32.mrf.mxu0
        %v4091 = vadd.f32 0.0, %v4090
        %v4092 = vpop.f32.mrf.mxu0
        %4093 = vmatprep.mubr.bf16.mxu0 %v3698
        %4094 = vmatmul.mubr.bf16.gmra.mxu0 %v3697
        %v4095 = vpop.f32.mrf.mxu0
        %v4096 = vadd.f32 0.0, %v4095
        %v4097 = vpop.f32.mrf.mxu0
        %v4098 = vpop.f32.mrf.mxu0
        %v4099 = vadd.f32 0.0, %v4098
        %v4100 = vpop.f32.mrf.mxu0
        %4101 = vmatprep.mubr.bf16.mxu0 %v3702
        %4102 = vmatmul.mubr.bf16.gmra.mxu0 %v3701
        %v4103 = vpop.f32.mrf.mxu0
        %v4104 = vadd.f32 0.0, %v4103
        %v4105 = vpop.f32.mrf.mxu0
        %v4106 = vpop.f32.mrf.mxu0
        %v4107 = vadd.f32 0.0, %v4106
        %v4108 = vpop.f32.mrf.mxu0
        %4109 = vmatprep.mubr.bf16.mxu0 %v3706
        %4110 = vmatmul.mubr.bf16.gmra.mxu0 %v3705
        %v4111 = vpop.f32.mrf.mxu0
        %v4112 = vadd.f32 0.0, %v4111
        %v4113 = vpop.f32.mrf.mxu0
        %v4114 = vpop.f32.mrf.mxu0
        %v4115 = vadd.f32 0.0, %v4114
        %v4116 = vpop.f32.mrf.mxu0
        %4117 = vmatprep.mubr.bf16.mxu0 %v3710
        %4118 = vmatmul.mubr.bf16.gmra.mxu0 %v3709
        %v4119 = vpop.f32.mrf.mxu0
        %v4120 = vadd.f32 0.0, %v4119
        %v4121 = vpop.f32.mrf.mxu0
        %v4122 = vpop.f32.mrf.mxu0
        %v4123 = vadd.f32 0.0, %v4122
        %v4124 = vpop.f32.mrf.mxu0
        %4125 = vmatprep.mubr.bf16.mxu0 %v3714
        %4126 = vmatmul.mubr.bf16.gmra.mxu0 %v3713
        %v4127 = vpop.f32.mrf.mxu0
        %v4128 = vadd.f32 0.0, %v4127
        %v4129 = vpop.f32.mrf.mxu0
        %v4130 = vpop.f32.mrf.mxu0
        %v4131 = vadd.f32 0.0, %v4130
        %v4132 = vpop.f32.mrf.mxu0
        %4133 = vdwg.mxu0
        %4134 = vmatprep.subr.bf16.mxu0 0
        %4135 = vmatpush1.bf16.msra.mxu0 %v3932
        %4136 = vmatprep.subr.bf16.mxu0 0
        %4137 = vmatpush1.bf16.msra.mxu0 %v3931
        %4138 = vmatprep.subr.bf16.mxu0 0
        %4139 = vmatpush1.bf16.msra.mxu0 %v3930
        %4140 = vmatprep.subr.bf16.mxu0 0
        %4141 = vmatpush1.bf16.msra.mxu0 %v3929
        %4142 = vmatprep.subr.bf16.mxu0 0
        %4143 = vmatpush1.bf16.msra.mxu0 %v3928
        %4144 = vmatprep.subr.bf16.mxu0 0
        %4145 = vmatpush1.bf16.msra.mxu0 %v3927
        %4146 = vmatprep.subr.bf16.mxu0 0
        %4147 = vmatpush1.bf16.msra.mxu0 %v3926
        %4148 = vmatprep.subr.bf16.mxu0 0
        %4149 = vmatpush1.bf16.msra.mxu0 %v3925
        %4150 = vmatprep.subr.bf16.mxu0 0
        %4151 = vmatpush2.bf16.msra.mxu0 %v3940
        %4152 = vmatprep.subr.bf16.mxu0 0
        %4153 = vmatpush2.bf16.msra.mxu0 %v3939
        %4154 = vmatprep.subr.bf16.mxu0 0
        %4155 = vmatpush2.bf16.msra.mxu0 %v3938
        %4156 = vmatprep.subr.bf16.mxu0 0
        %4157 = vmatpush2.bf16.msra.mxu0 %v3937
        %4158 = vmatprep.subr.bf16.mxu0 0
        %4159 = vmatpush2.bf16.msra.mxu0 %v3936
        %4160 = vmatprep.subr.bf16.mxu0 0
        %4161 = vmatpush2.bf16.msra.mxu0 %v3935
        %4162 = vmatprep.subr.bf16.mxu0 0
        %4163 = vmatpush2.bf16.msra.mxu0 %v3934
        %4164 = vmatprep.subr.bf16.mxu0 0
        %4165 = vmatpush2.bf16.msra.mxu0 %v3933
        %4166 = vmatprep.mubr.bf16.mxu0 %v3656
        %4167 = vmatmul.mubr.bf16.gmra.mxu0 %v3655
        %v4168 = vpop.f32.mrf.mxu0
        %v4169 = vadd.f32 %v4008, %v4168
        %v4170 = vpop.f32.mrf.mxu0
        %v4171 = vpop.f32.mrf.mxu0
        %v4172 = vadd.f32 %v4011, %v4171
        %v4173 = vpop.f32.mrf.mxu0
        %4174 = vmatprep.mubr.bf16.mxu0 %v3660
        %4175 = vmatmul.mubr.bf16.gmra.mxu0 %v3659
        %v4176 = vpop.f32.mrf.mxu0
        %v4177 = vadd.f32 %v4016, %v4176
        %v4178 = vpop.f32.mrf.mxu0
        %v4179 = vpop.f32.mrf.mxu0
        %v4180 = vadd.f32 %v4019, %v4179
        %v4181 = vpop.f32.mrf.mxu0
        %4182 = vmatprep.mubr.bf16.mxu0 %v3664
        %4183 = vmatmul.mubr.bf16.gmra.mxu0 %v3663
        %v4184 = vpop.f32.mrf.mxu0
        %v4185 = vadd.f32 %v4024, %v4184
        %v4186 = vpop.f32.mrf.mxu0
        %v4187 = vpop.f32.mrf.mxu0
        %v4188 = vadd.f32 %v4027, %v4187
        %v4189 = vpop.f32.mrf.mxu0
        %4190 = vmatprep.mubr.bf16.mxu0 %v3668
        %4191 = vmatmul.mubr.bf16.gmra.mxu0 %v3667
        %v4192 = vpop.f32.mrf.mxu0
        %v4193 = vadd.f32 %v4032, %v4192
        %v4194 = vpop.f32.mrf.mxu0
        %v4195 = vpop.f32.mrf.mxu0
        %v4196 = vadd.f32 %v4035, %v4195
        %v4197 = vpop.f32.mrf.mxu0
        %4198 = vmatprep.mubr.bf16.mxu0 %v3672
        %4199 = vmatmul.mubr.bf16.gmra.mxu0 %v3671
        %v4200 = vpop.f32.mrf.mxu0
        %v4201 = vadd.f32 %v4040, %v4200
        %v4202 = vpop.f32.mrf.mxu0
        %v4203 = vpop.f32.mrf.mxu0
        %v4204 = vadd.f32 %v4043, %v4203
        %v4205 = vpop.f32.mrf.mxu0
        %4206 = vmatprep.mubr.bf16.mxu0 %v3676
        %4207 = vmatmul.mubr.bf16.gmra.mxu0 %v3675
        %v4208 = vpop.f32.mrf.mxu0
        %v4209 = vadd.f32 %v4048, %v4208
        %v4210 = vpop.f32.mrf.mxu0
        %v4211 = vpop.f32.mrf.mxu0
        %v4212 = vadd.f32 %v4051, %v4211
        %v4213 = vpop.f32.mrf.mxu0
        %4214 = vmatprep.mubr.bf16.mxu0 %v3680
        %4215 = vmatmul.mubr.bf16.gmra.mxu0 %v3679
        %v4216 = vpop.f32.mrf.mxu0
        %v4217 = vadd.f32 %v4056, %v4216
        %v4218 = vpop.f32.mrf.mxu0
        %v4219 = vpop.f32.mrf.mxu0
        %v4220 = vadd.f32 %v4059, %v4219
        %v4221 = vpop.f32.mrf.mxu0
        %4222 = vmatprep.mubr.bf16.mxu0 %v3684
        %4223 = vmatmul.mubr.bf16.gmra.mxu0 %v3683
        %v4224 = vpop.f32.mrf.mxu0
        %v4225 = vadd.f32 %v4064, %v4224
        %v4226 = vpop.f32.mrf.mxu0
        %v4227 = vpop.f32.mrf.mxu0
        %v4228 = vadd.f32 %v4067, %v4227
        %v4229 = vpop.f32.mrf.mxu0
        %4230 = vmatprep.mubr.bf16.mxu0 %v3688
        %4231 = vmatmul.mubr.bf16.gmra.mxu0 %v3687
        %v4232 = vpop.f32.mrf.mxu0
        %v4233 = vadd.f32 %v4072, %v4232
        %v4234 = vpop.f32.mrf.mxu0
        %v4235 = vpop.f32.mrf.mxu0
        %v4236 = vadd.f32 %v4075, %v4235
        %v4237 = vpop.f32.mrf.mxu0
        %4238 = vmatprep.mubr.bf16.mxu0 %v3692
        %4239 = vmatmul.mubr.bf16.gmra.mxu0 %v3691
        %v4240 = vpop.f32.mrf.mxu0
        %v4241 = vadd.f32 %v4080, %v4240
        %v4242 = vpop.f32.mrf.mxu0
        %v4243 = vpop.f32.mrf.mxu0
        %v4244 = vadd.f32 %v4083, %v4243
        %v4245 = vpop.f32.mrf.mxu0
        %4246 = vmatprep.mubr.bf16.mxu0 %v3696
        %4247 = vmatmul.mubr.bf16.gmra.mxu0 %v3695
        %v4248 = vpop.f32.mrf.mxu0
        %v4249 = vadd.f32 %v4088, %v4248
        %v4250 = vpop.f32.mrf.mxu0
        %v4251 = vpop.f32.mrf.mxu0
        %v4252 = vadd.f32 %v4091, %v4251
        %v4253 = vpop.f32.mrf.mxu0
        %4254 = vmatprep.mubr.bf16.mxu0 %v3700
        %4255 = vmatmul.mubr.bf16.gmra.mxu0 %v3699
        %v4256 = vpop.f32.mrf.mxu0
        %v4257 = vadd.f32 %v4096, %v4256
        %v4258 = vpop.f32.mrf.mxu0
        %v4259 = vpop.f32.mrf.mxu0
        %v4260 = vadd.f32 %v4099, %v4259
        %v4261 = vpop.f32.mrf.mxu0
        %4262 = vmatprep.mubr.bf16.mxu0 %v3704
        %4263 = vmatmul.mubr.bf16.gmra.mxu0 %v3703
        %v4264 = vpop.f32.mrf.mxu0
        %v4265 = vadd.f32 %v4104, %v4264
        %v4266 = vpop.f32.mrf.mxu0
        %v4267 = vpop.f32.mrf.mxu0
        %v4268 = vadd.f32 %v4107, %v4267
        %v4269 = vpop.f32.mrf.mxu0
        %4270 = vmatprep.mubr.bf16.mxu0 %v3708
        %4271 = vmatmul.mubr.bf16.gmra.mxu0 %v3707
        %v4272 = vpop.f32.mrf.mxu0
        %v4273 = vadd.f32 %v4112, %v4272
        %v4274 = vpop.f32.mrf.mxu0
        %v4275 = vpop.f32.mrf.mxu0
        %v4276 = vadd.f32 %v4115, %v4275
        %v4277 = vpop.f32.mrf.mxu0
        %4278 = vmatprep.mubr.bf16.mxu0 %v3712
        %4279 = vmatmul.mubr.bf16.gmra.mxu0 %v3711
        %v4280 = vpop.f32.mrf.mxu0
        %v4281 = vadd.f32 %v4120, %v4280
        %v4282 = vpop.f32.mrf.mxu0
        %v4283 = vpop.f32.mrf.mxu0
        %v4284 = vadd.f32 %v4123, %v4283
        %v4285 = vpop.f32.mrf.mxu0
        %4286 = vmatprep.mubr.bf16.mxu0 %v3716
        %4287 = vmatmul.mubr.bf16.gmra.mxu0 %v3715
        %v4288 = vpop.f32.mrf.mxu0
        %v4289 = vadd.f32 %v4128, %v4288
        %v4290 = vpop.f32.mrf.mxu0
        %v4291 = vpop.f32.mrf.mxu0
        %v4292 = vadd.f32 %v4131, %v4291
        %v4293 = vpop.f32.mrf.mxu0
        %4294 = vdwg.mxu0
        %v4295 = vpack.c.bf16 %v4172, %v4169
        %v4296 = vpack.c.bf16 %v4180, %v4177
        %v4297 = vpack.c.bf16 %v4188, %v4185
        %v4298 = vpack.c.bf16 %v4196, %v4193
        %v4299 = vpack.c.bf16 %v4204, %v4201
        %v4300 = vpack.c.bf16 %v4212, %v4209
        %v4301 = vpack.c.bf16 %v4220, %v4217
        %v4302 = vpack.c.bf16 %v4228, %v4225
        %v4303 = vpack.c.bf16 %v4236, %v4233
        %v4304 = vpack.c.bf16 %v4244, %v4241
        %v4305 = vpack.c.bf16 %v4252, %v4249
        %v4306 = vpack.c.bf16 %v4260, %v4257
        %v4307 = vpack.c.bf16 %v4268, %v4265
        %v4308 = vpack.c.bf16 %v4276, %v4273
        %v4309 = vpack.c.bf16 %v4284, %v4281
        %v4310 = vpack.c.bf16 %v4292, %v4289
        %v4311 = vld [vmem:[#allocation19] sm:$0xf]
        %v4312 = vld [vmem:[#allocation19 + $0x4] sm:$0xf]
        %v4313 = vld [vmem:[#allocation19 + $0x8] sm:$0xf]
        %v4314 = vld [vmem:[#allocation19 + $0xc] sm:$0xf]
        %v4315 = vld [vmem:[#allocation19 + $0x10] sm:$0xf]
        %v4316 = vld [vmem:[#allocation19 + $0x14] sm:$0xf]
        %v4317 = vld [vmem:[#allocation19 + $0x18] sm:$0xf]
        %v4318 = vld [vmem:[#allocation19 + $0x1c] sm:$0xf]
        %v4319 = vld [vmem:[#allocation19 + $0x20] sm:$0xf]
        %v4320 = vld [vmem:[#allocation19 + $0x24] sm:$0xf]
        %v4321 = vld [vmem:[#allocation19 + $0x28] sm:$0xf]
        %v4322 = vld [vmem:[#allocation19 + $0x2c] sm:$0xf]
        %v4323 = vld [vmem:[#allocation19 + $0x30] sm:$0xf]
        %v4324 = vld [vmem:[#allocation19 + $0x34] sm:$0xf]
        %v4325 = vld [vmem:[#allocation19 + $0x38] sm:$0xf]
        %v4326 = vld [vmem:[#allocation19 + $0x3c] sm:$0xf]
        %v4343 = vunpack.c.l.b16 %v4311
        %v4344 = vunpack.c.l.b16 %v4312
        %v4345 = vunpack.c.l.b16 %v4313
        %v4346 = vunpack.c.l.b16 %v4314
        %v4347 = vunpack.c.l.b16 %v4315
        %v4348 = vunpack.c.l.b16 %v4316
        %v4349 = vunpack.c.l.b16 %v4317
        %v4350 = vunpack.c.l.b16 %v4318
        %v4351 = vunpack.c.l.b16 %v4319
        %v4352 = vunpack.c.l.b16 %v4320
        %v4353 = vunpack.c.l.b16 %v4321
        %v4354 = vunpack.c.l.b16 %v4322
        %v4355 = vunpack.c.l.b16 %v4323
        %v4356 = vunpack.c.l.b16 %v4324
        %v4357 = vunpack.c.l.b16 %v4325
        %v4358 = vunpack.c.l.b16 %v4326
        %v4359 = vpack.c.b16 %v4344, %v4343
        %v4360 = vpack.c.b16 %v4346, %v4345
        %v4361 = vpack.c.b16 %v4348, %v4347
        %v4362 = vpack.c.b16 %v4350, %v4349
        %v4363 = vpack.c.b16 %v4352, %v4351
        %v4364 = vpack.c.b16 %v4354, %v4353
        %v4365 = vpack.c.b16 %v4356, %v4355
        %v4366 = vpack.c.b16 %v4358, %v4357
        %4375 = vmatprep.subr.bf16.mxu0 0
        %4376 = vmatpush1.bf16.msra.mxu0 %v4366
        %4377 = vmatprep.subr.bf16.mxu0 0
        %4378 = vmatpush1.bf16.msra.mxu0 %v4365
        %4379 = vmatprep.subr.bf16.mxu0 0
        %4380 = vmatpush1.bf16.msra.mxu0 %v4364
        %4381 = vmatprep.subr.bf16.mxu0 0
        %4382 = vmatpush1.bf16.msra.mxu0 %v4363
        %4383 = vmatprep.subr.bf16.mxu0 0
        %4384 = vmatpush1.bf16.msra.mxu0 %v4362
        %4385 = vmatprep.subr.bf16.mxu0 0
        %4386 = vmatpush1.bf16.msra.mxu0 %v4361
        %4387 = vmatprep.subr.bf16.mxu0 0
        %4388 = vmatpush1.bf16.msra.mxu0 %v4360
        %4389 = vmatprep.subr.bf16.mxu0 0
        %4390 = vmatpush1.bf16.msra.mxu0 %v4359
        %4391 = vmatprep.subr.bf16.mxu0 0
        %4392 = vmatpush2.bf16.msra.mxu0 0
        %4393 = vmatprep.subr.bf16.mxu0 0
        %4394 = vmatpush2.bf16.msra.mxu0 0
        %4395 = vmatprep.subr.bf16.mxu0 0
        %4396 = vmatpush2.bf16.msra.mxu0 0
        %4397 = vmatprep.subr.bf16.mxu0 0
        %4398 = vmatpush2.bf16.msra.mxu0 0
        %4399 = vmatprep.subr.bf16.mxu0 0
        %4400 = vmatpush2.bf16.msra.mxu0 0
        %4401 = vmatprep.subr.bf16.mxu0 0
        %4402 = vmatpush2.bf16.msra.mxu0 0
        %4403 = vmatprep.subr.bf16.mxu0 0
        %4404 = vmatpush2.bf16.msra.mxu0 0
        %4405 = vmatprep.subr.bf16.mxu0 0
        %4406 = vmatpush2.bf16.msra.mxu0 0
        %4407 = vmatprep.mubr.bf16.mxu0 0
        %4408 = vmatmul.mubr.bf16.gmra.mxu0 %v4295
        %v4409 = vpop.f32.mrf.mxu0
        %v4410 = vadd.f32 %v1155, %v4409
        %v4411 = vpop.f32.mrf.mxu0
        %v4412 = vpop.f32.mrf.mxu0
        %v4413 = vadd.f32 %v1156, %v4412
        %v4414 = vpop.f32.mrf.mxu0
        %4415 = vmatprep.mubr.bf16.mxu0 0
        %4416 = vmatmul.mubr.bf16.gmra.mxu0 %v4296
        %v4417 = vpop.f32.mrf.mxu0
        %v4418 = vadd.f32 %v1157, %v4417
        %v4419 = vpop.f32.mrf.mxu0
        %v4420 = vpop.f32.mrf.mxu0
        %v4421 = vadd.f32 %v1158, %v4420
        %v4422 = vpop.f32.mrf.mxu0
        %4423 = vmatprep.mubr.bf16.mxu0 0
        %4424 = vmatmul.mubr.bf16.gmra.mxu0 %v4297
        %v4425 = vpop.f32.mrf.mxu0
        %v4426 = vadd.f32 %v1159, %v4425
        %v4427 = vpop.f32.mrf.mxu0
        %v4428 = vpop.f32.mrf.mxu0
        %v4429 = vadd.f32 %v1160, %v4428
        %v4430 = vpop.f32.mrf.mxu0
        %4431 = vmatprep.mubr.bf16.mxu0 0
        %4432 = vmatmul.mubr.bf16.gmra.mxu0 %v4298
        %v4433 = vpop.f32.mrf.mxu0
        %v4434 = vadd.f32 %v1161, %v4433
        %v4435 = vpop.f32.mrf.mxu0
        %v4436 = vpop.f32.mrf.mxu0
        %v4437 = vadd.f32 %v1162, %v4436
        %v4438 = vpop.f32.mrf.mxu0
        %4439 = vmatprep.mubr.bf16.mxu0 0
        %4440 = vmatmul.mubr.bf16.gmra.mxu0 %v4299
        %v4441 = vpop.f32.mrf.mxu0
        %v4442 = vadd.f32 %v1163, %v4441
        %v4443 = vpop.f32.mrf.mxu0
        %v4444 = vpop.f32.mrf.mxu0
        %v4445 = vadd.f32 %v1164, %v4444
        %v4446 = vpop.f32.mrf.mxu0
        %4447 = vmatprep.mubr.bf16.mxu0 0
        %4448 = vmatmul.mubr.bf16.gmra.mxu0 %v4300
        %v4449 = vpop.f32.mrf.mxu0
        %v4450 = vadd.f32 %v1165, %v4449
        %v4451 = vpop.f32.mrf.mxu0
        %v4452 = vpop.f32.mrf.mxu0
        %v4453 = vadd.f32 %v1166, %v4452
        %v4454 = vpop.f32.mrf.mxu0
        %4455 = vmatprep.mubr.bf16.mxu0 0
        %4456 = vmatmul.mubr.bf16.gmra.mxu0 %v4301
        %v4457 = vpop.f32.mrf.mxu0
        %v4458 = vadd.f32 %v1167, %v4457
        %v4459 = vpop.f32.mrf.mxu0
        %v4460 = vpop.f32.mrf.mxu0
        %v4461 = vadd.f32 %v1168, %v4460
        %v4462 = vpop.f32.mrf.mxu0
        %4463 = vmatprep.mubr.bf16.mxu0 0
        %4464 = vmatmul.mubr.bf16.gmra.mxu0 %v4302
        %v4465 = vpop.f32.mrf.mxu0
        %v4466 = vadd.f32 %v1169, %v4465
        %v4467 = vpop.f32.mrf.mxu0
        %v4468 = vpop.f32.mrf.mxu0
        %v4469 = vadd.f32 %v1170, %v4468
        %v4470 = vpop.f32.mrf.mxu0
        %4471 = vmatprep.mubr.bf16.mxu0 0
        %4472 = vmatmul.mubr.bf16.gmra.mxu0 %v4303
        %v4473 = vpop.f32.mrf.mxu0
        %v4474 = vadd.f32 %v1171, %v4473
        %v4475 = vpop.f32.mrf.mxu0
        %v4476 = vpop.f32.mrf.mxu0
        %v4477 = vadd.f32 %v1172, %v4476
        %v4478 = vpop.f32.mrf.mxu0
        %4479 = vmatprep.mubr.bf16.mxu0 0
        %4480 = vmatmul.mubr.bf16.gmra.mxu0 %v4304
        %v4481 = vpop.f32.mrf.mxu0
        %v4482 = vadd.f32 %v1173, %v4481
        %v4483 = vpop.f32.mrf.mxu0
        %v4484 = vpop.f32.mrf.mxu0
        %v4485 = vadd.f32 %v1174, %v4484
        %v4486 = vpop.f32.mrf.mxu0
        %4487 = vmatprep.mubr.bf16.mxu0 0
        %4488 = vmatmul.mubr.bf16.gmra.mxu0 %v4305
        %v4489 = vpop.f32.mrf.mxu0
        %v4490 = vadd.f32 %v1175, %v4489
        %v4491 = vpop.f32.mrf.mxu0
        %v4492 = vpop.f32.mrf.mxu0
        %v4493 = vadd.f32 %v1176, %v4492
        %v4494 = vpop.f32.mrf.mxu0
        %4495 = vmatprep.mubr.bf16.mxu0 0
        %4496 = vmatmul.mubr.bf16.gmra.mxu0 %v4306
        %v4497 = vpop.f32.mrf.mxu0
        %v4498 = vadd.f32 %v1177, %v4497
        %v4499 = vpop.f32.mrf.mxu0
        %v4500 = vpop.f32.mrf.mxu0
        %v4501 = vadd.f32 %v1178, %v4500
        %v4502 = vpop.f32.mrf.mxu0
        %4503 = vmatprep.mubr.bf16.mxu0 0
        %4504 = vmatmul.mubr.bf16.gmra.mxu0 %v4307
        %v4505 = vpop.f32.mrf.mxu0
        %v4506 = vadd.f32 %v1179, %v4505
        %v4507 = vpop.f32.mrf.mxu0
        %v4508 = vpop.f32.mrf.mxu0
        %v4509 = vadd.f32 %v1180, %v4508
        %v4510 = vpop.f32.mrf.mxu0
        %4511 = vmatprep.mubr.bf16.mxu0 0
        %4512 = vmatmul.mubr.bf16.gmra.mxu0 %v4308
        %v4513 = vpop.f32.mrf.mxu0
        %v4514 = vadd.f32 %v1181, %v4513
        %v4515 = vpop.f32.mrf.mxu0
        %v4516 = vpop.f32.mrf.mxu0
        %v4517 = vadd.f32 %v1182, %v4516
        %v4518 = vpop.f32.mrf.mxu0
        %4519 = vmatprep.mubr.bf16.mxu0 0
        %4520 = vmatmul.mubr.bf16.gmra.mxu0 %v4309
        %v4521 = vpop.f32.mrf.mxu0
        %v4522 = vadd.f32 %v1183, %v4521
        %v4523 = vpop.f32.mrf.mxu0
        %v4524 = vpop.f32.mrf.mxu0
        %v4525 = vadd.f32 %v1184, %v4524
        %v4526 = vpop.f32.mrf.mxu0
        %4527 = vmatprep.mubr.bf16.mxu0 0
        %4528 = vmatmul.mubr.bf16.gmra.mxu0 %v4310
        %v4529 = vpop.f32.mrf.mxu0
        %v4530 = vadd.f32 %v1185, %v4529
        %v4531 = vpop.f32.mrf.mxu0
        %v4532 = vpop.f32.mrf.mxu0
        %v4533 = vadd.f32 %v1186, %v4532
        %v4534 = vpop.f32.mrf.mxu0
        %4535 = vdwg.mxu0
        %v4536 = vld [vmem:[#allocation20] sm:$0x1]
        %v4537 = vld [vmem:[#allocation22] sm:$0x1]
        %4538 = vadd.xlane.f32.xlu0 %v4410
        %v4539 = vpop.xlane.xlu0 %4538
        %4540 = vadd.xlane.f32.xlu0 %v4413
        %v4541 = vpop.xlane.xlu0 %4540
        %4542 = vadd.xlane.f32.xlu0 %v4418
        %v4543 = vpop.xlane.xlu0 %4542
        %4544 = vadd.xlane.f32.xlu0 %v4421
        %v4545 = vpop.xlane.xlu0 %4544
        %4546 = vadd.xlane.f32.xlu0 %v4426
        %v4547 = vpop.xlane.xlu0 %4546
        %4548 = vadd.xlane.f32.xlu0 %v4429
        %v4549 = vpop.xlane.xlu0 %4548
        %4550 = vadd.xlane.f32.xlu0 %v4434
        %v4551 = vpop.xlane.xlu0 %4550
        %4552 = vadd.xlane.f32.xlu0 %v4437
        %v4553 = vpop.xlane.xlu0 %4552
        %4554 = vadd.xlane.f32.xlu0 %v4442
        %v4555 = vpop.xlane.xlu0 %4554
        %4556 = vadd.xlane.f32.xlu0 %v4445
        %v4557 = vpop.xlane.xlu0 %4556
        %4558 = vadd.xlane.f32.xlu0 %v4450
        %v4559 = vpop.xlane.xlu0 %4558
        %4560 = vadd.xlane.f32.xlu0 %v4453
        %v4561 = vpop.xlane.xlu0 %4560
        %4562 = vadd.xlane.f32.xlu0 %v4458
        %v4563 = vpop.xlane.xlu0 %4562
        %4564 = vadd.xlane.f32.xlu0 %v4461
        %v4565 = vpop.xlane.xlu0 %4564
        %4566 = vadd.xlane.f32.xlu0 %v4466
        %v4567 = vpop.xlane.xlu0 %4566
        %4568 = vadd.xlane.f32.xlu0 %v4469
        %v4569 = vpop.xlane.xlu0 %4568
        %4570 = vadd.xlane.f32.xlu0 %v4474
        %v4571 = vpop.xlane.xlu0 %4570
        %4572 = vadd.xlane.f32.xlu0 %v4477
        %v4573 = vpop.xlane.xlu0 %4572
        %4574 = vadd.xlane.f32.xlu0 %v4482
        %v4575 = vpop.xlane.xlu0 %4574
        %4576 = vadd.xlane.f32.xlu0 %v4485
        %v4577 = vpop.xlane.xlu0 %4576
        %4578 = vadd.xlane.f32.xlu0 %v4490
        %v4579 = vpop.xlane.xlu0 %4578
        %4580 = vadd.xlane.f32.xlu0 %v4493
        %v4581 = vpop.xlane.xlu0 %4580
        %4582 = vadd.xlane.f32.xlu0 %v4498
        %v4583 = vpop.xlane.xlu0 %4582
        %4584 = vadd.xlane.f32.xlu0 %v4501
        %v4585 = vpop.xlane.xlu0 %4584
        %4586 = vadd.xlane.f32.xlu0 %v4506
        %v4587 = vpop.xlane.xlu0 %4586
        %4588 = vadd.xlane.f32.xlu0 %v4509
        %v4589 = vpop.xlane.xlu0 %4588
        %4590 = vadd.xlane.f32.xlu0 %v4514
        %v4591 = vpop.xlane.xlu0 %4590
        %4592 = vadd.xlane.f32.xlu0 %v4517
        %v4593 = vpop.xlane.xlu0 %4592
        %4594 = vadd.xlane.f32.xlu0 %v4522
        %v4595 = vpop.xlane.xlu0 %4594
        %4596 = vadd.xlane.f32.xlu0 %v4525
        %v4597 = vpop.xlane.xlu0 %4596
        %4598 = vadd.xlane.f32.xlu0 %v4530
        %v4599 = vpop.xlane.xlu0 %4598
        %4600 = vadd.xlane.f32.xlu0 %v4533
        %v4601 = vpop.xlane.xlu0 %4600
        %v4602 = vrcp.pop 128.0
        %v4603 = vmul.f32 %v4539, %v4602
        %v4604 = vmul.f32 %v4541, %v4602
        %v4605 = vmul.f32 %v4543, %v4602
        %v4606 = vmul.f32 %v4545, %v4602
        %v4607 = vmul.f32 %v4547, %v4602
        %v4608 = vmul.f32 %v4549, %v4602
        %v4609 = vmul.f32 %v4551, %v4602
        %v4610 = vmul.f32 %v4553, %v4602
        %v4611 = vmul.f32 %v4555, %v4602
        %v4612 = vmul.f32 %v4557, %v4602
        %v4613 = vmul.f32 %v4559, %v4602
        %v4614 = vmul.f32 %v4561, %v4602
        %v4615 = vmul.f32 %v4563, %v4602
        %v4616 = vmul.f32 %v4565, %v4602
        %v4617 = vmul.f32 %v4567, %v4602
        %v4618 = vmul.f32 %v4569, %v4602
        %v4619 = vmul.f32 %v4571, %v4602
        %v4620 = vmul.f32 %v4573, %v4602
        %v4621 = vmul.f32 %v4575, %v4602
        %v4622 = vmul.f32 %v4577, %v4602
        %v4623 = vmul.f32 %v4579, %v4602
        %v4624 = vmul.f32 %v4581, %v4602
        %v4625 = vmul.f32 %v4583, %v4602
        %v4626 = vmul.f32 %v4585, %v4602
        %v4627 = vmul.f32 %v4587, %v4602
        %v4628 = vmul.f32 %v4589, %v4602
        %v4629 = vmul.f32 %v4591, %v4602
        %v4630 = vmul.f32 %v4593, %v4602
        %v4631 = vmul.f32 %v4595, %v4602
        %v4632 = vmul.f32 %v4597, %v4602
        %v4633 = vmul.f32 %v4599, %v4602
        %v4634 = vmul.f32 %v4601, %v4602
        %v4635 = vsub.f32 %v4410, %v4603
        %v4636 = vsub.f32 %v4413, %v4604
        %v4637 = vsub.f32 %v4418, %v4605
        %v4638 = vsub.f32 %v4421, %v4606
        %v4639 = vsub.f32 %v4426, %v4607
        %v4640 = vsub.f32 %v4429, %v4608
        %v4641 = vsub.f32 %v4434, %v4609
        %v4642 = vsub.f32 %v4437, %v4610
        %v4643 = vsub.f32 %v4442, %v4611
        %v4644 = vsub.f32 %v4445, %v4612
        %v4645 = vsub.f32 %v4450, %v4613
        %v4646 = vsub.f32 %v4453, %v4614
        %v4647 = vsub.f32 %v4458, %v4615
        %v4648 = vsub.f32 %v4461, %v4616
        %v4649 = vsub.f32 %v4466, %v4617
        %v4650 = vsub.f32 %v4469, %v4618
        %v4651 = vsub.f32 %v4474, %v4619
        %v4652 = vsub.f32 %v4477, %v4620
        %v4653 = vsub.f32 %v4482, %v4621
        %v4654 = vsub.f32 %v4485, %v4622
        %v4655 = vsub.f32 %v4490, %v4623
        %v4656 = vsub.f32 %v4493, %v4624
        %v4657 = vsub.f32 %v4498, %v4625
        %v4658 = vsub.f32 %v4501, %v4626
        %v4659 = vsub.f32 %v4506, %v4627
        %v4660 = vsub.f32 %v4509, %v4628
        %v4661 = vsub.f32 %v4514, %v4629
        %v4662 = vsub.f32 %v4517, %v4630
        %v4663 = vsub.f32 %v4522, %v4631
        %v4664 = vsub.f32 %v4525, %v4632
        %v4665 = vsub.f32 %v4530, %v4633
        %v4666 = vsub.f32 %v4533, %v4634
        %v4667 = vmul.f32 %v4635, %v4635
        %v4668 = vmul.f32 %v4636, %v4636
        %v4669 = vmul.f32 %v4637, %v4637
        %v4670 = vmul.f32 %v4638, %v4638
        %v4671 = vmul.f32 %v4639, %v4639
        %v4672 = vmul.f32 %v4640, %v4640
        %v4673 = vmul.f32 %v4641, %v4641
        %v4674 = vmul.f32 %v4642, %v4642
        %v4675 = vmul.f32 %v4643, %v4643
        %v4676 = vmul.f32 %v4644, %v4644
        %v4677 = vmul.f32 %v4645, %v4645
        %v4678 = vmul.f32 %v4646, %v4646
        %v4679 = vmul.f32 %v4647, %v4647
        %v4680 = vmul.f32 %v4648, %v4648
        %v4681 = vmul.f32 %v4649, %v4649
        %v4682 = vmul.f32 %v4650, %v4650
        %v4683 = vmul.f32 %v4651, %v4651
        %v4684 = vmul.f32 %v4652, %v4652
        %v4685 = vmul.f32 %v4653, %v4653
        %v4686 = vmul.f32 %v4654, %v4654
        %v4687 = vmul.f32 %v4655, %v4655
        %v4688 = vmul.f32 %v4656, %v4656
        %v4689 = vmul.f32 %v4657, %v4657
        %v4690 = vmul.f32 %v4658, %v4658
        %v4691 = vmul.f32 %v4659, %v4659
        %v4692 = vmul.f32 %v4660, %v4660
        %v4693 = vmul.f32 %v4661, %v4661
        %v4694 = vmul.f32 %v4662, %v4662
        %v4695 = vmul.f32 %v4663, %v4663
        %v4696 = vmul.f32 %v4664, %v4664
        %v4697 = vmul.f32 %v4665, %v4665
        %v4698 = vmul.f32 %v4666, %v4666
        %4699 = vadd.xlane.f32.xlu0 %v4667
        %v4700 = vpop.xlane.xlu0 %4699
        %4701 = vadd.xlane.f32.xlu0 %v4668
        %v4702 = vpop.xlane.xlu0 %4701
        %4703 = vadd.xlane.f32.xlu0 %v4669
        %v4704 = vpop.xlane.xlu0 %4703
        %4705 = vadd.xlane.f32.xlu0 %v4670
        %v4706 = vpop.xlane.xlu0 %4705
        %4707 = vadd.xlane.f32.xlu0 %v4671
        %v4708 = vpop.xlane.xlu0 %4707
        %4709 = vadd.xlane.f32.xlu0 %v4672
        %v4710 = vpop.xlane.xlu0 %4709
        %4711 = vadd.xlane.f32.xlu0 %v4673
        %v4712 = vpop.xlane.xlu0 %4711
        %4713 = vadd.xlane.f32.xlu0 %v4674
        %v4714 = vpop.xlane.xlu0 %4713
        %4715 = vadd.xlane.f32.xlu0 %v4675
        %v4716 = vpop.xlane.xlu0 %4715
        %4717 = vadd.xlane.f32.xlu0 %v4676
        %v4718 = vpop.xlane.xlu0 %4717
        %4719 = vadd.xlane.f32.xlu0 %v4677
        %v4720 = vpop.xlane.xlu0 %4719
        %4721 = vadd.xlane.f32.xlu0 %v4678
        %v4722 = vpop.xlane.xlu0 %4721
        %4723 = vadd.xlane.f32.xlu0 %v4679
        %v4724 = vpop.xlane.xlu0 %4723
        %4725 = vadd.xlane.f32.xlu0 %v4680
        %v4726 = vpop.xlane.xlu0 %4725
        %4727 = vadd.xlane.f32.xlu0 %v4681
        %v4728 = vpop.xlane.xlu0 %4727
        %4729 = vadd.xlane.f32.xlu0 %v4682
        %v4730 = vpop.xlane.xlu0 %4729
        %4731 = vadd.xlane.f32.xlu0 %v4683
        %v4732 = vpop.xlane.xlu0 %4731
        %4733 = vadd.xlane.f32.xlu0 %v4684
        %v4734 = vpop.xlane.xlu0 %4733
        %4735 = vadd.xlane.f32.xlu0 %v4685
        %v4736 = vpop.xlane.xlu0 %4735
        %4737 = vadd.xlane.f32.xlu0 %v4686
        %v4738 = vpop.xlane.xlu0 %4737
        %4739 = vadd.xlane.f32.xlu0 %v4687
        %v4740 = vpop.xlane.xlu0 %4739
        %4741 = vadd.xlane.f32.xlu0 %v4688
        %v4742 = vpop.xlane.xlu0 %4741
        %4743 = vadd.xlane.f32.xlu0 %v4689
        %v4744 = vpop.xlane.xlu0 %4743
        %4745 = vadd.xlane.f32.xlu0 %v4690
        %v4746 = vpop.xlane.xlu0 %4745
        %4747 = vadd.xlane.f32.xlu0 %v4691
        %v4748 = vpop.xlane.xlu0 %4747
        %4749 = vadd.xlane.f32.xlu0 %v4692
        %v4750 = vpop.xlane.xlu0 %4749
        %4751 = vadd.xlane.f32.xlu0 %v4693
        %v4752 = vpop.xlane.xlu0 %4751
        %4753 = vadd.xlane.f32.xlu0 %v4694
        %v4754 = vpop.xlane.xlu0 %4753
        %4755 = vadd.xlane.f32.xlu0 %v4695
        %v4756 = vpop.xlane.xlu0 %4755
        %4757 = vadd.xlane.f32.xlu0 %v4696
        %v4758 = vpop.xlane.xlu0 %4757
        %4759 = vadd.xlane.f32.xlu0 %v4697
        %v4760 = vpop.xlane.xlu0 %4759
        %4761 = vadd.xlane.f32.xlu0 %v4698
        %v4762 = vpop.xlane.xlu0 %4761
        %v4763 = vmul.f32 %v4700, %v4602
        %v4764 = vmul.f32 %v4702, %v4602
        %v4765 = vmul.f32 %v4704, %v4602
        %v4766 = vmul.f32 %v4706, %v4602
        %v4767 = vmul.f32 %v4708, %v4602
        %v4768 = vmul.f32 %v4710, %v4602
        %v4769 = vmul.f32 %v4712, %v4602
        %v4770 = vmul.f32 %v4714, %v4602
        %v4771 = vmul.f32 %v4716, %v4602
        %v4772 = vmul.f32 %v4718, %v4602
        %v4773 = vmul.f32 %v4720, %v4602
        %v4774 = vmul.f32 %v4722, %v4602
        %v4775 = vmul.f32 %v4724, %v4602
        %v4776 = vmul.f32 %v4726, %v4602
        %v4777 = vmul.f32 %v4728, %v4602
        %v4778 = vmul.f32 %v4730, %v4602
        %v4779 = vmul.f32 %v4732, %v4602
        %v4780 = vmul.f32 %v4734, %v4602
        %v4781 = vmul.f32 %v4736, %v4602
        %v4782 = vmul.f32 %v4738, %v4602
        %v4783 = vmul.f32 %v4740, %v4602
        %v4784 = vmul.f32 %v4742, %v4602
        %v4785 = vmul.f32 %v4744, %v4602
        %v4786 = vmul.f32 %v4746, %v4602
        %v4787 = vmul.f32 %v4748, %v4602
        %v4788 = vmul.f32 %v4750, %v4602
        %v4789 = vmul.f32 %v4752, %v4602
        %v4790 = vmul.f32 %v4754, %v4602
        %v4791 = vmul.f32 %v4756, %v4602
        %v4792 = vmul.f32 %v4758, %v4602
        %v4793 = vmul.f32 %v4760, %v4602
        %v4794 = vmul.f32 %v4762, %v4602
        %v4795 = vadd.f32 %v4763, 1e-06
        %v4796 = vadd.f32 %v4764, 1e-06
        %v4797 = vadd.f32 %v4765, 1e-06
        %v4798 = vadd.f32 %v4766, 1e-06
        %v4799 = vadd.f32 %v4767, 1e-06
        %v4800 = vadd.f32 %v4768, 1e-06
        %v4801 = vadd.f32 %v4769, 1e-06
        %v4802 = vadd.f32 %v4770, 1e-06
        %v4803 = vadd.f32 %v4771, 1e-06
        %v4804 = vadd.f32 %v4772, 1e-06
        %v4805 = vadd.f32 %v4773, 1e-06
        %v4806 = vadd.f32 %v4774, 1e-06
        %v4807 = vadd.f32 %v4775, 1e-06
        %v4808 = vadd.f32 %v4776, 1e-06
        %v4809 = vadd.f32 %v4777, 1e-06
        %v4810 = vadd.f32 %v4778, 1e-06
        %v4811 = vadd.f32 %v4779, 1e-06
        %v4812 = vadd.f32 %v4780, 1e-06
        %v4813 = vadd.f32 %v4781, 1e-06
        %v4814 = vadd.f32 %v4782, 1e-06
        %v4815 = vadd.f32 %v4783, 1e-06
        %v4816 = vadd.f32 %v4784, 1e-06
        %v4817 = vadd.f32 %v4785, 1e-06
        %v4818 = vadd.f32 %v4786, 1e-06
        %v4819 = vadd.f32 %v4787, 1e-06
        %v4820 = vadd.f32 %v4788, 1e-06
        %v4821 = vadd.f32 %v4789, 1e-06
        %v4822 = vadd.f32 %v4790, 1e-06
        %v4823 = vadd.f32 %v4791, 1e-06
        %v4824 = vadd.f32 %v4792, 1e-06
        %v4825 = vadd.f32 %v4793, 1e-06
        %v4826 = vadd.f32 %v4794, 1e-06
        %v4827 = vrsqrt.pop %v4795
        %v4828 = vrsqrt.pop %v4796
        %v4829 = vrsqrt.pop %v4797
        %v4830 = vrsqrt.pop %v4798
        %v4831 = vrsqrt.pop %v4799
        %v4832 = vrsqrt.pop %v4800
        %v4833 = vrsqrt.pop %v4801
        %v4834 = vrsqrt.pop %v4802
        %v4835 = vrsqrt.pop %v4803
        %v4836 = vrsqrt.pop %v4804
        %v4837 = vrsqrt.pop %v4805
        %v4838 = vrsqrt.pop %v4806
        %v4839 = vrsqrt.pop %v4807
        %v4840 = vrsqrt.pop %v4808
        %v4841 = vrsqrt.pop %v4809
        %v4842 = vrsqrt.pop %v4810
        %v4843 = vrsqrt.pop %v4811
        %v4844 = vrsqrt.pop %v4812
        %v4845 = vrsqrt.pop %v4813
        %v4846 = vrsqrt.pop %v4814
        %v4847 = vrsqrt.pop %v4815
        %v4848 = vrsqrt.pop %v4816
        %v4849 = vrsqrt.pop %v4817
        %v4850 = vrsqrt.pop %v4818
        %v4851 = vrsqrt.pop %v4819
        %v4852 = vrsqrt.pop %v4820
        %v4853 = vrsqrt.pop %v4821
        %v4854 = vrsqrt.pop %v4822
        %v4855 = vrsqrt.pop %v4823
        %v4856 = vrsqrt.pop %v4824
        %v4857 = vrsqrt.pop %v4825
        %v4858 = vrsqrt.pop %v4826
        %v4859 = vmul.f32 %v4635, %v4827
        %v4860 = vmul.f32 %v4636, %v4828
        %v4861 = vmul.f32 %v4637, %v4829
        %v4862 = vmul.f32 %v4638, %v4830
        %v4863 = vmul.f32 %v4639, %v4831
        %v4864 = vmul.f32 %v4640, %v4832
        %v4865 = vmul.f32 %v4641, %v4833
        %v4866 = vmul.f32 %v4642, %v4834
        %v4867 = vmul.f32 %v4643, %v4835
        %v4868 = vmul.f32 %v4644, %v4836
        %v4869 = vmul.f32 %v4645, %v4837
        %v4870 = vmul.f32 %v4646, %v4838
        %v4871 = vmul.f32 %v4647, %v4839
        %v4872 = vmul.f32 %v4648, %v4840
        %v4873 = vmul.f32 %v4649, %v4841
        %v4874 = vmul.f32 %v4650, %v4842
        %v4875 = vmul.f32 %v4651, %v4843
        %v4876 = vmul.f32 %v4652, %v4844
        %v4877 = vmul.f32 %v4653, %v4845
        %v4878 = vmul.f32 %v4654, %v4846
        %v4879 = vmul.f32 %v4655, %v4847
        %v4880 = vmul.f32 %v4656, %v4848
        %v4881 = vmul.f32 %v4657, %v4849
        %v4882 = vmul.f32 %v4658, %v4850
        %v4883 = vmul.f32 %v4659, %v4851
        %v4884 = vmul.f32 %v4660, %v4852
        %v4885 = vmul.f32 %v4661, %v4853
        %v4886 = vmul.f32 %v4662, %v4854
        %v4887 = vmul.f32 %v4663, %v4855
        %v4888 = vmul.f32 %v4664, %v4856
        %v4889 = vmul.f32 %v4665, %v4857
        %v4890 = vmul.f32 %v4666, %v4858
        %v4892 = vlaneseq
        %v4893 = vshrl.u32 %v4892, 7
        %v4894 = vsub.s32 0, %v4893
        %v4895 = vrot.slane %v4536, %v4894
        %v4897 = vmul.f32 %v4859, %v4895
        %v4898 = vmul.f32 %v4860, %v4895
        %v4899 = vmul.f32 %v4861, %v4895
        %v4900 = vmul.f32 %v4862, %v4895
        %v4901 = vmul.f32 %v4863, %v4895
        %v4902 = vmul.f32 %v4864, %v4895
        %v4903 = vmul.f32 %v4865, %v4895
        %v4904 = vmul.f32 %v4866, %v4895
        %v4905 = vmul.f32 %v4867, %v4895
        %v4906 = vmul.f32 %v4868, %v4895
        %v4907 = vmul.f32 %v4869, %v4895
        %v4908 = vmul.f32 %v4870, %v4895
        %v4909 = vmul.f32 %v4871, %v4895
        %v4910 = vmul.f32 %v4872, %v4895
        %v4911 = vmul.f32 %v4873, %v4895
        %v4912 = vmul.f32 %v4874, %v4895
        %v4913 = vmul.f32 %v4875, %v4895
        %v4914 = vmul.f32 %v4876, %v4895
        %v4915 = vmul.f32 %v4877, %v4895
        %v4916 = vmul.f32 %v4878, %v4895
        %v4917 = vmul.f32 %v4879, %v4895
        %v4918 = vmul.f32 %v4880, %v4895
        %v4919 = vmul.f32 %v4881, %v4895
        %v4920 = vmul.f32 %v4882, %v4895
        %v4921 = vmul.f32 %v4883, %v4895
        %v4922 = vmul.f32 %v4884, %v4895
        %v4923 = vmul.f32 %v4885, %v4895
        %v4924 = vmul.f32 %v4886, %v4895
        %v4925 = vmul.f32 %v4887, %v4895
        %v4926 = vmul.f32 %v4888, %v4895
        %v4927 = vmul.f32 %v4889, %v4895
        %v4928 = vmul.f32 %v4890, %v4895
        %v4930 = vlaneseq
        %v4931 = vshrl.u32 %v4930, 7
        %v4932 = vsub.s32 0, %v4931
        %v4933 = vrot.slane %v4537, %v4932
        %v4935 = vadd.f32 %v4897, %v4933
        %v4936 = vadd.f32 %v4898, %v4933
        %v4937 = vadd.f32 %v4899, %v4933
        %v4938 = vadd.f32 %v4900, %v4933
        %v4939 = vadd.f32 %v4901, %v4933
        %v4940 = vadd.f32 %v4902, %v4933
        %v4941 = vadd.f32 %v4903, %v4933
        %v4942 = vadd.f32 %v4904, %v4933
        %v4943 = vadd.f32 %v4905, %v4933
        %v4944 = vadd.f32 %v4906, %v4933
        %v4945 = vadd.f32 %v4907, %v4933
        %v4946 = vadd.f32 %v4908, %v4933
        %v4947 = vadd.f32 %v4909, %v4933
        %v4948 = vadd.f32 %v4910, %v4933
        %v4949 = vadd.f32 %v4911, %v4933
        %v4950 = vadd.f32 %v4912, %v4933
        %v4951 = vadd.f32 %v4913, %v4933
        %v4952 = vadd.f32 %v4914, %v4933
        %v4953 = vadd.f32 %v4915, %v4933
        %v4954 = vadd.f32 %v4916, %v4933
        %v4955 = vadd.f32 %v4917, %v4933
        %v4956 = vadd.f32 %v4918, %v4933
        %v4957 = vadd.f32 %v4919, %v4933
        %v4958 = vadd.f32 %v4920, %v4933
        %v4959 = vadd.f32 %v4921, %v4933
        %v4960 = vadd.f32 %v4922, %v4933
        %v4961 = vadd.f32 %v4923, %v4933
        %v4962 = vadd.f32 %v4924, %v4933
        %v4963 = vadd.f32 %v4925, %v4933
        %v4964 = vadd.f32 %v4926, %v4933
        %v4965 = vadd.f32 %v4927, %v4933
        %v4966 = vadd.f32 %v4928, %v4933
        %v4967 = vpack.c.bf16 %v4936, %v4935
        %v4968 = vpack.c.bf16 %v4938, %v4937
        %v4969 = vpack.c.bf16 %v4940, %v4939
        %v4970 = vpack.c.bf16 %v4942, %v4941
        %v4971 = vpack.c.bf16 %v4944, %v4943
        %v4972 = vpack.c.bf16 %v4946, %v4945
        %v4973 = vpack.c.bf16 %v4948, %v4947
        %v4974 = vpack.c.bf16 %v4950, %v4949
        %v4975 = vpack.c.bf16 %v4952, %v4951
        %v4976 = vpack.c.bf16 %v4954, %v4953
        %v4977 = vpack.c.bf16 %v4956, %v4955
        %v4978 = vpack.c.bf16 %v4958, %v4957
        %v4979 = vpack.c.bf16 %v4960, %v4959
        %v4980 = vpack.c.bf16 %v4962, %v4961
        %v4981 = vpack.c.bf16 %v4964, %v4963
        %v4982 = vpack.c.bf16 %v4966, %v4965
        %v4983 = vld [vmem:[#allocation16] sm:$0xf]
        %v4984 = vld [vmem:[#allocation16 + $0x4] sm:$0xf]
        %v4985 = vld [vmem:[#allocation16 + $0x8] sm:$0xf]
        %v4986 = vld [vmem:[#allocation16 + $0xc] sm:$0xf]
        %v4987 = vld [vmem:[#allocation16 + $0x10] sm:$0xf]
        %v4988 = vld [vmem:[#allocation16 + $0x14] sm:$0xf]
        %v4989 = vld [vmem:[#allocation16 + $0x18] sm:$0xf]
        %v4990 = vld [vmem:[#allocation16 + $0x1c] sm:$0xf]
        %v4991 = vld [vmem:[#allocation16 + $0x20] sm:$0xf]
        %v4992 = vld [vmem:[#allocation16 + $0x24] sm:$0xf]
        %v4993 = vld [vmem:[#allocation16 + $0x28] sm:$0xf]
        %v4994 = vld [vmem:[#allocation16 + $0x2c] sm:$0xf]
        %v4995 = vld [vmem:[#allocation16 + $0x30] sm:$0xf]
        %v4996 = vld [vmem:[#allocation16 + $0x34] sm:$0xf]
        %v4997 = vld [vmem:[#allocation16 + $0x38] sm:$0xf]
        %v4998 = vld [vmem:[#allocation16 + $0x3c] sm:$0xf]
        %v4999 = vld [vmem:[#allocation17] sm:$0x1]
        %v5001 = vlaneseq
        %v5002 = vshrl.u32 %v5001, 7
        %v5003 = vsub.s32 0, %v5002
        %v5004 = vrot.slane %v4999, %v5003
        %v5022 = vunpack.c.l.b16 %v4983
        %v5023 = vunpack.c.l.b16 %v4984
        %v5024 = vunpack.c.l.b16 %v4985
        %v5025 = vunpack.c.l.b16 %v4986
        %v5026 = vunpack.c.l.b16 %v4987
        %v5027 = vunpack.c.l.b16 %v4988
        %v5028 = vunpack.c.l.b16 %v4989
        %v5029 = vunpack.c.l.b16 %v4990
        %v5030 = vunpack.c.l.b16 %v4991
        %v5031 = vunpack.c.l.b16 %v4992
        %v5032 = vunpack.c.l.b16 %v4993
        %v5033 = vunpack.c.l.b16 %v4994
        %v5034 = vunpack.c.l.b16 %v4995
        %v5035 = vunpack.c.l.b16 %v4996
        %v5036 = vunpack.c.l.b16 %v4997
        %v5037 = vunpack.c.l.b16 %v4998
        %v5038 = vpack.c.b16 %v5023, %v5022
        %v5039 = vpack.c.b16 %v5025, %v5024
        %v5040 = vpack.c.b16 %v5027, %v5026
        %v5041 = vpack.c.b16 %v5029, %v5028
        %v5042 = vpack.c.b16 %v5031, %v5030
        %v5043 = vpack.c.b16 %v5033, %v5032
        %v5044 = vpack.c.b16 %v5035, %v5034
        %v5045 = vpack.c.b16 %v5037, %v5036
        %5054 = vmatprep.subr.bf16.mxu0 0
        %5055 = vmatpush1.bf16.msra.mxu0 %v5045
        %5056 = vmatprep.subr.bf16.mxu0 0
        %5057 = vmatpush1.bf16.msra.mxu0 %v5044
        %5058 = vmatprep.subr.bf16.mxu0 0
        %5059 = vmatpush1.bf16.msra.mxu0 %v5043
        %5060 = vmatprep.subr.bf16.mxu0 0
        %5061 = vmatpush1.bf16.msra.mxu0 %v5042
        %5062 = vmatprep.subr.bf16.mxu0 0
        %5063 = vmatpush1.bf16.msra.mxu0 %v5041
        %5064 = vmatprep.subr.bf16.mxu0 0
        %5065 = vmatpush1.bf16.msra.mxu0 %v5040
        %5066 = vmatprep.subr.bf16.mxu0 0
        %5067 = vmatpush1.bf16.msra.mxu0 %v5039
        %5068 = vmatprep.subr.bf16.mxu0 0
        %5069 = vmatpush1.bf16.msra.mxu0 %v5038
        %5070 = vmatprep.subr.bf16.mxu0 0
        %5071 = vmatpush2.bf16.msra.mxu0 0
        %5072 = vmatprep.subr.bf16.mxu0 0
        %5073 = vmatpush2.bf16.msra.mxu0 0
        %5074 = vmatprep.subr.bf16.mxu0 0
        %5075 = vmatpush2.bf16.msra.mxu0 0
        %5076 = vmatprep.subr.bf16.mxu0 0
        %5077 = vmatpush2.bf16.msra.mxu0 0
        %5078 = vmatprep.subr.bf16.mxu0 0
        %5079 = vmatpush2.bf16.msra.mxu0 0
        %5080 = vmatprep.subr.bf16.mxu0 0
        %5081 = vmatpush2.bf16.msra.mxu0 0
        %5082 = vmatprep.subr.bf16.mxu0 0
        %5083 = vmatpush2.bf16.msra.mxu0 0
        %5084 = vmatprep.subr.bf16.mxu0 0
        %5085 = vmatpush2.bf16.msra.mxu0 0
        %5086 = vmatprep.mubr.bf16.mxu0 0
        %5087 = vmatmul.mubr.bf16.gmra.mxu0 %v4967
        %v5088 = vpop.f32.mrf.mxu0
        %v5089 = vadd.f32 %v5004, %v5088
        %v5090 = vpop.f32.mrf.mxu0
        %v5091 = vpop.f32.mrf.mxu0
        %v5092 = vadd.f32 %v5004, %v5091
        %v5093 = vpop.f32.mrf.mxu0
        %5094 = vmatprep.mubr.bf16.mxu0 0
        %5095 = vmatmul.mubr.bf16.gmra.mxu0 %v4968
        %v5096 = vpop.f32.mrf.mxu0
        %v5097 = vadd.f32 %v5004, %v5096
        %v5098 = vpop.f32.mrf.mxu0
        %v5099 = vpop.f32.mrf.mxu0
        %v5100 = vadd.f32 %v5004, %v5099
        %v5101 = vpop.f32.mrf.mxu0
        %5102 = vmatprep.mubr.bf16.mxu0 0
        %5103 = vmatmul.mubr.bf16.gmra.mxu0 %v4969
        %v5104 = vpop.f32.mrf.mxu0
        %v5105 = vadd.f32 %v5004, %v5104
        %v5106 = vpop.f32.mrf.mxu0
        %v5107 = vpop.f32.mrf.mxu0
        %v5108 = vadd.f32 %v5004, %v5107
        %v5109 = vpop.f32.mrf.mxu0
        %5110 = vmatprep.mubr.bf16.mxu0 0
        %5111 = vmatmul.mubr.bf16.gmra.mxu0 %v4970
        %v5112 = vpop.f32.mrf.mxu0
        %v5113 = vadd.f32 %v5004, %v5112
        %v5114 = vpop.f32.mrf.mxu0
        %v5115 = vpop.f32.mrf.mxu0
        %v5116 = vadd.f32 %v5004, %v5115
        %v5117 = vpop.f32.mrf.mxu0
        %5118 = vmatprep.mubr.bf16.mxu0 0
        %5119 = vmatmul.mubr.bf16.gmra.mxu0 %v4971
        %v5120 = vpop.f32.mrf.mxu0
        %v5121 = vadd.f32 %v5004, %v5120
        %v5122 = vpop.f32.mrf.mxu0
        %v5123 = vpop.f32.mrf.mxu0
        %v5124 = vadd.f32 %v5004, %v5123
        %v5125 = vpop.f32.mrf.mxu0
        %5126 = vmatprep.mubr.bf16.mxu0 0
        %5127 = vmatmul.mubr.bf16.gmra.mxu0 %v4972
        %v5128 = vpop.f32.mrf.mxu0
        %v5129 = vadd.f32 %v5004, %v5128
        %v5130 = vpop.f32.mrf.mxu0
        %v5131 = vpop.f32.mrf.mxu0
        %v5132 = vadd.f32 %v5004, %v5131
        %v5133 = vpop.f32.mrf.mxu0
        %5134 = vmatprep.mubr.bf16.mxu0 0
        %5135 = vmatmul.mubr.bf16.gmra.mxu0 %v4973
        %v5136 = vpop.f32.mrf.mxu0
        %v5137 = vadd.f32 %v5004, %v5136
        %v5138 = vpop.f32.mrf.mxu0
        %v5139 = vpop.f32.mrf.mxu0
        %v5140 = vadd.f32 %v5004, %v5139
        %v5141 = vpop.f32.mrf.mxu0
        %5142 = vmatprep.mubr.bf16.mxu0 0
        %5143 = vmatmul.mubr.bf16.gmra.mxu0 %v4974
        %v5144 = vpop.f32.mrf.mxu0
        %v5145 = vadd.f32 %v5004, %v5144
        %v5146 = vpop.f32.mrf.mxu0
        %v5147 = vpop.f32.mrf.mxu0
        %v5148 = vadd.f32 %v5004, %v5147
        %v5149 = vpop.f32.mrf.mxu0
        %5150 = vmatprep.mubr.bf16.mxu0 0
        %5151 = vmatmul.mubr.bf16.gmra.mxu0 %v4975
        %v5152 = vpop.f32.mrf.mxu0
        %v5153 = vadd.f32 %v5004, %v5152
        %v5154 = vpop.f32.mrf.mxu0
        %v5155 = vpop.f32.mrf.mxu0
        %v5156 = vadd.f32 %v5004, %v5155
        %v5157 = vpop.f32.mrf.mxu0
        %5158 = vmatprep.mubr.bf16.mxu0 0
        %5159 = vmatmul.mubr.bf16.gmra.mxu0 %v4976
        %v5160 = vpop.f32.mrf.mxu0
        %v5161 = vadd.f32 %v5004, %v5160
        %v5162 = vpop.f32.mrf.mxu0
        %v5163 = vpop.f32.mrf.mxu0
        %v5164 = vadd.f32 %v5004, %v5163
        %v5165 = vpop.f32.mrf.mxu0
        %5166 = vmatprep.mubr.bf16.mxu0 0
        %5167 = vmatmul.mubr.bf16.gmra.mxu0 %v4977
        %v5168 = vpop.f32.mrf.mxu0
        %v5169 = vadd.f32 %v5004, %v5168
        %v5170 = vpop.f32.mrf.mxu0
        %v5171 = vpop.f32.mrf.mxu0
        %v5172 = vadd.f32 %v5004, %v5171
        %v5173 = vpop.f32.mrf.mxu0
        %5174 = vmatprep.mubr.bf16.mxu0 0
        %5175 = vmatmul.mubr.bf16.gmra.mxu0 %v4978
        %v5176 = vpop.f32.mrf.mxu0
        %v5177 = vadd.f32 %v5004, %v5176
        %v5178 = vpop.f32.mrf.mxu0
        %v5179 = vpop.f32.mrf.mxu0
        %v5180 = vadd.f32 %v5004, %v5179
        %v5181 = vpop.f32.mrf.mxu0
        %5182 = vmatprep.mubr.bf16.mxu0 0
        %5183 = vmatmul.mubr.bf16.gmra.mxu0 %v4979
        %v5184 = vpop.f32.mrf.mxu0
        %v5185 = vadd.f32 %v5004, %v5184
        %v5186 = vpop.f32.mrf.mxu0
        %v5187 = vpop.f32.mrf.mxu0
        %v5188 = vadd.f32 %v5004, %v5187
        %v5189 = vpop.f32.mrf.mxu0
        %5190 = vmatprep.mubr.bf16.mxu0 0
        %5191 = vmatmul.mubr.bf16.gmra.mxu0 %v4980
        %v5192 = vpop.f32.mrf.mxu0
        %v5193 = vadd.f32 %v5004, %v5192
        %v5194 = vpop.f32.mrf.mxu0
        %v5195 = vpop.f32.mrf.mxu0
        %v5196 = vadd.f32 %v5004, %v5195
        %v5197 = vpop.f32.mrf.mxu0
        %5198 = vmatprep.mubr.bf16.mxu0 0
        %5199 = vmatmul.mubr.bf16.gmra.mxu0 %v4981
        %v5200 = vpop.f32.mrf.mxu0
        %v5201 = vadd.f32 %v5004, %v5200
        %v5202 = vpop.f32.mrf.mxu0
        %v5203 = vpop.f32.mrf.mxu0
        %v5204 = vadd.f32 %v5004, %v5203
        %v5205 = vpop.f32.mrf.mxu0
        %5206 = vmatprep.mubr.bf16.mxu0 0
        %5207 = vmatmul.mubr.bf16.gmra.mxu0 %v4982
        %v5208 = vpop.f32.mrf.mxu0
        %v5209 = vadd.f32 %v5004, %v5208
        %v5210 = vpop.f32.mrf.mxu0
        %v5211 = vpop.f32.mrf.mxu0
        %v5212 = vadd.f32 %v5004, %v5211
        %v5213 = vpop.f32.mrf.mxu0
        %5214 = vdwg.mxu0
        %v5215 = vmul.f32 %v5089, 0.088388346
        %v5216 = vmul.f32 %v5092, 0.088388346
        %v5217 = vmul.f32 %v5097, 0.088388346
        %v5218 = vmul.f32 %v5100, 0.088388346
        %v5219 = vmul.f32 %v5105, 0.088388346
        %v5220 = vmul.f32 %v5108, 0.088388346
        %v5221 = vmul.f32 %v5113, 0.088388346
        %v5222 = vmul.f32 %v5116, 0.088388346
        %v5223 = vmul.f32 %v5121, 0.088388346
        %v5224 = vmul.f32 %v5124, 0.088388346
        %v5225 = vmul.f32 %v5129, 0.088388346
        %v5226 = vmul.f32 %v5132, 0.088388346
        %v5227 = vmul.f32 %v5137, 0.088388346
        %v5228 = vmul.f32 %v5140, 0.088388346
        %v5229 = vmul.f32 %v5145, 0.088388346
        %v5230 = vmul.f32 %v5148, 0.088388346
        %v5231 = vmul.f32 %v5153, 0.088388346
        %v5232 = vmul.f32 %v5156, 0.088388346
        %v5233 = vmul.f32 %v5161, 0.088388346
        %v5234 = vmul.f32 %v5164, 0.088388346
        %v5235 = vmul.f32 %v5169, 0.088388346
        %v5236 = vmul.f32 %v5172, 0.088388346
        %v5237 = vmul.f32 %v5177, 0.088388346
        %v5238 = vmul.f32 %v5180, 0.088388346
        %v5239 = vmul.f32 %v5185, 0.088388346
        %v5240 = vmul.f32 %v5188, 0.088388346
        %v5241 = vmul.f32 %v5193, 0.088388346
        %v5242 = vmul.f32 %v5196, 0.088388346
        %v5243 = vmul.f32 %v5201, 0.088388346
        %v5244 = vmul.f32 %v5204, 0.088388346
        %v5245 = vmul.f32 %v5209, 0.088388346
        %v5246 = vmul.f32 %v5212, 0.088388346
        %v5247 = vpack.c.bf16 %v5216, %v5215
        %v5248 = vpack.c.bf16 %v5218, %v5217
        %v5249 = vpack.c.bf16 %v5220, %v5219
        %v5250 = vpack.c.bf16 %v5222, %v5221
        %v5251 = vpack.c.bf16 %v5224, %v5223
        %v5252 = vpack.c.bf16 %v5226, %v5225
        %v5253 = vpack.c.bf16 %v5228, %v5227
        %v5254 = vpack.c.bf16 %v5230, %v5229
        %v5255 = vpack.c.bf16 %v5232, %v5231
        %v5256 = vpack.c.bf16 %v5234, %v5233
        %v5257 = vpack.c.bf16 %v5236, %v5235
        %v5258 = vpack.c.bf16 %v5238, %v5237
        %v5259 = vpack.c.bf16 %v5240, %v5239
        %v5260 = vpack.c.bf16 %v5242, %v5241
        %v5261 = vpack.c.bf16 %v5244, %v5243
        %v5262 = vpack.c.bf16 %v5246, %v5245
        %v5263 = vld [vmem:[%s970] sm:$0xff]
        %v5264 = vld [vmem:[%s970 + $0x8] sm:$0xff]
        %v5265 = vld [vmem:[%s970 + $0x10] sm:$0xff]
        %v5266 = vld [vmem:[%s970 + $0x18] sm:$0xff]
        %v5267 = vld [vmem:[%s970 + $0x20] sm:$0xff]
        %v5268 = vld [vmem:[%s970 + $0x28] sm:$0xff]
        %v5269 = vld [vmem:[%s970 + $0x30] sm:$0xff]
        %v5270 = vld [vmem:[%s970 + $0x38] sm:$0xff]
        %v5271 = vld [vmem:[%s970 + $0x40] sm:$0xff]
        %v5272 = vld [vmem:[%s970 + $0x48] sm:$0xff]
        %v5273 = vld [vmem:[%s970 + $0x50] sm:$0xff]
        %v5274 = vld [vmem:[%s970 + $0x58] sm:$0xff]
        %v5275 = vld [vmem:[%s970 + $0x60] sm:$0xff]
        %v5276 = vld [vmem:[%s970 + $0x68] sm:$0xff]
        %v5277 = vld [vmem:[%s970 + $0x70] sm:$0xff]
        %v5278 = vld [vmem:[%s970 + $0x78] sm:$0xff]
        %v5295 = vunpack.c.l.b16 %v5263
        %v5296 = vunpack.c.h.b16 %v5263
        %v5297 = vunpack.c.l.b16 %v5264
        %v5298 = vunpack.c.h.b16 %v5264
        %v5299 = vunpack.c.l.b16 %v5265
        %v5300 = vunpack.c.h.b16 %v5265
        %v5301 = vunpack.c.l.b16 %v5266
        %v5302 = vunpack.c.h.b16 %v5266
        %v5303 = vunpack.c.l.b16 %v5267
        %v5304 = vunpack.c.h.b16 %v5267
        %v5305 = vunpack.c.l.b16 %v5268
        %v5306 = vunpack.c.h.b16 %v5268
        %v5307 = vunpack.c.l.b16 %v5269
        %v5308 = vunpack.c.h.b16 %v5269
        %v5309 = vunpack.c.l.b16 %v5270
        %v5310 = vunpack.c.h.b16 %v5270
        %v5311 = vunpack.c.l.b16 %v5271
        %v5312 = vunpack.c.h.b16 %v5271
        %v5313 = vunpack.c.l.b16 %v5272
        %v5314 = vunpack.c.h.b16 %v5272
        %v5315 = vunpack.c.l.b16 %v5273
        %v5316 = vunpack.c.h.b16 %v5273
        %v5317 = vunpack.c.l.b16 %v5274
        %v5318 = vunpack.c.h.b16 %v5274
        %v5319 = vunpack.c.l.b16 %v5275
        %v5320 = vunpack.c.h.b16 %v5275
        %v5321 = vunpack.c.l.b16 %v5276
        %v5322 = vunpack.c.h.b16 %v5276
        %v5323 = vunpack.c.l.b16 %v5277
        %v5324 = vunpack.c.h.b16 %v5277
        %v5325 = vunpack.c.l.b16 %v5278
        %v5326 = vunpack.c.h.b16 %v5278
        %v5327 = vpack.c.b16 %v5297, %v5295
        %v5328 = vpack.c.b16 %v5298, %v5296
        %v5329 = vpack.c.b16 %v5301, %v5299
        %v5330 = vpack.c.b16 %v5302, %v5300
        %v5331 = vpack.c.b16 %v5305, %v5303
        %v5332 = vpack.c.b16 %v5306, %v5304
        %v5333 = vpack.c.b16 %v5309, %v5307
        %v5334 = vpack.c.b16 %v5310, %v5308
        %v5335 = vpack.c.b16 %v5313, %v5311
        %v5336 = vpack.c.b16 %v5314, %v5312
        %v5337 = vpack.c.b16 %v5317, %v5315
        %v5338 = vpack.c.b16 %v5318, %v5316
        %v5339 = vpack.c.b16 %v5321, %v5319
        %v5340 = vpack.c.b16 %v5322, %v5320
        %v5341 = vpack.c.b16 %v5325, %v5323
        %v5342 = vpack.c.b16 %v5326, %v5324
        %5359 = vmatprep.subr.bf16.mxu0 %v5342
        %5360 = vmatpush1.bf16.msra.mxu0 %v5341
        %5361 = vmatprep.subr.bf16.mxu0 %v5340
        %5362 = vmatpush1.bf16.msra.mxu0 %v5339
        %5363 = vmatprep.subr.bf16.mxu0 %v5338
        %5364 = vmatpush1.bf16.msra.mxu0 %v5337
        %5365 = vmatprep.subr.bf16.mxu0 %v5336
        %5366 = vmatpush1.bf16.msra.mxu0 %v5335
        %5367 = vmatprep.subr.bf16.mxu0 %v5334
        %5368 = vmatpush1.bf16.msra.mxu0 %v5333
        %5369 = vmatprep.subr.bf16.mxu0 %v5332
        %5370 = vmatpush1.bf16.msra.mxu0 %v5331
        %5371 = vmatprep.subr.bf16.mxu0 %v5330
        %5372 = vmatpush1.bf16.msra.mxu0 %v5329
        %5373 = vmatprep.subr.bf16.mxu0 %v5328
        %5374 = vmatpush1.bf16.msra.mxu0 %v5327
        %5375 = vmatprep.subr.bf16.mxu0 0
        %5376 = vmatpush2.bf16.msra.mxu0 0
        %5377 = vmatprep.subr.bf16.mxu0 0
        %5378 = vmatpush2.bf16.msra.mxu0 0
        %5379 = vmatprep.subr.bf16.mxu0 0
        %5380 = vmatpush2.bf16.msra.mxu0 0
        %5381 = vmatprep.subr.bf16.mxu0 0
        %5382 = vmatpush2.bf16.msra.mxu0 0
        %5383 = vmatprep.subr.bf16.mxu0 0
        %5384 = vmatpush2.bf16.msra.mxu0 0
        %5385 = vmatprep.subr.bf16.mxu0 0
        %5386 = vmatpush2.bf16.msra.mxu0 0
        %5387 = vmatprep.subr.bf16.mxu0 0
        %5388 = vmatpush2.bf16.msra.mxu0 0
        %5389 = vmatprep.subr.bf16.mxu0 0
        %5390 = vmatpush2.bf16.msra.mxu0 0
        %5391 = vmatprep.mubr.bf16.mxu0 0
        %5392 = vmatmul.mubr.bf16.gmra.mxu0 %v5247
        %v5393 = vpop.f32.mrf.mxu0
        %v5394 = vadd.f32 0.0, %v5393
        %v5395 = vpop.f32.mrf.mxu0
        %v5396 = vadd.f32 0.0, %v5395
        %v5397 = vpop.f32.mrf.mxu0
        %v5398 = vadd.f32 0.0, %v5397
        %v5399 = vpop.f32.mrf.mxu0
        %v5400 = vadd.f32 0.0, %v5399
        %5401 = vmatprep.mubr.bf16.mxu0 0
        %5402 = vmatmul.mubr.bf16.gmra.mxu0 %v5248
        %v5403 = vpop.f32.mrf.mxu0
        %v5404 = vadd.f32 0.0, %v5403
        %v5405 = vpop.f32.mrf.mxu0
        %v5406 = vadd.f32 0.0, %v5405
        %v5407 = vpop.f32.mrf.mxu0
        %v5408 = vadd.f32 0.0, %v5407
        %v5409 = vpop.f32.mrf.mxu0
        %v5410 = vadd.f32 0.0, %v5409
        %5411 = vmatprep.mubr.bf16.mxu0 0
        %5412 = vmatmul.mubr.bf16.gmra.mxu0 %v5249
        %v5413 = vpop.f32.mrf.mxu0
        %v5414 = vadd.f32 0.0, %v5413
        %v5415 = vpop.f32.mrf.mxu0
        %v5416 = vadd.f32 0.0, %v5415
        %v5417 = vpop.f32.mrf.mxu0
        %v5418 = vadd.f32 0.0, %v5417
        %v5419 = vpop.f32.mrf.mxu0
        %v5420 = vadd.f32 0.0, %v5419
        %5421 = vmatprep.mubr.bf16.mxu0 0
        %5422 = vmatmul.mubr.bf16.gmra.mxu0 %v5250
        %v5423 = vpop.f32.mrf.mxu0
        %v5424 = vadd.f32 0.0, %v5423
        %v5425 = vpop.f32.mrf.mxu0
        %v5426 = vadd.f32 0.0, %v5425
        %v5427 = vpop.f32.mrf.mxu0
        %v5428 = vadd.f32 0.0, %v5427
        %v5429 = vpop.f32.mrf.mxu0
        %v5430 = vadd.f32 0.0, %v5429
        %5431 = vmatprep.mubr.bf16.mxu0 0
        %5432 = vmatmul.mubr.bf16.gmra.mxu0 %v5251
        %v5433 = vpop.f32.mrf.mxu0
        %v5434 = vadd.f32 0.0, %v5433
        %v5435 = vpop.f32.mrf.mxu0
        %v5436 = vadd.f32 0.0, %v5435
        %v5437 = vpop.f32.mrf.mxu0
        %v5438 = vadd.f32 0.0, %v5437
        %v5439 = vpop.f32.mrf.mxu0
        %v5440 = vadd.f32 0.0, %v5439
        %5441 = vmatprep.mubr.bf16.mxu0 0
        %5442 = vmatmul.mubr.bf16.gmra.mxu0 %v5252
        %v5443 = vpop.f32.mrf.mxu0
        %v5444 = vadd.f32 0.0, %v5443
        %v5445 = vpop.f32.mrf.mxu0
        %v5446 = vadd.f32 0.0, %v5445
        %v5447 = vpop.f32.mrf.mxu0
        %v5448 = vadd.f32 0.0, %v5447
        %v5449 = vpop.f32.mrf.mxu0
        %v5450 = vadd.f32 0.0, %v5449
        %5451 = vmatprep.mubr.bf16.mxu0 0
        %5452 = vmatmul.mubr.bf16.gmra.mxu0 %v5253
        %v5453 = vpop.f32.mrf.mxu0
        %v5454 = vadd.f32 0.0, %v5453
        %v5455 = vpop.f32.mrf.mxu0
        %v5456 = vadd.f32 0.0, %v5455
        %v5457 = vpop.f32.mrf.mxu0
        %v5458 = vadd.f32 0.0, %v5457
        %v5459 = vpop.f32.mrf.mxu0
        %v5460 = vadd.f32 0.0, %v5459
        %5461 = vmatprep.mubr.bf16.mxu0 0
        %5462 = vmatmul.mubr.bf16.gmra.mxu0 %v5254
        %v5463 = vpop.f32.mrf.mxu0
        %v5464 = vadd.f32 0.0, %v5463
        %v5465 = vpop.f32.mrf.mxu0
        %v5466 = vadd.f32 0.0, %v5465
        %v5467 = vpop.f32.mrf.mxu0
        %v5468 = vadd.f32 0.0, %v5467
        %v5469 = vpop.f32.mrf.mxu0
        %v5470 = vadd.f32 0.0, %v5469
        %5471 = vmatprep.mubr.bf16.mxu0 0
        %5472 = vmatmul.mubr.bf16.gmra.mxu0 %v5255
        %v5473 = vpop.f32.mrf.mxu0
        %v5474 = vadd.f32 0.0, %v5473
        %v5475 = vpop.f32.mrf.mxu0
        %v5476 = vadd.f32 0.0, %v5475
        %v5477 = vpop.f32.mrf.mxu0
        %v5478 = vadd.f32 0.0, %v5477
        %v5479 = vpop.f32.mrf.mxu0
        %v5480 = vadd.f32 0.0, %v5479
        %5481 = vmatprep.mubr.bf16.mxu0 0
        %5482 = vmatmul.mubr.bf16.gmra.mxu0 %v5256
        %v5483 = vpop.f32.mrf.mxu0
        %v5484 = vadd.f32 0.0, %v5483
        %v5485 = vpop.f32.mrf.mxu0
        %v5486 = vadd.f32 0.0, %v5485
        %v5487 = vpop.f32.mrf.mxu0
        %v5488 = vadd.f32 0.0, %v5487
        %v5489 = vpop.f32.mrf.mxu0
        %v5490 = vadd.f32 0.0, %v5489
        %5491 = vmatprep.mubr.bf16.mxu0 0
        %5492 = vmatmul.mubr.bf16.gmra.mxu0 %v5257
        %v5493 = vpop.f32.mrf.mxu0
        %v5494 = vadd.f32 0.0, %v5493
        %v5495 = vpop.f32.mrf.mxu0
        %v5496 = vadd.f32 0.0, %v5495
        %v5497 = vpop.f32.mrf.mxu0
        %v5498 = vadd.f32 0.0, %v5497
        %v5499 = vpop.f32.mrf.mxu0
        %v5500 = vadd.f32 0.0, %v5499
        %5501 = vmatprep.mubr.bf16.mxu0 0
        %5502 = vmatmul.mubr.bf16.gmra.mxu0 %v5258
        %v5503 = vpop.f32.mrf.mxu0
        %v5504 = vadd.f32 0.0, %v5503
        %v5505 = vpop.f32.mrf.mxu0
        %v5506 = vadd.f32 0.0, %v5505
        %v5507 = vpop.f32.mrf.mxu0
        %v5508 = vadd.f32 0.0, %v5507
        %v5509 = vpop.f32.mrf.mxu0
        %v5510 = vadd.f32 0.0, %v5509
        %5511 = vmatprep.mubr.bf16.mxu0 0
        %5512 = vmatmul.mubr.bf16.gmra.mxu0 %v5259
        %v5513 = vpop.f32.mrf.mxu0
        %v5514 = vadd.f32 0.0, %v5513
        %v5515 = vpop.f32.mrf.mxu0
        %v5516 = vadd.f32 0.0, %v5515
        %v5517 = vpop.f32.mrf.mxu0
        %v5518 = vadd.f32 0.0, %v5517
        %v5519 = vpop.f32.mrf.mxu0
        %v5520 = vadd.f32 0.0, %v5519
        %5521 = vmatprep.mubr.bf16.mxu0 0
        %5522 = vmatmul.mubr.bf16.gmra.mxu0 %v5260
        %v5523 = vpop.f32.mrf.mxu0
        %v5524 = vadd.f32 0.0, %v5523
        %v5525 = vpop.f32.mrf.mxu0
        %v5526 = vadd.f32 0.0, %v5525
        %v5527 = vpop.f32.mrf.mxu0
        %v5528 = vadd.f32 0.0, %v5527
        %v5529 = vpop.f32.mrf.mxu0
        %v5530 = vadd.f32 0.0, %v5529
        %5531 = vmatprep.mubr.bf16.mxu0 0
        %5532 = vmatmul.mubr.bf16.gmra.mxu0 %v5261
        %v5533 = vpop.f32.mrf.mxu0
        %v5534 = vadd.f32 0.0, %v5533
        %v5535 = vpop.f32.mrf.mxu0
        %v5536 = vadd.f32 0.0, %v5535
        %v5537 = vpop.f32.mrf.mxu0
        %v5538 = vadd.f32 0.0, %v5537
        %v5539 = vpop.f32.mrf.mxu0
        %v5540 = vadd.f32 0.0, %v5539
        %5541 = vmatprep.mubr.bf16.mxu0 0
        %5542 = vmatmul.mubr.bf16.gmra.mxu0 %v5262
        %v5543 = vpop.f32.mrf.mxu0
        %v5544 = vadd.f32 0.0, %v5543
        %v5545 = vpop.f32.mrf.mxu0
        %v5546 = vadd.f32 0.0, %v5545
        %v5547 = vpop.f32.mrf.mxu0
        %v5548 = vadd.f32 0.0, %v5547
        %v5549 = vpop.f32.mrf.mxu0
        %v5550 = vadd.f32 0.0, %v5549
        %5551 = vdwg.mxu0
        %v5552 = vld [vmem:[%s997] sm:$0xff]
        %v5553 = vld [vmem:[%s997 + $0x8] sm:$0xff]
        %v5554 = vld [vmem:[%s997 + $0x10] sm:$0xff]
        %v5555 = vld [vmem:[%s997 + $0x18] sm:$0xff]
        %v5556 = vld [vmem:[%s997 + $0x20] sm:$0xff]
        %v5557 = vld [vmem:[%s997 + $0x28] sm:$0xff]
        %v5558 = vld [vmem:[%s997 + $0x30] sm:$0xff]
        %v5559 = vld [vmem:[%s997 + $0x38] sm:$0xff]
        %v5560 = vld [vmem:[%s997 + $0x40] sm:$0xff]
        %v5561 = vld [vmem:[%s997 + $0x48] sm:$0xff]
        %v5562 = vld [vmem:[%s997 + $0x50] sm:$0xff]
        %v5563 = vld [vmem:[%s997 + $0x58] sm:$0xff]
        %v5564 = vld [vmem:[%s997 + $0x60] sm:$0xff]
        %v5565 = vld [vmem:[%s997 + $0x68] sm:$0xff]
        %v5566 = vld [vmem:[%s997 + $0x70] sm:$0xff]
        %v5567 = vld [vmem:[%s997 + $0x78] sm:$0xff]
        %vm5568 = vnez %v5552
        %vm5569 = vnez %v5553
        %vm5570 = vnez %v5554
        %vm5571 = vnez %v5555
        %vm5572 = vnez %v5556
        %vm5573 = vnez %v5557
        %vm5574 = vnez %v5558
        %vm5575 = vnez %v5559
        %vm5576 = vnez %v5560
        %vm5577 = vnez %v5561
        %vm5578 = vnez %v5562
        %vm5579 = vnez %v5563
        %vm5580 = vnez %v5564
        %vm5581 = vnez %v5565
        %vm5582 = vnez %v5566
        %vm5583 = vnez %v5567
        %v5584 = vsel %vm5568, 16843009, 0
        %v5585 = vsel %vm5569, 16843009, 0
        %v5586 = vsel %vm5570, 16843009, 0
        %v5587 = vsel %vm5571, 16843009, 0
        %v5588 = vsel %vm5572, 16843009, 0
        %v5589 = vsel %vm5573, 16843009, 0
        %v5590 = vsel %vm5574, 16843009, 0
        %v5591 = vsel %vm5575, 16843009, 0
        %v5592 = vsel %vm5576, 16843009, 0
        %v5593 = vsel %vm5577, 16843009, 0
        %v5594 = vsel %vm5578, 16843009, 0
        %v5595 = vsel %vm5579, 16843009, 0
        %v5596 = vsel %vm5580, 16843009, 0
        %v5597 = vsel %vm5581, 16843009, 0
        %v5598 = vsel %vm5582, 16843009, 0
        %v5599 = vsel %vm5583, 16843009, 0
        %v5600 = vunpack.c.0.s8 %v5584
        %v5601 = vunpack.c.0.s8 %v5585
        %v5602 = vunpack.c.1.s8 %v5584
        %v5603 = vunpack.c.1.s8 %v5585
        %v5604 = vunpack.c.2.s8 %v5584
        %v5605 = vunpack.c.2.s8 %v5585
        %v5606 = vunpack.c.3.s8 %v5584
        %v5607 = vunpack.c.3.s8 %v5585
        %v5608 = vunpack.c.0.s8 %v5586
        %v5609 = vunpack.c.0.s8 %v5587
        %v5610 = vunpack.c.1.s8 %v5586
        %v5611 = vunpack.c.1.s8 %v5587
        %v5612 = vunpack.c.2.s8 %v5586
        %v5613 = vunpack.c.2.s8 %v5587
        %v5614 = vunpack.c.3.s8 %v5586
        %v5615 = vunpack.c.3.s8 %v5587
        %v5616 = vunpack.c.0.s8 %v5588
        %v5617 = vunpack.c.0.s8 %v5589
        %v5618 = vunpack.c.1.s8 %v5588
        %v5619 = vunpack.c.1.s8 %v5589
        %v5620 = vunpack.c.2.s8 %v5588
        %v5621 = vunpack.c.2.s8 %v5589
        %v5622 = vunpack.c.3.s8 %v5588
        %v5623 = vunpack.c.3.s8 %v5589
        %v5624 = vunpack.c.0.s8 %v5590
        %v5625 = vunpack.c.0.s8 %v5591
        %v5626 = vunpack.c.1.s8 %v5590
        %v5627 = vunpack.c.1.s8 %v5591
        %v5628 = vunpack.c.2.s8 %v5590
        %v5629 = vunpack.c.2.s8 %v5591
        %v5630 = vunpack.c.3.s8 %v5590
        %v5631 = vunpack.c.3.s8 %v5591
        %v5632 = vunpack.c.0.s8 %v5592
        %v5633 = vunpack.c.0.s8 %v5593
        %v5634 = vunpack.c.1.s8 %v5592
        %v5635 = vunpack.c.1.s8 %v5593
        %v5636 = vunpack.c.2.s8 %v5592
        %v5637 = vunpack.c.2.s8 %v5593
        %v5638 = vunpack.c.3.s8 %v5592
        %v5639 = vunpack.c.3.s8 %v5593
        %v5640 = vunpack.c.0.s8 %v5594
        %v5641 = vunpack.c.0.s8 %v5595
        %v5642 = vunpack.c.1.s8 %v5594
        %v5643 = vunpack.c.1.s8 %v5595
        %v5644 = vunpack.c.2.s8 %v5594
        %v5645 = vunpack.c.2.s8 %v5595
        %v5646 = vunpack.c.3.s8 %v5594
        %v5647 = vunpack.c.3.s8 %v5595
        %v5648 = vunpack.c.0.s8 %v5596
        %v5649 = vunpack.c.0.s8 %v5597
        %v5650 = vunpack.c.1.s8 %v5596
        %v5651 = vunpack.c.1.s8 %v5597
        %v5652 = vunpack.c.2.s8 %v5596
        %v5653 = vunpack.c.2.s8 %v5597
        %v5654 = vunpack.c.3.s8 %v5596
        %v5655 = vunpack.c.3.s8 %v5597
        %v5656 = vunpack.c.0.s8 %v5598
        %v5657 = vunpack.c.0.s8 %v5599
        %v5658 = vunpack.c.1.s8 %v5598
        %v5659 = vunpack.c.1.s8 %v5599
        %v5660 = vunpack.c.2.s8 %v5598
        %v5661 = vunpack.c.2.s8 %v5599
        %v5662 = vunpack.c.3.s8 %v5598
        %v5663 = vunpack.c.3.s8 %v5599
        %v5664 = vpack.c.b16 %v5601, %v5600
        %v5665 = vpack.c.b8 %v5664, %v5664
        %v5666 = vpack.c.b16 %v5603, %v5602
        %v5667 = vpack.c.b8 %v5666, %v5666
        %v5668 = vpack.c.b16 %v5605, %v5604
        %v5669 = vpack.c.b8 %v5668, %v5668
        %v5670 = vpack.c.b16 %v5607, %v5606
        %v5671 = vpack.c.b8 %v5670, %v5670
        %v5672 = vpack.c.b16 %v5609, %v5608
        %v5673 = vpack.c.b8 %v5672, %v5672
        %v5674 = vpack.c.b16 %v5611, %v5610
        %v5675 = vpack.c.b8 %v5674, %v5674
        %v5676 = vpack.c.b16 %v5613, %v5612
        %v5677 = vpack.c.b8 %v5676, %v5676
        %v5678 = vpack.c.b16 %v5615, %v5614
        %v5679 = vpack.c.b8 %v5678, %v5678
        %v5680 = vpack.c.b16 %v5617, %v5616
        %v5681 = vpack.c.b8 %v5680, %v5680
        %v5682 = vpack.c.b16 %v5619, %v5618
        %v5683 = vpack.c.b8 %v5682, %v5682
        %v5684 = vpack.c.b16 %v5621, %v5620
        %v5685 = vpack.c.b8 %v5684, %v5684
        %v5686 = vpack.c.b16 %v5623, %v5622
        %v5687 = vpack.c.b8 %v5686, %v5686
        %v5688 = vpack.c.b16 %v5625, %v5624
        %v5689 = vpack.c.b8 %v5688, %v5688
        %v5690 = vpack.c.b16 %v5627, %v5626
        %v5691 = vpack.c.b8 %v5690, %v5690
        %v5692 = vpack.c.b16 %v5629, %v5628
        %v5693 = vpack.c.b8 %v5692, %v5692
        %v5694 = vpack.c.b16 %v5631, %v5630
        %v5695 = vpack.c.b8 %v5694, %v5694
        %v5696 = vpack.c.b16 %v5633, %v5632
        %v5697 = vpack.c.b8 %v5696, %v5696
        %v5698 = vpack.c.b16 %v5635, %v5634
        %v5699 = vpack.c.b8 %v5698, %v5698
        %v5700 = vpack.c.b16 %v5637, %v5636
        %v5701 = vpack.c.b8 %v5700, %v5700
        %v5702 = vpack.c.b16 %v5639, %v5638
        %v5703 = vpack.c.b8 %v5702, %v5702
        %v5704 = vpack.c.b16 %v5641, %v5640
        %v5705 = vpack.c.b8 %v5704, %v5704
        %v5706 = vpack.c.b16 %v5643, %v5642
        %v5707 = vpack.c.b8 %v5706, %v5706
        %v5708 = vpack.c.b16 %v5645, %v5644
        %v5709 = vpack.c.b8 %v5708, %v5708
        %v5710 = vpack.c.b16 %v5647, %v5646
        %v5711 = vpack.c.b8 %v5710, %v5710
        %v5712 = vpack.c.b16 %v5649, %v5648
        %v5713 = vpack.c.b8 %v5712, %v5712
        %v5714 = vpack.c.b16 %v5651, %v5650
        %v5715 = vpack.c.b8 %v5714, %v5714
        %v5716 = vpack.c.b16 %v5653, %v5652
        %v5717 = vpack.c.b8 %v5716, %v5716
        %v5718 = vpack.c.b16 %v5655, %v5654
        %v5719 = vpack.c.b8 %v5718, %v5718
        %v5720 = vpack.c.b16 %v5657, %v5656
        %v5721 = vpack.c.b8 %v5720, %v5720
        %v5722 = vpack.c.b16 %v5659, %v5658
        %v5723 = vpack.c.b8 %v5722, %v5722
        %v5724 = vpack.c.b16 %v5661, %v5660
        %v5725 = vpack.c.b8 %v5724, %v5724
        %v5726 = vpack.c.b16 %v5663, %v5662
        %v5727 = vpack.c.b8 %v5726, %v5726
        %vm5728 = vnez %v5665
        %vm5729 = vnez %v5667
        %vm5730 = vnez %v5669
        %vm5731 = vnez %v5671
        %vm5732 = vnez %v5673
        %vm5733 = vnez %v5675
        %vm5734 = vnez %v5677
        %vm5735 = vnez %v5679
        %vm5736 = vnez %v5681
        %vm5737 = vnez %v5683
        %vm5738 = vnez %v5685
        %vm5739 = vnez %v5687
        %vm5740 = vnez %v5689
        %vm5741 = vnez %v5691
        %vm5742 = vnez %v5693
        %vm5743 = vnez %v5695
        %vm5744 = vnez %v5697
        %vm5745 = vnez %v5699
        %vm5746 = vnez %v5701
        %vm5747 = vnez %v5703
        %vm5748 = vnez %v5705
        %vm5749 = vnez %v5707
        %vm5750 = vnez %v5709
        %vm5751 = vnez %v5711
        %vm5752 = vnez %v5713
        %vm5753 = vnez %v5715
        %vm5754 = vnez %v5717
        %vm5755 = vnez %v5719
        %vm5756 = vnez %v5721
        %vm5757 = vnez %v5723
        %vm5758 = vnez %v5725
        %vm5759 = vnez %v5727
        %v5760 = vsel %vm5728, 16843009, 0
        %v5761 = vsel %vm5729, 16843009, 0
        %v5762 = vsel %vm5730, 16843009, 0
        %v5763 = vsel %vm5731, 16843009, 0
        %v5764 = vsel %vm5732, 16843009, 0
        %v5765 = vsel %vm5733, 16843009, 0
        %v5766 = vsel %vm5734, 16843009, 0
        %v5767 = vsel %vm5735, 16843009, 0
        %v5768 = vsel %vm5736, 16843009, 0
        %v5769 = vsel %vm5737, 16843009, 0
        %v5770 = vsel %vm5738, 16843009, 0
        %v5771 = vsel %vm5739, 16843009, 0
        %v5772 = vsel %vm5740, 16843009, 0
        %v5773 = vsel %vm5741, 16843009, 0
        %v5774 = vsel %vm5742, 16843009, 0
        %v5775 = vsel %vm5743, 16843009, 0
        %v5776 = vsel %vm5744, 16843009, 0
        %v5777 = vsel %vm5745, 16843009, 0
        %v5778 = vsel %vm5746, 16843009, 0
        %v5779 = vsel %vm5747, 16843009, 0
        %v5780 = vsel %vm5748, 16843009, 0
        %v5781 = vsel %vm5749, 16843009, 0
        %v5782 = vsel %vm5750, 16843009, 0
        %v5783 = vsel %vm5751, 16843009, 0
        %v5784 = vsel %vm5752, 16843009, 0
        %v5785 = vsel %vm5753, 16843009, 0
        %v5786 = vsel %vm5754, 16843009, 0
        %v5787 = vsel %vm5755, 16843009, 0
        %v5788 = vsel %vm5756, 16843009, 0
        %v5789 = vsel %vm5757, 16843009, 0
        %v5790 = vsel %vm5758, 16843009, 0
        %v5791 = vsel %vm5759, 16843009, 0
        %v5792 = vunpack.c.0.s8 %v5760
        %v5793 = vunpack.c.1.s8 %v5760
        %v5794 = vunpack.c.0.s8 %v5761
        %v5795 = vunpack.c.1.s8 %v5761
        %v5796 = vunpack.c.0.s8 %v5762
        %v5797 = vunpack.c.1.s8 %v5762
        %v5798 = vunpack.c.0.s8 %v5763
        %v5799 = vunpack.c.1.s8 %v5763
        %v5800 = vunpack.c.0.s8 %v5764
        %v5801 = vunpack.c.1.s8 %v5764
        %v5802 = vunpack.c.0.s8 %v5765
        %v5803 = vunpack.c.1.s8 %v5765
        %v5804 = vunpack.c.0.s8 %v5766
        %v5805 = vunpack.c.1.s8 %v5766
        %v5806 = vunpack.c.0.s8 %v5767
        %v5807 = vunpack.c.1.s8 %v5767
        %v5808 = vunpack.c.0.s8 %v5768
        %v5809 = vunpack.c.1.s8 %v5768
        %v5810 = vunpack.c.0.s8 %v5769
        %v5811 = vunpack.c.1.s8 %v5769
        %v5812 = vunpack.c.0.s8 %v5770
        %v5813 = vunpack.c.1.s8 %v5770
        %v5814 = vunpack.c.0.s8 %v5771
        %v5815 = vunpack.c.1.s8 %v5771
        %v5816 = vunpack.c.0.s8 %v5772
        %v5817 = vunpack.c.1.s8 %v5772
        %v5818 = vunpack.c.0.s8 %v5773
        %v5819 = vunpack.c.1.s8 %v5773
        %v5820 = vunpack.c.0.s8 %v5774
        %v5821 = vunpack.c.1.s8 %v5774
        %v5822 = vunpack.c.0.s8 %v5775
        %v5823 = vunpack.c.1.s8 %v5775
        %v5824 = vunpack.c.0.s8 %v5776
        %v5825 = vunpack.c.1.s8 %v5776
        %v5826 = vunpack.c.0.s8 %v5777
        %v5827 = vunpack.c.1.s8 %v5777
        %v5828 = vunpack.c.0.s8 %v5778
        %v5829 = vunpack.c.1.s8 %v5778
        %v5830 = vunpack.c.0.s8 %v5779
        %v5831 = vunpack.c.1.s8 %v5779
        %v5832 = vunpack.c.0.s8 %v5780
        %v5833 = vunpack.c.1.s8 %v5780
        %v5834 = vunpack.c.0.s8 %v5781
        %v5835 = vunpack.c.1.s8 %v5781
        %v5836 = vunpack.c.0.s8 %v5782
        %v5837 = vunpack.c.1.s8 %v5782
        %v5838 = vunpack.c.0.s8 %v5783
        %v5839 = vunpack.c.1.s8 %v5783
        %v5840 = vunpack.c.0.s8 %v5784
        %v5841 = vunpack.c.1.s8 %v5784
        %v5842 = vunpack.c.0.s8 %v5785
        %v5843 = vunpack.c.1.s8 %v5785
        %v5844 = vunpack.c.0.s8 %v5786
        %v5845 = vunpack.c.1.s8 %v5786
        %v5846 = vunpack.c.0.s8 %v5787
        %v5847 = vunpack.c.1.s8 %v5787
        %v5848 = vunpack.c.0.s8 %v5788
        %v5849 = vunpack.c.1.s8 %v5788
        %v5850 = vunpack.c.0.s8 %v5789
        %v5851 = vunpack.c.1.s8 %v5789
        %v5852 = vunpack.c.0.s8 %v5790
        %v5853 = vunpack.c.1.s8 %v5790
        %v5854 = vunpack.c.0.s8 %v5791
        %v5855 = vunpack.c.1.s8 %v5791
        %vm5856 = vcmp.ne.s32.totalorder %v5792, 0
        %vm5857 = vcmp.ne.s32.totalorder %v5793, 0
        %vm5858 = vcmp.ne.s32.totalorder %v5794, 0
        %vm5859 = vcmp.ne.s32.totalorder %v5795, 0
        %vm5860 = vcmp.ne.s32.totalorder %v5796, 0
        %vm5861 = vcmp.ne.s32.totalorder %v5797, 0
        %vm5862 = vcmp.ne.s32.totalorder %v5798, 0
        %vm5863 = vcmp.ne.s32.totalorder %v5799, 0
        %vm5864 = vcmp.ne.s32.totalorder %v5800, 0
        %vm5865 = vcmp.ne.s32.totalorder %v5801, 0
        %vm5866 = vcmp.ne.s32.totalorder %v5802, 0
        %vm5867 = vcmp.ne.s32.totalorder %v5803, 0
        %vm5868 = vcmp.ne.s32.totalorder %v5804, 0
        %vm5869 = vcmp.ne.s32.totalorder %v5805, 0
        %vm5870 = vcmp.ne.s32.totalorder %v5806, 0
        %vm5871 = vcmp.ne.s32.totalorder %v5807, 0
        %vm5872 = vcmp.ne.s32.totalorder %v5808, 0
        %vm5873 = vcmp.ne.s32.totalorder %v5809, 0
        %vm5874 = vcmp.ne.s32.totalorder %v5810, 0
        %vm5875 = vcmp.ne.s32.totalorder %v5811, 0
        %vm5876 = vcmp.ne.s32.totalorder %v5812, 0
        %vm5877 = vcmp.ne.s32.totalorder %v5813, 0
        %vm5878 = vcmp.ne.s32.totalorder %v5814, 0
        %vm5879 = vcmp.ne.s32.totalorder %v5815, 0
        %vm5880 = vcmp.ne.s32.totalorder %v5816, 0
        %vm5881 = vcmp.ne.s32.totalorder %v5817, 0
        %vm5882 = vcmp.ne.s32.totalorder %v5818, 0
        %vm5883 = vcmp.ne.s32.totalorder %v5819, 0
        %vm5884 = vcmp.ne.s32.totalorder %v5820, 0
        %vm5885 = vcmp.ne.s32.totalorder %v5821, 0
        %vm5886 = vcmp.ne.s32.totalorder %v5822, 0
        %vm5887 = vcmp.ne.s32.totalorder %v5823, 0
        %vm5888 = vcmp.ne.s32.totalorder %v5824, 0
        %vm5889 = vcmp.ne.s32.totalorder %v5825, 0
        %vm5890 = vcmp.ne.s32.totalorder %v5826, 0
        %vm5891 = vcmp.ne.s32.totalorder %v5827, 0
        %vm5892 = vcmp.ne.s32.totalorder %v5828, 0
        %vm5893 = vcmp.ne.s32.totalorder %v5829, 0
        %vm5894 = vcmp.ne.s32.totalorder %v5830, 0
        %vm5895 = vcmp.ne.s32.totalorder %v5831, 0
        %vm5896 = vcmp.ne.s32.totalorder %v5832, 0
        %vm5897 = vcmp.ne.s32.totalorder %v5833, 0
        %vm5898 = vcmp.ne.s32.totalorder %v5834, 0
        %vm5899 = vcmp.ne.s32.totalorder %v5835, 0
        %vm5900 = vcmp.ne.s32.totalorder %v5836, 0
        %vm5901 = vcmp.ne.s32.totalorder %v5837, 0
        %vm5902 = vcmp.ne.s32.totalorder %v5838, 0
        %vm5903 = vcmp.ne.s32.totalorder %v5839, 0
        %vm5904 = vcmp.ne.s32.totalorder %v5840, 0
        %vm5905 = vcmp.ne.s32.totalorder %v5841, 0
        %vm5906 = vcmp.ne.s32.totalorder %v5842, 0
        %vm5907 = vcmp.ne.s32.totalorder %v5843, 0
        %vm5908 = vcmp.ne.s32.totalorder %v5844, 0
        %vm5909 = vcmp.ne.s32.totalorder %v5845, 0
        %vm5910 = vcmp.ne.s32.totalorder %v5846, 0
        %vm5911 = vcmp.ne.s32.totalorder %v5847, 0
        %vm5912 = vcmp.ne.s32.totalorder %v5848, 0
        %vm5913 = vcmp.ne.s32.totalorder %v5849, 0
        %vm5914 = vcmp.ne.s32.totalorder %v5850, 0
        %vm5915 = vcmp.ne.s32.totalorder %v5851, 0
        %vm5916 = vcmp.ne.s32.totalorder %v5852, 0
        %vm5917 = vcmp.ne.s32.totalorder %v5853, 0
        %vm5918 = vcmp.ne.s32.totalorder %v5854, 0
        %vm5919 = vcmp.ne.s32.totalorder %v5855, 0
        %v5920 = vsel %vm5856, -1e+30, %v5394
        %v5921 = vsel %vm5857, -1e+30, %v5396
        %v5922 = vsel %vm5858, -1e+30, %v5398
        %v5923 = vsel %vm5859, -1e+30, %v5400
        %v5924 = vsel %vm5860, -1e+30, %v5404
        %v5925 = vsel %vm5861, -1e+30, %v5406
        %v5926 = vsel %vm5862, -1e+30, %v5408
        %v5927 = vsel %vm5863, -1e+30, %v5410
        %v5928 = vsel %vm5864, -1e+30, %v5414
        %v5929 = vsel %vm5865, -1e+30, %v5416
        %v5930 = vsel %vm5866, -1e+30, %v5418
        %v5931 = vsel %vm5867, -1e+30, %v5420
        %v5932 = vsel %vm5868, -1e+30, %v5424
        %v5933 = vsel %vm5869, -1e+30, %v5426
        %v5934 = vsel %vm5870, -1e+30, %v5428
        %v5935 = vsel %vm5871, -1e+30, %v5430
        %v5936 = vsel %vm5872, -1e+30, %v5434
        %v5937 = vsel %vm5873, -1e+30, %v5436
        %v5938 = vsel %vm5874, -1e+30, %v5438
        %v5939 = vsel %vm5875, -1e+30, %v5440
        %v5940 = vsel %vm5876, -1e+30, %v5444
        %v5941 = vsel %vm5877, -1e+30, %v5446
        %v5942 = vsel %vm5878, -1e+30, %v5448
        %v5943 = vsel %vm5879, -1e+30, %v5450
        %v5944 = vsel %vm5880, -1e+30, %v5454
        %v5945 = vsel %vm5881, -1e+30, %v5456
        %v5946 = vsel %vm5882, -1e+30, %v5458
        %v5947 = vsel %vm5883, -1e+30, %v5460
        %v5948 = vsel %vm5884, -1e+30, %v5464
        %v5949 = vsel %vm5885, -1e+30, %v5466
        %v5950 = vsel %vm5886, -1e+30, %v5468
        %v5951 = vsel %vm5887, -1e+30, %v5470
        %v5952 = vsel %vm5888, -1e+30, %v5474
        %v5953 = vsel %vm5889, -1e+30, %v5476
        %v5954 = vsel %vm5890, -1e+30, %v5478
        %v5955 = vsel %vm5891, -1e+30, %v5480
        %v5956 = vsel %vm5892, -1e+30, %v5484
        %v5957 = vsel %vm5893, -1e+30, %v5486
        %v5958 = vsel %vm5894, -1e+30, %v5488
        %v5959 = vsel %vm5895, -1e+30, %v5490
        %v5960 = vsel %vm5896, -1e+30, %v5494
        %v5961 = vsel %vm5897, -1e+30, %v5496
        %v5962 = vsel %vm5898, -1e+30, %v5498
        %v5963 = vsel %vm5899, -1e+30, %v5500
        %v5964 = vsel %vm5900, -1e+30, %v5504
        %v5965 = vsel %vm5901, -1e+30, %v5506
        %v5966 = vsel %vm5902, -1e+30, %v5508
        %v5967 = vsel %vm5903, -1e+30, %v5510
        %v5968 = vsel %vm5904, -1e+30, %v5514
        %v5969 = vsel %vm5905, -1e+30, %v5516
        %v5970 = vsel %vm5906, -1e+30, %v5518
        %v5971 = vsel %vm5907, -1e+30, %v5520
        %v5972 = vsel %vm5908, -1e+30, %v5524
        %v5973 = vsel %vm5909, -1e+30, %v5526
        %v5974 = vsel %vm5910, -1e+30, %v5528
        %v5975 = vsel %vm5911, -1e+30, %v5530
        %v5976 = vsel %vm5912, -1e+30, %v5534
        %v5977 = vsel %vm5913, -1e+30, %v5536
        %v5978 = vsel %vm5914, -1e+30, %v5538
        %v5979 = vsel %vm5915, -1e+30, %v5540
        %v5980 = vsel %vm5916, -1e+30, %v5544
        %v5981 = vsel %vm5917, -1e+30, %v5546
        %v5982 = vsel %vm5918, -1e+30, %v5548
        %v5983 = vsel %vm5919, -1e+30, %v5550
        %v5984 = vmax.f32 %v5920, %v5921
        %5985 = vmax.xlane.f32.xlu0 %v5984
        %v5986 = vpop.xlane.xlu0 %5985
        %v5987 = vmax.f32 %v5922, %v5923
        %5988 = vmax.xlane.f32.xlu0 %v5987
        %v5989 = vpop.xlane.xlu0 %5988
        %v5990 = vmax.f32 %v5924, %v5925
        %5991 = vmax.xlane.f32.xlu0 %v5990
        %v5992 = vpop.xlane.xlu0 %5991
        %v5993 = vmax.f32 %v5926, %v5927
        %5994 = vmax.xlane.f32.xlu0 %v5993
        %v5995 = vpop.xlane.xlu0 %5994
        %v5996 = vmax.f32 %v5928, %v5929
        %5997 = vmax.xlane.f32.xlu0 %v5996
        %v5998 = vpop.xlane.xlu0 %5997
        %v5999 = vmax.f32 %v5930, %v5931
        %6000 = vmax.xlane.f32.xlu0 %v5999
        %v6001 = vpop.xlane.xlu0 %6000
        %v6002 = vmax.f32 %v5932, %v5933
        %6003 = vmax.xlane.f32.xlu0 %v6002
        %v6004 = vpop.xlane.xlu0 %6003
        %v6005 = vmax.f32 %v5934, %v5935
        %6006 = vmax.xlane.f32.xlu0 %v6005
        %v6007 = vpop.xlane.xlu0 %6006
        %v6008 = vmax.f32 %v5936, %v5937
        %6009 = vmax.xlane.f32.xlu0 %v6008
        %v6010 = vpop.xlane.xlu0 %6009
        %v6011 = vmax.f32 %v5938, %v5939
        %6012 = vmax.xlane.f32.xlu0 %v6011
        %v6013 = vpop.xlane.xlu0 %6012
        %v6014 = vmax.f32 %v5940, %v5941
        %6015 = vmax.xlane.f32.xlu0 %v6014
        %v6016 = vpop.xlane.xlu0 %6015
        %v6017 = vmax.f32 %v5942, %v5943
        %6018 = vmax.xlane.f32.xlu0 %v6017
        %v6019 = vpop.xlane.xlu0 %6018
        %v6020 = vmax.f32 %v5944, %v5945
        %6021 = vmax.xlane.f32.xlu0 %v6020
        %v6022 = vpop.xlane.xlu0 %6021
        %v6023 = vmax.f32 %v5946, %v5947
        %6024 = vmax.xlane.f32.xlu0 %v6023
        %v6025 = vpop.xlane.xlu0 %6024
        %v6026 = vmax.f32 %v5948, %v5949
        %6027 = vmax.xlane.f32.xlu0 %v6026
        %v6028 = vpop.xlane.xlu0 %6027
        %v6029 = vmax.f32 %v5950, %v5951
        %6030 = vmax.xlane.f32.xlu0 %v6029
        %v6031 = vpop.xlane.xlu0 %6030
        %v6032 = vmax.f32 %v5952, %v5953
        %6033 = vmax.xlane.f32.xlu0 %v6032
        %v6034 = vpop.xlane.xlu0 %6033
        %v6035 = vmax.f32 %v5954, %v5955
        %6036 = vmax.xlane.f32.xlu0 %v6035
        %v6037 = vpop.xlane.xlu0 %6036
        %v6038 = vmax.f32 %v5956, %v5957
        %6039 = vmax.xlane.f32.xlu0 %v6038
        %v6040 = vpop.xlane.xlu0 %6039
        %v6041 = vmax.f32 %v5958, %v5959
        %6042 = vmax.xlane.f32.xlu0 %v6041
        %v6043 = vpop.xlane.xlu0 %6042
        %v6044 = vmax.f32 %v5960, %v5961
        %6045 = vmax.xlane.f32.xlu0 %v6044
        %v6046 = vpop.xlane.xlu0 %6045
        %v6047 = vmax.f32 %v5962, %v5963
        %6048 = vmax.xlane.f32.xlu0 %v6047
        %v6049 = vpop.xlane.xlu0 %6048
        %v6050 = vmax.f32 %v5964, %v5965
        %6051 = vmax.xlane.f32.xlu0 %v6050
        %v6052 = vpop.xlane.xlu0 %6051
        %v6053 = vmax.f32 %v5966, %v5967
        %6054 = vmax.xlane.f32.xlu0 %v6053
        %v6055 = vpop.xlane.xlu0 %6054
        %v6056 = vmax.f32 %v5968, %v5969
        %6057 = vmax.xlane.f32.xlu0 %v6056
        %v6058 = vpop.xlane.xlu0 %6057
        %v6059 = vmax.f32 %v5970, %v5971
        %6060 = vmax.xlane.f32.xlu0 %v6059
        %v6061 = vpop.xlane.xlu0 %6060
        %v6062 = vmax.f32 %v5972, %v5973
        %6063 = vmax.xlane.f32.xlu0 %v6062
        %v6064 = vpop.xlane.xlu0 %6063
        %v6065 = vmax.f32 %v5974, %v5975
        %6066 = vmax.xlane.f32.xlu0 %v6065
        %v6067 = vpop.xlane.xlu0 %6066
        %v6068 = vmax.f32 %v5976, %v5977
        %6069 = vmax.xlane.f32.xlu0 %v6068
        %v6070 = vpop.xlane.xlu0 %6069
        %v6071 = vmax.f32 %v5978, %v5979
        %6072 = vmax.xlane.f32.xlu0 %v6071
        %v6073 = vpop.xlane.xlu0 %6072
        %v6074 = vmax.f32 %v5980, %v5981
        %6075 = vmax.xlane.f32.xlu0 %v6074
        %v6076 = vpop.xlane.xlu0 %6075
        %v6077 = vmax.f32 %v5982, %v5983
        %6078 = vmax.xlane.f32.xlu0 %v6077
        %v6079 = vpop.xlane.xlu0 %6078
        %v6080 = vsub.f32 %v5920, %v5986
        %v6081 = vsub.f32 %v5921, %v5986
        %v6082 = vsub.f32 %v5922, %v5989
        %v6083 = vsub.f32 %v5923, %v5989
        %v6084 = vsub.f32 %v5924, %v5992
        %v6085 = vsub.f32 %v5925, %v5992
        %v6086 = vsub.f32 %v5926, %v5995
        %v6087 = vsub.f32 %v5927, %v5995
        %v6088 = vsub.f32 %v5928, %v5998
        %v6089 = vsub.f32 %v5929, %v5998
        %v6090 = vsub.f32 %v5930, %v6001
        %v6091 = vsub.f32 %v5931, %v6001
        %v6092 = vsub.f32 %v5932, %v6004
        %v6093 = vsub.f32 %v5933, %v6004
        %v6094 = vsub.f32 %v5934, %v6007
        %v6095 = vsub.f32 %v5935, %v6007
        %v6096 = vsub.f32 %v5936, %v6010
        %v6097 = vsub.f32 %v5937, %v6010
        %v6098 = vsub.f32 %v5938, %v6013
        %v6099 = vsub.f32 %v5939, %v6013
        %v6100 = vsub.f32 %v5940, %v6016
        %v6101 = vsub.f32 %v5941, %v6016
        %v6102 = vsub.f32 %v5942, %v6019
        %v6103 = vsub.f32 %v5943, %v6019
        %v6104 = vsub.f32 %v5944, %v6022
        %v6105 = vsub.f32 %v5945, %v6022
        %v6106 = vsub.f32 %v5946, %v6025
        %v6107 = vsub.f32 %v5947, %v6025
        %v6108 = vsub.f32 %v5948, %v6028
        %v6109 = vsub.f32 %v5949, %v6028
        %v6110 = vsub.f32 %v5950, %v6031
        %v6111 = vsub.f32 %v5951, %v6031
        %v6112 = vsub.f32 %v5952, %v6034
        %v6113 = vsub.f32 %v5953, %v6034
        %v6114 = vsub.f32 %v5954, %v6037
        %v6115 = vsub.f32 %v5955, %v6037
        %v6116 = vsub.f32 %v5956, %v6040
        %v6117 = vsub.f32 %v5957, %v6040
        %v6118 = vsub.f32 %v5958, %v6043
        %v6119 = vsub.f32 %v5959, %v6043
        %v6120 = vsub.f32 %v5960, %v6046
        %v6121 = vsub.f32 %v5961, %v6046
        %v6122 = vsub.f32 %v5962, %v6049
        %v6123 = vsub.f32 %v5963, %v6049
        %v6124 = vsub.f32 %v5964, %v6052
        %v6125 = vsub.f32 %v5965, %v6052
        %v6126 = vsub.f32 %v5966, %v6055
        %v6127 = vsub.f32 %v5967, %v6055
        %v6128 = vsub.f32 %v5968, %v6058
        %v6129 = vsub.f32 %v5969, %v6058
        %v6130 = vsub.f32 %v5970, %v6061
        %v6131 = vsub.f32 %v5971, %v6061
        %v6132 = vsub.f32 %v5972, %v6064
        %v6133 = vsub.f32 %v5973, %v6064
        %v6134 = vsub.f32 %v5974, %v6067
        %v6135 = vsub.f32 %v5975, %v6067
        %v6136 = vsub.f32 %v5976, %v6070
        %v6137 = vsub.f32 %v5977, %v6070
        %v6138 = vsub.f32 %v5978, %v6073
        %v6139 = vsub.f32 %v5979, %v6073
        %v6140 = vsub.f32 %v5980, %v6076
        %v6141 = vsub.f32 %v5981, %v6076
        %v6142 = vsub.f32 %v5982, %v6079
        %v6143 = vsub.f32 %v5983, %v6079
        %v6144 = vmul.f32 %v6080, 1.442695
        %v6145 = vpow.pop %v6144
        %v6146 = vmul.f32 %v6081, 1.442695
        %v6147 = vpow.pop %v6146
        %v6148 = vmul.f32 %v6082, 1.442695
        %v6149 = vpow.pop %v6148
        %v6150 = vmul.f32 %v6083, 1.442695
        %v6151 = vpow.pop %v6150
        %v6152 = vmul.f32 %v6084, 1.442695
        %v6153 = vpow.pop %v6152
        %v6154 = vmul.f32 %v6085, 1.442695
        %v6155 = vpow.pop %v6154
        %v6156 = vmul.f32 %v6086, 1.442695
        %v6157 = vpow.pop %v6156
        %v6158 = vmul.f32 %v6087, 1.442695
        %v6159 = vpow.pop %v6158
        %v6160 = vmul.f32 %v6088, 1.442695
        %v6161 = vpow.pop %v6160
        %v6162 = vmul.f32 %v6089, 1.442695
        %v6163 = vpow.pop %v6162
        %v6164 = vmul.f32 %v6090, 1.442695
        %v6165 = vpow.pop %v6164
        %v6166 = vmul.f32 %v6091, 1.442695
        %v6167 = vpow.pop %v6166
        %v6168 = vmul.f32 %v6092, 1.442695
        %v6169 = vpow.pop %v6168
        %v6170 = vmul.f32 %v6093, 1.442695
        %v6171 = vpow.pop %v6170
        %v6172 = vmul.f32 %v6094, 1.442695
        %v6173 = vpow.pop %v6172
        %v6174 = vmul.f32 %v6095, 1.442695
        %v6175 = vpow.pop %v6174
        %v6176 = vmul.f32 %v6096, 1.442695
        %v6177 = vpow.pop %v6176
        %v6178 = vmul.f32 %v6097, 1.442695
        %v6179 = vpow.pop %v6178
        %v6180 = vmul.f32 %v6098, 1.442695
        %v6181 = vpow.pop %v6180
        %v6182 = vmul.f32 %v6099, 1.442695
        %v6183 = vpow.pop %v6182
        %v6184 = vmul.f32 %v6100, 1.442695
        %v6185 = vpow.pop %v6184
        %v6186 = vmul.f32 %v6101, 1.442695
        %v6187 = vpow.pop %v6186
        %v6188 = vmul.f32 %v6102, 1.442695
        %v6189 = vpow.pop %v6188
        %v6190 = vmul.f32 %v6103, 1.442695
        %v6191 = vpow.pop %v6190
        %v6192 = vmul.f32 %v6104, 1.442695
        %v6193 = vpow.pop %v6192
        %v6194 = vmul.f32 %v6105, 1.442695
        %v6195 = vpow.pop %v6194
        %v6196 = vmul.f32 %v6106, 1.442695
        %v6197 = vpow.pop %v6196
        %v6198 = vmul.f32 %v6107, 1.442695
        %v6199 = vpow.pop %v6198
        %v6200 = vmul.f32 %v6108, 1.442695
        %v6201 = vpow.pop %v6200
        %v6202 = vmul.f32 %v6109, 1.442695
        %v6203 = vpow.pop %v6202
        %v6204 = vmul.f32 %v6110, 1.442695
        %v6205 = vpow.pop %v6204
        %v6206 = vmul.f32 %v6111, 1.442695
        %v6207 = vpow.pop %v6206
        %v6208 = vmul.f32 %v6112, 1.442695
        %v6209 = vpow.pop %v6208
        %v6210 = vmul.f32 %v6113, 1.442695
        %v6211 = vpow.pop %v6210
        %v6212 = vmul.f32 %v6114, 1.442695
        %v6213 = vpow.pop %v6212
        %v6214 = vmul.f32 %v6115, 1.442695
        %v6215 = vpow.pop %v6214
        %v6216 = vmul.f32 %v6116, 1.442695
        %v6217 = vpow.pop %v6216
        %v6218 = vmul.f32 %v6117, 1.442695
        %v6219 = vpow.pop %v6218
        %v6220 = vmul.f32 %v6118, 1.442695
        %v6221 = vpow.pop %v6220
        %v6222 = vmul.f32 %v6119, 1.442695
        %v6223 = vpow.pop %v6222
        %v6224 = vmul.f32 %v6120, 1.442695
        %v6225 = vpow.pop %v6224
        %v6226 = vmul.f32 %v6121, 1.442695
        %v6227 = vpow.pop %v6226
        %v6228 = vmul.f32 %v6122, 1.442695
        %v6229 = vpow.pop %v6228
        %v6230 = vmul.f32 %v6123, 1.442695
        %v6231 = vpow.pop %v6230
        %v6232 = vmul.f32 %v6124, 1.442695
        %v6233 = vpow.pop %v6232
        %v6234 = vmul.f32 %v6125, 1.442695
        %v6235 = vpow.pop %v6234
        %v6236 = vmul.f32 %v6126, 1.442695
        %v6237 = vpow.pop %v6236
        %v6238 = vmul.f32 %v6127, 1.442695
        %v6239 = vpow.pop %v6238
        %v6240 = vmul.f32 %v6128, 1.442695
        %v6241 = vpow.pop %v6240
        %v6242 = vmul.f32 %v6129, 1.442695
        %v6243 = vpow.pop %v6242
        %v6244 = vmul.f32 %v6130, 1.442695
        %v6245 = vpow.pop %v6244
        %v6246 = vmul.f32 %v6131, 1.442695
        %v6247 = vpow.pop %v6246
        %v6248 = vmul.f32 %v6132, 1.442695
        %v6249 = vpow.pop %v6248
        %v6250 = vmul.f32 %v6133, 1.442695
        %v6251 = vpow.pop %v6250
        %v6252 = vmul.f32 %v6134, 1.442695
        %v6253 = vpow.pop %v6252
        %v6254 = vmul.f32 %v6135, 1.442695
        %v6255 = vpow.pop %v6254
        %v6256 = vmul.f32 %v6136, 1.442695
        %v6257 = vpow.pop %v6256
        %v6258 = vmul.f32 %v6137, 1.442695
        %v6259 = vpow.pop %v6258
        %v6260 = vmul.f32 %v6138, 1.442695
        %v6261 = vpow.pop %v6260
        %v6262 = vmul.f32 %v6139, 1.442695
        %v6263 = vpow.pop %v6262
        %v6264 = vmul.f32 %v6140, 1.442695
        %v6265 = vpow.pop %v6264
        %v6266 = vmul.f32 %v6141, 1.442695
        %v6267 = vpow.pop %v6266
        %v6268 = vmul.f32 %v6142, 1.442695
        %v6269 = vpow.pop %v6268
        %v6270 = vmul.f32 %v6143, 1.442695
        %v6271 = vpow.pop %v6270
        %v6272 = vadd.f32 %v6145, %v6147
        %6273 = vadd.xlane.f32.xlu0 %v6272
        %v6274 = vpop.xlane.xlu0 %6273
        %v6275 = vadd.f32 %v6149, %v6151
        %6276 = vadd.xlane.f32.xlu0 %v6275
        %v6277 = vpop.xlane.xlu0 %6276
        %v6278 = vadd.f32 %v6153, %v6155
        %6279 = vadd.xlane.f32.xlu0 %v6278
        %v6280 = vpop.xlane.xlu0 %6279
        %v6281 = vadd.f32 %v6157, %v6159
        %6282 = vadd.xlane.f32.xlu0 %v6281
        %v6283 = vpop.xlane.xlu0 %6282
        %v6284 = vadd.f32 %v6161, %v6163
        %6285 = vadd.xlane.f32.xlu0 %v6284
        %v6286 = vpop.xlane.xlu0 %6285
        %v6287 = vadd.f32 %v6165, %v6167
        %6288 = vadd.xlane.f32.xlu0 %v6287
        %v6289 = vpop.xlane.xlu0 %6288
        %v6290 = vadd.f32 %v6169, %v6171
        %6291 = vadd.xlane.f32.xlu0 %v6290
        %v6292 = vpop.xlane.xlu0 %6291
        %v6293 = vadd.f32 %v6173, %v6175
        %6294 = vadd.xlane.f32.xlu0 %v6293
        %v6295 = vpop.xlane.xlu0 %6294
        %v6296 = vadd.f32 %v6177, %v6179
        %6297 = vadd.xlane.f32.xlu0 %v6296
        %v6298 = vpop.xlane.xlu0 %6297
        %v6299 = vadd.f32 %v6181, %v6183
        %6300 = vadd.xlane.f32.xlu0 %v6299
        %v6301 = vpop.xlane.xlu0 %6300
        %v6302 = vadd.f32 %v6185, %v6187
        %6303 = vadd.xlane.f32.xlu0 %v6302
        %v6304 = vpop.xlane.xlu0 %6303
        %v6305 = vadd.f32 %v6189, %v6191
        %6306 = vadd.xlane.f32.xlu0 %v6305
        %v6307 = vpop.xlane.xlu0 %6306
        %v6308 = vadd.f32 %v6193, %v6195
        %6309 = vadd.xlane.f32.xlu0 %v6308
        %v6310 = vpop.xlane.xlu0 %6309
        %v6311 = vadd.f32 %v6197, %v6199
        %6312 = vadd.xlane.f32.xlu0 %v6311
        %v6313 = vpop.xlane.xlu0 %6312
        %v6314 = vadd.f32 %v6201, %v6203
        %6315 = vadd.xlane.f32.xlu0 %v6314
        %v6316 = vpop.xlane.xlu0 %6315
        %v6317 = vadd.f32 %v6205, %v6207
        %6318 = vadd.xlane.f32.xlu0 %v6317
        %v6319 = vpop.xlane.xlu0 %6318
        %v6320 = vadd.f32 %v6209, %v6211
        %6321 = vadd.xlane.f32.xlu0 %v6320
        %v6322 = vpop.xlane.xlu0 %6321
        %v6323 = vadd.f32 %v6213, %v6215
        %6324 = vadd.xlane.f32.xlu0 %v6323
        %v6325 = vpop.xlane.xlu0 %6324
        %v6326 = vadd.f32 %v6217, %v6219
        %6327 = vadd.xlane.f32.xlu0 %v6326
        %v6328 = vpop.xlane.xlu0 %6327
        %v6329 = vadd.f32 %v6221, %v6223
        %6330 = vadd.xlane.f32.xlu0 %v6329
        %v6331 = vpop.xlane.xlu0 %6330
        %v6332 = vadd.f32 %v6225, %v6227
        %6333 = vadd.xlane.f32.xlu0 %v6332
        %v6334 = vpop.xlane.xlu0 %6333
        %v6335 = vadd.f32 %v6229, %v6231
        %6336 = vadd.xlane.f32.xlu0 %v6335
        %v6337 = vpop.xlane.xlu0 %6336
        %v6338 = vadd.f32 %v6233, %v6235
        %6339 = vadd.xlane.f32.xlu0 %v6338
        %v6340 = vpop.xlane.xlu0 %6339
        %v6341 = vadd.f32 %v6237, %v6239
        %6342 = vadd.xlane.f32.xlu0 %v6341
        %v6343 = vpop.xlane.xlu0 %6342
        %v6344 = vadd.f32 %v6241, %v6243
        %6345 = vadd.xlane.f32.xlu0 %v6344
        %v6346 = vpop.xlane.xlu0 %6345
        %v6347 = vadd.f32 %v6245, %v6247
        %6348 = vadd.xlane.f32.xlu0 %v6347
        %v6349 = vpop.xlane.xlu0 %6348
        %v6350 = vadd.f32 %v6249, %v6251
        %6351 = vadd.xlane.f32.xlu0 %v6350
        %v6352 = vpop.xlane.xlu0 %6351
        %v6353 = vadd.f32 %v6253, %v6255
        %6354 = vadd.xlane.f32.xlu0 %v6353
        %v6355 = vpop.xlane.xlu0 %6354
        %v6356 = vadd.f32 %v6257, %v6259
        %6357 = vadd.xlane.f32.xlu0 %v6356
        %v6358 = vpop.xlane.xlu0 %6357
        %v6359 = vadd.f32 %v6261, %v6263
        %6360 = vadd.xlane.f32.xlu0 %v6359
        %v6361 = vpop.xlane.xlu0 %6360
        %v6362 = vadd.f32 %v6265, %v6267
        %6363 = vadd.xlane.f32.xlu0 %v6362
        %v6364 = vpop.xlane.xlu0 %6363
        %v6365 = vadd.f32 %v6269, %v6271
        %6366 = vadd.xlane.f32.xlu0 %v6365
        %v6367 = vpop.xlane.xlu0 %6366
        %v6368 = vrcp.pop %v6274
        %v6369 = vrcp.pop %v6277
        %v6370 = vrcp.pop %v6280
        %v6371 = vrcp.pop %v6283
        %v6372 = vrcp.pop %v6286
        %v6373 = vrcp.pop %v6289
        %v6374 = vrcp.pop %v6292
        %v6375 = vrcp.pop %v6295
        %v6376 = vrcp.pop %v6298
        %v6377 = vrcp.pop %v6301
        %v6378 = vrcp.pop %v6304
        %v6379 = vrcp.pop %v6307
        %v6380 = vrcp.pop %v6310
        %v6381 = vrcp.pop %v6313
        %v6382 = vrcp.pop %v6316
        %v6383 = vrcp.pop %v6319
        %v6384 = vrcp.pop %v6322
        %v6385 = vrcp.pop %v6325
        %v6386 = vrcp.pop %v6328
        %v6387 = vrcp.pop %v6331
        %v6388 = vrcp.pop %v6334
        %v6389 = vrcp.pop %v6337
        %v6390 = vrcp.pop %v6340
        %v6391 = vrcp.pop %v6343
        %v6392 = vrcp.pop %v6346
        %v6393 = vrcp.pop %v6349
        %v6394 = vrcp.pop %v6352
        %v6395 = vrcp.pop %v6355
        %v6396 = vrcp.pop %v6358
        %v6397 = vrcp.pop %v6361
        %v6398 = vrcp.pop %v6364
        %v6399 = vrcp.pop %v6367
        %v6400 = vmul.f32 %v6145, %v6368
        %v6401 = vmul.f32 %v6147, %v6368
        %v6402 = vmul.f32 %v6149, %v6369
        %v6403 = vmul.f32 %v6151, %v6369
        %v6404 = vmul.f32 %v6153, %v6370
        %v6405 = vmul.f32 %v6155, %v6370
        %v6406 = vmul.f32 %v6157, %v6371
        %v6407 = vmul.f32 %v6159, %v6371
        %v6408 = vmul.f32 %v6161, %v6372
        %v6409 = vmul.f32 %v6163, %v6372
        %v6410 = vmul.f32 %v6165, %v6373
        %v6411 = vmul.f32 %v6167, %v6373
        %v6412 = vmul.f32 %v6169, %v6374
        %v6413 = vmul.f32 %v6171, %v6374
        %v6414 = vmul.f32 %v6173, %v6375
        %v6415 = vmul.f32 %v6175, %v6375
        %v6416 = vmul.f32 %v6177, %v6376
        %v6417 = vmul.f32 %v6179, %v6376
        %v6418 = vmul.f32 %v6181, %v6377
        %v6419 = vmul.f32 %v6183, %v6377
        %v6420 = vmul.f32 %v6185, %v6378
        %v6421 = vmul.f32 %v6187, %v6378
        %v6422 = vmul.f32 %v6189, %v6379
        %v6423 = vmul.f32 %v6191, %v6379
        %v6424 = vmul.f32 %v6193, %v6380
        %v6425 = vmul.f32 %v6195, %v6380
        %v6426 = vmul.f32 %v6197, %v6381
        %v6427 = vmul.f32 %v6199, %v6381
        %v6428 = vmul.f32 %v6201, %v6382
        %v6429 = vmul.f32 %v6203, %v6382
        %v6430 = vmul.f32 %v6205, %v6383
        %v6431 = vmul.f32 %v6207, %v6383
        %v6432 = vmul.f32 %v6209, %v6384
        %v6433 = vmul.f32 %v6211, %v6384
        %v6434 = vmul.f32 %v6213, %v6385
        %v6435 = vmul.f32 %v6215, %v6385
        %v6436 = vmul.f32 %v6217, %v6386
        %v6437 = vmul.f32 %v6219, %v6386
        %v6438 = vmul.f32 %v6221, %v6387
        %v6439 = vmul.f32 %v6223, %v6387
        %v6440 = vmul.f32 %v6225, %v6388
        %v6441 = vmul.f32 %v6227, %v6388
        %v6442 = vmul.f32 %v6229, %v6389
        %v6443 = vmul.f32 %v6231, %v6389
        %v6444 = vmul.f32 %v6233, %v6390
        %v6445 = vmul.f32 %v6235, %v6390
        %v6446 = vmul.f32 %v6237, %v6391
        %v6447 = vmul.f32 %v6239, %v6391
        %v6448 = vmul.f32 %v6241, %v6392
        %v6449 = vmul.f32 %v6243, %v6392
        %v6450 = vmul.f32 %v6245, %v6393
        %v6451 = vmul.f32 %v6247, %v6393
        %v6452 = vmul.f32 %v6249, %v6394
        %v6453 = vmul.f32 %v6251, %v6394
        %v6454 = vmul.f32 %v6253, %v6395
        %v6455 = vmul.f32 %v6255, %v6395
        %v6456 = vmul.f32 %v6257, %v6396
        %v6457 = vmul.f32 %v6259, %v6396
        %v6458 = vmul.f32 %v6261, %v6397
        %v6459 = vmul.f32 %v6263, %v6397
        %v6460 = vmul.f32 %v6265, %v6398
        %v6461 = vmul.f32 %v6267, %v6398
        %v6462 = vmul.f32 %v6269, %v6399
        %v6463 = vmul.f32 %v6271, %v6399
        %6464 = vst [vmem:[%s1144] sm:$0xff] %v6400
        %6465 = vst [vmem:[%s1144 + $0x8] sm:$0xff] %v6401
        %6466 = vst [vmem:[%s1144 + $0x10] sm:$0xff] %v6402
        %6467 = vst [vmem:[%s1144 + $0x18] sm:$0xff] %v6403
        %6468 = vst [vmem:[%s1144 + $0x20] sm:$0xff] %v6404
        %6469 = vst [vmem:[%s1144 + $0x28] sm:$0xff] %v6405
        %6470 = vst [vmem:[%s1144 + $0x30] sm:$0xff] %v6406
        %6471 = vst [vmem:[%s1144 + $0x38] sm:$0xff] %v6407
        %6472 = vst [vmem:[%s1144 + $0x40] sm:$0xff] %v6408
        %6473 = vst [vmem:[%s1144 + $0x48] sm:$0xff] %v6409
        %6474 = vst [vmem:[%s1144 + $0x50] sm:$0xff] %v6410
        %6475 = vst [vmem:[%s1144 + $0x58] sm:$0xff] %v6411
        %6476 = vst [vmem:[%s1144 + $0x60] sm:$0xff] %v6412
        %6477 = vst [vmem:[%s1144 + $0x68] sm:$0xff] %v6413
        %6478 = vst [vmem:[%s1144 + $0x70] sm:$0xff] %v6414
        %6479 = vst [vmem:[%s1144 + $0x78] sm:$0xff] %v6415
        %6480 = vst [vmem:[%s1144 + $0x80] sm:$0xff] %v6416
        %6481 = vst [vmem:[%s1144 + $0x88] sm:$0xff] %v6417
        %6482 = vst [vmem:[%s1144 + $0x90] sm:$0xff] %v6418
        %6483 = vst [vmem:[%s1144 + $0x98] sm:$0xff] %v6419
        %6484 = vst [vmem:[%s1144 + $0xa0] sm:$0xff] %v6420
        %6485 = vst [vmem:[%s1144 + $0xa8] sm:$0xff] %v6421
        %6486 = vst [vmem:[%s1144 + $0xb0] sm:$0xff] %v6422
        %6487 = vst [vmem:[%s1144 + $0xb8] sm:$0xff] %v6423
        %6488 = vst [vmem:[%s1144 + $0xc0] sm:$0xff] %v6424
        %6489 = vst [vmem:[%s1144 + $0xc8] sm:$0xff] %v6425
        %6490 = vst [vmem:[%s1144 + $0xd0] sm:$0xff] %v6426
        %6491 = vst [vmem:[%s1144 + $0xd8] sm:$0xff] %v6427
        %6492 = vst [vmem:[%s1144 + $0xe0] sm:$0xff] %v6428
        %6493 = vst [vmem:[%s1144 + $0xe8] sm:$0xff] %v6429
        %6494 = vst [vmem:[%s1144 + $0xf0] sm:$0xff] %v6430
        %6495 = vst [vmem:[%s1144 + $0xf8] sm:$0xff] %v6431
        %6496 = vst [vmem:[%s1144 + $0x100] sm:$0xff] %v6432
        %6497 = vst [vmem:[%s1144 + $0x108] sm:$0xff] %v6433
        %6498 = vst [vmem:[%s1144 + $0x110] sm:$0xff] %v6434
        %6499 = vst [vmem:[%s1144 + $0x118] sm:$0xff] %v6435
        %6500 = vst [vmem:[%s1144 + $0x120] sm:$0xff] %v6436
        %6501 = vst [vmem:[%s1144 + $0x128] sm:$0xff] %v6437
        %6502 = vst [vmem:[%s1144 + $0x130] sm:$0xff] %v6438
        %6503 = vst [vmem:[%s1144 + $0x138] sm:$0xff] %v6439
        %6504 = vst [vmem:[%s1144 + $0x140] sm:$0xff] %v6440
        %6505 = vst [vmem:[%s1144 + $0x148] sm:$0xff] %v6441
        %6506 = vst [vmem:[%s1144 + $0x150] sm:$0xff] %v6442
        %6507 = vst [vmem:[%s1144 + $0x158] sm:$0xff] %v6443
        %6508 = vst [vmem:[%s1144 + $0x160] sm:$0xff] %v6444
        %6509 = vst [vmem:[%s1144 + $0x168] sm:$0xff] %v6445
        %6510 = vst [vmem:[%s1144 + $0x170] sm:$0xff] %v6446
        %6511 = vst [vmem:[%s1144 + $0x178] sm:$0xff] %v6447
        %6512 = vst [vmem:[%s1144 + $0x180] sm:$0xff] %v6448
        %6513 = vst [vmem:[%s1144 + $0x188] sm:$0xff] %v6449
        %6514 = vst [vmem:[%s1144 + $0x190] sm:$0xff] %v6450
        %6515 = vst [vmem:[%s1144 + $0x198] sm:$0xff] %v6451
        %6516 = vst [vmem:[%s1144 + $0x1a0] sm:$0xff] %v6452
        %6517 = vst [vmem:[%s1144 + $0x1a8] sm:$0xff] %v6453
        %6518 = vst [vmem:[%s1144 + $0x1b0] sm:$0xff] %v6454
        %6519 = vst [vmem:[%s1144 + $0x1b8] sm:$0xff] %v6455
        %6520 = vst [vmem:[%s1144 + $0x1c0] sm:$0xff] %v6456
        %6521 = vst [vmem:[%s1144 + $0x1c8] sm:$0xff] %v6457
        %6522 = vst [vmem:[%s1144 + $0x1d0] sm:$0xff] %v6458
        %6523 = vst [vmem:[%s1144 + $0x1d8] sm:$0xff] %v6459
        %6524 = vst [vmem:[%s1144 + $0x1e0] sm:$0xff] %v6460
        %6525 = vst [vmem:[%s1144 + $0x1e8] sm:$0xff] %v6461
        %6526 = vst [vmem:[%s1144 + $0x1f0] sm:$0xff] %v6462
        %6527 = vst [vmem:[%s1144 + $0x1f8] sm:$0xff] %v6463
        %v6528 = vpack.c.bf16 %v6402, %v6400
        %v6529 = vpack.c.bf16 %v6403, %v6401
        %v6530 = vpack.c.bf16 %v6406, %v6404
        %v6531 = vpack.c.bf16 %v6407, %v6405
        %v6532 = vpack.c.bf16 %v6410, %v6408
        %v6533 = vpack.c.bf16 %v6411, %v6409
        %v6534 = vpack.c.bf16 %v6414, %v6412
        %v6535 = vpack.c.bf16 %v6415, %v6413
        %v6536 = vpack.c.bf16 %v6418, %v6416
        %v6537 = vpack.c.bf16 %v6419, %v6417
        %v6538 = vpack.c.bf16 %v6422, %v6420
        %v6539 = vpack.c.bf16 %v6423, %v6421
        %v6540 = vpack.c.bf16 %v6426, %v6424
        %v6541 = vpack.c.bf16 %v6427, %v6425
        %v6542 = vpack.c.bf16 %v6430, %v6428
        %v6543 = vpack.c.bf16 %v6431, %v6429
        %v6544 = vpack.c.bf16 %v6434, %v6432
        %v6545 = vpack.c.bf16 %v6435, %v6433
        %v6546 = vpack.c.bf16 %v6438, %v6436
        %v6547 = vpack.c.bf16 %v6439, %v6437
        %v6548 = vpack.c.bf16 %v6442, %v6440
        %v6549 = vpack.c.bf16 %v6443, %v6441
        %v6550 = vpack.c.bf16 %v6446, %v6444
        %v6551 = vpack.c.bf16 %v6447, %v6445
        %v6552 = vpack.c.bf16 %v6450, %v6448
        %v6553 = vpack.c.bf16 %v6451, %v6449
        %v6554 = vpack.c.bf16 %v6454, %v6452
        %v6555 = vpack.c.bf16 %v6455, %v6453
        %v6556 = vpack.c.bf16 %v6458, %v6456
        %v6557 = vpack.c.bf16 %v6459, %v6457
        %v6558 = vpack.c.bf16 %v6462, %v6460
        %v6559 = vpack.c.bf16 %v6463, %v6461
        %v6560 = vld [vmem:[%s979] sm:$0xf]
        %v6561 = vld [vmem:[%s979 + $0x4] sm:$0xf]
        %v6562 = vld [vmem:[%s979 + $0x8] sm:$0xf]
        %v6563 = vld [vmem:[%s979 + $0xc] sm:$0xf]
        %v6564 = vld [vmem:[%s979 + $0x10] sm:$0xf]
        %v6565 = vld [vmem:[%s979 + $0x14] sm:$0xf]
        %v6566 = vld [vmem:[%s979 + $0x18] sm:$0xf]
        %v6567 = vld [vmem:[%s979 + $0x1c] sm:$0xf]
        %v6568 = vld [vmem:[%s979 + $0x20] sm:$0xf]
        %v6569 = vld [vmem:[%s979 + $0x24] sm:$0xf]
        %v6570 = vld [vmem:[%s979 + $0x28] sm:$0xf]
        %v6571 = vld [vmem:[%s979 + $0x2c] sm:$0xf]
        %v6572 = vld [vmem:[%s979 + $0x30] sm:$0xf]
        %v6573 = vld [vmem:[%s979 + $0x34] sm:$0xf]
        %v6574 = vld [vmem:[%s979 + $0x38] sm:$0xf]
        %v6575 = vld [vmem:[%s979 + $0x3c] sm:$0xf]
        %v6576 = vld [vmem:[%s979 + $0x40] sm:$0xf]
        %v6577 = vld [vmem:[%s979 + $0x44] sm:$0xf]
        %v6578 = vld [vmem:[%s979 + $0x48] sm:$0xf]
        %v6579 = vld [vmem:[%s979 + $0x4c] sm:$0xf]
        %v6580 = vld [vmem:[%s979 + $0x50] sm:$0xf]
        %v6581 = vld [vmem:[%s979 + $0x54] sm:$0xf]
        %v6582 = vld [vmem:[%s979 + $0x58] sm:$0xf]
        %v6583 = vld [vmem:[%s979 + $0x5c] sm:$0xf]
        %v6584 = vld [vmem:[%s979 + $0x60] sm:$0xf]
        %v6585 = vld [vmem:[%s979 + $0x64] sm:$0xf]
        %v6586 = vld [vmem:[%s979 + $0x68] sm:$0xf]
        %v6587 = vld [vmem:[%s979 + $0x6c] sm:$0xf]
        %v6588 = vld [vmem:[%s979 + $0x70] sm:$0xf]
        %v6589 = vld [vmem:[%s979 + $0x74] sm:$0xf]
        %v6590 = vld [vmem:[%s979 + $0x78] sm:$0xf]
        %v6591 = vld [vmem:[%s979 + $0x7c] sm:$0xf]
        %v6624 = vunpack.c.l.b16 %v6560
        %v6625 = vunpack.c.l.b16 %v6561
        %v6626 = vunpack.c.l.b16 %v6562
        %v6627 = vunpack.c.l.b16 %v6563
        %v6628 = vunpack.c.l.b16 %v6564
        %v6629 = vunpack.c.l.b16 %v6565
        %v6630 = vunpack.c.l.b16 %v6566
        %v6631 = vunpack.c.l.b16 %v6567
        %v6632 = vunpack.c.l.b16 %v6568
        %v6633 = vunpack.c.l.b16 %v6569
        %v6634 = vunpack.c.l.b16 %v6570
        %v6635 = vunpack.c.l.b16 %v6571
        %v6636 = vunpack.c.l.b16 %v6572
        %v6637 = vunpack.c.l.b16 %v6573
        %v6638 = vunpack.c.l.b16 %v6574
        %v6639 = vunpack.c.l.b16 %v6575
        %v6640 = vunpack.c.l.b16 %v6576
        %v6641 = vunpack.c.l.b16 %v6577
        %v6642 = vunpack.c.l.b16 %v6578
        %v6643 = vunpack.c.l.b16 %v6579
        %v6644 = vunpack.c.l.b16 %v6580
        %v6645 = vunpack.c.l.b16 %v6581
        %v6646 = vunpack.c.l.b16 %v6582
        %v6647 = vunpack.c.l.b16 %v6583
        %v6648 = vunpack.c.l.b16 %v6584
        %v6649 = vunpack.c.l.b16 %v6585
        %v6650 = vunpack.c.l.b16 %v6586
        %v6651 = vunpack.c.l.b16 %v6587
        %v6652 = vunpack.c.l.b16 %v6588
        %v6653 = vunpack.c.l.b16 %v6589
        %v6654 = vunpack.c.l.b16 %v6590
        %v6655 = vunpack.c.l.b16 %v6591
        %v6656 = vpack.c.b16 %v6625, %v6624
        %v6657 = vpack.c.b16 %v6627, %v6626
        %v6658 = vpack.c.b16 %v6629, %v6628
        %v6659 = vpack.c.b16 %v6631, %v6630
        %v6660 = vpack.c.b16 %v6633, %v6632
        %v6661 = vpack.c.b16 %v6635, %v6634
        %v6662 = vpack.c.b16 %v6637, %v6636
        %v6663 = vpack.c.b16 %v6639, %v6638
        %v6664 = vpack.c.b16 %v6641, %v6640
        %v6665 = vpack.c.b16 %v6643, %v6642
        %v6666 = vpack.c.b16 %v6645, %v6644
        %v6667 = vpack.c.b16 %v6647, %v6646
        %v6668 = vpack.c.b16 %v6649, %v6648
        %v6669 = vpack.c.b16 %v6651, %v6650
        %v6670 = vpack.c.b16 %v6653, %v6652
        %v6671 = vpack.c.b16 %v6655, %v6654
        %6688 = vmatprep.subr.bf16.mxu0 0
        %6689 = vmatpush1.bf16.msra.mxu0 %v6663
        %6690 = vmatprep.subr.bf16.mxu0 0
        %6691 = vmatpush1.bf16.msra.mxu0 %v6662
        %6692 = vmatprep.subr.bf16.mxu0 0
        %6693 = vmatpush1.bf16.msra.mxu0 %v6661
        %6694 = vmatprep.subr.bf16.mxu0 0
        %6695 = vmatpush1.bf16.msra.mxu0 %v6660
        %6696 = vmatprep.subr.bf16.mxu0 0
        %6697 = vmatpush1.bf16.msra.mxu0 %v6659
        %6698 = vmatprep.subr.bf16.mxu0 0
        %6699 = vmatpush1.bf16.msra.mxu0 %v6658
        %6700 = vmatprep.subr.bf16.mxu0 0
        %6701 = vmatpush1.bf16.msra.mxu0 %v6657
        %6702 = vmatprep.subr.bf16.mxu0 0
        %6703 = vmatpush1.bf16.msra.mxu0 %v6656
        %6704 = vmatprep.subr.bf16.mxu0 0
        %6705 = vmatpush2.bf16.msra.mxu0 %v6671
        %6706 = vmatprep.subr.bf16.mxu0 0
        %6707 = vmatpush2.bf16.msra.mxu0 %v6670
        %6708 = vmatprep.subr.bf16.mxu0 0
        %6709 = vmatpush2.bf16.msra.mxu0 %v6669
        %6710 = vmatprep.subr.bf16.mxu0 0
        %6711 = vmatpush2.bf16.msra.mxu0 %v6668
        %6712 = vmatprep.subr.bf16.mxu0 0
        %6713 = vmatpush2.bf16.msra.mxu0 %v6667
        %6714 = vmatprep.subr.bf16.mxu0 0
        %6715 = vmatpush2.bf16.msra.mxu0 %v6666
        %6716 = vmatprep.subr.bf16.mxu0 0
        %6717 = vmatpush2.bf16.msra.mxu0 %v6665
        %6718 = vmatprep.subr.bf16.mxu0 0
        %6719 = vmatpush2.bf16.msra.mxu0 %v6664
        %6720 = vmatprep.mubr.bf16.mxu0 %v6529
        %6721 = vmatmul.mubr.bf16.gmra.mxu0 %v6528
        %v6722 = vpop.f32.mrf.mxu0
        %v6723 = vadd.f32 0.0, %v6722
        %v6724 = vpop.f32.mrf.mxu0
        %v6725 = vpop.f32.mrf.mxu0
        %v6726 = vadd.f32 0.0, %v6725
        %v6727 = vpop.f32.mrf.mxu0
        %6728 = vmatprep.mubr.bf16.mxu0 %v6531
        %6729 = vmatmul.mubr.bf16.gmra.mxu0 %v6530
        %v6730 = vpop.f32.mrf.mxu0
        %v6731 = vadd.f32 0.0, %v6730
        %v6732 = vpop.f32.mrf.mxu0
        %v6733 = vpop.f32.mrf.mxu0
        %v6734 = vadd.f32 0.0, %v6733
        %v6735 = vpop.f32.mrf.mxu0
        %6736 = vmatprep.mubr.bf16.mxu0 %v6533
        %6737 = vmatmul.mubr.bf16.gmra.mxu0 %v6532
        %v6738 = vpop.f32.mrf.mxu0
        %v6739 = vadd.f32 0.0, %v6738
        %v6740 = vpop.f32.mrf.mxu0
        %v6741 = vpop.f32.mrf.mxu0
        %v6742 = vadd.f32 0.0, %v6741
        %v6743 = vpop.f32.mrf.mxu0
        %6744 = vmatprep.mubr.bf16.mxu0 %v6535
        %6745 = vmatmul.mubr.bf16.gmra.mxu0 %v6534
        %v6746 = vpop.f32.mrf.mxu0
        %v6747 = vadd.f32 0.0, %v6746
        %v6748 = vpop.f32.mrf.mxu0
        %v6749 = vpop.f32.mrf.mxu0
        %v6750 = vadd.f32 0.0, %v6749
        %v6751 = vpop.f32.mrf.mxu0
        %6752 = vmatprep.mubr.bf16.mxu0 %v6537
        %6753 = vmatmul.mubr.bf16.gmra.mxu0 %v6536
        %v6754 = vpop.f32.mrf.mxu0
        %v6755 = vadd.f32 0.0, %v6754
        %v6756 = vpop.f32.mrf.mxu0
        %v6757 = vpop.f32.mrf.mxu0
        %v6758 = vadd.f32 0.0, %v6757
        %v6759 = vpop.f32.mrf.mxu0
        %6760 = vmatprep.mubr.bf16.mxu0 %v6539
        %6761 = vmatmul.mubr.bf16.gmra.mxu0 %v6538
        %v6762 = vpop.f32.mrf.mxu0
        %v6763 = vadd.f32 0.0, %v6762
        %v6764 = vpop.f32.mrf.mxu0
        %v6765 = vpop.f32.mrf.mxu0
        %v6766 = vadd.f32 0.0, %v6765
        %v6767 = vpop.f32.mrf.mxu0
        %6768 = vmatprep.mubr.bf16.mxu0 %v6541
        %6769 = vmatmul.mubr.bf16.gmra.mxu0 %v6540
        %v6770 = vpop.f32.mrf.mxu0
        %v6771 = vadd.f32 0.0, %v6770
        %v6772 = vpop.f32.mrf.mxu0
        %v6773 = vpop.f32.mrf.mxu0
        %v6774 = vadd.f32 0.0, %v6773
        %v6775 = vpop.f32.mrf.mxu0
        %6776 = vmatprep.mubr.bf16.mxu0 %v6543
        %6777 = vmatmul.mubr.bf16.gmra.mxu0 %v6542
        %v6778 = vpop.f32.mrf.mxu0
        %v6779 = vadd.f32 0.0, %v6778
        %v6780 = vpop.f32.mrf.mxu0
        %v6781 = vpop.f32.mrf.mxu0
        %v6782 = vadd.f32 0.0, %v6781
        %v6783 = vpop.f32.mrf.mxu0
        %6784 = vmatprep.mubr.bf16.mxu0 %v6545
        %6785 = vmatmul.mubr.bf16.gmra.mxu0 %v6544
        %v6786 = vpop.f32.mrf.mxu0
        %v6787 = vadd.f32 0.0, %v6786
        %v6788 = vpop.f32.mrf.mxu0
        %v6789 = vpop.f32.mrf.mxu0
        %v6790 = vadd.f32 0.0, %v6789
        %v6791 = vpop.f32.mrf.mxu0
        %6792 = vmatprep.mubr.bf16.mxu0 %v6547
        %6793 = vmatmul.mubr.bf16.gmra.mxu0 %v6546
        %v6794 = vpop.f32.mrf.mxu0
        %v6795 = vadd.f32 0.0, %v6794
        %v6796 = vpop.f32.mrf.mxu0
        %v6797 = vpop.f32.mrf.mxu0
        %v6798 = vadd.f32 0.0, %v6797
        %v6799 = vpop.f32.mrf.mxu0
        %6800 = vmatprep.mubr.bf16.mxu0 %v6549
        %6801 = vmatmul.mubr.bf16.gmra.mxu0 %v6548
        %v6802 = vpop.f32.mrf.mxu0
        %v6803 = vadd.f32 0.0, %v6802
        %v6804 = vpop.f32.mrf.mxu0
        %v6805 = vpop.f32.mrf.mxu0
        %v6806 = vadd.f32 0.0, %v6805
        %v6807 = vpop.f32.mrf.mxu0
        %6808 = vmatprep.mubr.bf16.mxu0 %v6551
        %6809 = vmatmul.mubr.bf16.gmra.mxu0 %v6550
        %v6810 = vpop.f32.mrf.mxu0
        %v6811 = vadd.f32 0.0, %v6810
        %v6812 = vpop.f32.mrf.mxu0
        %v6813 = vpop.f32.mrf.mxu0
        %v6814 = vadd.f32 0.0, %v6813
        %v6815 = vpop.f32.mrf.mxu0
        %6816 = vmatprep.mubr.bf16.mxu0 %v6553
        %6817 = vmatmul.mubr.bf16.gmra.mxu0 %v6552
        %v6818 = vpop.f32.mrf.mxu0
        %v6819 = vadd.f32 0.0, %v6818
        %v6820 = vpop.f32.mrf.mxu0
        %v6821 = vpop.f32.mrf.mxu0
        %v6822 = vadd.f32 0.0, %v6821
        %v6823 = vpop.f32.mrf.mxu0
        %6824 = vmatprep.mubr.bf16.mxu0 %v6555
        %6825 = vmatmul.mubr.bf16.gmra.mxu0 %v6554
        %v6826 = vpop.f32.mrf.mxu0
        %v6827 = vadd.f32 0.0, %v6826
        %v6828 = vpop.f32.mrf.mxu0
        %v6829 = vpop.f32.mrf.mxu0
        %v6830 = vadd.f32 0.0, %v6829
        %v6831 = vpop.f32.mrf.mxu0
        %6832 = vmatprep.mubr.bf16.mxu0 %v6557
        %6833 = vmatmul.mubr.bf16.gmra.mxu0 %v6556
        %v6834 = vpop.f32.mrf.mxu0
        %v6835 = vadd.f32 0.0, %v6834
        %v6836 = vpop.f32.mrf.mxu0
        %v6837 = vpop.f32.mrf.mxu0
        %v6838 = vadd.f32 0.0, %v6837
        %v6839 = vpop.f32.mrf.mxu0
        %6840 = vmatprep.mubr.bf16.mxu0 %v6559
        %6841 = vmatmul.mubr.bf16.gmra.mxu0 %v6558
        %v6842 = vpop.f32.mrf.mxu0
        %v6843 = vadd.f32 0.0, %v6842
        %v6844 = vpop.f32.mrf.mxu0
        %v6845 = vpop.f32.mrf.mxu0
        %v6846 = vadd.f32 0.0, %v6845
        %v6847 = vpop.f32.mrf.mxu0
        %6848 = vdwg.mxu0
        %v6849 = vpack.c.bf16 %v6726, %v6723
        %v6850 = vpack.c.bf16 %v6734, %v6731
        %v6851 = vpack.c.bf16 %v6742, %v6739
        %v6852 = vpack.c.bf16 %v6750, %v6747
        %v6853 = vpack.c.bf16 %v6758, %v6755
        %v6854 = vpack.c.bf16 %v6766, %v6763
        %v6855 = vpack.c.bf16 %v6774, %v6771
        %v6856 = vpack.c.bf16 %v6782, %v6779
        %v6857 = vpack.c.bf16 %v6790, %v6787
        %v6858 = vpack.c.bf16 %v6798, %v6795
        %v6859 = vpack.c.bf16 %v6806, %v6803
        %v6860 = vpack.c.bf16 %v6814, %v6811
        %v6861 = vpack.c.bf16 %v6822, %v6819
        %v6862 = vpack.c.bf16 %v6830, %v6827
        %v6863 = vpack.c.bf16 %v6838, %v6835
        %v6864 = vpack.c.bf16 %v6846, %v6843
        %v6865 = vld [vmem:[#allocation19] sm:$0xf]
        %v6866 = vld [vmem:[#allocation19 + $0x4] sm:$0xf]
        %v6867 = vld [vmem:[#allocation19 + $0x8] sm:$0xf]
        %v6868 = vld [vmem:[#allocation19 + $0xc] sm:$0xf]
        %v6869 = vld [vmem:[#allocation19 + $0x10] sm:$0xf]
        %v6870 = vld [vmem:[#allocation19 + $0x14] sm:$0xf]
        %v6871 = vld [vmem:[#allocation19 + $0x18] sm:$0xf]
        %v6872 = vld [vmem:[#allocation19 + $0x1c] sm:$0xf]
        %v6873 = vld [vmem:[#allocation19 + $0x20] sm:$0xf]
        %v6874 = vld [vmem:[#allocation19 + $0x24] sm:$0xf]
        %v6875 = vld [vmem:[#allocation19 + $0x28] sm:$0xf]
        %v6876 = vld [vmem:[#allocation19 + $0x2c] sm:$0xf]
        %v6877 = vld [vmem:[#allocation19 + $0x30] sm:$0xf]
        %v6878 = vld [vmem:[#allocation19 + $0x34] sm:$0xf]
        %v6879 = vld [vmem:[#allocation19 + $0x38] sm:$0xf]
        %v6880 = vld [vmem:[#allocation19 + $0x3c] sm:$0xf]
        %v6897 = vunpack.c.l.b16 %v6865
        %v6898 = vunpack.c.l.b16 %v6866
        %v6899 = vunpack.c.l.b16 %v6867
        %v6900 = vunpack.c.l.b16 %v6868
        %v6901 = vunpack.c.l.b16 %v6869
        %v6902 = vunpack.c.l.b16 %v6870
        %v6903 = vunpack.c.l.b16 %v6871
        %v6904 = vunpack.c.l.b16 %v6872
        %v6905 = vunpack.c.l.b16 %v6873
        %v6906 = vunpack.c.l.b16 %v6874
        %v6907 = vunpack.c.l.b16 %v6875
        %v6908 = vunpack.c.l.b16 %v6876
        %v6909 = vunpack.c.l.b16 %v6877
        %v6910 = vunpack.c.l.b16 %v6878
        %v6911 = vunpack.c.l.b16 %v6879
        %v6912 = vunpack.c.l.b16 %v6880
        %v6913 = vpack.c.b16 %v6898, %v6897
        %v6914 = vpack.c.b16 %v6900, %v6899
        %v6915 = vpack.c.b16 %v6902, %v6901
        %v6916 = vpack.c.b16 %v6904, %v6903
        %v6917 = vpack.c.b16 %v6906, %v6905
        %v6918 = vpack.c.b16 %v6908, %v6907
        %v6919 = vpack.c.b16 %v6910, %v6909
        %v6920 = vpack.c.b16 %v6912, %v6911
        %6929 = vmatprep.subr.bf16.mxu0 0
        %6930 = vmatpush1.bf16.msra.mxu0 %v6920
        %6931 = vmatprep.subr.bf16.mxu0 0
        %6932 = vmatpush1.bf16.msra.mxu0 %v6919
        %6933 = vmatprep.subr.bf16.mxu0 0
        %6934 = vmatpush1.bf16.msra.mxu0 %v6918
        %6935 = vmatprep.subr.bf16.mxu0 0
        %6936 = vmatpush1.bf16.msra.mxu0 %v6917
        %6937 = vmatprep.subr.bf16.mxu0 0
        %6938 = vmatpush1.bf16.msra.mxu0 %v6916
        %6939 = vmatprep.subr.bf16.mxu0 0
        %6940 = vmatpush1.bf16.msra.mxu0 %v6915
        %6941 = vmatprep.subr.bf16.mxu0 0
        %6942 = vmatpush1.bf16.msra.mxu0 %v6914
        %6943 = vmatprep.subr.bf16.mxu0 0
        %6944 = vmatpush1.bf16.msra.mxu0 %v6913
        %6945 = vmatprep.subr.bf16.mxu0 0
        %6946 = vmatpush2.bf16.msra.mxu0 0
        %6947 = vmatprep.subr.bf16.mxu0 0
        %6948 = vmatpush2.bf16.msra.mxu0 0
        %6949 = vmatprep.subr.bf16.mxu0 0
        %6950 = vmatpush2.bf16.msra.mxu0 0
        %6951 = vmatprep.subr.bf16.mxu0 0
        %6952 = vmatpush2.bf16.msra.mxu0 0
        %6953 = vmatprep.subr.bf16.mxu0 0
        %6954 = vmatpush2.bf16.msra.mxu0 0
        %6955 = vmatprep.subr.bf16.mxu0 0
        %6956 = vmatpush2.bf16.msra.mxu0 0
        %6957 = vmatprep.subr.bf16.mxu0 0
        %6958 = vmatpush2.bf16.msra.mxu0 0
        %6959 = vmatprep.subr.bf16.mxu0 0
        %6960 = vmatpush2.bf16.msra.mxu0 0
        %6961 = vmatprep.mubr.bf16.mxu0 0
        %6962 = vmatmul.mubr.bf16.gmra.mxu0 %v6849
        %v6963 = vpop.f32.mrf.mxu0
        %v6964 = vadd.f32 %v4935, %v6963
        %v6965 = vpop.f32.mrf.mxu0
        %v6966 = vpop.f32.mrf.mxu0
        %v6967 = vadd.f32 %v4936, %v6966
        %v6968 = vpop.f32.mrf.mxu0
        %6969 = vmatprep.mubr.bf16.mxu0 0
        %6970 = vmatmul.mubr.bf16.gmra.mxu0 %v6850
        %v6971 = vpop.f32.mrf.mxu0
        %v6972 = vadd.f32 %v4937, %v6971
        %v6973 = vpop.f32.mrf.mxu0
        %v6974 = vpop.f32.mrf.mxu0
        %v6975 = vadd.f32 %v4938, %v6974
        %v6976 = vpop.f32.mrf.mxu0
        %6977 = vmatprep.mubr.bf16.mxu0 0
        %6978 = vmatmul.mubr.bf16.gmra.mxu0 %v6851
        %v6979 = vpop.f32.mrf.mxu0
        %v6980 = vadd.f32 %v4939, %v6979
        %v6981 = vpop.f32.mrf.mxu0
        %v6982 = vpop.f32.mrf.mxu0
        %v6983 = vadd.f32 %v4940, %v6982
        %v6984 = vpop.f32.mrf.mxu0
        %6985 = vmatprep.mubr.bf16.mxu0 0
        %6986 = vmatmul.mubr.bf16.gmra.mxu0 %v6852
        %v6987 = vpop.f32.mrf.mxu0
        %v6988 = vadd.f32 %v4941, %v6987
        %v6989 = vpop.f32.mrf.mxu0
        %v6990 = vpop.f32.mrf.mxu0
        %v6991 = vadd.f32 %v4942, %v6990
        %v6992 = vpop.f32.mrf.mxu0
        %6993 = vmatprep.mubr.bf16.mxu0 0
        %6994 = vmatmul.mubr.bf16.gmra.mxu0 %v6853
        %v6995 = vpop.f32.mrf.mxu0
        %v6996 = vadd.f32 %v4943, %v6995
        %v6997 = vpop.f32.mrf.mxu0
        %v6998 = vpop.f32.mrf.mxu0
        %v6999 = vadd.f32 %v4944, %v6998
        %v7000 = vpop.f32.mrf.mxu0
        %7001 = vmatprep.mubr.bf16.mxu0 0
        %7002 = vmatmul.mubr.bf16.gmra.mxu0 %v6854
        %v7003 = vpop.f32.mrf.mxu0
        %v7004 = vadd.f32 %v4945, %v7003
        %v7005 = vpop.f32.mrf.mxu0
        %v7006 = vpop.f32.mrf.mxu0
        %v7007 = vadd.f32 %v4946, %v7006
        %v7008 = vpop.f32.mrf.mxu0
        %7009 = vmatprep.mubr.bf16.mxu0 0
        %7010 = vmatmul.mubr.bf16.gmra.mxu0 %v6855
        %v7011 = vpop.f32.mrf.mxu0
        %v7012 = vadd.f32 %v4947, %v7011
        %v7013 = vpop.f32.mrf.mxu0
        %v7014 = vpop.f32.mrf.mxu0
        %v7015 = vadd.f32 %v4948, %v7014
        %v7016 = vpop.f32.mrf.mxu0
        %7017 = vmatprep.mubr.bf16.mxu0 0
        %7018 = vmatmul.mubr.bf16.gmra.mxu0 %v6856
        %v7019 = vpop.f32.mrf.mxu0
        %v7020 = vadd.f32 %v4949, %v7019
        %v7021 = vpop.f32.mrf.mxu0
        %v7022 = vpop.f32.mrf.mxu0
        %v7023 = vadd.f32 %v4950, %v7022
        %v7024 = vpop.f32.mrf.mxu0
        %7025 = vmatprep.mubr.bf16.mxu0 0
        %7026 = vmatmul.mubr.bf16.gmra.mxu0 %v6857
        %v7027 = vpop.f32.mrf.mxu0
        %v7028 = vadd.f32 %v4951, %v7027
        %v7029 = vpop.f32.mrf.mxu0
        %v7030 = vpop.f32.mrf.mxu0
        %v7031 = vadd.f32 %v4952, %v7030
        %v7032 = vpop.f32.mrf.mxu0
        %7033 = vmatprep.mubr.bf16.mxu0 0
        %7034 = vmatmul.mubr.bf16.gmra.mxu0 %v6858
        %v7035 = vpop.f32.mrf.mxu0
        %v7036 = vadd.f32 %v4953, %v7035
        %v7037 = vpop.f32.mrf.mxu0
        %v7038 = vpop.f32.mrf.mxu0
        %v7039 = vadd.f32 %v4954, %v7038
        %v7040 = vpop.f32.mrf.mxu0
        %7041 = vmatprep.mubr.bf16.mxu0 0
        %7042 = vmatmul.mubr.bf16.gmra.mxu0 %v6859
        %v7043 = vpop.f32.mrf.mxu0
        %v7044 = vadd.f32 %v4955, %v7043
        %v7045 = vpop.f32.mrf.mxu0
        %v7046 = vpop.f32.mrf.mxu0
        %v7047 = vadd.f32 %v4956, %v7046
        %v7048 = vpop.f32.mrf.mxu0
        %7049 = vmatprep.mubr.bf16.mxu0 0
        %7050 = vmatmul.mubr.bf16.gmra.mxu0 %v6860
        %v7051 = vpop.f32.mrf.mxu0
        %v7052 = vadd.f32 %v4957, %v7051
        %v7053 = vpop.f32.mrf.mxu0
        %v7054 = vpop.f32.mrf.mxu0
        %v7055 = vadd.f32 %v4958, %v7054
        %v7056 = vpop.f32.mrf.mxu0
        %7057 = vmatprep.mubr.bf16.mxu0 0
        %7058 = vmatmul.mubr.bf16.gmra.mxu0 %v6861
        %v7059 = vpop.f32.mrf.mxu0
        %v7060 = vadd.f32 %v4959, %v7059
        %v7061 = vpop.f32.mrf.mxu0
        %v7062 = vpop.f32.mrf.mxu0
        %v7063 = vadd.f32 %v4960, %v7062
        %v7064 = vpop.f32.mrf.mxu0
        %7065 = vmatprep.mubr.bf16.mxu0 0
        %7066 = vmatmul.mubr.bf16.gmra.mxu0 %v6862
        %v7067 = vpop.f32.mrf.mxu0
        %v7068 = vadd.f32 %v4961, %v7067
        %v7069 = vpop.f32.mrf.mxu0
        %v7070 = vpop.f32.mrf.mxu0
        %v7071 = vadd.f32 %v4962, %v7070
        %v7072 = vpop.f32.mrf.mxu0
        %7073 = vmatprep.mubr.bf16.mxu0 0
        %7074 = vmatmul.mubr.bf16.gmra.mxu0 %v6863
        %v7075 = vpop.f32.mrf.mxu0
        %v7076 = vadd.f32 %v4963, %v7075
        %v7077 = vpop.f32.mrf.mxu0
        %v7078 = vpop.f32.mrf.mxu0
        %v7079 = vadd.f32 %v4964, %v7078
        %v7080 = vpop.f32.mrf.mxu0
        %7081 = vmatprep.mubr.bf16.mxu0 0
        %7082 = vmatmul.mubr.bf16.gmra.mxu0 %v6864
        %v7083 = vpop.f32.mrf.mxu0
        %v7084 = vadd.f32 %v4965, %v7083
        %v7085 = vpop.f32.mrf.mxu0
        %v7086 = vpop.f32.mrf.mxu0
        %v7087 = vadd.f32 %v4966, %v7086
        %v7088 = vpop.f32.mrf.mxu0
        %7089 = vdwg.mxu0
        %v7090 = vld [vmem:[#allocation20] sm:$0x1]
        %v7091 = vld [vmem:[#allocation22] sm:$0x1]
        %7092 = vadd.xlane.f32.xlu0 %v6964
        %v7093 = vpop.xlane.xlu0 %7092
        %7094 = vadd.xlane.f32.xlu0 %v6967
        %v7095 = vpop.xlane.xlu0 %7094
        %7096 = vadd.xlane.f32.xlu0 %v6972
        %v7097 = vpop.xlane.xlu0 %7096
        %7098 = vadd.xlane.f32.xlu0 %v6975
        %v7099 = vpop.xlane.xlu0 %7098
        %7100 = vadd.xlane.f32.xlu0 %v6980
        %v7101 = vpop.xlane.xlu0 %7100
        %7102 = vadd.xlane.f32.xlu0 %v6983
        %v7103 = vpop.xlane.xlu0 %7102
        %7104 = vadd.xlane.f32.xlu0 %v6988
        %v7105 = vpop.xlane.xlu0 %7104
        %7106 = vadd.xlane.f32.xlu0 %v6991
        %v7107 = vpop.xlane.xlu0 %7106
        %7108 = vadd.xlane.f32.xlu0 %v6996
        %v7109 = vpop.xlane.xlu0 %7108
        %7110 = vadd.xlane.f32.xlu0 %v6999
        %v7111 = vpop.xlane.xlu0 %7110
        %7112 = vadd.xlane.f32.xlu0 %v7004
        %v7113 = vpop.xlane.xlu0 %7112
        %7114 = vadd.xlane.f32.xlu0 %v7007
        %v7115 = vpop.xlane.xlu0 %7114
        %7116 = vadd.xlane.f32.xlu0 %v7012
        %v7117 = vpop.xlane.xlu0 %7116
        %7118 = vadd.xlane.f32.xlu0 %v7015
        %v7119 = vpop.xlane.xlu0 %7118
        %7120 = vadd.xlane.f32.xlu0 %v7020
        %v7121 = vpop.xlane.xlu0 %7120
        %7122 = vadd.xlane.f32.xlu0 %v7023
        %v7123 = vpop.xlane.xlu0 %7122
        %7124 = vadd.xlane.f32.xlu0 %v7028
        %v7125 = vpop.xlane.xlu0 %7124
        %7126 = vadd.xlane.f32.xlu0 %v7031
        %v7127 = vpop.xlane.xlu0 %7126
        %7128 = vadd.xlane.f32.xlu0 %v7036
        %v7129 = vpop.xlane.xlu0 %7128
        %7130 = vadd.xlane.f32.xlu0 %v7039
        %v7131 = vpop.xlane.xlu0 %7130
        %7132 = vadd.xlane.f32.xlu0 %v7044
        %v7133 = vpop.xlane.xlu0 %7132
        %7134 = vadd.xlane.f32.xlu0 %v7047
        %v7135 = vpop.xlane.xlu0 %7134
        %7136 = vadd.xlane.f32.xlu0 %v7052
        %v7137 = vpop.xlane.xlu0 %7136
        %7138 = vadd.xlane.f32.xlu0 %v7055
        %v7139 = vpop.xlane.xlu0 %7138
        %7140 = vadd.xlane.f32.xlu0 %v7060
        %v7141 = vpop.xlane.xlu0 %7140
        %7142 = vadd.xlane.f32.xlu0 %v7063
        %v7143 = vpop.xlane.xlu0 %7142
        %7144 = vadd.xlane.f32.xlu0 %v7068
        %v7145 = vpop.xlane.xlu0 %7144
        %7146 = vadd.xlane.f32.xlu0 %v7071
        %v7147 = vpop.xlane.xlu0 %7146
        %7148 = vadd.xlane.f32.xlu0 %v7076
        %v7149 = vpop.xlane.xlu0 %7148
        %7150 = vadd.xlane.f32.xlu0 %v7079
        %v7151 = vpop.xlane.xlu0 %7150
        %7152 = vadd.xlane.f32.xlu0 %v7084
        %v7153 = vpop.xlane.xlu0 %7152
        %7154 = vadd.xlane.f32.xlu0 %v7087
        %v7155 = vpop.xlane.xlu0 %7154
        %v7156 = vmul.f32 %v7093, %v4602
        %v7157 = vmul.f32 %v7095, %v4602
        %v7158 = vmul.f32 %v7097, %v4602
        %v7159 = vmul.f32 %v7099, %v4602
        %v7160 = vmul.f32 %v7101, %v4602
        %v7161 = vmul.f32 %v7103, %v4602
        %v7162 = vmul.f32 %v7105, %v4602
        %v7163 = vmul.f32 %v7107, %v4602
        %v7164 = vmul.f32 %v7109, %v4602
        %v7165 = vmul.f32 %v7111, %v4602
        %v7166 = vmul.f32 %v7113, %v4602
        %v7167 = vmul.f32 %v7115, %v4602
        %v7168 = vmul.f32 %v7117, %v4602
        %v7169 = vmul.f32 %v7119, %v4602
        %v7170 = vmul.f32 %v7121, %v4602
        %v7171 = vmul.f32 %v7123, %v4602
        %v7172 = vmul.f32 %v7125, %v4602
        %v7173 = vmul.f32 %v7127, %v4602
        %v7174 = vmul.f32 %v7129, %v4602
        %v7175 = vmul.f32 %v7131, %v4602
        %v7176 = vmul.f32 %v7133, %v4602
        %v7177 = vmul.f32 %v7135, %v4602
        %v7178 = vmul.f32 %v7137, %v4602
        %v7179 = vmul.f32 %v7139, %v4602
        %v7180 = vmul.f32 %v7141, %v4602
        %v7181 = vmul.f32 %v7143, %v4602
        %v7182 = vmul.f32 %v7145, %v4602
        %v7183 = vmul.f32 %v7147, %v4602
        %v7184 = vmul.f32 %v7149, %v4602
        %v7185 = vmul.f32 %v7151, %v4602
        %v7186 = vmul.f32 %v7153, %v4602
        %v7187 = vmul.f32 %v7155, %v4602
        %v7188 = vsub.f32 %v6964, %v7156
        %v7189 = vsub.f32 %v6967, %v7157
        %v7190 = vsub.f32 %v6972, %v7158
        %v7191 = vsub.f32 %v6975, %v7159
        %v7192 = vsub.f32 %v6980, %v7160
        %v7193 = vsub.f32 %v6983, %v7161
        %v7194 = vsub.f32 %v6988, %v7162
        %v7195 = vsub.f32 %v6991, %v7163
        %v7196 = vsub.f32 %v6996, %v7164
        %v7197 = vsub.f32 %v6999, %v7165
        %v7198 = vsub.f32 %v7004, %v7166
        %v7199 = vsub.f32 %v7007, %v7167
        %v7200 = vsub.f32 %v7012, %v7168
        %v7201 = vsub.f32 %v7015, %v7169
        %v7202 = vsub.f32 %v7020, %v7170
        %v7203 = vsub.f32 %v7023, %v7171
        %v7204 = vsub.f32 %v7028, %v7172
        %v7205 = vsub.f32 %v7031, %v7173
        %v7206 = vsub.f32 %v7036, %v7174
        %v7207 = vsub.f32 %v7039, %v7175
        %v7208 = vsub.f32 %v7044, %v7176
        %v7209 = vsub.f32 %v7047, %v7177
        %v7210 = vsub.f32 %v7052, %v7178
        %v7211 = vsub.f32 %v7055, %v7179
        %v7212 = vsub.f32 %v7060, %v7180
        %v7213 = vsub.f32 %v7063, %v7181
        %v7214 = vsub.f32 %v7068, %v7182
        %v7215 = vsub.f32 %v7071, %v7183
        %v7216 = vsub.f32 %v7076, %v7184
        %v7217 = vsub.f32 %v7079, %v7185
        %v7218 = vsub.f32 %v7084, %v7186
        %v7219 = vsub.f32 %v7087, %v7187
        %v7220 = vmul.f32 %v7188, %v7188
        %v7221 = vmul.f32 %v7189, %v7189
        %v7222 = vmul.f32 %v7190, %v7190
        %v7223 = vmul.f32 %v7191, %v7191
        %v7224 = vmul.f32 %v7192, %v7192
        %v7225 = vmul.f32 %v7193, %v7193
        %v7226 = vmul.f32 %v7194, %v7194
        %v7227 = vmul.f32 %v7195, %v7195
        %v7228 = vmul.f32 %v7196, %v7196
        %v7229 = vmul.f32 %v7197, %v7197
        %v7230 = vmul.f32 %v7198, %v7198
        %v7231 = vmul.f32 %v7199, %v7199
        %v7232 = vmul.f32 %v7200, %v7200
        %v7233 = vmul.f32 %v7201, %v7201
        %v7234 = vmul.f32 %v7202, %v7202
        %v7235 = vmul.f32 %v7203, %v7203
        %v7236 = vmul.f32 %v7204, %v7204
        %v7237 = vmul.f32 %v7205, %v7205
        %v7238 = vmul.f32 %v7206, %v7206
        %v7239 = vmul.f32 %v7207, %v7207
        %v7240 = vmul.f32 %v7208, %v7208
        %v7241 = vmul.f32 %v7209, %v7209
        %v7242 = vmul.f32 %v7210, %v7210
        %v7243 = vmul.f32 %v7211, %v7211
        %v7244 = vmul.f32 %v7212, %v7212
        %v7245 = vmul.f32 %v7213, %v7213
        %v7246 = vmul.f32 %v7214, %v7214
        %v7247 = vmul.f32 %v7215, %v7215
        %v7248 = vmul.f32 %v7216, %v7216
        %v7249 = vmul.f32 %v7217, %v7217
        %v7250 = vmul.f32 %v7218, %v7218
        %v7251 = vmul.f32 %v7219, %v7219
        %7252 = vadd.xlane.f32.xlu0 %v7220
        %v7253 = vpop.xlane.xlu0 %7252
        %7254 = vadd.xlane.f32.xlu0 %v7221
        %v7255 = vpop.xlane.xlu0 %7254
        %7256 = vadd.xlane.f32.xlu0 %v7222
        %v7257 = vpop.xlane.xlu0 %7256
        %7258 = vadd.xlane.f32.xlu0 %v7223
        %v7259 = vpop.xlane.xlu0 %7258
        %7260 = vadd.xlane.f32.xlu0 %v7224
        %v7261 = vpop.xlane.xlu0 %7260
        %7262 = vadd.xlane.f32.xlu0 %v7225
        %v7263 = vpop.xlane.xlu0 %7262
        %7264 = vadd.xlane.f32.xlu0 %v7226
        %v7265 = vpop.xlane.xlu0 %7264
        %7266 = vadd.xlane.f32.xlu0 %v7227
        %v7267 = vpop.xlane.xlu0 %7266
        %7268 = vadd.xlane.f32.xlu0 %v7228
        %v7269 = vpop.xlane.xlu0 %7268
        %7270 = vadd.xlane.f32.xlu0 %v7229
        %v7271 = vpop.xlane.xlu0 %7270
        %7272 = vadd.xlane.f32.xlu0 %v7230
        %v7273 = vpop.xlane.xlu0 %7272
        %7274 = vadd.xlane.f32.xlu0 %v7231
        %v7275 = vpop.xlane.xlu0 %7274
        %7276 = vadd.xlane.f32.xlu0 %v7232
        %v7277 = vpop.xlane.xlu0 %7276
        %7278 = vadd.xlane.f32.xlu0 %v7233
        %v7279 = vpop.xlane.xlu0 %7278
        %7280 = vadd.xlane.f32.xlu0 %v7234
        %v7281 = vpop.xlane.xlu0 %7280
        %7282 = vadd.xlane.f32.xlu0 %v7235
        %v7283 = vpop.xlane.xlu0 %7282
        %7284 = vadd.xlane.f32.xlu0 %v7236
        %v7285 = vpop.xlane.xlu0 %7284
        %7286 = vadd.xlane.f32.xlu0 %v7237
        %v7287 = vpop.xlane.xlu0 %7286
        %7288 = vadd.xlane.f32.xlu0 %v7238
        %v7289 = vpop.xlane.xlu0 %7288
        %7290 = vadd.xlane.f32.xlu0 %v7239
        %v7291 = vpop.xlane.xlu0 %7290
        %7292 = vadd.xlane.f32.xlu0 %v7240
        %v7293 = vpop.xlane.xlu0 %7292
        %7294 = vadd.xlane.f32.xlu0 %v7241
        %v7295 = vpop.xlane.xlu0 %7294
        %7296 = vadd.xlane.f32.xlu0 %v7242
        %v7297 = vpop.xlane.xlu0 %7296
        %7298 = vadd.xlane.f32.xlu0 %v7243
        %v7299 = vpop.xlane.xlu0 %7298
        %7300 = vadd.xlane.f32.xlu0 %v7244
        %v7301 = vpop.xlane.xlu0 %7300
        %7302 = vadd.xlane.f32.xlu0 %v7245
        %v7303 = vpop.xlane.xlu0 %7302
        %7304 = vadd.xlane.f32.xlu0 %v7246
        %v7305 = vpop.xlane.xlu0 %7304
        %7306 = vadd.xlane.f32.xlu0 %v7247
        %v7307 = vpop.xlane.xlu0 %7306
        %7308 = vadd.xlane.f32.xlu0 %v7248
        %v7309 = vpop.xlane.xlu0 %7308
        %7310 = vadd.xlane.f32.xlu0 %v7249
        %v7311 = vpop.xlane.xlu0 %7310
        %7312 = vadd.xlane.f32.xlu0 %v7250
        %v7313 = vpop.xlane.xlu0 %7312
        %7314 = vadd.xlane.f32.xlu0 %v7251
        %v7315 = vpop.xlane.xlu0 %7314
        %v7316 = vmul.f32 %v7253, %v4602
        %v7317 = vmul.f32 %v7255, %v4602
        %v7318 = vmul.f32 %v7257, %v4602
        %v7319 = vmul.f32 %v7259, %v4602
        %v7320 = vmul.f32 %v7261, %v4602
        %v7321 = vmul.f32 %v7263, %v4602
        %v7322 = vmul.f32 %v7265, %v4602
        %v7323 = vmul.f32 %v7267, %v4602
        %v7324 = vmul.f32 %v7269, %v4602
        %v7325 = vmul.f32 %v7271, %v4602
        %v7326 = vmul.f32 %v7273, %v4602
        %v7327 = vmul.f32 %v7275, %v4602
        %v7328 = vmul.f32 %v7277, %v4602
        %v7329 = vmul.f32 %v7279, %v4602
        %v7330 = vmul.f32 %v7281, %v4602
        %v7331 = vmul.f32 %v7283, %v4602
        %v7332 = vmul.f32 %v7285, %v4602
        %v7333 = vmul.f32 %v7287, %v4602
        %v7334 = vmul.f32 %v7289, %v4602
        %v7335 = vmul.f32 %v7291, %v4602
        %v7336 = vmul.f32 %v7293, %v4602
        %v7337 = vmul.f32 %v7295, %v4602
        %v7338 = vmul.f32 %v7297, %v4602
        %v7339 = vmul.f32 %v7299, %v4602
        %v7340 = vmul.f32 %v7301, %v4602
        %v7341 = vmul.f32 %v7303, %v4602
        %v7342 = vmul.f32 %v7305, %v4602
        %v7343 = vmul.f32 %v7307, %v4602
        %v7344 = vmul.f32 %v7309, %v4602
        %v7345 = vmul.f32 %v7311, %v4602
        %v7346 = vmul.f32 %v7313, %v4602
        %v7347 = vmul.f32 %v7315, %v4602
        %v7348 = vadd.f32 %v7316, 1e-06
        %v7349 = vadd.f32 %v7317, 1e-06
        %v7350 = vadd.f32 %v7318, 1e-06
        %v7351 = vadd.f32 %v7319, 1e-06
        %v7352 = vadd.f32 %v7320, 1e-06
        %v7353 = vadd.f32 %v7321, 1e-06
        %v7354 = vadd.f32 %v7322, 1e-06
        %v7355 = vadd.f32 %v7323, 1e-06
        %v7356 = vadd.f32 %v7324, 1e-06
        %v7357 = vadd.f32 %v7325, 1e-06
        %v7358 = vadd.f32 %v7326, 1e-06
        %v7359 = vadd.f32 %v7327, 1e-06
        %v7360 = vadd.f32 %v7328, 1e-06
        %v7361 = vadd.f32 %v7329, 1e-06
        %v7362 = vadd.f32 %v7330, 1e-06
        %v7363 = vadd.f32 %v7331, 1e-06
        %v7364 = vadd.f32 %v7332, 1e-06
        %v7365 = vadd.f32 %v7333, 1e-06
        %v7366 = vadd.f32 %v7334, 1e-06
        %v7367 = vadd.f32 %v7335, 1e-06
        %v7368 = vadd.f32 %v7336, 1e-06
        %v7369 = vadd.f32 %v7337, 1e-06
        %v7370 = vadd.f32 %v7338, 1e-06
        %v7371 = vadd.f32 %v7339, 1e-06
        %v7372 = vadd.f32 %v7340, 1e-06
        %v7373 = vadd.f32 %v7341, 1e-06
        %v7374 = vadd.f32 %v7342, 1e-06
        %v7375 = vadd.f32 %v7343, 1e-06
        %v7376 = vadd.f32 %v7344, 1e-06
        %v7377 = vadd.f32 %v7345, 1e-06
        %v7378 = vadd.f32 %v7346, 1e-06
        %v7379 = vadd.f32 %v7347, 1e-06
        %v7380 = vrsqrt.pop %v7348
        %v7381 = vrsqrt.pop %v7349
        %v7382 = vrsqrt.pop %v7350
        %v7383 = vrsqrt.pop %v7351
        %v7384 = vrsqrt.pop %v7352
        %v7385 = vrsqrt.pop %v7353
        %v7386 = vrsqrt.pop %v7354
        %v7387 = vrsqrt.pop %v7355
        %v7388 = vrsqrt.pop %v7356
        %v7389 = vrsqrt.pop %v7357
        %v7390 = vrsqrt.pop %v7358
        %v7391 = vrsqrt.pop %v7359
        %v7392 = vrsqrt.pop %v7360
        %v7393 = vrsqrt.pop %v7361
        %v7394 = vrsqrt.pop %v7362
        %v7395 = vrsqrt.pop %v7363
        %v7396 = vrsqrt.pop %v7364
        %v7397 = vrsqrt.pop %v7365
        %v7398 = vrsqrt.pop %v7366
        %v7399 = vrsqrt.pop %v7367
        %v7400 = vrsqrt.pop %v7368
        %v7401 = vrsqrt.pop %v7369
        %v7402 = vrsqrt.pop %v7370
        %v7403 = vrsqrt.pop %v7371
        %v7404 = vrsqrt.pop %v7372
        %v7405 = vrsqrt.pop %v7373
        %v7406 = vrsqrt.pop %v7374
        %v7407 = vrsqrt.pop %v7375
        %v7408 = vrsqrt.pop %v7376
        %v7409 = vrsqrt.pop %v7377
        %v7410 = vrsqrt.pop %v7378
        %v7411 = vrsqrt.pop %v7379
        %v7412 = vmul.f32 %v7188, %v7380
        %v7413 = vmul.f32 %v7189, %v7381
        %v7414 = vmul.f32 %v7190, %v7382
        %v7415 = vmul.f32 %v7191, %v7383
        %v7416 = vmul.f32 %v7192, %v7384
        %v7417 = vmul.f32 %v7193, %v7385
        %v7418 = vmul.f32 %v7194, %v7386
        %v7419 = vmul.f32 %v7195, %v7387
        %v7420 = vmul.f32 %v7196, %v7388
        %v7421 = vmul.f32 %v7197, %v7389
        %v7422 = vmul.f32 %v7198, %v7390
        %v7423 = vmul.f32 %v7199, %v7391
        %v7424 = vmul.f32 %v7200, %v7392
        %v7425 = vmul.f32 %v7201, %v7393
        %v7426 = vmul.f32 %v7202, %v7394
        %v7427 = vmul.f32 %v7203, %v7395
        %v7428 = vmul.f32 %v7204, %v7396
        %v7429 = vmul.f32 %v7205, %v7397
        %v7430 = vmul.f32 %v7206, %v7398
        %v7431 = vmul.f32 %v7207, %v7399
        %v7432 = vmul.f32 %v7208, %v7400
        %v7433 = vmul.f32 %v7209, %v7401
        %v7434 = vmul.f32 %v7210, %v7402
        %v7435 = vmul.f32 %v7211, %v7403
        %v7436 = vmul.f32 %v7212, %v7404
        %v7437 = vmul.f32 %v7213, %v7405
        %v7438 = vmul.f32 %v7214, %v7406
        %v7439 = vmul.f32 %v7215, %v7407
        %v7440 = vmul.f32 %v7216, %v7408
        %v7441 = vmul.f32 %v7217, %v7409
        %v7442 = vmul.f32 %v7218, %v7410
        %v7443 = vmul.f32 %v7219, %v7411
        %v7445 = vlaneseq
        %v7446 = vshrl.u32 %v7445, 7
        %v7447 = vsub.s32 0, %v7446
        %v7448 = vrot.slane %v7090, %v7447
        %v7450 = vmul.f32 %v7412, %v7448
        %v7451 = vmul.f32 %v7413, %v7448
        %v7452 = vmul.f32 %v7414, %v7448
        %v7453 = vmul.f32 %v7415, %v7448
        %v7454 = vmul.f32 %v7416, %v7448
        %v7455 = vmul.f32 %v7417, %v7448
        %v7456 = vmul.f32 %v7418, %v7448
        %v7457 = vmul.f32 %v7419, %v7448
        %v7458 = vmul.f32 %v7420, %v7448
        %v7459 = vmul.f32 %v7421, %v7448
        %v7460 = vmul.f32 %v7422, %v7448
        %v7461 = vmul.f32 %v7423, %v7448
        %v7462 = vmul.f32 %v7424, %v7448
        %v7463 = vmul.f32 %v7425, %v7448
        %v7464 = vmul.f32 %v7426, %v7448
        %v7465 = vmul.f32 %v7427, %v7448
        %v7466 = vmul.f32 %v7428, %v7448
        %v7467 = vmul.f32 %v7429, %v7448
        %v7468 = vmul.f32 %v7430, %v7448
        %v7469 = vmul.f32 %v7431, %v7448
        %v7470 = vmul.f32 %v7432, %v7448
        %v7471 = vmul.f32 %v7433, %v7448
        %v7472 = vmul.f32 %v7434, %v7448
        %v7473 = vmul.f32 %v7435, %v7448
        %v7474 = vmul.f32 %v7436, %v7448
        %v7475 = vmul.f32 %v7437, %v7448
        %v7476 = vmul.f32 %v7438, %v7448
        %v7477 = vmul.f32 %v7439, %v7448
        %v7478 = vmul.f32 %v7440, %v7448
        %v7479 = vmul.f32 %v7441, %v7448
        %v7480 = vmul.f32 %v7442, %v7448
        %v7481 = vmul.f32 %v7443, %v7448
        %v7483 = vlaneseq
        %v7484 = vshrl.u32 %v7483, 7
        %v7485 = vsub.s32 0, %v7484
        %v7486 = vrot.slane %v7091, %v7485
        %v7488 = vadd.f32 %v7450, %v7486
        %v7489 = vadd.f32 %v7451, %v7486
        %v7490 = vadd.f32 %v7452, %v7486
        %v7491 = vadd.f32 %v7453, %v7486
        %v7492 = vadd.f32 %v7454, %v7486
        %v7493 = vadd.f32 %v7455, %v7486
        %v7494 = vadd.f32 %v7456, %v7486
        %v7495 = vadd.f32 %v7457, %v7486
        %v7496 = vadd.f32 %v7458, %v7486
        %v7497 = vadd.f32 %v7459, %v7486
        %v7498 = vadd.f32 %v7460, %v7486
        %v7499 = vadd.f32 %v7461, %v7486
        %v7500 = vadd.f32 %v7462, %v7486
        %v7501 = vadd.f32 %v7463, %v7486
        %v7502 = vadd.f32 %v7464, %v7486
        %v7503 = vadd.f32 %v7465, %v7486
        %v7504 = vadd.f32 %v7466, %v7486
        %v7505 = vadd.f32 %v7467, %v7486
        %v7506 = vadd.f32 %v7468, %v7486
        %v7507 = vadd.f32 %v7469, %v7486
        %v7508 = vadd.f32 %v7470, %v7486
        %v7509 = vadd.f32 %v7471, %v7486
        %v7510 = vadd.f32 %v7472, %v7486
        %v7511 = vadd.f32 %v7473, %v7486
        %v7512 = vadd.f32 %v7474, %v7486
        %v7513 = vadd.f32 %v7475, %v7486
        %v7514 = vadd.f32 %v7476, %v7486
        %v7515 = vadd.f32 %v7477, %v7486
        %v7516 = vadd.f32 %v7478, %v7486
        %v7517 = vadd.f32 %v7479, %v7486
        %v7518 = vadd.f32 %v7480, %v7486
        %v7519 = vadd.f32 %v7481, %v7486
        %v7520 = vpack.c.bf16 %v7489, %v7488
        %v7521 = vpack.c.bf16 %v7491, %v7490
        %v7522 = vpack.c.bf16 %v7493, %v7492
        %v7523 = vpack.c.bf16 %v7495, %v7494
        %v7524 = vpack.c.bf16 %v7497, %v7496
        %v7525 = vpack.c.bf16 %v7499, %v7498
        %v7526 = vpack.c.bf16 %v7501, %v7500
        %v7527 = vpack.c.bf16 %v7503, %v7502
        %v7528 = vpack.c.bf16 %v7505, %v7504
        %v7529 = vpack.c.bf16 %v7507, %v7506
        %v7530 = vpack.c.bf16 %v7509, %v7508
        %v7531 = vpack.c.bf16 %v7511, %v7510
        %v7532 = vpack.c.bf16 %v7513, %v7512
        %v7533 = vpack.c.bf16 %v7515, %v7514
        %v7534 = vpack.c.bf16 %v7517, %v7516
        %v7535 = vpack.c.bf16 %v7519, %v7518
        %v7536 = vld [vmem:[#allocation23] sm:$0xff]
        %v7537 = vld [vmem:[#allocation23 + $0x8] sm:$0xff]
        %v7538 = vld [vmem:[#allocation23 + $0x10] sm:$0xff]
        %v7539 = vld [vmem:[#allocation23 + $0x18] sm:$0xff]
        %v7540 = vld [vmem:[#allocation23 + $0x20] sm:$0xff]
        %v7541 = vld [vmem:[#allocation23 + $0x28] sm:$0xff]
        %v7542 = vld [vmem:[#allocation23 + $0x30] sm:$0xff]
        %v7543 = vld [vmem:[#allocation23 + $0x38] sm:$0xff]
        %v7544 = vld [vmem:[#allocation23 + $0x40] sm:$0xff]
        %v7545 = vld [vmem:[#allocation23 + $0x48] sm:$0xff]
        %v7546 = vld [vmem:[#allocation23 + $0x50] sm:$0xff]
        %v7547 = vld [vmem:[#allocation23 + $0x58] sm:$0xff]
        %v7548 = vld [vmem:[#allocation23 + $0x60] sm:$0xff]
        %v7549 = vld [vmem:[#allocation23 + $0x68] sm:$0xff]
        %v7550 = vld [vmem:[#allocation23 + $0x70] sm:$0xff]
        %v7551 = vld [vmem:[#allocation23 + $0x78] sm:$0xff]
        %v7552 = vld [vmem:[#allocation25] sm:$0x3]
        %v7554 = vlaneseq
        %v7555 = vshrl.u32 %v7554, 7
        %v7556 = vsub.s32 0, %v7555
        %v7557 = vrot.slane %v7552, %v7556
        %v7558 = vlaneseq
        %v7559 = vshrl.u32 %v7558, 7
        %v7560 = vsub.s32 1, %v7559
        %v7561 = vrot.slane %v7552, %v7560
        %v7580 = vunpack.c.l.b16 %v7536
        %v7581 = vunpack.c.h.b16 %v7536
        %v7582 = vunpack.c.l.b16 %v7537
        %v7583 = vunpack.c.h.b16 %v7537
        %v7584 = vunpack.c.l.b16 %v7538
        %v7585 = vunpack.c.h.b16 %v7538
        %v7586 = vunpack.c.l.b16 %v7539
        %v7587 = vunpack.c.h.b16 %v7539
        %v7588 = vunpack.c.l.b16 %v7540
        %v7589 = vunpack.c.h.b16 %v7540
        %v7590 = vunpack.c.l.b16 %v7541
        %v7591 = vunpack.c.h.b16 %v7541
        %v7592 = vunpack.c.l.b16 %v7542
        %v7593 = vunpack.c.h.b16 %v7542
        %v7594 = vunpack.c.l.b16 %v7543
        %v7595 = vunpack.c.h.b16 %v7543
        %v7596 = vunpack.c.l.b16 %v7544
        %v7597 = vunpack.c.h.b16 %v7544
        %v7598 = vunpack.c.l.b16 %v7545
        %v7599 = vunpack.c.h.b16 %v7545
        %v7600 = vunpack.c.l.b16 %v7546
        %v7601 = vunpack.c.h.b16 %v7546
        %v7602 = vunpack.c.l.b16 %v7547
        %v7603 = vunpack.c.h.b16 %v7547
        %v7604 = vunpack.c.l.b16 %v7548
        %v7605 = vunpack.c.h.b16 %v7548
        %v7606 = vunpack.c.l.b16 %v7549
        %v7607 = vunpack.c.h.b16 %v7549
        %v7608 = vunpack.c.l.b16 %v7550
        %v7609 = vunpack.c.h.b16 %v7550
        %v7610 = vunpack.c.l.b16 %v7551
        %v7611 = vunpack.c.h.b16 %v7551
        %v7612 = vpack.c.b16 %v7582, %v7580
        %v7613 = vpack.c.b16 %v7583, %v7581
        %v7614 = vpack.c.b16 %v7586, %v7584
        %v7615 = vpack.c.b16 %v7587, %v7585
        %v7616 = vpack.c.b16 %v7590, %v7588
        %v7617 = vpack.c.b16 %v7591, %v7589
        %v7618 = vpack.c.b16 %v7594, %v7592
        %v7619 = vpack.c.b16 %v7595, %v7593
        %v7620 = vpack.c.b16 %v7598, %v7596
        %v7621 = vpack.c.b16 %v7599, %v7597
        %v7622 = vpack.c.b16 %v7602, %v7600
        %v7623 = vpack.c.b16 %v7603, %v7601
        %v7624 = vpack.c.b16 %v7606, %v7604
        %v7625 = vpack.c.b16 %v7607, %v7605
        %v7626 = vpack.c.b16 %v7610, %v7608
        %v7627 = vpack.c.b16 %v7611, %v7609
        %7644 = vmatprep.subr.bf16.mxu0 %v7627
        %7645 = vmatpush1.bf16.msra.mxu0 %v7626
        %7646 = vmatprep.subr.bf16.mxu0 %v7625
        %7647 = vmatpush1.bf16.msra.mxu0 %v7624
        %7648 = vmatprep.subr.bf16.mxu0 %v7623
        %7649 = vmatpush1.bf16.msra.mxu0 %v7622
        %7650 = vmatprep.subr.bf16.mxu0 %v7621
        %7651 = vmatpush1.bf16.msra.mxu0 %v7620
        %7652 = vmatprep.subr.bf16.mxu0 %v7619
        %7653 = vmatpush1.bf16.msra.mxu0 %v7618
        %7654 = vmatprep.subr.bf16.mxu0 %v7617
        %7655 = vmatpush1.bf16.msra.mxu0 %v7616
        %7656 = vmatprep.subr.bf16.mxu0 %v7615
        %7657 = vmatpush1.bf16.msra.mxu0 %v7614
        %7658 = vmatprep.subr.bf16.mxu0 %v7613
        %7659 = vmatpush1.bf16.msra.mxu0 %v7612
        %7660 = vmatprep.subr.bf16.mxu0 0
        %7661 = vmatpush2.bf16.msra.mxu0 0
        %7662 = vmatprep.subr.bf16.mxu0 0
        %7663 = vmatpush2.bf16.msra.mxu0 0
        %7664 = vmatprep.subr.bf16.mxu0 0
        %7665 = vmatpush2.bf16.msra.mxu0 0
        %7666 = vmatprep.subr.bf16.mxu0 0
        %7667 = vmatpush2.bf16.msra.mxu0 0
        %7668 = vmatprep.subr.bf16.mxu0 0
        %7669 = vmatpush2.bf16.msra.mxu0 0
        %7670 = vmatprep.subr.bf16.mxu0 0
        %7671 = vmatpush2.bf16.msra.mxu0 0
        %7672 = vmatprep.subr.bf16.mxu0 0
        %7673 = vmatpush2.bf16.msra.mxu0 0
        %7674 = vmatprep.subr.bf16.mxu0 0
        %7675 = vmatpush2.bf16.msra.mxu0 0
        %7676 = vmatprep.mubr.bf16.mxu0 0
        %7677 = vmatmul.mubr.bf16.gmra.mxu0 %v7520
        %v7678 = vpop.f32.mrf.mxu0
        %v7679 = vadd.f32 %v7557, %v7678
        %v7680 = vpop.f32.mrf.mxu0
        %v7681 = vadd.f32 %v7561, %v7680
        %v7682 = vpop.f32.mrf.mxu0
        %v7683 = vadd.f32 %v7557, %v7682
        %v7684 = vpop.f32.mrf.mxu0
        %v7685 = vadd.f32 %v7561, %v7684
        %7686 = vmatprep.mubr.bf16.mxu0 0
        %7687 = vmatmul.mubr.bf16.gmra.mxu0 %v7521
        %v7688 = vpop.f32.mrf.mxu0
        %v7689 = vadd.f32 %v7557, %v7688
        %v7690 = vpop.f32.mrf.mxu0
        %v7691 = vadd.f32 %v7561, %v7690
        %v7692 = vpop.f32.mrf.mxu0
        %v7693 = vadd.f32 %v7557, %v7692
        %v7694 = vpop.f32.mrf.mxu0
        %v7695 = vadd.f32 %v7561, %v7694
        %7696 = vmatprep.mubr.bf16.mxu0 0
        %7697 = vmatmul.mubr.bf16.gmra.mxu0 %v7522
        %v7698 = vpop.f32.mrf.mxu0
        %v7699 = vadd.f32 %v7557, %v7698
        %v7700 = vpop.f32.mrf.mxu0
        %v7701 = vadd.f32 %v7561, %v7700
        %v7702 = vpop.f32.mrf.mxu0
        %v7703 = vadd.f32 %v7557, %v7702
        %v7704 = vpop.f32.mrf.mxu0
        %v7705 = vadd.f32 %v7561, %v7704
        %7706 = vmatprep.mubr.bf16.mxu0 0
        %7707 = vmatmul.mubr.bf16.gmra.mxu0 %v7523
        %v7708 = vpop.f32.mrf.mxu0
        %v7709 = vadd.f32 %v7557, %v7708
        %v7710 = vpop.f32.mrf.mxu0
        %v7711 = vadd.f32 %v7561, %v7710
        %v7712 = vpop.f32.mrf.mxu0
        %v7713 = vadd.f32 %v7557, %v7712
        %v7714 = vpop.f32.mrf.mxu0
        %v7715 = vadd.f32 %v7561, %v7714
        %7716 = vmatprep.mubr.bf16.mxu0 0
        %7717 = vmatmul.mubr.bf16.gmra.mxu0 %v7524
        %v7718 = vpop.f32.mrf.mxu0
        %v7719 = vadd.f32 %v7557, %v7718
        %v7720 = vpop.f32.mrf.mxu0
        %v7721 = vadd.f32 %v7561, %v7720
        %v7722 = vpop.f32.mrf.mxu0
        %v7723 = vadd.f32 %v7557, %v7722
        %v7724 = vpop.f32.mrf.mxu0
        %v7725 = vadd.f32 %v7561, %v7724
        %7726 = vmatprep.mubr.bf16.mxu0 0
        %7727 = vmatmul.mubr.bf16.gmra.mxu0 %v7525
        %v7728 = vpop.f32.mrf.mxu0
        %v7729 = vadd.f32 %v7557, %v7728
        %v7730 = vpop.f32.mrf.mxu0
        %v7731 = vadd.f32 %v7561, %v7730
        %v7732 = vpop.f32.mrf.mxu0
        %v7733 = vadd.f32 %v7557, %v7732
        %v7734 = vpop.f32.mrf.mxu0
        %v7735 = vadd.f32 %v7561, %v7734
        %7736 = vmatprep.mubr.bf16.mxu0 0
        %7737 = vmatmul.mubr.bf16.gmra.mxu0 %v7526
        %v7738 = vpop.f32.mrf.mxu0
        %v7739 = vadd.f32 %v7557, %v7738
        %v7740 = vpop.f32.mrf.mxu0
        %v7741 = vadd.f32 %v7561, %v7740
        %v7742 = vpop.f32.mrf.mxu0
        %v7743 = vadd.f32 %v7557, %v7742
        %v7744 = vpop.f32.mrf.mxu0
        %v7745 = vadd.f32 %v7561, %v7744
        %7746 = vmatprep.mubr.bf16.mxu0 0
        %7747 = vmatmul.mubr.bf16.gmra.mxu0 %v7527
        %v7748 = vpop.f32.mrf.mxu0
        %v7749 = vadd.f32 %v7557, %v7748
        %v7750 = vpop.f32.mrf.mxu0
        %v7751 = vadd.f32 %v7561, %v7750
        %v7752 = vpop.f32.mrf.mxu0
        %v7753 = vadd.f32 %v7557, %v7752
        %v7754 = vpop.f32.mrf.mxu0
        %v7755 = vadd.f32 %v7561, %v7754
        %7756 = vmatprep.mubr.bf16.mxu0 0
        %7757 = vmatmul.mubr.bf16.gmra.mxu0 %v7528
        %v7758 = vpop.f32.mrf.mxu0
        %v7759 = vadd.f32 %v7557, %v7758
        %v7760 = vpop.f32.mrf.mxu0
        %v7761 = vadd.f32 %v7561, %v7760
        %v7762 = vpop.f32.mrf.mxu0
        %v7763 = vadd.f32 %v7557, %v7762
        %v7764 = vpop.f32.mrf.mxu0
        %v7765 = vadd.f32 %v7561, %v7764
        %7766 = vmatprep.mubr.bf16.mxu0 0
        %7767 = vmatmul.mubr.bf16.gmra.mxu0 %v7529
        %v7768 = vpop.f32.mrf.mxu0
        %v7769 = vadd.f32 %v7557, %v7768
        %v7770 = vpop.f32.mrf.mxu0
        %v7771 = vadd.f32 %v7561, %v7770
        %v7772 = vpop.f32.mrf.mxu0
        %v7773 = vadd.f32 %v7557, %v7772
        %v7774 = vpop.f32.mrf.mxu0
        %v7775 = vadd.f32 %v7561, %v7774
        %7776 = vmatprep.mubr.bf16.mxu0 0
        %7777 = vmatmul.mubr.bf16.gmra.mxu0 %v7530
        %v7778 = vpop.f32.mrf.mxu0
        %v7779 = vadd.f32 %v7557, %v7778
        %v7780 = vpop.f32.mrf.mxu0
        %v7781 = vadd.f32 %v7561, %v7780
        %v7782 = vpop.f32.mrf.mxu0
        %v7783 = vadd.f32 %v7557, %v7782
        %v7784 = vpop.f32.mrf.mxu0
        %v7785 = vadd.f32 %v7561, %v7784
        %7786 = vmatprep.mubr.bf16.mxu0 0
        %7787 = vmatmul.mubr.bf16.gmra.mxu0 %v7531
        %v7788 = vpop.f32.mrf.mxu0
        %v7789 = vadd.f32 %v7557, %v7788
        %v7790 = vpop.f32.mrf.mxu0
        %v7791 = vadd.f32 %v7561, %v7790
        %v7792 = vpop.f32.mrf.mxu0
        %v7793 = vadd.f32 %v7557, %v7792
        %v7794 = vpop.f32.mrf.mxu0
        %v7795 = vadd.f32 %v7561, %v7794
        %7796 = vmatprep.mubr.bf16.mxu0 0
        %7797 = vmatmul.mubr.bf16.gmra.mxu0 %v7532
        %v7798 = vpop.f32.mrf.mxu0
        %v7799 = vadd.f32 %v7557, %v7798
        %v7800 = vpop.f32.mrf.mxu0
        %v7801 = vadd.f32 %v7561, %v7800
        %v7802 = vpop.f32.mrf.mxu0
        %v7803 = vadd.f32 %v7557, %v7802
        %v7804 = vpop.f32.mrf.mxu0
        %v7805 = vadd.f32 %v7561, %v7804
        %7806 = vmatprep.mubr.bf16.mxu0 0
        %7807 = vmatmul.mubr.bf16.gmra.mxu0 %v7533
        %v7808 = vpop.f32.mrf.mxu0
        %v7809 = vadd.f32 %v7557, %v7808
        %v7810 = vpop.f32.mrf.mxu0
        %v7811 = vadd.f32 %v7561, %v7810
        %v7812 = vpop.f32.mrf.mxu0
        %v7813 = vadd.f32 %v7557, %v7812
        %v7814 = vpop.f32.mrf.mxu0
        %v7815 = vadd.f32 %v7561, %v7814
        %7816 = vmatprep.mubr.bf16.mxu0 0
        %7817 = vmatmul.mubr.bf16.gmra.mxu0 %v7534
        %v7818 = vpop.f32.mrf.mxu0
        %v7819 = vadd.f32 %v7557, %v7818
        %v7820 = vpop.f32.mrf.mxu0
        %v7821 = vadd.f32 %v7561, %v7820
        %v7822 = vpop.f32.mrf.mxu0
        %v7823 = vadd.f32 %v7557, %v7822
        %v7824 = vpop.f32.mrf.mxu0
        %v7825 = vadd.f32 %v7561, %v7824
        %7826 = vmatprep.mubr.bf16.mxu0 0
        %7827 = vmatmul.mubr.bf16.gmra.mxu0 %v7535
        %v7828 = vpop.f32.mrf.mxu0
        %v7829 = vadd.f32 %v7557, %v7828
        %v7830 = vpop.f32.mrf.mxu0
        %v7831 = vadd.f32 %v7561, %v7830
        %v7832 = vpop.f32.mrf.mxu0
        %v7833 = vadd.f32 %v7557, %v7832
        %v7834 = vpop.f32.mrf.mxu0
        %v7835 = vadd.f32 %v7561, %v7834
        %7836 = vdwg.mxu0
        %v7837 = vmax.f32 %v7679, 0.0
        %v7838 = vmax.f32 %v7681, 0.0
        %v7839 = vmax.f32 %v7683, 0.0
        %v7840 = vmax.f32 %v7685, 0.0
        %v7841 = vmax.f32 %v7689, 0.0
        %v7842 = vmax.f32 %v7691, 0.0
        %v7843 = vmax.f32 %v7693, 0.0
        %v7844 = vmax.f32 %v7695, 0.0
        %v7845 = vmax.f32 %v7699, 0.0
        %v7846 = vmax.f32 %v7701, 0.0
        %v7847 = vmax.f32 %v7703, 0.0
        %v7848 = vmax.f32 %v7705, 0.0
        %v7849 = vmax.f32 %v7709, 0.0
        %v7850 = vmax.f32 %v7711, 0.0
        %v7851 = vmax.f32 %v7713, 0.0
        %v7852 = vmax.f32 %v7715, 0.0
        %v7853 = vmax.f32 %v7719, 0.0
        %v7854 = vmax.f32 %v7721, 0.0
        %v7855 = vmax.f32 %v7723, 0.0
        %v7856 = vmax.f32 %v7725, 0.0
        %v7857 = vmax.f32 %v7729, 0.0
        %v7858 = vmax.f32 %v7731, 0.0
        %v7859 = vmax.f32 %v7733, 0.0
        %v7860 = vmax.f32 %v7735, 0.0
        %v7861 = vmax.f32 %v7739, 0.0
        %v7862 = vmax.f32 %v7741, 0.0
        %v7863 = vmax.f32 %v7743, 0.0
        %v7864 = vmax.f32 %v7745, 0.0
        %v7865 = vmax.f32 %v7749, 0.0
        %v7866 = vmax.f32 %v7751, 0.0
        %v7867 = vmax.f32 %v7753, 0.0
        %v7868 = vmax.f32 %v7755, 0.0
        %v7869 = vmax.f32 %v7759, 0.0
        %v7870 = vmax.f32 %v7761, 0.0
        %v7871 = vmax.f32 %v7763, 0.0
        %v7872 = vmax.f32 %v7765, 0.0
        %v7873 = vmax.f32 %v7769, 0.0
        %v7874 = vmax.f32 %v7771, 0.0
        %v7875 = vmax.f32 %v7773, 0.0
        %v7876 = vmax.f32 %v7775, 0.0
        %v7877 = vmax.f32 %v7779, 0.0
        %v7878 = vmax.f32 %v7781, 0.0
        %v7879 = vmax.f32 %v7783, 0.0
        %v7880 = vmax.f32 %v7785, 0.0
        %v7881 = vmax.f32 %v7789, 0.0
        %v7882 = vmax.f32 %v7791, 0.0
        %v7883 = vmax.f32 %v7793, 0.0
        %v7884 = vmax.f32 %v7795, 0.0
        %v7885 = vmax.f32 %v7799, 0.0
        %v7886 = vmax.f32 %v7801, 0.0
        %v7887 = vmax.f32 %v7803, 0.0
        %v7888 = vmax.f32 %v7805, 0.0
        %v7889 = vmax.f32 %v7809, 0.0
        %v7890 = vmax.f32 %v7811, 0.0
        %v7891 = vmax.f32 %v7813, 0.0
        %v7892 = vmax.f32 %v7815, 0.0
        %v7893 = vmax.f32 %v7819, 0.0
        %v7894 = vmax.f32 %v7821, 0.0
        %v7895 = vmax.f32 %v7823, 0.0
        %v7896 = vmax.f32 %v7825, 0.0
        %v7897 = vmax.f32 %v7829, 0.0
        %v7898 = vmax.f32 %v7831, 0.0
        %v7899 = vmax.f32 %v7833, 0.0
        %v7900 = vmax.f32 %v7835, 0.0
        %v7901 = vpack.c.bf16 %v7839, %v7837
        %v7902 = vpack.c.bf16 %v7840, %v7838
        %v7903 = vpack.c.bf16 %v7843, %v7841
        %v7904 = vpack.c.bf16 %v7844, %v7842
        %v7905 = vpack.c.bf16 %v7847, %v7845
        %v7906 = vpack.c.bf16 %v7848, %v7846
        %v7907 = vpack.c.bf16 %v7851, %v7849
        %v7908 = vpack.c.bf16 %v7852, %v7850
        %v7909 = vpack.c.bf16 %v7855, %v7853
        %v7910 = vpack.c.bf16 %v7856, %v7854
        %v7911 = vpack.c.bf16 %v7859, %v7857
        %v7912 = vpack.c.bf16 %v7860, %v7858
        %v7913 = vpack.c.bf16 %v7863, %v7861
        %v7914 = vpack.c.bf16 %v7864, %v7862
        %v7915 = vpack.c.bf16 %v7867, %v7865
        %v7916 = vpack.c.bf16 %v7868, %v7866
        %v7917 = vpack.c.bf16 %v7871, %v7869
        %v7918 = vpack.c.bf16 %v7872, %v7870
        %v7919 = vpack.c.bf16 %v7875, %v7873
        %v7920 = vpack.c.bf16 %v7876, %v7874
        %v7921 = vpack.c.bf16 %v7879, %v7877
        %v7922 = vpack.c.bf16 %v7880, %v7878
        %v7923 = vpack.c.bf16 %v7883, %v7881
        %v7924 = vpack.c.bf16 %v7884, %v7882
        %v7925 = vpack.c.bf16 %v7887, %v7885
        %v7926 = vpack.c.bf16 %v7888, %v7886
        %v7927 = vpack.c.bf16 %v7891, %v7889
        %v7928 = vpack.c.bf16 %v7892, %v7890
        %v7929 = vpack.c.bf16 %v7895, %v7893
        %v7930 = vpack.c.bf16 %v7896, %v7894
        %v7931 = vpack.c.bf16 %v7899, %v7897
        %v7932 = vpack.c.bf16 %v7900, %v7898
        %v7933 = vld [vmem:[#allocation26] sm:$0xf]
        %v7934 = vld [vmem:[#allocation26 + $0x4] sm:$0xf]
        %v7935 = vld [vmem:[#allocation26 + $0x8] sm:$0xf]
        %v7936 = vld [vmem:[#allocation26 + $0xc] sm:$0xf]
        %v7937 = vld [vmem:[#allocation26 + $0x10] sm:$0xf]
        %v7938 = vld [vmem:[#allocation26 + $0x14] sm:$0xf]
        %v7939 = vld [vmem:[#allocation26 + $0x18] sm:$0xf]
        %v7940 = vld [vmem:[#allocation26 + $0x1c] sm:$0xf]
        %v7941 = vld [vmem:[#allocation26 + $0x20] sm:$0xf]
        %v7942 = vld [vmem:[#allocation26 + $0x24] sm:$0xf]
        %v7943 = vld [vmem:[#allocation26 + $0x28] sm:$0xf]
        %v7944 = vld [vmem:[#allocation26 + $0x2c] sm:$0xf]
        %v7945 = vld [vmem:[#allocation26 + $0x30] sm:$0xf]
        %v7946 = vld [vmem:[#allocation26 + $0x34] sm:$0xf]
        %v7947 = vld [vmem:[#allocation26 + $0x38] sm:$0xf]
        %v7948 = vld [vmem:[#allocation26 + $0x3c] sm:$0xf]
        %v7949 = vld [vmem:[#allocation26 + $0x40] sm:$0xf]
        %v7950 = vld [vmem:[#allocation26 + $0x44] sm:$0xf]
        %v7951 = vld [vmem:[#allocation26 + $0x48] sm:$0xf]
        %v7952 = vld [vmem:[#allocation26 + $0x4c] sm:$0xf]
        %v7953 = vld [vmem:[#allocation26 + $0x50] sm:$0xf]
        %v7954 = vld [vmem:[#allocation26 + $0x54] sm:$0xf]
        %v7955 = vld [vmem:[#allocation26 + $0x58] sm:$0xf]
        %v7956 = vld [vmem:[#allocation26 + $0x5c] sm:$0xf]
        %v7957 = vld [vmem:[#allocation26 + $0x60] sm:$0xf]
        %v7958 = vld [vmem:[#allocation26 + $0x64] sm:$0xf]
        %v7959 = vld [vmem:[#allocation26 + $0x68] sm:$0xf]
        %v7960 = vld [vmem:[#allocation26 + $0x6c] sm:$0xf]
        %v7961 = vld [vmem:[#allocation26 + $0x70] sm:$0xf]
        %v7962 = vld [vmem:[#allocation26 + $0x74] sm:$0xf]
        %v7963 = vld [vmem:[#allocation26 + $0x78] sm:$0xf]
        %v7964 = vld [vmem:[#allocation26 + $0x7c] sm:$0xf]
        %v7965 = vld [vmem:[#allocation28] sm:$0x1]
        %v7967 = vlaneseq
        %v7968 = vshrl.u32 %v7967, 7
        %v7969 = vsub.s32 0, %v7968
        %v7970 = vrot.slane %v7965, %v7969
        %v8004 = vunpack.c.l.b16 %v7933
        %v8005 = vunpack.c.l.b16 %v7934
        %v8006 = vunpack.c.l.b16 %v7935
        %v8007 = vunpack.c.l.b16 %v7936
        %v8008 = vunpack.c.l.b16 %v7937
        %v8009 = vunpack.c.l.b16 %v7938
        %v8010 = vunpack.c.l.b16 %v7939
        %v8011 = vunpack.c.l.b16 %v7940
        %v8012 = vunpack.c.l.b16 %v7941
        %v8013 = vunpack.c.l.b16 %v7942
        %v8014 = vunpack.c.l.b16 %v7943
        %v8015 = vunpack.c.l.b16 %v7944
        %v8016 = vunpack.c.l.b16 %v7945
        %v8017 = vunpack.c.l.b16 %v7946
        %v8018 = vunpack.c.l.b16 %v7947
        %v8019 = vunpack.c.l.b16 %v7948
        %v8020 = vunpack.c.l.b16 %v7949
        %v8021 = vunpack.c.l.b16 %v7950
        %v8022 = vunpack.c.l.b16 %v7951
        %v8023 = vunpack.c.l.b16 %v7952
        %v8024 = vunpack.c.l.b16 %v7953
        %v8025 = vunpack.c.l.b16 %v7954
        %v8026 = vunpack.c.l.b16 %v7955
        %v8027 = vunpack.c.l.b16 %v7956
        %v8028 = vunpack.c.l.b16 %v7957
        %v8029 = vunpack.c.l.b16 %v7958
        %v8030 = vunpack.c.l.b16 %v7959
        %v8031 = vunpack.c.l.b16 %v7960
        %v8032 = vunpack.c.l.b16 %v7961
        %v8033 = vunpack.c.l.b16 %v7962
        %v8034 = vunpack.c.l.b16 %v7963
        %v8035 = vunpack.c.l.b16 %v7964
        %v8036 = vpack.c.b16 %v8005, %v8004
        %v8037 = vpack.c.b16 %v8007, %v8006
        %v8038 = vpack.c.b16 %v8009, %v8008
        %v8039 = vpack.c.b16 %v8011, %v8010
        %v8040 = vpack.c.b16 %v8013, %v8012
        %v8041 = vpack.c.b16 %v8015, %v8014
        %v8042 = vpack.c.b16 %v8017, %v8016
        %v8043 = vpack.c.b16 %v8019, %v8018
        %v8044 = vpack.c.b16 %v8021, %v8020
        %v8045 = vpack.c.b16 %v8023, %v8022
        %v8046 = vpack.c.b16 %v8025, %v8024
        %v8047 = vpack.c.b16 %v8027, %v8026
        %v8048 = vpack.c.b16 %v8029, %v8028
        %v8049 = vpack.c.b16 %v8031, %v8030
        %v8050 = vpack.c.b16 %v8033, %v8032
        %v8051 = vpack.c.b16 %v8035, %v8034
        %8068 = vmatprep.subr.bf16.mxu0 0
        %8069 = vmatpush1.bf16.msra.mxu0 %v8043
        %8070 = vmatprep.subr.bf16.mxu0 0
        %8071 = vmatpush1.bf16.msra.mxu0 %v8042
        %8072 = vmatprep.subr.bf16.mxu0 0
        %8073 = vmatpush1.bf16.msra.mxu0 %v8041
        %8074 = vmatprep.subr.bf16.mxu0 0
        %8075 = vmatpush1.bf16.msra.mxu0 %v8040
        %8076 = vmatprep.subr.bf16.mxu0 0
        %8077 = vmatpush1.bf16.msra.mxu0 %v8039
        %8078 = vmatprep.subr.bf16.mxu0 0
        %8079 = vmatpush1.bf16.msra.mxu0 %v8038
        %8080 = vmatprep.subr.bf16.mxu0 0
        %8081 = vmatpush1.bf16.msra.mxu0 %v8037
        %8082 = vmatprep.subr.bf16.mxu0 0
        %8083 = vmatpush1.bf16.msra.mxu0 %v8036
        %8084 = vmatprep.subr.bf16.mxu0 0
        %8085 = vmatpush2.bf16.msra.mxu0 %v8051
        %8086 = vmatprep.subr.bf16.mxu0 0
        %8087 = vmatpush2.bf16.msra.mxu0 %v8050
        %8088 = vmatprep.subr.bf16.mxu0 0
        %8089 = vmatpush2.bf16.msra.mxu0 %v8049
        %8090 = vmatprep.subr.bf16.mxu0 0
        %8091 = vmatpush2.bf16.msra.mxu0 %v8048
        %8092 = vmatprep.subr.bf16.mxu0 0
        %8093 = vmatpush2.bf16.msra.mxu0 %v8047
        %8094 = vmatprep.subr.bf16.mxu0 0
        %8095 = vmatpush2.bf16.msra.mxu0 %v8046
        %8096 = vmatprep.subr.bf16.mxu0 0
        %8097 = vmatpush2.bf16.msra.mxu0 %v8045
        %8098 = vmatprep.subr.bf16.mxu0 0
        %8099 = vmatpush2.bf16.msra.mxu0 %v8044
        %8100 = vmatprep.mubr.bf16.mxu0 %v7902
        %8101 = vmatmul.mubr.bf16.gmra.mxu0 %v7901
        %v8102 = vpop.f32.mrf.mxu0
        %v8103 = vadd.f32 %v7970, %v8102
        %v8104 = vpop.f32.mrf.mxu0
        %v8105 = vpop.f32.mrf.mxu0
        %v8106 = vadd.f32 %v7970, %v8105
        %v8107 = vpop.f32.mrf.mxu0
        %8108 = vmatprep.mubr.bf16.mxu0 %v7904
        %8109 = vmatmul.mubr.bf16.gmra.mxu0 %v7903
        %v8110 = vpop.f32.mrf.mxu0
        %v8111 = vadd.f32 %v7970, %v8110
        %v8112 = vpop.f32.mrf.mxu0
        %v8113 = vpop.f32.mrf.mxu0
        %v8114 = vadd.f32 %v7970, %v8113
        %v8115 = vpop.f32.mrf.mxu0
        %8116 = vmatprep.mubr.bf16.mxu0 %v7906
        %8117 = vmatmul.mubr.bf16.gmra.mxu0 %v7905
        %v8118 = vpop.f32.mrf.mxu0
        %v8119 = vadd.f32 %v7970, %v8118
        %v8120 = vpop.f32.mrf.mxu0
        %v8121 = vpop.f32.mrf.mxu0
        %v8122 = vadd.f32 %v7970, %v8121
        %v8123 = vpop.f32.mrf.mxu0
        %8124 = vmatprep.mubr.bf16.mxu0 %v7908
        %8125 = vmatmul.mubr.bf16.gmra.mxu0 %v7907
        %v8126 = vpop.f32.mrf.mxu0
        %v8127 = vadd.f32 %v7970, %v8126
        %v8128 = vpop.f32.mrf.mxu0
        %v8129 = vpop.f32.mrf.mxu0
        %v8130 = vadd.f32 %v7970, %v8129
        %v8131 = vpop.f32.mrf.mxu0
        %8132 = vmatprep.mubr.bf16.mxu0 %v7910
        %8133 = vmatmul.mubr.bf16.gmra.mxu0 %v7909
        %v8134 = vpop.f32.mrf.mxu0
        %v8135 = vadd.f32 %v7970, %v8134
        %v8136 = vpop.f32.mrf.mxu0
        %v8137 = vpop.f32.mrf.mxu0
        %v8138 = vadd.f32 %v7970, %v8137
        %v8139 = vpop.f32.mrf.mxu0
        %8140 = vmatprep.mubr.bf16.mxu0 %v7912
        %8141 = vmatmul.mubr.bf16.gmra.mxu0 %v7911
        %v8142 = vpop.f32.mrf.mxu0
        %v8143 = vadd.f32 %v7970, %v8142
        %v8144 = vpop.f32.mrf.mxu0
        %v8145 = vpop.f32.mrf.mxu0
        %v8146 = vadd.f32 %v7970, %v8145
        %v8147 = vpop.f32.mrf.mxu0
        %8148 = vmatprep.mubr.bf16.mxu0 %v7914
        %8149 = vmatmul.mubr.bf16.gmra.mxu0 %v7913
        %v8150 = vpop.f32.mrf.mxu0
        %v8151 = vadd.f32 %v7970, %v8150
        %v8152 = vpop.f32.mrf.mxu0
        %v8153 = vpop.f32.mrf.mxu0
        %v8154 = vadd.f32 %v7970, %v8153
        %v8155 = vpop.f32.mrf.mxu0
        %8156 = vmatprep.mubr.bf16.mxu0 %v7916
        %8157 = vmatmul.mubr.bf16.gmra.mxu0 %v7915
        %v8158 = vpop.f32.mrf.mxu0
        %v8159 = vadd.f32 %v7970, %v8158
        %v8160 = vpop.f32.mrf.mxu0
        %v8161 = vpop.f32.mrf.mxu0
        %v8162 = vadd.f32 %v7970, %v8161
        %v8163 = vpop.f32.mrf.mxu0
        %8164 = vmatprep.mubr.bf16.mxu0 %v7918
        %8165 = vmatmul.mubr.bf16.gmra.mxu0 %v7917
        %v8166 = vpop.f32.mrf.mxu0
        %v8167 = vadd.f32 %v7970, %v8166
        %v8168 = vpop.f32.mrf.mxu0
        %v8169 = vpop.f32.mrf.mxu0
        %v8170 = vadd.f32 %v7970, %v8169
        %v8171 = vpop.f32.mrf.mxu0
        %8172 = vmatprep.mubr.bf16.mxu0 %v7920
        %8173 = vmatmul.mubr.bf16.gmra.mxu0 %v7919
        %v8174 = vpop.f32.mrf.mxu0
        %v8175 = vadd.f32 %v7970, %v8174
        %v8176 = vpop.f32.mrf.mxu0
        %v8177 = vpop.f32.mrf.mxu0
        %v8178 = vadd.f32 %v7970, %v8177
        %v8179 = vpop.f32.mrf.mxu0
        %8180 = vmatprep.mubr.bf16.mxu0 %v7922
        %8181 = vmatmul.mubr.bf16.gmra.mxu0 %v7921
        %v8182 = vpop.f32.mrf.mxu0
        %v8183 = vadd.f32 %v7970, %v8182
        %v8184 = vpop.f32.mrf.mxu0
        %v8185 = vpop.f32.mrf.mxu0
        %v8186 = vadd.f32 %v7970, %v8185
        %v8187 = vpop.f32.mrf.mxu0
        %8188 = vmatprep.mubr.bf16.mxu0 %v7924
        %8189 = vmatmul.mubr.bf16.gmra.mxu0 %v7923
        %v8190 = vpop.f32.mrf.mxu0
        %v8191 = vadd.f32 %v7970, %v8190
        %v8192 = vpop.f32.mrf.mxu0
        %v8193 = vpop.f32.mrf.mxu0
        %v8194 = vadd.f32 %v7970, %v8193
        %v8195 = vpop.f32.mrf.mxu0
        %8196 = vmatprep.mubr.bf16.mxu0 %v7926
        %8197 = vmatmul.mubr.bf16.gmra.mxu0 %v7925
        %v8198 = vpop.f32.mrf.mxu0
        %v8199 = vadd.f32 %v7970, %v8198
        %v8200 = vpop.f32.mrf.mxu0
        %v8201 = vpop.f32.mrf.mxu0
        %v8202 = vadd.f32 %v7970, %v8201
        %v8203 = vpop.f32.mrf.mxu0
        %8204 = vmatprep.mubr.bf16.mxu0 %v7928
        %8205 = vmatmul.mubr.bf16.gmra.mxu0 %v7927
        %v8206 = vpop.f32.mrf.mxu0
        %v8207 = vadd.f32 %v7970, %v8206
        %v8208 = vpop.f32.mrf.mxu0
        %v8209 = vpop.f32.mrf.mxu0
        %v8210 = vadd.f32 %v7970, %v8209
        %v8211 = vpop.f32.mrf.mxu0
        %8212 = vmatprep.mubr.bf16.mxu0 %v7930
        %8213 = vmatmul.mubr.bf16.gmra.mxu0 %v7929
        %v8214 = vpop.f32.mrf.mxu0
        %v8215 = vadd.f32 %v7970, %v8214
        %v8216 = vpop.f32.mrf.mxu0
        %v8217 = vpop.f32.mrf.mxu0
        %v8218 = vadd.f32 %v7970, %v8217
        %v8219 = vpop.f32.mrf.mxu0
        %8220 = vmatprep.mubr.bf16.mxu0 %v7932
        %8221 = vmatmul.mubr.bf16.gmra.mxu0 %v7931
        %v8222 = vpop.f32.mrf.mxu0
        %v8223 = vadd.f32 %v7970, %v8222
        %v8224 = vpop.f32.mrf.mxu0
        %v8225 = vpop.f32.mrf.mxu0
        %v8226 = vadd.f32 %v7970, %v8225
        %v8227 = vpop.f32.mrf.mxu0
        %8228 = vdwg.mxu0
        %v8229 = vadd.f32 %v8103, %v7488
        %v8230 = vadd.f32 %v8106, %v7489
        %v8231 = vadd.f32 %v8111, %v7490
        %v8232 = vadd.f32 %v8114, %v7491
        %v8233 = vadd.f32 %v8119, %v7492
        %v8234 = vadd.f32 %v8122, %v7493
        %v8235 = vadd.f32 %v8127, %v7494
        %v8236 = vadd.f32 %v8130, %v7495
        %v8237 = vadd.f32 %v8135, %v7496
        %v8238 = vadd.f32 %v8138, %v7497
        %v8239 = vadd.f32 %v8143, %v7498
        %v8240 = vadd.f32 %v8146, %v7499
        %v8241 = vadd.f32 %v8151, %v7500
        %v8242 = vadd.f32 %v8154, %v7501
        %v8243 = vadd.f32 %v8159, %v7502
        %v8244 = vadd.f32 %v8162, %v7503
        %v8245 = vadd.f32 %v8167, %v7504
        %v8246 = vadd.f32 %v8170, %v7505
        %v8247 = vadd.f32 %v8175, %v7506
        %v8248 = vadd.f32 %v8178, %v7507
        %v8249 = vadd.f32 %v8183, %v7508
        %v8250 = vadd.f32 %v8186, %v7509
        %v8251 = vadd.f32 %v8191, %v7510
        %v8252 = vadd.f32 %v8194, %v7511
        %v8253 = vadd.f32 %v8199, %v7512
        %v8254 = vadd.f32 %v8202, %v7513
        %v8255 = vadd.f32 %v8207, %v7514
        %v8256 = vadd.f32 %v8210, %v7515
        %v8257 = vadd.f32 %v8215, %v7516
        %v8258 = vadd.f32 %v8218, %v7517
        %v8259 = vadd.f32 %v8223, %v7518
        %v8260 = vadd.f32 %v8226, %v7519
        %v8261 = vld [vmem:[#allocation29] sm:$0x1]
        %v8262 = vld [vmem:[#allocation31] sm:$0x1]
        %8263 = vadd.xlane.f32.xlu0 %v8229
        %v8264 = vpop.xlane.xlu0 %8263
        %8265 = vadd.xlane.f32.xlu0 %v8230
        %v8266 = vpop.xlane.xlu0 %8265
        %8267 = vadd.xlane.f32.xlu0 %v8231
        %v8268 = vpop.xlane.xlu0 %8267
        %8269 = vadd.xlane.f32.xlu0 %v8232
        %v8270 = vpop.xlane.xlu0 %8269
        %8271 = vadd.xlane.f32.xlu0 %v8233
        %v8272 = vpop.xlane.xlu0 %8271
        %8273 = vadd.xlane.f32.xlu0 %v8234
        %v8274 = vpop.xlane.xlu0 %8273
        %8275 = vadd.xlane.f32.xlu0 %v8235
        %v8276 = vpop.xlane.xlu0 %8275
        %8277 = vadd.xlane.f32.xlu0 %v8236
        %v8278 = vpop.xlane.xlu0 %8277
        %8279 = vadd.xlane.f32.xlu0 %v8237
        %v8280 = vpop.xlane.xlu0 %8279
        %8281 = vadd.xlane.f32.xlu0 %v8238
        %v8282 = vpop.xlane.xlu0 %8281
        %8283 = vadd.xlane.f32.xlu0 %v8239
        %v8284 = vpop.xlane.xlu0 %8283
        %8285 = vadd.xlane.f32.xlu0 %v8240
        %v8286 = vpop.xlane.xlu0 %8285
        %8287 = vadd.xlane.f32.xlu0 %v8241
        %v8288 = vpop.xlane.xlu0 %8287
        %8289 = vadd.xlane.f32.xlu0 %v8242
        %v8290 = vpop.xlane.xlu0 %8289
        %8291 = vadd.xlane.f32.xlu0 %v8243
        %v8292 = vpop.xlane.xlu0 %8291
        %8293 = vadd.xlane.f32.xlu0 %v8244
        %v8294 = vpop.xlane.xlu0 %8293
        %8295 = vadd.xlane.f32.xlu0 %v8245
        %v8296 = vpop.xlane.xlu0 %8295
        %8297 = vadd.xlane.f32.xlu0 %v8246
        %v8298 = vpop.xlane.xlu0 %8297
        %8299 = vadd.xlane.f32.xlu0 %v8247
        %v8300 = vpop.xlane.xlu0 %8299
        %8301 = vadd.xlane.f32.xlu0 %v8248
        %v8302 = vpop.xlane.xlu0 %8301
        %8303 = vadd.xlane.f32.xlu0 %v8249
        %v8304 = vpop.xlane.xlu0 %8303
        %8305 = vadd.xlane.f32.xlu0 %v8250
        %v8306 = vpop.xlane.xlu0 %8305
        %8307 = vadd.xlane.f32.xlu0 %v8251
        %v8308 = vpop.xlane.xlu0 %8307
        %8309 = vadd.xlane.f32.xlu0 %v8252
        %v8310 = vpop.xlane.xlu0 %8309
        %8311 = vadd.xlane.f32.xlu0 %v8253
        %v8312 = vpop.xlane.xlu0 %8311
        %8313 = vadd.xlane.f32.xlu0 %v8254
        %v8314 = vpop.xlane.xlu0 %8313
        %8315 = vadd.xlane.f32.xlu0 %v8255
        %v8316 = vpop.xlane.xlu0 %8315
        %8317 = vadd.xlane.f32.xlu0 %v8256
        %v8318 = vpop.xlane.xlu0 %8317
        %8319 = vadd.xlane.f32.xlu0 %v8257
        %v8320 = vpop.xlane.xlu0 %8319
        %8321 = vadd.xlane.f32.xlu0 %v8258
        %v8322 = vpop.xlane.xlu0 %8321
        %8323 = vadd.xlane.f32.xlu0 %v8259
        %v8324 = vpop.xlane.xlu0 %8323
        %8325 = vadd.xlane.f32.xlu0 %v8260
        %v8326 = vpop.xlane.xlu0 %8325
        %v8327 = vmul.f32 %v8264, %v4602
        %v8328 = vmul.f32 %v8266, %v4602
        %v8329 = vmul.f32 %v8268, %v4602
        %v8330 = vmul.f32 %v8270, %v4602
        %v8331 = vmul.f32 %v8272, %v4602
        %v8332 = vmul.f32 %v8274, %v4602
        %v8333 = vmul.f32 %v8276, %v4602
        %v8334 = vmul.f32 %v8278, %v4602
        %v8335 = vmul.f32 %v8280, %v4602
        %v8336 = vmul.f32 %v8282, %v4602
        %v8337 = vmul.f32 %v8284, %v4602
        %v8338 = vmul.f32 %v8286, %v4602
        %v8339 = vmul.f32 %v8288, %v4602
        %v8340 = vmul.f32 %v8290, %v4602
        %v8341 = vmul.f32 %v8292, %v4602
        %v8342 = vmul.f32 %v8294, %v4602
        %v8343 = vmul.f32 %v8296, %v4602
        %v8344 = vmul.f32 %v8298, %v4602
        %v8345 = vmul.f32 %v8300, %v4602
        %v8346 = vmul.f32 %v8302, %v4602
        %v8347 = vmul.f32 %v8304, %v4602
        %v8348 = vmul.f32 %v8306, %v4602
        %v8349 = vmul.f32 %v8308, %v4602
        %v8350 = vmul.f32 %v8310, %v4602
        %v8351 = vmul.f32 %v8312, %v4602
        %v8352 = vmul.f32 %v8314, %v4602
        %v8353 = vmul.f32 %v8316, %v4602
        %v8354 = vmul.f32 %v8318, %v4602
        %v8355 = vmul.f32 %v8320, %v4602
        %v8356 = vmul.f32 %v8322, %v4602
        %v8357 = vmul.f32 %v8324, %v4602
        %v8358 = vmul.f32 %v8326, %v4602
        %v8359 = vsub.f32 %v8229, %v8327
        %v8360 = vsub.f32 %v8230, %v8328
        %v8361 = vsub.f32 %v8231, %v8329
        %v8362 = vsub.f32 %v8232, %v8330
        %v8363 = vsub.f32 %v8233, %v8331
        %v8364 = vsub.f32 %v8234, %v8332
        %v8365 = vsub.f32 %v8235, %v8333
        %v8366 = vsub.f32 %v8236, %v8334
        %v8367 = vsub.f32 %v8237, %v8335
        %v8368 = vsub.f32 %v8238, %v8336
        %v8369 = vsub.f32 %v8239, %v8337
        %v8370 = vsub.f32 %v8240, %v8338
        %v8371 = vsub.f32 %v8241, %v8339
        %v8372 = vsub.f32 %v8242, %v8340
        %v8373 = vsub.f32 %v8243, %v8341
        %v8374 = vsub.f32 %v8244, %v8342
        %v8375 = vsub.f32 %v8245, %v8343
        %v8376 = vsub.f32 %v8246, %v8344
        %v8377 = vsub.f32 %v8247, %v8345
        %v8378 = vsub.f32 %v8248, %v8346
        %v8379 = vsub.f32 %v8249, %v8347
        %v8380 = vsub.f32 %v8250, %v8348
        %v8381 = vsub.f32 %v8251, %v8349
        %v8382 = vsub.f32 %v8252, %v8350
        %v8383 = vsub.f32 %v8253, %v8351
        %v8384 = vsub.f32 %v8254, %v8352
        %v8385 = vsub.f32 %v8255, %v8353
        %v8386 = vsub.f32 %v8256, %v8354
        %v8387 = vsub.f32 %v8257, %v8355
        %v8388 = vsub.f32 %v8258, %v8356
        %v8389 = vsub.f32 %v8259, %v8357
        %v8390 = vsub.f32 %v8260, %v8358
        %v8391 = vmul.f32 %v8359, %v8359
        %v8392 = vmul.f32 %v8360, %v8360
        %v8393 = vmul.f32 %v8361, %v8361
        %v8394 = vmul.f32 %v8362, %v8362
        %v8395 = vmul.f32 %v8363, %v8363
        %v8396 = vmul.f32 %v8364, %v8364
        %v8397 = vmul.f32 %v8365, %v8365
        %v8398 = vmul.f32 %v8366, %v8366
        %v8399 = vmul.f32 %v8367, %v8367
        %v8400 = vmul.f32 %v8368, %v8368
        %v8401 = vmul.f32 %v8369, %v8369
        %v8402 = vmul.f32 %v8370, %v8370
        %v8403 = vmul.f32 %v8371, %v8371
        %v8404 = vmul.f32 %v8372, %v8372
        %v8405 = vmul.f32 %v8373, %v8373
        %v8406 = vmul.f32 %v8374, %v8374
        %v8407 = vmul.f32 %v8375, %v8375
        %v8408 = vmul.f32 %v8376, %v8376
        %v8409 = vmul.f32 %v8377, %v8377
        %v8410 = vmul.f32 %v8378, %v8378
        %v8411 = vmul.f32 %v8379, %v8379
        %v8412 = vmul.f32 %v8380, %v8380
        %v8413 = vmul.f32 %v8381, %v8381
        %v8414 = vmul.f32 %v8382, %v8382
        %v8415 = vmul.f32 %v8383, %v8383
        %v8416 = vmul.f32 %v8384, %v8384
        %v8417 = vmul.f32 %v8385, %v8385
        %v8418 = vmul.f32 %v8386, %v8386
        %v8419 = vmul.f32 %v8387, %v8387
        %v8420 = vmul.f32 %v8388, %v8388
        %v8421 = vmul.f32 %v8389, %v8389
        %v8422 = vmul.f32 %v8390, %v8390
        %8423 = vadd.xlane.f32.xlu0 %v8391
        %v8424 = vpop.xlane.xlu0 %8423
        %8425 = vadd.xlane.f32.xlu0 %v8392
        %v8426 = vpop.xlane.xlu0 %8425
        %8427 = vadd.xlane.f32.xlu0 %v8393
        %v8428 = vpop.xlane.xlu0 %8427
        %8429 = vadd.xlane.f32.xlu0 %v8394
        %v8430 = vpop.xlane.xlu0 %8429
        %8431 = vadd.xlane.f32.xlu0 %v8395
        %v8432 = vpop.xlane.xlu0 %8431
        %8433 = vadd.xlane.f32.xlu0 %v8396
        %v8434 = vpop.xlane.xlu0 %8433
        %8435 = vadd.xlane.f32.xlu0 %v8397
        %v8436 = vpop.xlane.xlu0 %8435
        %8437 = vadd.xlane.f32.xlu0 %v8398
        %v8438 = vpop.xlane.xlu0 %8437
        %8439 = vadd.xlane.f32.xlu0 %v8399
        %v8440 = vpop.xlane.xlu0 %8439
        %8441 = vadd.xlane.f32.xlu0 %v8400
        %v8442 = vpop.xlane.xlu0 %8441
        %8443 = vadd.xlane.f32.xlu0 %v8401
        %v8444 = vpop.xlane.xlu0 %8443
        %8445 = vadd.xlane.f32.xlu0 %v8402
        %v8446 = vpop.xlane.xlu0 %8445
        %8447 = vadd.xlane.f32.xlu0 %v8403
        %v8448 = vpop.xlane.xlu0 %8447
        %8449 = vadd.xlane.f32.xlu0 %v8404
        %v8450 = vpop.xlane.xlu0 %8449
        %8451 = vadd.xlane.f32.xlu0 %v8405
        %v8452 = vpop.xlane.xlu0 %8451
        %8453 = vadd.xlane.f32.xlu0 %v8406
        %v8454 = vpop.xlane.xlu0 %8453
        %8455 = vadd.xlane.f32.xlu0 %v8407
        %v8456 = vpop.xlane.xlu0 %8455
        %8457 = vadd.xlane.f32.xlu0 %v8408
        %v8458 = vpop.xlane.xlu0 %8457
        %8459 = vadd.xlane.f32.xlu0 %v8409
        %v8460 = vpop.xlane.xlu0 %8459
        %8461 = vadd.xlane.f32.xlu0 %v8410
        %v8462 = vpop.xlane.xlu0 %8461
        %8463 = vadd.xlane.f32.xlu0 %v8411
        %v8464 = vpop.xlane.xlu0 %8463
        %8465 = vadd.xlane.f32.xlu0 %v8412
        %v8466 = vpop.xlane.xlu0 %8465
        %8467 = vadd.xlane.f32.xlu0 %v8413
        %v8468 = vpop.xlane.xlu0 %8467
        %8469 = vadd.xlane.f32.xlu0 %v8414
        %v8470 = vpop.xlane.xlu0 %8469
        %8471 = vadd.xlane.f32.xlu0 %v8415
        %v8472 = vpop.xlane.xlu0 %8471
        %8473 = vadd.xlane.f32.xlu0 %v8416
        %v8474 = vpop.xlane.xlu0 %8473
        %8475 = vadd.xlane.f32.xlu0 %v8417
        %v8476 = vpop.xlane.xlu0 %8475
        %8477 = vadd.xlane.f32.xlu0 %v8418
        %v8478 = vpop.xlane.xlu0 %8477
        %8479 = vadd.xlane.f32.xlu0 %v8419
        %v8480 = vpop.xlane.xlu0 %8479
        %8481 = vadd.xlane.f32.xlu0 %v8420
        %v8482 = vpop.xlane.xlu0 %8481
        %8483 = vadd.xlane.f32.xlu0 %v8421
        %v8484 = vpop.xlane.xlu0 %8483
        %8485 = vadd.xlane.f32.xlu0 %v8422
        %v8486 = vpop.xlane.xlu0 %8485
        %v8487 = vmul.f32 %v8424, %v4602
        %v8488 = vmul.f32 %v8426, %v4602
        %v8489 = vmul.f32 %v8428, %v4602
        %v8490 = vmul.f32 %v8430, %v4602
        %v8491 = vmul.f32 %v8432, %v4602
        %v8492 = vmul.f32 %v8434, %v4602
        %v8493 = vmul.f32 %v8436, %v4602
        %v8494 = vmul.f32 %v8438, %v4602
        %v8495 = vmul.f32 %v8440, %v4602
        %v8496 = vmul.f32 %v8442, %v4602
        %v8497 = vmul.f32 %v8444, %v4602
        %v8498 = vmul.f32 %v8446, %v4602
        %v8499 = vmul.f32 %v8448, %v4602
        %v8500 = vmul.f32 %v8450, %v4602
        %v8501 = vmul.f32 %v8452, %v4602
        %v8502 = vmul.f32 %v8454, %v4602
        %v8503 = vmul.f32 %v8456, %v4602
        %v8504 = vmul.f32 %v8458, %v4602
        %v8505 = vmul.f32 %v8460, %v4602
        %v8506 = vmul.f32 %v8462, %v4602
        %v8507 = vmul.f32 %v8464, %v4602
        %v8508 = vmul.f32 %v8466, %v4602
        %v8509 = vmul.f32 %v8468, %v4602
        %v8510 = vmul.f32 %v8470, %v4602
        %v8511 = vmul.f32 %v8472, %v4602
        %v8512 = vmul.f32 %v8474, %v4602
        %v8513 = vmul.f32 %v8476, %v4602
        %v8514 = vmul.f32 %v8478, %v4602
        %v8515 = vmul.f32 %v8480, %v4602
        %v8516 = vmul.f32 %v8482, %v4602
        %v8517 = vmul.f32 %v8484, %v4602
        %v8518 = vmul.f32 %v8486, %v4602
        %v8519 = vadd.f32 %v8487, 1e-06
        %v8520 = vadd.f32 %v8488, 1e-06
        %v8521 = vadd.f32 %v8489, 1e-06
        %v8522 = vadd.f32 %v8490, 1e-06
        %v8523 = vadd.f32 %v8491, 1e-06
        %v8524 = vadd.f32 %v8492, 1e-06
        %v8525 = vadd.f32 %v8493, 1e-06
        %v8526 = vadd.f32 %v8494, 1e-06
        %v8527 = vadd.f32 %v8495, 1e-06
        %v8528 = vadd.f32 %v8496, 1e-06
        %v8529 = vadd.f32 %v8497, 1e-06
        %v8530 = vadd.f32 %v8498, 1e-06
        %v8531 = vadd.f32 %v8499, 1e-06
        %v8532 = vadd.f32 %v8500, 1e-06
        %v8533 = vadd.f32 %v8501, 1e-06
        %v8534 = vadd.f32 %v8502, 1e-06
        %v8535 = vadd.f32 %v8503, 1e-06
        %v8536 = vadd.f32 %v8504, 1e-06
        %v8537 = vadd.f32 %v8505, 1e-06
        %v8538 = vadd.f32 %v8506, 1e-06
        %v8539 = vadd.f32 %v8507, 1e-06
        %v8540 = vadd.f32 %v8508, 1e-06
        %v8541 = vadd.f32 %v8509, 1e-06
        %v8542 = vadd.f32 %v8510, 1e-06
        %v8543 = vadd.f32 %v8511, 1e-06
        %v8544 = vadd.f32 %v8512, 1e-06
        %v8545 = vadd.f32 %v8513, 1e-06
        %v8546 = vadd.f32 %v8514, 1e-06
        %v8547 = vadd.f32 %v8515, 1e-06
        %v8548 = vadd.f32 %v8516, 1e-06
        %v8549 = vadd.f32 %v8517, 1e-06
        %v8550 = vadd.f32 %v8518, 1e-06
        %v8551 = vrsqrt.pop %v8519
        %v8552 = vrsqrt.pop %v8520
        %v8553 = vrsqrt.pop %v8521
        %v8554 = vrsqrt.pop %v8522
        %v8555 = vrsqrt.pop %v8523
        %v8556 = vrsqrt.pop %v8524
        %v8557 = vrsqrt.pop %v8525
        %v8558 = vrsqrt.pop %v8526
        %v8559 = vrsqrt.pop %v8527
        %v8560 = vrsqrt.pop %v8528
        %v8561 = vrsqrt.pop %v8529
        %v8562 = vrsqrt.pop %v8530
        %v8563 = vrsqrt.pop %v8531
        %v8564 = vrsqrt.pop %v8532
        %v8565 = vrsqrt.pop %v8533
        %v8566 = vrsqrt.pop %v8534
        %v8567 = vrsqrt.pop %v8535
        %v8568 = vrsqrt.pop %v8536
        %v8569 = vrsqrt.pop %v8537
        %v8570 = vrsqrt.pop %v8538
        %v8571 = vrsqrt.pop %v8539
        %v8572 = vrsqrt.pop %v8540
        %v8573 = vrsqrt.pop %v8541
        %v8574 = vrsqrt.pop %v8542
        %v8575 = vrsqrt.pop %v8543
        %v8576 = vrsqrt.pop %v8544
        %v8577 = vrsqrt.pop %v8545
        %v8578 = vrsqrt.pop %v8546
        %v8579 = vrsqrt.pop %v8547
        %v8580 = vrsqrt.pop %v8548
        %v8581 = vrsqrt.pop %v8549
        %v8582 = vrsqrt.pop %v8550
        %v8583 = vmul.f32 %v8359, %v8551
        %v8584 = vmul.f32 %v8360, %v8552
        %v8585 = vmul.f32 %v8361, %v8553
        %v8586 = vmul.f32 %v8362, %v8554
        %v8587 = vmul.f32 %v8363, %v8555
        %v8588 = vmul.f32 %v8364, %v8556
        %v8589 = vmul.f32 %v8365, %v8557
        %v8590 = vmul.f32 %v8366, %v8558
        %v8591 = vmul.f32 %v8367, %v8559
        %v8592 = vmul.f32 %v8368, %v8560
        %v8593 = vmul.f32 %v8369, %v8561
        %v8594 = vmul.f32 %v8370, %v8562
        %v8595 = vmul.f32 %v8371, %v8563
        %v8596 = vmul.f32 %v8372, %v8564
        %v8597 = vmul.f32 %v8373, %v8565
        %v8598 = vmul.f32 %v8374, %v8566
        %v8599 = vmul.f32 %v8375, %v8567
        %v8600 = vmul.f32 %v8376, %v8568
        %v8601 = vmul.f32 %v8377, %v8569
        %v8602 = vmul.f32 %v8378, %v8570
        %v8603 = vmul.f32 %v8379, %v8571
        %v8604 = vmul.f32 %v8380, %v8572
        %v8605 = vmul.f32 %v8381, %v8573
        %v8606 = vmul.f32 %v8382, %v8574
        %v8607 = vmul.f32 %v8383, %v8575
        %v8608 = vmul.f32 %v8384, %v8576
        %v8609 = vmul.f32 %v8385, %v8577
        %v8610 = vmul.f32 %v8386, %v8578
        %v8611 = vmul.f32 %v8387, %v8579
        %v8612 = vmul.f32 %v8388, %v8580
        %v8613 = vmul.f32 %v8389, %v8581
        %v8614 = vmul.f32 %v8390, %v8582
        %v8616 = vlaneseq
        %v8617 = vshrl.u32 %v8616, 7
        %v8618 = vsub.s32 0, %v8617
        %v8619 = vrot.slane %v8261, %v8618
        %v8621 = vmul.f32 %v8583, %v8619
        %v8622 = vmul.f32 %v8584, %v8619
        %v8623 = vmul.f32 %v8585, %v8619
        %v8624 = vmul.f32 %v8586, %v8619
        %v8625 = vmul.f32 %v8587, %v8619
        %v8626 = vmul.f32 %v8588, %v8619
        %v8627 = vmul.f32 %v8589, %v8619
        %v8628 = vmul.f32 %v8590, %v8619
        %v8629 = vmul.f32 %v8591, %v8619
        %v8630 = vmul.f32 %v8592, %v8619
        %v8631 = vmul.f32 %v8593, %v8619
        %v8632 = vmul.f32 %v8594, %v8619
        %v8633 = vmul.f32 %v8595, %v8619
        %v8634 = vmul.f32 %v8596, %v8619
        %v8635 = vmul.f32 %v8597, %v8619
        %v8636 = vmul.f32 %v8598, %v8619
        %v8637 = vmul.f32 %v8599, %v8619
        %v8638 = vmul.f32 %v8600, %v8619
        %v8639 = vmul.f32 %v8601, %v8619
        %v8640 = vmul.f32 %v8602, %v8619
        %v8641 = vmul.f32 %v8603, %v8619
        %v8642 = vmul.f32 %v8604, %v8619
        %v8643 = vmul.f32 %v8605, %v8619
        %v8644 = vmul.f32 %v8606, %v8619
        %v8645 = vmul.f32 %v8607, %v8619
        %v8646 = vmul.f32 %v8608, %v8619
        %v8647 = vmul.f32 %v8609, %v8619
        %v8648 = vmul.f32 %v8610, %v8619
        %v8649 = vmul.f32 %v8611, %v8619
        %v8650 = vmul.f32 %v8612, %v8619
        %v8651 = vmul.f32 %v8613, %v8619
        %v8652 = vmul.f32 %v8614, %v8619
        %v8654 = vlaneseq
        %v8655 = vshrl.u32 %v8654, 7
        %v8656 = vsub.s32 0, %v8655
        %v8657 = vrot.slane %v8262, %v8656
        %v8659 = vadd.f32 %v8621, %v8657
        %v8660 = vadd.f32 %v8622, %v8657
        %v8661 = vadd.f32 %v8623, %v8657
        %v8662 = vadd.f32 %v8624, %v8657
        %v8663 = vadd.f32 %v8625, %v8657
        %v8664 = vadd.f32 %v8626, %v8657
        %v8665 = vadd.f32 %v8627, %v8657
        %v8666 = vadd.f32 %v8628, %v8657
        %v8667 = vadd.f32 %v8629, %v8657
        %v8668 = vadd.f32 %v8630, %v8657
        %v8669 = vadd.f32 %v8631, %v8657
        %v8670 = vadd.f32 %v8632, %v8657
        %v8671 = vadd.f32 %v8633, %v8657
        %v8672 = vadd.f32 %v8634, %v8657
        %v8673 = vadd.f32 %v8635, %v8657
        %v8674 = vadd.f32 %v8636, %v8657
        %v8675 = vadd.f32 %v8637, %v8657
        %v8676 = vadd.f32 %v8638, %v8657
        %v8677 = vadd.f32 %v8639, %v8657
        %v8678 = vadd.f32 %v8640, %v8657
        %v8679 = vadd.f32 %v8641, %v8657
        %v8680 = vadd.f32 %v8642, %v8657
        %v8681 = vadd.f32 %v8643, %v8657
        %v8682 = vadd.f32 %v8644, %v8657
        %v8683 = vadd.f32 %v8645, %v8657
        %v8684 = vadd.f32 %v8646, %v8657
        %v8685 = vadd.f32 %v8647, %v8657
        %v8686 = vadd.f32 %v8648, %v8657
        %v8687 = vadd.f32 %v8649, %v8657
        %v8688 = vadd.f32 %v8650, %v8657
        %v8689 = vadd.f32 %v8651, %v8657
        %v8690 = vadd.f32 %v8652, %v8657
        %8691 = vst [vmem:[%s1130] sm:$0xff] %v8659
        %8692 = vst [vmem:[%s1130 + $0x8] sm:$0xff] %v8660
        %8693 = vst [vmem:[%s1130 + $0x10] sm:$0xff] %v8661
        %8694 = vst [vmem:[%s1130 + $0x18] sm:$0xff] %v8662
        %8695 = vst [vmem:[%s1130 + $0x20] sm:$0xff] %v8663
        %8696 = vst [vmem:[%s1130 + $0x28] sm:$0xff] %v8664
        %8697 = vst [vmem:[%s1130 + $0x30] sm:$0xff] %v8665
        %8698 = vst [vmem:[%s1130 + $0x38] sm:$0xff] %v8666
        %8699 = vst [vmem:[%s1130 + $0x40] sm:$0xff] %v8667
        %8700 = vst [vmem:[%s1130 + $0x48] sm:$0xff] %v8668
        %8701 = vst [vmem:[%s1130 + $0x50] sm:$0xff] %v8669
        %8702 = vst [vmem:[%s1130 + $0x58] sm:$0xff] %v8670
        %8703 = vst [vmem:[%s1130 + $0x60] sm:$0xff] %v8671
        %8704 = vst [vmem:[%s1130 + $0x68] sm:$0xff] %v8672
        %8705 = vst [vmem:[%s1130 + $0x70] sm:$0xff] %v8673
        %8706 = vst [vmem:[%s1130 + $0x78] sm:$0xff] %v8674
        %8707 = vst [vmem:[%s1130 + $0x80] sm:$0xff] %v8675
        %8708 = vst [vmem:[%s1130 + $0x88] sm:$0xff] %v8676
        %8709 = vst [vmem:[%s1130 + $0x90] sm:$0xff] %v8677
        %8710 = vst [vmem:[%s1130 + $0x98] sm:$0xff] %v8678
        %8711 = vst [vmem:[%s1130 + $0xa0] sm:$0xff] %v8679
        %8712 = vst [vmem:[%s1130 + $0xa8] sm:$0xff] %v8680
        %8713 = vst [vmem:[%s1130 + $0xb0] sm:$0xff] %v8681
        %8714 = vst [vmem:[%s1130 + $0xb8] sm:$0xff] %v8682
        %8715 = vst [vmem:[%s1130 + $0xc0] sm:$0xff] %v8683
        %8716 = vst [vmem:[%s1130 + $0xc8] sm:$0xff] %v8684
        %8717 = vst [vmem:[%s1130 + $0xd0] sm:$0xff] %v8685
        %8718 = vst [vmem:[%s1130 + $0xd8] sm:$0xff] %v8686
        %8719 = vst [vmem:[%s1130 + $0xe0] sm:$0xff] %v8687
        %8720 = vst [vmem:[%s1130 + $0xe8] sm:$0xff] %v8688
        %8721 = vst [vmem:[%s1130 + $0xf0] sm:$0xff] %v8689
        %8722 = vst [vmem:[%s1130 + $0xf8] sm:$0xff] %v8690
        %s8723 = sand.u32 %s528, 1
        %s8724 = scalar_lea.sflag [#allocation4], %s8723
        %s8725 = sand.u32 %s528, 1
        %s8726 = smul.addr %s8725, 256
        %s8727 = scalar_lea.vmem [#allocation32], %s8726
        %s8728 = sand.u32 %s59, 1
        %s8729 = scalar_lea.sflag [#allocation34], %s8728
        %s8730 = sand.u32 %s556, 1
        %s8731 = smul.addr %s8730, 1024
        %s8732 = scalar_lea.vmem [#allocation33], %s8731
        %s8733 = sand.u32 %s59, 1
        %s8734 = scalar_lea.sflag [#allocation34], %s8733
        %s8735 = sand.u32 %s584, 1
        %s8736 = smul.addr %s8735, 512
        %s8737 = scalar_lea.vmem [#allocation35], %s8736
        // Predicated region
        $region173: #{tpu_custom_call.1} parent=95 // pred_check
          %p8738 = pneg %p538
        $region174: #{tpu_custom_call.1} parent=95 // pred_check_branch
          %8740 = sbr.rel (%p8738) target = $region176
        $region175: #{tpu_custom_call.1} parent=95 // pred_region
          %s8741 = smul.u32 32, %s64
          %s8743 = ssub.s32 4096, 4096
          %8744 = vsyncadd %s8724, %s8743
          %s8745 = smul.addr %s63, 64
          %s8746 = sadd.s32 %s8741, %s8745
          %s8747 = smul.addr %s8746, 128
          %s8748 = scalar_lea.hbm %s19, %s8747
          %s8749 = sshll.u32 %s8727, 4
          %s8750 = int_to_ptr.vmem [resolvable:$true] %s8749
          %8755 = dma.vmem_to_hbm [thread:$0]  %s8750, 4096, %s8748, %s8724, 128, 128, 8
        $region176: #{tpu_custom_call.1} parent=95 // pred_fallthru
          _
        // Predicated region
        $region177: #{tpu_custom_call.1} parent=95 // pred_check
          %p8756 = pneg %p566
        $region178: #{tpu_custom_call.1} parent=95 // pred_check_branch
          %8758 = sbr.rel (%p8756) target = $region180
        $region179: #{tpu_custom_call.1} parent=95 // pred_region
          %s8759 = smul.u32 32, %s64
          %s8761 = ssub.s32 16384, 16384
          %8762 = vsyncadd %s8729, %s8761
          %s8763 = smul.addr %s8759, 4
          %s8764 = smul.addr %s63, 256
          %s8765 = sadd.s32 %s8763, %s8764
          %s8766 = smul.addr %s8765, 128
          %s8767 = scalar_lea.hbm %s20, %s8766
          %s8768 = sshll.u32 %s8732, 4
          %s8769 = int_to_ptr.vmem [resolvable:$true] %s8768
          %8774 = dma.vmem_to_hbm [thread:$0]  %s8769, 16384, %s8767, %s8729, 512, 512, 32
        $region180: #{tpu_custom_call.1} parent=95 // pred_fallthru
          _
        // Predicated region
        $region181: #{tpu_custom_call.1} parent=95 // pred_check
          %p8775 = pneg %p594
        $region182: #{tpu_custom_call.1} parent=95 // pred_check_branch
          %8777 = sbr.rel (%p8775) target = $region184
        $region183: #{tpu_custom_call.1} parent=95 // pred_region
          %s8778 = smul.u32 32, %s64
          %s8780 = ssub.s32 8192, 8192
          %8781 = vsyncadd %s8734, %s8780
          %s8782 = smul.addr %s8778, 2
          %s8783 = smul.addr %s63, 128
          %s8784 = sadd.s32 %s8782, %s8783
          %s8785 = smul.addr %s8784, 128
          %s8786 = scalar_lea.hbm %s21, %s8785
          %s8787 = sshll.u32 %s8737, 4
          %s8788 = int_to_ptr.vmem [resolvable:$true] %s8787
          %8793 = dma.vmem_to_hbm [thread:$0]  %s8788, 8192, %s8786, %s8734, 256, 256, 16
        $region184: #{tpu_custom_call.1} parent=95 // pred_fallthru
          _
      $region96: #{tpu_custom_call.1} parent=5 // pred_fallthru
        _
      %p8794 = scmp.le.s32.totalorder 2, %s54
      // Predicated region
      $region185: #{tpu_custom_call.1} parent=5 // pred_check
        %p8795 = pneg %p8794
      $region186: #{tpu_custom_call.1} parent=5 // pred_check_branch
        %8797 = sbr.rel (%p8795) target = $region188
      $region187: #{tpu_custom_call.1} parent=5 // pred_region
        %s8798 = ssub.s32 %s54, 2
        // Predicated region
        $region189: #{tpu_custom_call.1} parent=187 // pred_check
          %p8799 = pneg %p544
        $region190: #{tpu_custom_call.1} parent=187 // pred_check_branch
          %8801 = sbr.rel (%p8799) target = $region192
        $region191: #{tpu_custom_call.1} parent=187 // pred_region
          %s8802 = sand.u32 %s529, 1
          %s8803 = scalar_lea.sflag [#allocation4], %s8802
          %s8804 = sand.u32 %s529, 1
          %s8805 = smul.addr %s8804, 256
          %s8806 = scalar_lea.vmem [#allocation32], %s8805
          %8807 = dma.done %s8803, 4096
        $region192: #{tpu_custom_call.1} parent=187 // pred_fallthru
          _
        // Predicated region
        $region193: #{tpu_custom_call.1} parent=187 // pred_check
          %p8808 = pneg %p572
        $region194: #{tpu_custom_call.1} parent=187 // pred_check_branch
          %8810 = sbr.rel (%p8808) target = $region196
        $region195: #{tpu_custom_call.1} parent=187 // pred_region
          %s8811 = sand.u32 %s60, 1
          %s8812 = scalar_lea.sflag [#allocation34], %s8811
          %s8813 = sand.u32 %s557, 1
          %s8814 = smul.addr %s8813, 1024
          %s8815 = scalar_lea.vmem [#allocation33], %s8814
          %8816 = dma.done %s8812, 16384
        $region196: #{tpu_custom_call.1} parent=187 // pred_fallthru
          _
        // Predicated region
        $region197: #{tpu_custom_call.1} parent=187 // pred_check
          %p8817 = pneg %p600
        $region198: #{tpu_custom_call.1} parent=187 // pred_check_branch
          %8819 = sbr.rel (%p8817) target = $region200
        $region199: #{tpu_custom_call.1} parent=187 // pred_region
          %s8820 = sand.u32 %s60, 1
          %s8821 = scalar_lea.sflag [#allocation34], %s8820
          %s8822 = sand.u32 %s585, 1
          %s8823 = smul.addr %s8822, 512
          %s8824 = scalar_lea.vmem [#allocation35], %s8823
          %8825 = dma.done %s8821, 8192
        $region200: #{tpu_custom_call.1} parent=187 // pred_fallthru
          _
      $region188: #{tpu_custom_call.1} parent=5 // pred_fallthru
        _
    $region6: #{tpu_custom_call.1} parent=1 // loop_footer
      %s58 = sadd.s32 1, %s54
    $region7: #{tpu_custom_call.1} parent=1 // loop_footer_branch
      %53 = sbr.rel target = $region3
    $region8: #{tpu_custom_call.1} parent=1 // loop_exit
      _
    %8826 = vsyncpa [#allocation3], 1
    %s8827 = scalar_lea.sflag [#allocation3], 1
    %8828 = vsyncpa %s8827, 1
    %8829 = vsyncpa [#allocation6], 1
    %s8830 = scalar_lea.sflag [#allocation6], 1
    %8831 = vsyncpa %s8830, 1
    %8832 = vsyncpa [#allocation9], 1
    %s8833 = scalar_lea.sflag [#allocation9], 1
    %8834 = vsyncpa %s8833, 1
    %8835 = vsyncpa [#allocation12], 1
    %s8836 = scalar_lea.sflag [#allocation12], 1
    %8837 = vsyncpa %s8836, 1
    %8838 = vsyncpa [#allocation15], 1
    %s8839 = scalar_lea.sflag [#allocation15], 1
    %8840 = vsyncpa %s8839, 1
    %8841 = vsyncpa [#allocation18], 1
    %8842 = vsyncpa [#allocation21], 1
    %8843 = vsyncpa [#allocation24], 1
    %8844 = vsyncpa [#allocation27], 1
    %8845 = vsyncpa [#allocation30], 1
    %8846 = vsyncpa [#allocation4], 1
    %s8847 = scalar_lea.sflag [#allocation4], 1
    %8848 = vsyncpa %s8847, 1
    %8849 = vsyncpa [#allocation34], 1
    %s8850 = scalar_lea.sflag [#allocation34], 1
    %8851 = vsyncpa %s8850, 1

</llo_original>
